<compile_context>
chip_gen: v5e
topology: v5e:2x2
jax: 0.10.0
libtpu: 0.0.40
codegen_flags: <defaults>
</compile_context>

<pallas_src>
import functools

import jax
import jax.numpy as jnp
from jax.experimental import pallas as pl
from jax.experimental.pallas import tpu as pltpu

NUM_CLASSES = 5


# ---------------------------------------------------------------------------
# Kernel 1: fused 3x3 conv (stride 1, pad 1) + bias + ReLU + 2x2 max-pool.
# One grid step processes one image.  The padded input arrives as two
# de-interleaved halves (even / odd padded columns), which turns both the
# width taps of the conv and the width-direction pooling into unit-stride
# static slices inside the kernel (no strided loads, no in-kernel reshapes).
# ---------------------------------------------------------------------------
def _conv_relu_pool_kernel(xe_ref, xo_ref, w_ref, b_ref, o_ref, *, H, W, Cin, Cout):
    Ho, Wo = H // 2, W // 2
    bias = b_ref[...]                                  # (1, Cout), hoisted
    w = [w_ref[t] for t in range(9)]                   # 9 x (Cin, Cout), resident

    # Conv output pixel 2j   reads padded cols (2j,   2j+1, 2j+2) = (even[j], odd[j],   even[j+1])
    # Conv output pixel 2j+1 reads padded cols (2j+1, 2j+2, 2j+3) = (odd[j],  even[j+1], odd[j+1])
    even_sel = ((xe_ref, 0), (xo_ref, 0), (xe_ref, 1))
    odd_sel = ((xo_ref, 0), (xe_ref, 1), (xo_ref, 1))

    def conv_half_row(h, sel):
        # All even (or all odd) conv output pixels of conv row `h`: (Wo, Cout).
        acc = None
        for kh in range(3):
            for kw in range(3):
                ref, s = sel[kw]
                xi = ref[0, h + kh, s:s + Wo, :]       # (Wo, Cin) static slice
                t = jnp.dot(xi, w[kh * 3 + kw], preferred_element_type=jnp.float32)
                acc = t if acc is None else acc + t
        return jnp.maximum(acc + bias, 0.0)            # bias + ReLU fused

    def body(r, carry):
        h0 = 2 * r
        # 2x2 max pool = max over {even,odd} width halves x {2r, 2r+1} rows.
        pooled = jnp.maximum(
            jnp.maximum(conv_half_row(h0, even_sel), conv_half_row(h0, odd_sel)),
            jnp.maximum(conv_half_row(h0 + 1, even_sel), conv_half_row(h0 + 1, odd_sel)),
        )
        o_ref[0, r] = pooled                           # (Wo, Cout) pooled row
        return carry

    jax.lax.fori_loop(0, Ho, body, 0)


def conv3x3_relu_pool(x_nhwc, w9, b):
    """Fused conv3x3(pad 1) + bias + ReLU + maxpool2x2.  w9: (9, Cin, Cout)."""
    B, H, W, Cin = x_nhwc.shape
    Cout = w9.shape[-1]
    Ho, Wo = H // 2, W // 2
    Wh = (W + 2) // 2                                  # width of each column half
    xp = jnp.pad(x_nhwc, ((0, 0), (1, 1), (1, 1), (0, 0)))
    x_even = xp[:, :, 0::2, :]                         # (B, H+2, Wh, Cin)
    x_odd = xp[:, :, 1::2, :]                          # (B, H+2, Wh, Cin)
    kern = functools.partial(_conv_relu_pool_kernel, H=H, W=W, Cin=Cin, Cout=Cout)
    return pl.pallas_call(
        kern,
        out_shape=jax.ShapeDtypeStruct((B, Ho, Wo, Cout), jnp.float32),
        grid=(B,),
        in_specs=[
            pl.BlockSpec((1, H + 2, Wh, Cin), lambda i: (i, 0, 0, 0)),
            pl.BlockSpec((1, H + 2, Wh, Cin), lambda i: (i, 0, 0, 0)),
            pl.BlockSpec((9, Cin, Cout), lambda i: (0, 0, 0)),
            pl.BlockSpec((1, Cout), lambda i: (0, 0)),
        ],
        out_specs=pl.BlockSpec((1, Ho, Wo, Cout), lambda i: (i, 0, 0, 0)),
        compiler_params=pltpu.CompilerParams(dimension_semantics=("parallel",)),
    )(x_even, x_odd, w9, b.reshape(1, Cout))


# ---------------------------------------------------------------------------
# Kernel 2: fused classifier  relu(x @ W1 + b1) @ W2 + b2.
# ---------------------------------------------------------------------------
def _mlp_kernel(x_ref, w1_ref, b1_ref, w2_ref, b2_ref, o_ref):
    h = jnp.dot(x_ref[...], w1_ref[...], preferred_element_type=jnp.float32) + b1_ref[...]
    h = jnp.maximum(h, 0.0)
    o_ref[...] = (jnp.dot(h, w2_ref[...], preferred_element_type=jnp.float32)
                  + b2_ref[...]).astype(o_ref.dtype)


def mlp_head(x, w1, b1, w2, b2, *, row_tile=512):
    B, K1 = x.shape
    H1 = w1.shape[1]
    C = w2.shape[1]
    tb = min(B, row_tile)                              # cdiv grid, masked tail if needed
    return pl.pallas_call(
        _mlp_kernel,
        out_shape=jax.ShapeDtypeStruct((B, C), jnp.float32),
        grid=(pl.cdiv(B, tb),),
        in_specs=[
            pl.BlockSpec((tb, K1), lambda i: (i, 0)),
            pl.BlockSpec((K1, H1), lambda i: (0, 0)),
            pl.BlockSpec((1, H1), lambda i: (0, 0)),
            pl.BlockSpec((H1, C), lambda i: (0, 0)),
            pl.BlockSpec((1, C), lambda i: (0, 0)),
        ],
        out_specs=pl.BlockSpec((tb, C), lambda i: (i, 0)),
        compiler_params=pltpu.CompilerParams(dimension_semantics=("parallel",)),
    )(x, w1, b1.reshape(1, H1), w2, b2.reshape(1, C))


# ---------------------------------------------------------------------------
# Parameters (PyTorch layouts) and one-time conversion to kernel layouts.
# ---------------------------------------------------------------------------
def init_torch_params(key, num_classes=NUM_CLASSES):
    """Synthetic parameters in the PyTorch layouts of SimpleCNN."""
    ks = jax.random.split(key, 8)
    s = 0.05
    return {
        "conv1_w": s * jax.random.normal(ks[0], (16, 3, 3, 3), jnp.float32),   # (Cout,Cin,kh,kw)
        "conv1_b": s * jax.random.normal(ks[1], (16,), jnp.float32),
        "conv2_w": s * jax.random.normal(ks[2], (32, 16, 3, 3), jnp.float32),
        "conv2_b": s * jax.random.normal(ks[3], (32,), jnp.float32),
        "fc1_w": s * jax.random.normal(ks[4], (128, 32 * 15 * 15), jnp.float32),  # (out,in)
        "fc1_b": s * jax.random.normal(ks[5], (128,), jnp.float32),
        "fc2_w": s * jax.random.normal(ks[6], (num_classes, 128), jnp.float32),
        "fc2_b": s * jax.random.normal(ks[7], (num_classes,), jnp.float32),
    }


def convert_params(tp):
    """One-time PyTorch -> kernel layout conversion (done outside the forward).

    * conv weights (Cout,Cin,3,3) -> (9, Cin, Cout), tap index kh*3+kw.
    * fc weights (out,in) -> (in,out).
    * fc1 rows are permuted from PyTorch's (C,H,W) flatten order to the (H,W,C)
      order the NHWC pipeline produces, removing the per-forward transpose.
    """
    def conv_w(w):
        cout, cin = w.shape[0], w.shape[1]
        return jnp.transpose(w, (2, 3, 1, 0)).reshape(9, cin, cout)

    fc1 = jnp.transpose(tp["fc1_w"], (1, 0))                         # rows in (C,H,W) order
    fc1 = fc1.reshape(32, 15, 15, 128).transpose(1, 2, 0, 3).reshape(32 * 15 * 15, 128)
    return {
        "conv1_w": conv_w(tp["conv1_w"]), "conv1_b": tp["conv1_b"],
        "conv2_w": conv_w(tp["conv2_w"]), "conv2_b": tp["conv2_b"],
        "fc1_w": fc1, "fc1_b": tp["fc1_b"],
        "fc2_w": jnp.transpose(tp["fc2_w"], (1, 0)), "fc2_b": tp["fc2_b"],
    }


# ---------------------------------------------------------------------------
# Full forward pass (matches SimpleCNN.forward).
# ---------------------------------------------------------------------------
def simple_cnn_forward(x_nchw, kp):
    x = jnp.transpose(x_nchw, (0, 2, 3, 1))                          # (B, 60, 60, 3) NHWC
    x = conv3x3_relu_pool(x, kp["conv1_w"], kp["conv1_b"])           # (B, 30, 30, 16)
    x = conv3x3_relu_pool(x, kp["conv2_w"], kp["conv2_b"])           # (B, 15, 15, 32)
    B = x.shape[0]
    x = x.reshape(B, 15 * 15 * 32)                                   # HWC flatten (fc1_w permuted)
    return mlp_head(x, kp["fc1_w"], kp["fc1_b"], kp["fc2_w"], kp["fc2_b"])  # (B, 5)


if __name__ == "__main__":
    key = jax.random.PRNGKey(0)
    k_x, k_p = jax.random.split(key)
    # 60x60 spatial input is forced by Linear(32*15*15, 128).
    x = jax.random.normal(k_x, (2, 3, 60, 60), jnp.float32)
    kparams = convert_params(init_torch_params(k_p))

    fwd = jax.jit(simple_cnn_forward)
    out = jax.block_until_ready(fwd(x, kparams))

    assert out.shape == (2, NUM_CLASSES), out.shape
    assert out.dtype == jnp.float32
    assert bool(jnp.all(jnp.isfinite(out)))
    print("KERNEL_OK")
</pallas_src>

<mosaic_0001>
module attributes {stable_mosaic.version = 11 : i64} {
  func.func @_conv_relu_pool_kernel(%arg0: i32, %arg1: memref<1x62x31x3xf32, #tpu.memory_space<vmem>>, %arg2: memref<1x62x31x3xf32, #tpu.memory_space<vmem>>, %arg3: memref<9x3x16xf32, #tpu.memory_space<vmem>>, %arg4: memref<1x16xf32, #tpu.memory_space<vmem>>, %arg5: memref<1x30x30x16xf32, #tpu.memory_space<vmem>>) attributes {dimension_semantics = [#tpu.dimension_semantics<parallel>], iteration_bounds = array<i64: 2>, scalar_prefetch = 0 : i64, scratch_operands = 0 : i64, tpu.core_type = #tpu.core_type<tc>, window_params = [{transform_indices = @transform_0, window_bounds = array<i64: 1, 62, 31, 3>}, {transform_indices = @transform_1, window_bounds = array<i64: 1, 62, 31, 3>}, {pipeline_mode = #tpu.pipeline_mode<synchronous>, transform_indices = @transform_2, window_bounds = array<i64: 9, 3, 16>}, {pipeline_mode = #tpu.pipeline_mode<synchronous>, transform_indices = @transform_3, window_bounds = array<i64: 1, 16>}, {transform_indices = @transform_4, window_bounds = array<i64: 1, 30, 30, 16>}]} {
    %c0 = arith.constant 0 : index
    %c0_0 = arith.constant 0 : index
    %0 = vector.load %arg4[%c0, %c0_0] : memref<1x16xf32, #tpu.memory_space<vmem>>, vector<1x16xf32>
    %c0_1 = arith.constant 0 : index
    %c0_2 = arith.constant 0 : index
    %c0_3 = arith.constant 0 : index
    %1 = vector.load %arg3[%c0_1, %c0_2, %c0_3] : memref<9x3x16xf32, #tpu.memory_space<vmem>>, vector<1x3x16xf32>
    %2 = vector.shape_cast %1 : vector<1x3x16xf32> to vector<3x16xf32>
    %c1 = arith.constant 1 : index
    %c0_4 = arith.constant 0 : index
    %c0_5 = arith.constant 0 : index
    %3 = vector.load %arg3[%c1, %c0_4, %c0_5] : memref<9x3x16xf32, #tpu.memory_space<vmem>>, vector<1x3x16xf32>
    %4 = vector.shape_cast %3 : vector<1x3x16xf32> to vector<3x16xf32>
    %c2 = arith.constant 2 : index
    %c0_6 = arith.constant 0 : index
    %c0_7 = arith.constant 0 : index
    %5 = vector.load %arg3[%c2, %c0_6, %c0_7] : memref<9x3x16xf32, #tpu.memory_space<vmem>>, vector<1x3x16xf32>
    %6 = vector.shape_cast %5 : vector<1x3x16xf32> to vector<3x16xf32>
    %c3 = arith.constant 3 : index
    %c0_8 = arith.constant 0 : index
    %c0_9 = arith.constant 0 : index
    %7 = vector.load %arg3[%c3, %c0_8, %c0_9] : memref<9x3x16xf32, #tpu.memory_space<vmem>>, vector<1x3x16xf32>
    %8 = vector.shape_cast %7 : vector<1x3x16xf32> to vector<3x16xf32>
    %c4 = arith.constant 4 : index
    %c0_10 = arith.constant 0 : index
    %c0_11 = arith.constant 0 : index
    %9 = vector.load %arg3[%c4, %c0_10, %c0_11] : memref<9x3x16xf32, #tpu.memory_space<vmem>>, vector<1x3x16xf32>
    %10 = vector.shape_cast %9 : vector<1x3x16xf32> to vector<3x16xf32>
    %c5 = arith.constant 5 : index
    %c0_12 = arith.constant 0 : index
    %c0_13 = arith.constant 0 : index
    %11 = vector.load %arg3[%c5, %c0_12, %c0_13] : memref<9x3x16xf32, #tpu.memory_space<vmem>>, vector<1x3x16xf32>
    %12 = vector.shape_cast %11 : vector<1x3x16xf32> to vector<3x16xf32>
    %c6 = arith.constant 6 : index
    %c0_14 = arith.constant 0 : index
    %c0_15 = arith.constant 0 : index
    %13 = vector.load %arg3[%c6, %c0_14, %c0_15] : memref<9x3x16xf32, #tpu.memory_space<vmem>>, vector<1x3x16xf32>
    %14 = vector.shape_cast %13 : vector<1x3x16xf32> to vector<3x16xf32>
    %c7 = arith.constant 7 : index
    %c0_16 = arith.constant 0 : index
    %c0_17 = arith.constant 0 : index
    %15 = vector.load %arg3[%c7, %c0_16, %c0_17] : memref<9x3x16xf32, #tpu.memory_space<vmem>>, vector<1x3x16xf32>
    %16 = vector.shape_cast %15 : vector<1x3x16xf32> to vector<3x16xf32>
    %c8 = arith.constant 8 : index
    %c0_18 = arith.constant 0 : index
    %c0_19 = arith.constant 0 : index
    %17 = vector.load %arg3[%c8, %c0_18, %c0_19] : memref<9x3x16xf32, #tpu.memory_space<vmem>>, vector<1x3x16xf32>
    %18 = vector.shape_cast %17 : vector<1x3x16xf32> to vector<3x16xf32>
    %c0_i32 = arith.constant 0 : i32
    %c30_i32 = arith.constant 30 : i32
    %19 = arith.addi %c0_i32, %c30_i32 : i32
    %c1_i32 = arith.constant 1 : i32
    scf.for %arg6 = %c0_i32 to %19 step %c1_i32  : i32 {
      %c2_i32 = arith.constant 2 : i32
      %20 = arith.muli %c2_i32, %arg6 : i32
      %c0_i32_21 = arith.constant 0 : i32
      %21 = arith.addi %20, %c0_i32_21 : i32
      %c0_22 = arith.constant 0 : index
      %22 = arith.index_cast %21 : i32 to index
      %c0_23 = arith.constant 0 : index
      %c0_24 = arith.constant 0 : index
      %23 = vector.load %arg1[%c0_22, %22, %c0_23, %c0_24] : memref<1x62x31x3xf32, #tpu.memory_space<vmem>>, vector<1x1x30x3xf32>
      %24 = vector.shape_cast %23 : vector<1x1x30x3xf32> to vector<30x3xf32>
      %cst = arith.constant dense<0.000000e+00> : vector<30x16xf32>
      %25 = tpu.matmul %24, %2, %cst {dimension_numbers = #tpu.dot_dimension_numbers<[1], [0], [0], [1], [0, 0, 1, 1], [], []>} : vector<30x3xf32>, vector<3x16xf32>, vector<30x16xf32> -> vector<30x16xf32>
      %c0_i32_25 = arith.constant 0 : i32
      %26 = arith.addi %20, %c0_i32_25 : i32
      %c0_26 = arith.constant 0 : index
      %27 = arith.index_cast %26 : i32 to index
      %c0_27 = arith.constant 0 : index
      %c0_28 = arith.constant 0 : index
      %28 = vector.load %arg2[%c0_26, %27, %c0_27, %c0_28] : memref<1x62x31x3xf32, #tpu.memory_space<vmem>>, vector<1x1x30x3xf32>
      %29 = vector.shape_cast %28 : vector<1x1x30x3xf32> to vector<30x3xf32>
      %cst_29 = arith.constant dense<0.000000e+00> : vector<30x16xf32>
      %30 = tpu.matmul %29, %4, %cst_29 {dimension_numbers = #tpu.dot_dimension_numbers<[1], [0], [0], [1], [0, 0, 1, 1], [], []>} : vector<30x3xf32>, vector<3x16xf32>, vector<30x16xf32> -> vector<30x16xf32>
      %31 = arith.addf %25, %30 : vector<30x16xf32>
      %c0_i32_30 = arith.constant 0 : i32
      %32 = arith.addi %20, %c0_i32_30 : i32
      %c0_31 = arith.constant 0 : index
      %33 = arith.index_cast %32 : i32 to index
      %c1_32 = arith.constant 1 : index
      %c0_33 = arith.constant 0 : index
      %34 = vector.load %arg1[%c0_31, %33, %c1_32, %c0_33] : memref<1x62x31x3xf32, #tpu.memory_space<vmem>>, vector<1x1x30x3xf32>
      %35 = vector.shape_cast %34 : vector<1x1x30x3xf32> to vector<30x3xf32>
      %cst_34 = arith.constant dense<0.000000e+00> : vector<30x16xf32>
      %36 = tpu.matmul %35, %6, %cst_34 {dimension_numbers = #tpu.dot_dimension_numbers<[1], [0], [0], [1], [0, 0, 1, 1], [], []>} : vector<30x3xf32>, vector<3x16xf32>, vector<30x16xf32> -> vector<30x16xf32>
      %37 = arith.addf %31, %36 : vector<30x16xf32>
      %c1_i32_35 = arith.constant 1 : i32
      %38 = arith.addi %20, %c1_i32_35 : i32
      %c0_36 = arith.constant 0 : index
      %39 = arith.index_cast %38 : i32 to index
      %c0_37 = arith.constant 0 : index
      %c0_38 = arith.constant 0 : index
      %40 = vector.load %arg1[%c0_36, %39, %c0_37, %c0_38] : memref<1x62x31x3xf32, #tpu.memory_space<vmem>>, vector<1x1x30x3xf32>
      %41 = vector.shape_cast %40 : vector<1x1x30x3xf32> to vector<30x3xf32>
      %cst_39 = arith.constant dense<0.000000e+00> : vector<30x16xf32>
      %42 = tpu.matmul %41, %8, %cst_39 {dimension_numbers = #tpu.dot_dimension_numbers<[1], [0], [0], [1], [0, 0, 1, 1], [], []>} : vector<30x3xf32>, vector<3x16xf32>, vector<30x16xf32> -> vector<30x16xf32>
      %43 = arith.addf %37, %42 : vector<30x16xf32>
      %c1_i32_40 = arith.constant 1 : i32
      %44 = arith.addi %20, %c1_i32_40 : i32
      %c0_41 = arith.constant 0 : index
      %45 = arith.index_cast %44 : i32 to index
      %c0_42 = arith.constant 0 : index
      %c0_43 = arith.constant 0 : index
      %46 = vector.load %arg2[%c0_41, %45, %c0_42, %c0_43] : memref<1x62x31x3xf32, #tpu.memory_space<vmem>>, vector<1x1x30x3xf32>
      %47 = vector.shape_cast %46 : vector<1x1x30x3xf32> to vector<30x3xf32>
      %cst_44 = arith.constant dense<0.000000e+00> : vector<30x16xf32>
      %48 = tpu.matmul %47, %10, %cst_44 {dimension_numbers = #tpu.dot_dimension_numbers<[1], [0], [0], [1], [0, 0, 1, 1], [], []>} : vector<30x3xf32>, vector<3x16xf32>, vector<30x16xf32> -> vector<30x16xf32>
      %49 = arith.addf %43, %48 : vector<30x16xf32>
      %c1_i32_45 = arith.constant 1 : i32
      %50 = arith.addi %20, %c1_i32_45 : i32
      %c0_46 = arith.constant 0 : index
      %51 = arith.index_cast %50 : i32 to index
      %c1_47 = arith.constant 1 : index
      %c0_48 = arith.constant 0 : index
      %52 = vector.load %arg1[%c0_46, %51, %c1_47, %c0_48] : memref<1x62x31x3xf32, #tpu.memory_space<vmem>>, vector<1x1x30x3xf32>
      %53 = vector.shape_cast %52 : vector<1x1x30x3xf32> to vector<30x3xf32>
      %cst_49 = arith.constant dense<0.000000e+00> : vector<30x16xf32>
      %54 = tpu.matmul %53, %12, %cst_49 {dimension_numbers = #tpu.dot_dimension_numbers<[1], [0], [0], [1], [0, 0, 1, 1], [], []>} : vector<30x3xf32>, vector<3x16xf32>, vector<30x16xf32> -> vector<30x16xf32>
      %55 = arith.addf %49, %54 : vector<30x16xf32>
      %c2_i32_50 = arith.constant 2 : i32
      %56 = arith.addi %20, %c2_i32_50 : i32
      %c0_51 = arith.constant 0 : index
      %57 = arith.index_cast %56 : i32 to index
      %c0_52 = arith.constant 0 : index
      %c0_53 = arith.constant 0 : index
      %58 = vector.load %arg1[%c0_51, %57, %c0_52, %c0_53] : memref<1x62x31x3xf32, #tpu.memory_space<vmem>>, vector<1x1x30x3xf32>
      %59 = vector.shape_cast %58 : vector<1x1x30x3xf32> to vector<30x3xf32>
      %cst_54 = arith.constant dense<0.000000e+00> : vector<30x16xf32>
      %60 = tpu.matmul %59, %14, %cst_54 {dimension_numbers = #tpu.dot_dimension_numbers<[1], [0], [0], [1], [0, 0, 1, 1], [], []>} : vector<30x3xf32>, vector<3x16xf32>, vector<30x16xf32> -> vector<30x16xf32>
      %61 = arith.addf %55, %60 : vector<30x16xf32>
      %c2_i32_55 = arith.constant 2 : i32
      %62 = arith.addi %20, %c2_i32_55 : i32
      %c0_56 = arith.constant 0 : index
      %63 = arith.index_cast %62 : i32 to index
      %c0_57 = arith.constant 0 : index
      %c0_58 = arith.constant 0 : index
      %64 = vector.load %arg2[%c0_56, %63, %c0_57, %c0_58] : memref<1x62x31x3xf32, #tpu.memory_space<vmem>>, vector<1x1x30x3xf32>
      %65 = vector.shape_cast %64 : vector<1x1x30x3xf32> to vector<30x3xf32>
      %cst_59 = arith.constant dense<0.000000e+00> : vector<30x16xf32>
      %66 = tpu.matmul %65, %16, %cst_59 {dimension_numbers = #tpu.dot_dimension_numbers<[1], [0], [0], [1], [0, 0, 1, 1], [], []>} : vector<30x3xf32>, vector<3x16xf32>, vector<30x16xf32> -> vector<30x16xf32>
      %67 = arith.addf %61, %66 : vector<30x16xf32>
      %c2_i32_60 = arith.constant 2 : i32
      %68 = arith.addi %20, %c2_i32_60 : i32
      %c0_61 = arith.constant 0 : index
      %69 = arith.index_cast %68 : i32 to index
      %c1_62 = arith.constant 1 : index
      %c0_63 = arith.constant 0 : index
      %70 = vector.load %arg1[%c0_61, %69, %c1_62, %c0_63] : memref<1x62x31x3xf32, #tpu.memory_space<vmem>>, vector<1x1x30x3xf32>
      %71 = vector.shape_cast %70 : vector<1x1x30x3xf32> to vector<30x3xf32>
      %cst_64 = arith.constant dense<0.000000e+00> : vector<30x16xf32>
      %72 = tpu.matmul %71, %18, %cst_64 {dimension_numbers = #tpu.dot_dimension_numbers<[1], [0], [0], [1], [0, 0, 1, 1], [], []>} : vector<30x3xf32>, vector<3x16xf32>, vector<30x16xf32> -> vector<30x16xf32>
      %73 = arith.addf %67, %72 : vector<30x16xf32>
      %74 = vector.broadcast %0 : vector<1x16xf32> to vector<30x16xf32>
      %75 = arith.addf %73, %74 : vector<30x16xf32>
      %cst_65 = arith.constant 0.000000e+00 : f32
      %76 = vector.broadcast %cst_65 : f32 to vector<30x16xf32>
      %77 = arith.maximumf %75, %76 : vector<30x16xf32>
      %c0_i32_66 = arith.constant 0 : i32
      %78 = arith.addi %20, %c0_i32_66 : i32
      %c0_67 = arith.constant 0 : index
      %79 = arith.index_cast %78 : i32 to index
      %c0_68 = arith.constant 0 : index
      %c0_69 = arith.constant 0 : index
      %80 = vector.load %arg2[%c0_67, %79, %c0_68, %c0_69] : memref<1x62x31x3xf32, #tpu.memory_space<vmem>>, vector<1x1x30x3xf32>
      %81 = vector.shape_cast %80 : vector<1x1x30x3xf32> to vector<30x3xf32>
      %cst_70 = arith.constant dense<0.000000e+00> : vector<30x16xf32>
      %82 = tpu.matmul %81, %2, %cst_70 {dimension_numbers = #tpu.dot_dimension_numbers<[1], [0], [0], [1], [0, 0, 1, 1], [], []>} : vector<30x3xf32>, vector<3x16xf32>, vector<30x16xf32> -> vector<30x16xf32>
      %c0_i32_71 = arith.constant 0 : i32
      %83 = arith.addi %20, %c0_i32_71 : i32
      %c0_72 = arith.constant 0 : index
      %84 = arith.index_cast %83 : i32 to index
      %c1_73 = arith.constant 1 : index
      %c0_74 = arith.constant 0 : index
      %85 = vector.load %arg1[%c0_72, %84, %c1_73, %c0_74] : memref<1x62x31x3xf32, #tpu.memory_space<vmem>>, vector<1x1x30x3xf32>
      %86 = vector.shape_cast %85 : vector<1x1x30x3xf32> to vector<30x3xf32>
      %cst_75 = arith.constant dense<0.000000e+00> : vector<30x16xf32>
      %87 = tpu.matmul %86, %4, %cst_75 {dimension_numbers = #tpu.dot_dimension_numbers<[1], [0], [0], [1], [0, 0, 1, 1], [], []>} : vector<30x3xf32>, vector<3x16xf32>, vector<30x16xf32> -> vector<30x16xf32>
      %88 = arith.addf %82, %87 : vector<30x16xf32>
      %c0_i32_76 = arith.constant 0 : i32
      %89 = arith.addi %20, %c0_i32_76 : i32
      %c0_77 = arith.constant 0 : index
      %90 = arith.index_cast %89 : i32 to index
      %c1_78 = arith.constant 1 : index
      %c0_79 = arith.constant 0 : index
      %91 = vector.load %arg2[%c0_77, %90, %c1_78, %c0_79] : memref<1x62x31x3xf32, #tpu.memory_space<vmem>>, vector<1x1x30x3xf32>
      %92 = vector.shape_cast %91 : vector<1x1x30x3xf32> to vector<30x3xf32>
      %cst_80 = arith.constant dense<0.000000e+00> : vector<30x16xf32>
      %93 = tpu.matmul %92, %6, %cst_80 {dimension_numbers = #tpu.dot_dimension_numbers<[1], [0], [0], [1], [0, 0, 1, 1], [], []>} : vector<30x3xf32>, vector<3x16xf32>, vector<30x16xf32> -> vector<30x16xf32>
      %94 = arith.addf %88, %93 : vector<30x16xf32>
      %c1_i32_81 = arith.constant 1 : i32
      %95 = arith.addi %20, %c1_i32_81 : i32
      %c0_82 = arith.constant 0 : index
      %96 = arith.index_cast %95 : i32 to index
      %c0_83 = arith.constant 0 : index
      %c0_84 = arith.constant 0 : index
      %97 = vector.load %arg2[%c0_82, %96, %c0_83, %c0_84] : memref<1x62x31x3xf32, #tpu.memory_space<vmem>>, vector<1x1x30x3xf32>
      %98 = vector.shape_cast %97 : vector<1x1x30x3xf32> to vector<30x3xf32>
      %cst_85 = arith.constant dense<0.000000e+00> : vector<30x16xf32>
      %99 = tpu.matmul %98, %8, %cst_85 {dimension_numbers = #tpu.dot_dimension_numbers<[1], [0], [0], [1], [0, 0, 1, 1], [], []>} : vector<30x3xf32>, vector<3x16xf32>, vector<30x16xf32> -> vector<30x16xf32>
      %100 = arith.addf %94, %99 : vector<30x16xf32>
      %c1_i32_86 = arith.constant 1 : i32
      %101 = arith.addi %20, %c1_i32_86 : i32
      %c0_87 = arith.constant 0 : index
      %102 = arith.index_cast %101 : i32 to index
      %c1_88 = arith.constant 1 : index
      %c0_89 = arith.constant 0 : index
      %103 = vector.load %arg1[%c0_87, %102, %c1_88, %c0_89] : memref<1x62x31x3xf32, #tpu.memory_space<vmem>>, vector<1x1x30x3xf32>
      %104 = vector.shape_cast %103 : vector<1x1x30x3xf32> to vector<30x3xf32>
      %cst_90 = arith.constant dense<0.000000e+00> : vector<30x16xf32>
      %105 = tpu.matmul %104, %10, %cst_90 {dimension_numbers = #tpu.dot_dimension_numbers<[1], [0], [0], [1], [0, 0, 1, 1], [], []>} : vector<30x3xf32>, vector<3x16xf32>, vector<30x16xf32> -> vector<30x16xf32>
      %106 = arith.addf %100, %105 : vector<30x16xf32>
      %c1_i32_91 = arith.constant 1 : i32
      %107 = arith.addi %20, %c1_i32_91 : i32
      %c0_92 = arith.constant 0 : index
      %108 = arith.index_cast %107 : i32 to index
      %c1_93 = arith.constant 1 : index
      %c0_94 = arith.constant 0 : index
      %109 = vector.load %arg2[%c0_92, %108, %c1_93, %c0_94] : memref<1x62x31x3xf32, #tpu.memory_space<vmem>>, vector<1x1x30x3xf32>
      %110 = vector.shape_cast %109 : vector<1x1x30x3xf32> to vector<30x3xf32>
      %cst_95 = arith.constant dense<0.000000e+00> : vector<30x16xf32>
      %111 = tpu.matmul %110, %12, %cst_95 {dimension_numbers = #tpu.dot_dimension_numbers<[1], [0], [0], [1], [0, 0, 1, 1], [], []>} : vector<30x3xf32>, vector<3x16xf32>, vector<30x16xf32> -> vector<30x16xf32>
      %112 = arith.addf %106, %111 : vector<30x16xf32>
      %c2_i32_96 = arith.constant 2 : i32
      %113 = arith.addi %20, %c2_i32_96 : i32
      %c0_97 = arith.constant 0 : index
      %114 = arith.index_cast %113 : i32 to index
      %c0_98 = arith.constant 0 : index
      %c0_99 = arith.constant 0 : index
      %115 = vector.load %arg2[%c0_97, %114, %c0_98, %c0_99] : memref<1x62x31x3xf32, #tpu.memory_space<vmem>>, vector<1x1x30x3xf32>
      %116 = vector.shape_cast %115 : vector<1x1x30x3xf32> to vector<30x3xf32>
      %cst_100 = arith.constant dense<0.000000e+00> : vector<30x16xf32>
      %117 = tpu.matmul %116, %14, %cst_100 {dimension_numbers = #tpu.dot_dimension_numbers<[1], [0], [0], [1], [0, 0, 1, 1], [], []>} : vector<30x3xf32>, vector<3x16xf32>, vector<30x16xf32> -> vector<30x16xf32>
      %118 = arith.addf %112, %117 : vector<30x16xf32>
      %c2_i32_101 = arith.constant 2 : i32
      %119 = arith.addi %20, %c2_i32_101 : i32
      %c0_102 = arith.constant 0 : index
      %120 = arith.index_cast %119 : i32 to index
      %c1_103 = arith.constant 1 : index
      %c0_104 = arith.constant 0 : index
      %121 = vector.load %arg1[%c0_102, %120, %c1_103, %c0_104] : memref<1x62x31x3xf32, #tpu.memory_space<vmem>>, vector<1x1x30x3xf32>
      %122 = vector.shape_cast %121 : vector<1x1x30x3xf32> to vector<30x3xf32>
      %cst_105 = arith.constant dense<0.000000e+00> : vector<30x16xf32>
      %123 = tpu.matmul %122, %16, %cst_105 {dimension_numbers = #tpu.dot_dimension_numbers<[1], [0], [0], [1], [0, 0, 1, 1], [], []>} : vector<30x3xf32>, vector<3x16xf32>, vector<30x16xf32> -> vector<30x16xf32>
      %124 = arith.addf %118, %123 : vector<30x16xf32>
      %c2_i32_106 = arith.constant 2 : i32
      %125 = arith.addi %20, %c2_i32_106 : i32
      %c0_107 = arith.constant 0 : index
      %126 = arith.index_cast %125 : i32 to index
      %c1_108 = arith.constant 1 : index
      %c0_109 = arith.constant 0 : index
      %127 = vector.load %arg2[%c0_107, %126, %c1_108, %c0_109] : memref<1x62x31x3xf32, #tpu.memory_space<vmem>>, vector<1x1x30x3xf32>
      %128 = vector.shape_cast %127 : vector<1x1x30x3xf32> to vector<30x3xf32>
      %cst_110 = arith.constant dense<0.000000e+00> : vector<30x16xf32>
      %129 = tpu.matmul %128, %18, %cst_110 {dimension_numbers = #tpu.dot_dimension_numbers<[1], [0], [0], [1], [0, 0, 1, 1], [], []>} : vector<30x3xf32>, vector<3x16xf32>, vector<30x16xf32> -> vector<30x16xf32>
      %130 = arith.addf %124, %129 : vector<30x16xf32>
      %131 = vector.broadcast %0 : vector<1x16xf32> to vector<30x16xf32>
      %132 = arith.addf %130, %131 : vector<30x16xf32>
      %cst_111 = arith.constant 0.000000e+00 : f32
      %133 = vector.broadcast %cst_111 : f32 to vector<30x16xf32>
      %134 = arith.maximumf %132, %133 : vector<30x16xf32>
      %135 = arith.maximumf %77, %134 : vector<30x16xf32>
      %c1_i32_112 = arith.constant 1 : i32
      %136 = arith.addi %20, %c1_i32_112 : i32
      %c0_i32_113 = arith.constant 0 : i32
      %137 = arith.addi %136, %c0_i32_113 : i32
      %c0_114 = arith.constant 0 : index
      %138 = arith.index_cast %137 : i32 to index
      %c0_115 = arith.constant 0 : index
      %c0_116 = arith.constant 0 : index
      %139 = vector.load %arg1[%c0_114, %138, %c0_115, %c0_116] : memref<1x62x31x3xf32, #tpu.memory_space<vmem>>, vector<1x1x30x3xf32>
      %140 = vector.shape_cast %139 : vector<1x1x30x3xf32> to vector<30x3xf32>
      %cst_117 = arith.constant dense<0.000000e+00> : vector<30x16xf32>
      %141 = tpu.matmul %140, %2, %cst_117 {dimension_numbers = #tpu.dot_dimension_numbers<[1], [0], [0], [1], [0, 0, 1, 1], [], []>} : vector<30x3xf32>, vector<3x16xf32>, vector<30x16xf32> -> vector<30x16xf32>
      %c0_i32_118 = arith.constant 0 : i32
      %142 = arith.addi %136, %c0_i32_118 : i32
      %c0_119 = arith.constant 0 : index
      %143 = arith.index_cast %142 : i32 to index
      %c0_120 = arith.constant 0 : index
      %c0_121 = arith.constant 0 : index
      %144 = vector.load %arg2[%c0_119, %143, %c0_120, %c0_121] : memref<1x62x31x3xf32, #tpu.memory_space<vmem>>, vector<1x1x30x3xf32>
      %145 = vector.shape_cast %144 : vector<1x1x30x3xf32> to vector<30x3xf32>
      %cst_122 = arith.constant dense<0.000000e+00> : vector<30x16xf32>
      %146 = tpu.matmul %145, %4, %cst_122 {dimension_numbers = #tpu.dot_dimension_numbers<[1], [0], [0], [1], [0, 0, 1, 1], [], []>} : vector<30x3xf32>, vector<3x16xf32>, vector<30x16xf32> -> vector<30x16xf32>
      %147 = arith.addf %141, %146 : vector<30x16xf32>
      %c0_i32_123 = arith.constant 0 : i32
      %148 = arith.addi %136, %c0_i32_123 : i32
      %c0_124 = arith.constant 0 : index
      %149 = arith.index_cast %148 : i32 to index
      %c1_125 = arith.constant 1 : index
      %c0_126 = arith.constant 0 : index
      %150 = vector.load %arg1[%c0_124, %149, %c1_125, %c0_126] : memref<1x62x31x3xf32, #tpu.memory_space<vmem>>, vector<1x1x30x3xf32>
      %151 = vector.shape_cast %150 : vector<1x1x30x3xf32> to vector<30x3xf32>
      %cst_127 = arith.constant dense<0.000000e+00> : vector<30x16xf32>
      %152 = tpu.matmul %151, %6, %cst_127 {dimension_numbers = #tpu.dot_dimension_numbers<[1], [0], [0], [1], [0, 0, 1, 1], [], []>} : vector<30x3xf32>, vector<3x16xf32>, vector<30x16xf32> -> vector<30x16xf32>
      %153 = arith.addf %147, %152 : vector<30x16xf32>
      %c1_i32_128 = arith.constant 1 : i32
      %154 = arith.addi %136, %c1_i32_128 : i32
      %c0_129 = arith.constant 0 : index
      %155 = arith.index_cast %154 : i32 to index
      %c0_130 = arith.constant 0 : index
      %c0_131 = arith.constant 0 : index
      %156 = vector.load %arg1[%c0_129, %155, %c0_130, %c0_131] : memref<1x62x31x3xf32, #tpu.memory_space<vmem>>, vector<1x1x30x3xf32>
      %157 = vector.shape_cast %156 : vector<1x1x30x3xf32> to vector<30x3xf32>
      %cst_132 = arith.constant dense<0.000000e+00> : vector<30x16xf32>
      %158 = tpu.matmul %157, %8, %cst_132 {dimension_numbers = #tpu.dot_dimension_numbers<[1], [0], [0], [1], [0, 0, 1, 1], [], []>} : vector<30x3xf32>, vector<3x16xf32>, vector<30x16xf32> -> vector<30x16xf32>
      %159 = arith.addf %153, %158 : vector<30x16xf32>
      %c1_i32_133 = arith.constant 1 : i32
      %160 = arith.addi %136, %c1_i32_133 : i32
      %c0_134 = arith.constant 0 : index
      %161 = arith.index_cast %160 : i32 to index
      %c0_135 = arith.constant 0 : index
      %c0_136 = arith.constant 0 : index
      %162 = vector.load %arg2[%c0_134, %161, %c0_135, %c0_136] : memref<1x62x31x3xf32, #tpu.memory_space<vmem>>, vector<1x1x30x3xf32>
      %163 = vector.shape_cast %162 : vector<1x1x30x3xf32> to vector<30x3xf32>
      %cst_137 = arith.constant dense<0.000000e+00> : vector<30x16xf32>
      %164 = tpu.matmul %163, %10, %cst_137 {dimension_numbers = #tpu.dot_dimension_numbers<[1], [0], [0], [1], [0, 0, 1, 1], [], []>} : vector<30x3xf32>, vector<3x16xf32>, vector<30x16xf32> -> vector<30x16xf32>
      %165 = arith.addf %159, %164 : vector<30x16xf32>
      %c1_i32_138 = arith.constant 1 : i32
      %166 = arith.addi %136, %c1_i32_138 : i32
      %c0_139 = arith.constant 0 : index
      %167 = arith.index_cast %166 : i32 to index
      %c1_140 = arith.constant 1 : index
      %c0_141 = arith.constant 0 : index
      %168 = vector.load %arg1[%c0_139, %167, %c1_140, %c0_141] : memref<1x62x31x3xf32, #tpu.memory_space<vmem>>, vector<1x1x30x3xf32>
      %169 = vector.shape_cast %168 : vector<1x1x30x3xf32> to vector<30x3xf32>
      %cst_142 = arith.constant dense<0.000000e+00> : vector<30x16xf32>
      %170 = tpu.matmul %169, %12, %cst_142 {dimension_numbers = #tpu.dot_dimension_numbers<[1], [0], [0], [1], [0, 0, 1, 1], [], []>} : vector<30x3xf32>, vector<3x16xf32>, vector<30x16xf32> -> vector<30x16xf32>
      %171 = arith.addf %165, %170 : vector<30x16xf32>
      %c2_i32_143 = arith.constant 2 : i32
      %172 = arith.addi %136, %c2_i32_143 : i32
      %c0_144 = arith.constant 0 : index
      %173 = arith.index_cast %172 : i32 to index
      %c0_145 = arith.constant 0 : index
      %c0_146 = arith.constant 0 : index
      %174 = vector.load %arg1[%c0_144, %173, %c0_145, %c0_146] : memref<1x62x31x3xf32, #tpu.memory_space<vmem>>, vector<1x1x30x3xf32>
      %175 = vector.shape_cast %174 : vector<1x1x30x3xf32> to vector<30x3xf32>
      %cst_147 = arith.constant dense<0.000000e+00> : vector<30x16xf32>
      %176 = tpu.matmul %175, %14, %cst_147 {dimension_numbers = #tpu.dot_dimension_numbers<[1], [0], [0], [1], [0, 0, 1, 1], [], []>} : vector<30x3xf32>, vector<3x16xf32>, vector<30x16xf32> -> vector<30x16xf32>
      %177 = arith.addf %171, %176 : vector<30x16xf32>
      %c2_i32_148 = arith.constant 2 : i32
      %178 = arith.addi %136, %c2_i32_148 : i32
      %c0_149 = arith.constant 0 : index
      %179 = arith.index_cast %178 : i32 to index
      %c0_150 = arith.constant 0 : index
      %c0_151 = arith.constant 0 : index
      %180 = vector.load %arg2[%c0_149, %179, %c0_150, %c0_151] : memref<1x62x31x3xf32, #tpu.memory_space<vmem>>, vector<1x1x30x3xf32>
      %181 = vector.shape_cast %180 : vector<1x1x30x3xf32> to vector<30x3xf32>
      %cst_152 = arith.constant dense<0.000000e+00> : vector<30x16xf32>
      %182 = tpu.matmul %181, %16, %cst_152 {dimension_numbers = #tpu.dot_dimension_numbers<[1], [0], [0], [1], [0, 0, 1, 1], [], []>} : vector<30x3xf32>, vector<3x16xf32>, vector<30x16xf32> -> vector<30x16xf32>
      %183 = arith.addf %177, %182 : vector<30x16xf32>
      %c2_i32_153 = arith.constant 2 : i32
      %184 = arith.addi %136, %c2_i32_153 : i32
      %c0_154 = arith.constant 0 : index
      %185 = arith.index_cast %184 : i32 to index
      %c1_155 = arith.constant 1 : index
      %c0_156 = arith.constant 0 : index
      %186 = vector.load %arg1[%c0_154, %185, %c1_155, %c0_156] : memref<1x62x31x3xf32, #tpu.memory_space<vmem>>, vector<1x1x30x3xf32>
      %187 = vector.shape_cast %186 : vector<1x1x30x3xf32> to vector<30x3xf32>
      %cst_157 = arith.constant dense<0.000000e+00> : vector<30x16xf32>
      %188 = tpu.matmul %187, %18, %cst_157 {dimension_numbers = #tpu.dot_dimension_numbers<[1], [0], [0], [1], [0, 0, 1, 1], [], []>} : vector<30x3xf32>, vector<3x16xf32>, vector<30x16xf32> -> vector<30x16xf32>
      %189 = arith.addf %183, %188 : vector<30x16xf32>
      %190 = vector.broadcast %0 : vector<1x16xf32> to vector<30x16xf32>
      %191 = arith.addf %189, %190 : vector<30x16xf32>
      %cst_158 = arith.constant 0.000000e+00 : f32
      %192 = vector.broadcast %cst_158 : f32 to vector<30x16xf32>
      %193 = arith.maximumf %191, %192 : vector<30x16xf32>
      %c1_i32_159 = arith.constant 1 : i32
      %194 = arith.addi %20, %c1_i32_159 : i32
      %c0_i32_160 = arith.constant 0 : i32
      %195 = arith.addi %194, %c0_i32_160 : i32
      %c0_161 = arith.constant 0 : index
      %196 = arith.index_cast %195 : i32 to index
      %c0_162 = arith.constant 0 : index
      %c0_163 = arith.constant 0 : index
      %197 = vector.load %arg2[%c0_161, %196, %c0_162, %c0_163] : memref<1x62x31x3xf32, #tpu.memory_space<vmem>>, vector<1x1x30x3xf32>
      %198 = vector.shape_cast %197 : vector<1x1x30x3xf32> to vector<30x3xf32>
      %cst_164 = arith.constant dense<0.000000e+00> : vector<30x16xf32>
      %199 = tpu.matmul %198, %2, %cst_164 {dimension_numbers = #tpu.dot_dimension_numbers<[1], [0], [0], [1], [0, 0, 1, 1], [], []>} : vector<30x3xf32>, vector<3x16xf32>, vector<30x16xf32> -> vector<30x16xf32>
      %c0_i32_165 = arith.constant 0 : i32
      %200 = arith.addi %194, %c0_i32_165 : i32
      %c0_166 = arith.constant 0 : index
      %201 = arith.index_cast %200 : i32 to index
      %c1_167 = arith.constant 1 : index
      %c0_168 = arith.constant 0 : index
      %202 = vector.load %arg1[%c0_166, %201, %c1_167, %c0_168] : memref<1x62x31x3xf32, #tpu.memory_space<vmem>>, vector<1x1x30x3xf32>
      %203 = vector.shape_cast %202 : vector<1x1x30x3xf32> to vector<30x3xf32>
      %cst_169 = arith.constant dense<0.000000e+00> : vector<30x16xf32>
      %204 = tpu.matmul %203, %4, %cst_169 {dimension_numbers = #tpu.dot_dimension_numbers<[1], [0], [0], [1], [0, 0, 1, 1], [], []>} : vector<30x3xf32>, vector<3x16xf32>, vector<30x16xf32> -> vector<30x16xf32>
      %205 = arith.addf %199, %204 : vector<30x16xf32>
      %c0_i32_170 = arith.constant 0 : i32
      %206 = arith.addi %194, %c0_i32_170 : i32
      %c0_171 = arith.constant 0 : index
      %207 = arith.index_cast %206 : i32 to index
      %c1_172 = arith.constant 1 : index
      %c0_173 = arith.constant 0 : index
      %208 = vector.load %arg2[%c0_171, %207, %c1_172, %c0_173] : memref<1x62x31x3xf32, #tpu.memory_space<vmem>>, vector<1x1x30x3xf32>
      %209 = vector.shape_cast %208 : vector<1x1x30x3xf32> to vector<30x3xf32>
      %cst_174 = arith.constant dense<0.000000e+00> : vector<30x16xf32>
      %210 = tpu.matmul %209, %6, %cst_174 {dimension_numbers = #tpu.dot_dimension_numbers<[1], [0], [0], [1], [0, 0, 1, 1], [], []>} : vector<30x3xf32>, vector<3x16xf32>, vector<30x16xf32> -> vector<30x16xf32>
      %211 = arith.addf %205, %210 : vector<30x16xf32>
      %c1_i32_175 = arith.constant 1 : i32
      %212 = arith.addi %194, %c1_i32_175 : i32
      %c0_176 = arith.constant 0 : index
      %213 = arith.index_cast %212 : i32 to index
      %c0_177 = arith.constant 0 : index
      %c0_178 = arith.constant 0 : index
      %214 = vector.load %arg2[%c0_176, %213, %c0_177, %c0_178] : memref<1x62x31x3xf32, #tpu.memory_space<vmem>>, vector<1x1x30x3xf32>
      %215 = vector.shape_cast %214 : vector<1x1x30x3xf32> to vector<30x3xf32>
      %cst_179 = arith.constant dense<0.000000e+00> : vector<30x16xf32>
      %216 = tpu.matmul %215, %8, %cst_179 {dimension_numbers = #tpu.dot_dimension_numbers<[1], [0], [0], [1], [0, 0, 1, 1], [], []>} : vector<30x3xf32>, vector<3x16xf32>, vector<30x16xf32> -> vector<30x16xf32>
      %217 = arith.addf %211, %216 : vector<30x16xf32>
      %c1_i32_180 = arith.constant 1 : i32
      %218 = arith.addi %194, %c1_i32_180 : i32
      %c0_181 = arith.constant 0 : index
      %219 = arith.index_cast %218 : i32 to index
      %c1_182 = arith.constant 1 : index
      %c0_183 = arith.constant 0 : index
      %220 = vector.load %arg1[%c0_181, %219, %c1_182, %c0_183] : memref<1x62x31x3xf32, #tpu.memory_space<vmem>>, vector<1x1x30x3xf32>
      %221 = vector.shape_cast %220 : vector<1x1x30x3xf32> to vector<30x3xf32>
      %cst_184 = arith.constant dense<0.000000e+00> : vector<30x16xf32>
      %222 = tpu.matmul %221, %10, %cst_184 {dimension_numbers = #tpu.dot_dimension_numbers<[1], [0], [0], [1], [0, 0, 1, 1], [], []>} : vector<30x3xf32>, vector<3x16xf32>, vector<30x16xf32> -> vector<30x16xf32>
      %223 = arith.addf %217, %222 : vector<30x16xf32>
      %c1_i32_185 = arith.constant 1 : i32
      %224 = arith.addi %194, %c1_i32_185 : i32
      %c0_186 = arith.constant 0 : index
      %225 = arith.index_cast %224 : i32 to index
      %c1_187 = arith.constant 1 : index
      %c0_188 = arith.constant 0 : index
      %226 = vector.load %arg2[%c0_186, %225, %c1_187, %c0_188] : memref<1x62x31x3xf32, #tpu.memory_space<vmem>>, vector<1x1x30x3xf32>
      %227 = vector.shape_cast %226 : vector<1x1x30x3xf32> to vector<30x3xf32>
      %cst_189 = arith.constant dense<0.000000e+00> : vector<30x16xf32>
      %228 = tpu.matmul %227, %12, %cst_189 {dimension_numbers = #tpu.dot_dimension_numbers<[1], [0], [0], [1], [0, 0, 1, 1], [], []>} : vector<30x3xf32>, vector<3x16xf32>, vector<30x16xf32> -> vector<30x16xf32>
      %229 = arith.addf %223, %228 : vector<30x16xf32>
      %c2_i32_190 = arith.constant 2 : i32
      %230 = arith.addi %194, %c2_i32_190 : i32
      %c0_191 = arith.constant 0 : index
      %231 = arith.index_cast %230 : i32 to index
      %c0_192 = arith.constant 0 : index
      %c0_193 = arith.constant 0 : index
      %232 = vector.load %arg2[%c0_191, %231, %c0_192, %c0_193] : memref<1x62x31x3xf32, #tpu.memory_space<vmem>>, vector<1x1x30x3xf32>
      %233 = vector.shape_cast %232 : vector<1x1x30x3xf32> to vector<30x3xf32>
      %cst_194 = arith.constant dense<0.000000e+00> : vector<30x16xf32>
      %234 = tpu.matmul %233, %14, %cst_194 {dimension_numbers = #tpu.dot_dimension_numbers<[1], [0], [0], [1], [0, 0, 1, 1], [], []>} : vector<30x3xf32>, vector<3x16xf32>, vector<30x16xf32> -> vector<30x16xf32>
      %235 = arith.addf %229, %234 : vector<30x16xf32>
      %c2_i32_195 = arith.constant 2 : i32
      %236 = arith.addi %194, %c2_i32_195 : i32
      %c0_196 = arith.constant 0 : index
      %237 = arith.index_cast %236 : i32 to index
      %c1_197 = arith.constant 1 : index
      %c0_198 = arith.constant 0 : index
      %238 = vector.load %arg1[%c0_196, %237, %c1_197, %c0_198] : memref<1x62x31x3xf32, #tpu.memory_space<vmem>>, vector<1x1x30x3xf32>
      %239 = vector.shape_cast %238 : vector<1x1x30x3xf32> to vector<30x3xf32>
      %cst_199 = arith.constant dense<0.000000e+00> : vector<30x16xf32>
      %240 = tpu.matmul %239, %16, %cst_199 {dimension_numbers = #tpu.dot_dimension_numbers<[1], [0], [0], [1], [0, 0, 1, 1], [], []>} : vector<30x3xf32>, vector<3x16xf32>, vector<30x16xf32> -> vector<30x16xf32>
      %241 = arith.addf %235, %240 : vector<30x16xf32>
      %c2_i32_200 = arith.constant 2 : i32
      %242 = arith.addi %194, %c2_i32_200 : i32
      %c0_201 = arith.constant 0 : index
      %243 = arith.index_cast %242 : i32 to index
      %c1_202 = arith.constant 1 : index
      %c0_203 = arith.constant 0 : index
      %244 = vector.load %arg2[%c0_201, %243, %c1_202, %c0_203] : memref<1x62x31x3xf32, #tpu.memory_space<vmem>>, vector<1x1x30x3xf32>
      %245 = vector.shape_cast %244 : vector<1x1x30x3xf32> to vector<30x3xf32>
      %cst_204 = arith.constant dense<0.000000e+00> : vector<30x16xf32>
      %246 = tpu.matmul %245, %18, %cst_204 {dimension_numbers = #tpu.dot_dimension_numbers<[1], [0], [0], [1], [0, 0, 1, 1], [], []>} : vector<30x3xf32>, vector<3x16xf32>, vector<30x16xf32> -> vector<30x16xf32>
      %247 = arith.addf %241, %246 : vector<30x16xf32>
      %248 = vector.broadcast %0 : vector<1x16xf32> to vector<30x16xf32>
      %249 = arith.addf %247, %248 : vector<30x16xf32>
      %cst_205 = arith.constant 0.000000e+00 : f32
      %250 = vector.broadcast %cst_205 : f32 to vector<30x16xf32>
      %251 = arith.maximumf %249, %250 : vector<30x16xf32>
      %252 = arith.maximumf %193, %251 : vector<30x16xf32>
      %253 = arith.maximumf %135, %252 : vector<30x16xf32>
      %c0_206 = arith.constant 0 : index
      %254 = arith.index_cast %arg6 : i32 to index
      %c0_207 = arith.constant 0 : index
      %c0_208 = arith.constant 0 : index
      %255 = vector.load %arg5[%c0_206, %254, %c0_207, %c0_208] : memref<1x30x30x16xf32, #tpu.memory_space<vmem>>, vector<1x1x30x16xf32>
      %256 = vector.shape_cast %255 : vector<1x1x30x16xf32> to vector<30x16xf32>
      %257 = vector.shape_cast %253 : vector<30x16xf32> to vector<1x1x30x16xf32>
      tpu.vector_store %arg5[%c0_206, %254, %c0_207, %c0_208], %257 {strides = array<i32>} : memref<1x30x30x16xf32, #tpu.memory_space<vmem>>, vector<1x1x30x16xf32>,
    }
    %c30_i32_20 = arith.constant 30 : i32
    return
  }
  func.func @transform_0(%arg0: i32) -> (i32, i32, i32, i32) {
    %c0_i32 = arith.constant 0 : i32
    %c0_i32_0 = arith.constant 0 : i32
    %c0_i32_1 = arith.constant 0 : i32
    %c0_i32_2 = arith.constant 0 : i32
    return %arg0, %c0_i32, %c0_i32_0, %c0_i32_1 : i32, i32, i32, i32
  }
  func.func @transform_1(%arg0: i32) -> (i32, i32, i32, i32) {
    %c0_i32 = arith.constant 0 : i32
    %c0_i32_0 = arith.constant 0 : i32
    %c0_i32_1 = arith.constant 0 : i32
    %c0_i32_2 = arith.constant 0 : i32
    return %arg0, %c0_i32, %c0_i32_0, %c0_i32_1 : i32, i32, i32, i32
  }
  func.func @transform_2(%arg0: i32) -> (i32, i32, i32) {
    %c0_i32 = arith.constant 0 : i32
    %c0_i32_0 = arith.constant 0 : i32
    %c0_i32_1 = arith.constant 0 : i32
    %c0_i32_2 = arith.constant 0 : i32
    return %c0_i32, %c0_i32_0, %c0_i32_1 : i32, i32, i32
  }
  func.func @transform_3(%arg0: i32) -> (i32, i32) {
    %c0_i32 = arith.constant 0 : i32
    %c0_i32_0 = arith.constant 0 : i32
    %c0_i32_1 = arith.constant 0 : i32
    return %c0_i32, %c0_i32_0 : i32, i32
  }
  func.func @transform_4(%arg0: i32) -> (i32, i32, i32, i32) {
    %c0_i32 = arith.constant 0 : i32
    %c0_i32_0 = arith.constant 0 : i32
    %c0_i32_1 = arith.constant 0 : i32
    %c0_i32_2 = arith.constant 0 : i32
    return %arg0, %c0_i32, %c0_i32_0, %c0_i32_1 : i32, i32, i32, i32
  }
}

module attributes {stable_mosaic.version = 11 : i64} {
  func.func @_conv_relu_pool_kernel(%arg0: i32, %arg1: memref<1x32x16x16xf32, #tpu.memory_space<vmem>>, %arg2: memref<1x32x16x16xf32, #tpu.memory_space<vmem>>, %arg3: memref<9x16x32xf32, #tpu.memory_space<vmem>>, %arg4: memref<1x32xf32, #tpu.memory_space<vmem>>, %arg5: memref<1x15x15x32xf32, #tpu.memory_space<vmem>>) attributes {dimension_semantics = [#tpu.dimension_semantics<parallel>], iteration_bounds = array<i64: 2>, scalar_prefetch = 0 : i64, scratch_operands = 0 : i64, tpu.core_type = #tpu.core_type<tc>, window_params = [{transform_indices = @transform_0, window_bounds = array<i64: 1, 32, 16, 16>}, {transform_indices = @transform_1, window_bounds = array<i64: 1, 32, 16, 16>}, {pipeline_mode = #tpu.pipeline_mode<synchronous>, transform_indices = @transform_2, window_bounds = array<i64: 9, 16, 32>}, {pipeline_mode = #tpu.pipeline_mode<synchronous>, transform_indices = @transform_3, window_bounds = array<i64: 1, 32>}, {transform_indices = @transform_4, window_bounds = array<i64: 1, 15, 15, 32>}]} {
    %c0 = arith.constant 0 : index
    %c0_0 = arith.constant 0 : index
    %0 = vector.load %arg4[%c0, %c0_0] : memref<1x32xf32, #tpu.memory_space<vmem>>, vector<1x32xf32>
    %c0_1 = arith.constant 0 : index
    %c0_2 = arith.constant 0 : index
    %c0_3 = arith.constant 0 : index
    %1 = vector.load %arg3[%c0_1, %c0_2, %c0_3] : memref<9x16x32xf32, #tpu.memory_space<vmem>>, vector<1x16x32xf32>
    %2 = vector.shape_cast %1 : vector<1x16x32xf32> to vector<16x32xf32>
    %c1 = arith.constant 1 : index
    %c0_4 = arith.constant 0 : index
    %c0_5 = arith.constant 0 : index
    %3 = vector.load %arg3[%c1, %c0_4, %c0_5] : memref<9x16x32xf32, #tpu.memory_space<vmem>>, vector<1x16x32xf32>
    %4 = vector.shape_cast %3 : vector<1x16x32xf32> to vector<16x32xf32>
    %c2 = arith.constant 2 : index
    %c0_6 = arith.constant 0 : index
    %c0_7 = arith.constant 0 : index
    %5 = vector.load %arg3[%c2, %c0_6, %c0_7] : memref<9x16x32xf32, #tpu.memory_space<vmem>>, vector<1x16x32xf32>
    %6 = vector.shape_cast %5 : vector<1x16x32xf32> to vector<16x32xf32>
    %c3 = arith.constant 3 : index
    %c0_8 = arith.constant 0 : index
    %c0_9 = arith.constant 0 : index
    %7 = vector.load %arg3[%c3, %c0_8, %c0_9] : memref<9x16x32xf32, #tpu.memory_space<vmem>>, vector<1x16x32xf32>
    %8 = vector.shape_cast %7 : vector<1x16x32xf32> to vector<16x32xf32>
    %c4 = arith.constant 4 : index
    %c0_10 = arith.constant 0 : index
    %c0_11 = arith.constant 0 : index
    %9 = vector.load %arg3[%c4, %c0_10, %c0_11] : memref<9x16x32xf32, #tpu.memory_space<vmem>>, vector<1x16x32xf32>
    %10 = vector.shape_cast %9 : vector<1x16x32xf32> to vector<16x32xf32>
    %c5 = arith.constant 5 : index
    %c0_12 = arith.constant 0 : index
    %c0_13 = arith.constant 0 : index
    %11 = vector.load %arg3[%c5, %c0_12, %c0_13] : memref<9x16x32xf32, #tpu.memory_space<vmem>>, vector<1x16x32xf32>
    %12 = vector.shape_cast %11 : vector<1x16x32xf32> to vector<16x32xf32>
    %c6 = arith.constant 6 : index
    %c0_14 = arith.constant 0 : index
    %c0_15 = arith.constant 0 : index
    %13 = vector.load %arg3[%c6, %c0_14, %c0_15] : memref<9x16x32xf32, #tpu.memory_space<vmem>>, vector<1x16x32xf32>
    %14 = vector.shape_cast %13 : vector<1x16x32xf32> to vector<16x32xf32>
    %c7 = arith.constant 7 : index
    %c0_16 = arith.constant 0 : index
    %c0_17 = arith.constant 0 : index
    %15 = vector.load %arg3[%c7, %c0_16, %c0_17] : memref<9x16x32xf32, #tpu.memory_space<vmem>>, vector<1x16x32xf32>
    %16 = vector.shape_cast %15 : vector<1x16x32xf32> to vector<16x32xf32>
    %c8 = arith.constant 8 : index
    %c0_18 = arith.constant 0 : index
    %c0_19 = arith.constant 0 : index
    %17 = vector.load %arg3[%c8, %c0_18, %c0_19] : memref<9x16x32xf32, #tpu.memory_space<vmem>>, vector<1x16x32xf32>
    %18 = vector.shape_cast %17 : vector<1x16x32xf32> to vector<16x32xf32>
    %c0_i32 = arith.constant 0 : i32
    %c15_i32 = arith.constant 15 : i32
    %19 = arith.addi %c0_i32, %c15_i32 : i32
    %c1_i32 = arith.constant 1 : i32
    scf.for %arg6 = %c0_i32 to %19 step %c1_i32  : i32 {
      %c2_i32 = arith.constant 2 : i32
      %20 = arith.muli %c2_i32, %arg6 : i32
      %c0_i32_21 = arith.constant 0 : i32
      %21 = arith.addi %20, %c0_i32_21 : i32
      %c0_22 = arith.constant 0 : index
      %22 = arith.index_cast %21 : i32 to index
      %c0_23 = arith.constant 0 : index
      %c0_24 = arith.constant 0 : index
      %23 = vector.load %arg1[%c0_22, %22, %c0_23, %c0_24] : memref<1x32x16x16xf32, #tpu.memory_space<vmem>>, vector<1x1x15x16xf32>
      %24 = vector.shape_cast %23 : vector<1x1x15x16xf32> to vector<15x16xf32>
      %cst = arith.constant dense<0.000000e+00> : vector<15x32xf32>
      %25 = tpu.matmul %24, %2, %cst {dimension_numbers = #tpu.dot_dimension_numbers<[1], [0], [0], [1], [0, 0, 1, 1], [], []>} : vector<15x16xf32>, vector<16x32xf32>, vector<15x32xf32> -> vector<15x32xf32>
      %c0_i32_25 = arith.constant 0 : i32
      %26 = arith.addi %20, %c0_i32_25 : i32
      %c0_26 = arith.constant 0 : index
      %27 = arith.index_cast %26 : i32 to index
      %c0_27 = arith.constant 0 : index
      %c0_28 = arith.constant 0 : index
      %28 = vector.load %arg2[%c0_26, %27, %c0_27, %c0_28] : memref<1x32x16x16xf32, #tpu.memory_space<vmem>>, vector<1x1x15x16xf32>
      %29 = vector.shape_cast %28 : vector<1x1x15x16xf32> to vector<15x16xf32>
      %cst_29 = arith.constant dense<0.000000e+00> : vector<15x32xf32>
      %30 = tpu.matmul %29, %4, %cst_29 {dimension_numbers = #tpu.dot_dimension_numbers<[1], [0], [0], [1], [0, 0, 1, 1], [], []>} : vector<15x16xf32>, vector<16x32xf32>, vector<15x32xf32> -> vector<15x32xf32>
      %31 = arith.addf %25, %30 : vector<15x32xf32>
      %c0_i32_30 = arith.constant 0 : i32
      %32 = arith.addi %20, %c0_i32_30 : i32
      %c0_31 = arith.constant 0 : index
      %33 = arith.index_cast %32 : i32 to index
      %c1_32 = arith.constant 1 : index
      %c0_33 = arith.constant 0 : index
      %34 = vector.load %arg1[%c0_31, %33, %c1_32, %c0_33] : memref<1x32x16x16xf32, #tpu.memory_space<vmem>>, vector<1x1x15x16xf32>
      %35 = vector.shape_cast %34 : vector<1x1x15x16xf32> to vector<15x16xf32>
      %cst_34 = arith.constant dense<0.000000e+00> : vector<15x32xf32>
      %36 = tpu.matmul %35, %6, %cst_34 {dimension_numbers = #tpu.dot_dimension_numbers<[1], [0], [0], [1], [0, 0, 1, 1], [], []>} : vector<15x16xf32>, vector<16x32xf32>, vector<15x32xf32> -> vector<15x32xf32>
      %37 = arith.addf %31, %36 : vector<15x32xf32>
      %c1_i32_35 = arith.constant 1 : i32
      %38 = arith.addi %20, %c1_i32_35 : i32
      %c0_36 = arith.constant 0 : index
      %39 = arith.index_cast %38 : i32 to index
      %c0_37 = arith.constant 0 : index
      %c0_38 = arith.constant 0 : index
      %40 = vector.load %arg1[%c0_36, %39, %c0_37, %c0_38] : memref<1x32x16x16xf32, #tpu.memory_space<vmem>>, vector<1x1x15x16xf32>
      %41 = vector.shape_cast %40 : vector<1x1x15x16xf32> to vector<15x16xf32>
      %cst_39 = arith.constant dense<0.000000e+00> : vector<15x32xf32>
      %42 = tpu.matmul %41, %8, %cst_39 {dimension_numbers = #tpu.dot_dimension_numbers<[1], [0], [0], [1], [0, 0, 1, 1], [], []>} : vector<15x16xf32>, vector<16x32xf32>, vector<15x32xf32> -> vector<15x32xf32>
      %43 = arith.addf %37, %42 : vector<15x32xf32>
      %c1_i32_40 = arith.constant 1 : i32
      %44 = arith.addi %20, %c1_i32_40 : i32
      %c0_41 = arith.constant 0 : index
      %45 = arith.index_cast %44 : i32 to index
      %c0_42 = arith.constant 0 : index
      %c0_43 = arith.constant 0 : index
      %46 = vector.load %arg2[%c0_41, %45, %c0_42, %c0_43] : memref<1x32x16x16xf32, #tpu.memory_space<vmem>>, vector<1x1x15x16xf32>
      %47 = vector.shape_cast %46 : vector<1x1x15x16xf32> to vector<15x16xf32>
      %cst_44 = arith.constant dense<0.000000e+00> : vector<15x32xf32>
      %48 = tpu.matmul %47, %10, %cst_44 {dimension_numbers = #tpu.dot_dimension_numbers<[1], [0], [0], [1], [0, 0, 1, 1], [], []>} : vector<15x16xf32>, vector<16x32xf32>, vector<15x32xf32> -> vector<15x32xf32>
      %49 = arith.addf %43, %48 : vector<15x32xf32>
      %c1_i32_45 = arith.constant 1 : i32
      %50 = arith.addi %20, %c1_i32_45 : i32
      %c0_46 = arith.constant 0 : index
      %51 = arith.index_cast %50 : i32 to index
      %c1_47 = arith.constant 1 : index
      %c0_48 = arith.constant 0 : index
      %52 = vector.load %arg1[%c0_46, %51, %c1_47, %c0_48] : memref<1x32x16x16xf32, #tpu.memory_space<vmem>>, vector<1x1x15x16xf32>
      %53 = vector.shape_cast %52 : vector<1x1x15x16xf32> to vector<15x16xf32>
      %cst_49 = arith.constant dense<0.000000e+00> : vector<15x32xf32>
      %54 = tpu.matmul %53, %12, %cst_49 {dimension_numbers = #tpu.dot_dimension_numbers<[1], [0], [0], [1], [0, 0, 1, 1], [], []>} : vector<15x16xf32>, vector<16x32xf32>, vector<15x32xf32> -> vector<15x32xf32>
      %55 = arith.addf %49, %54 : vector<15x32xf32>
      %c2_i32_50 = arith.constant 2 : i32
      %56 = arith.addi %20, %c2_i32_50 : i32
      %c0_51 = arith.constant 0 : index
      %57 = arith.index_cast %56 : i32 to index
      %c0_52 = arith.constant 0 : index
      %c0_53 = arith.constant 0 : index
      %58 = vector.load %arg1[%c0_51, %57, %c0_52, %c0_53] : memref<1x32x16x16xf32, #tpu.memory_space<vmem>>, vector<1x1x15x16xf32>
      %59 = vector.shape_cast %58 : vector<1x1x15x16xf32> to vector<15x16xf32>
      %cst_54 = arith.constant dense<0.000000e+00> : vector<15x32xf32>
      %60 = tpu.matmul %59, %14, %cst_54 {dimension_numbers = #tpu.dot_dimension_numbers<[1], [0], [0], [1], [0, 0, 1, 1], [], []>} : vector<15x16xf32>, vector<16x32xf32>, vector<15x32xf32> -> vector<15x32xf32>
      %61 = arith.addf %55, %60 : vector<15x32xf32>
      %c2_i32_55 = arith.constant 2 : i32
      %62 = arith.addi %20, %c2_i32_55 : i32
      %c0_56 = arith.constant 0 : index
      %63 = arith.index_cast %62 : i32 to index
      %c0_57 = arith.constant 0 : index
      %c0_58 = arith.constant 0 : index
      %64 = vector.load %arg2[%c0_56, %63, %c0_57, %c0_58] : memref<1x32x16x16xf32, #tpu.memory_space<vmem>>, vector<1x1x15x16xf32>
      %65 = vector.shape_cast %64 : vector<1x1x15x16xf32> to vector<15x16xf32>
      %cst_59 = arith.constant dense<0.000000e+00> : vector<15x32xf32>
      %66 = tpu.matmul %65, %16, %cst_59 {dimension_numbers = #tpu.dot_dimension_numbers<[1], [0], [0], [1], [0, 0, 1, 1], [], []>} : vector<15x16xf32>, vector<16x32xf32>, vector<15x32xf32> -> vector<15x32xf32>
      %67 = arith.addf %61, %66 : vector<15x32xf32>
      %c2_i32_60 = arith.constant 2 : i32
      %68 = arith.addi %20, %c2_i32_60 : i32
      %c0_61 = arith.constant 0 : index
      %69 = arith.index_cast %68 : i32 to index
      %c1_62 = arith.constant 1 : index
      %c0_63 = arith.constant 0 : index
      %70 = vector.load %arg1[%c0_61, %69, %c1_62, %c0_63] : memref<1x32x16x16xf32, #tpu.memory_space<vmem>>, vector<1x1x15x16xf32>
      %71 = vector.shape_cast %70 : vector<1x1x15x16xf32> to vector<15x16xf32>
      %cst_64 = arith.constant dense<0.000000e+00> : vector<15x32xf32>
      %72 = tpu.matmul %71, %18, %cst_64 {dimension_numbers = #tpu.dot_dimension_numbers<[1], [0], [0], [1], [0, 0, 1, 1], [], []>} : vector<15x16xf32>, vector<16x32xf32>, vector<15x32xf32> -> vector<15x32xf32>
      %73 = arith.addf %67, %72 : vector<15x32xf32>
      %74 = vector.broadcast %0 : vector<1x32xf32> to vector<15x32xf32>
      %75 = arith.addf %73, %74 : vector<15x32xf32>
      %cst_65 = arith.constant 0.000000e+00 : f32
      %76 = vector.broadcast %cst_65 : f32 to vector<15x32xf32>
      %77 = arith.maximumf %75, %76 : vector<15x32xf32>
      %c0_i32_66 = arith.constant 0 : i32
      %78 = arith.addi %20, %c0_i32_66 : i32
      %c0_67 = arith.constant 0 : index
      %79 = arith.index_cast %78 : i32 to index
      %c0_68 = arith.constant 0 : index
      %c0_69 = arith.constant 0 : index
      %80 = vector.load %arg2[%c0_67, %79, %c0_68, %c0_69] : memref<1x32x16x16xf32, #tpu.memory_space<vmem>>, vector<1x1x15x16xf32>
      %81 = vector.shape_cast %80 : vector<1x1x15x16xf32> to vector<15x16xf32>
      %cst_70 = arith.constant dense<0.000000e+00> : vector<15x32xf32>
      %82 = tpu.matmul %81, %2, %cst_70 {dimension_numbers = #tpu.dot_dimension_numbers<[1], [0], [0], [1], [0, 0, 1, 1], [], []>} : vector<15x16xf32>, vector<16x32xf32>, vector<15x32xf32> -> vector<15x32xf32>
      %c0_i32_71 = arith.constant 0 : i32
      %83 = arith.addi %20, %c0_i32_71 : i32
      %c0_72 = arith.constant 0 : index
      %84 = arith.index_cast %83 : i32 to index
      %c1_73 = arith.constant 1 : index
      %c0_74 = arith.constant 0 : index
      %85 = vector.load %arg1[%c0_72, %84, %c1_73, %c0_74] : memref<1x32x16x16xf32, #tpu.memory_space<vmem>>, vector<1x1x15x16xf32>
      %86 = vector.shape_cast %85 : vector<1x1x15x16xf32> to vector<15x16xf32>
      %cst_75 = arith.constant dense<0.000000e+00> : vector<15x32xf32>
      %87 = tpu.matmul %86, %4, %cst_75 {dimension_numbers = #tpu.dot_dimension_numbers<[1], [0], [0], [1], [0, 0, 1, 1], [], []>} : vector<15x16xf32>, vector<16x32xf32>, vector<15x32xf32> -> vector<15x32xf32>
      %88 = arith.addf %82, %87 : vector<15x32xf32>
      %c0_i32_76 = arith.constant 0 : i32
      %89 = arith.addi %20, %c0_i32_76 : i32
      %c0_77 = arith.constant 0 : index
      %90 = arith.index_cast %89 : i32 to index
      %c1_78 = arith.constant 1 : index
      %c0_79 = arith.constant 0 : index
      %91 = vector.load %arg2[%c0_77, %90, %c1_78, %c0_79] : memref<1x32x16x16xf32, #tpu.memory_space<vmem>>, vector<1x1x15x16xf32>
      %92 = vector.shape_cast %91 : vector<1x1x15x16xf32> to vector<15x16xf32>
      %cst_80 = arith.constant dense<0.000000e+00> : vector<15x32xf32>
      %93 = tpu.matmul %92, %6, %cst_80 {dimension_numbers = #tpu.dot_dimension_numbers<[1], [0], [0], [1], [0, 0, 1, 1], [], []>} : vector<15x16xf32>, vector<16x32xf32>, vector<15x32xf32> -> vector<15x32xf32>
      %94 = arith.addf %88, %93 : vector<15x32xf32>
      %c1_i32_81 = arith.constant 1 : i32
      %95 = arith.addi %20, %c1_i32_81 : i32
      %c0_82 = arith.constant 0 : index
      %96 = arith.index_cast %95 : i32 to index
      %c0_83 = arith.constant 0 : index
      %c0_84 = arith.constant 0 : index
      %97 = vector.load %arg2[%c0_82, %96, %c0_83, %c0_84] : memref<1x32x16x16xf32, #tpu.memory_space<vmem>>, vector<1x1x15x16xf32>
      %98 = vector.shape_cast %97 : vector<1x1x15x16xf32> to vector<15x16xf32>
      %cst_85 = arith.constant dense<0.000000e+00> : vector<15x32xf32>
      %99 = tpu.matmul %98, %8, %cst_85 {dimension_numbers = #tpu.dot_dimension_numbers<[1], [0], [0], [1], [0, 0, 1, 1], [], []>} : vector<15x16xf32>, vector<16x32xf32>, vector<15x32xf32> -> vector<15x32xf32>
      %100 = arith.addf %94, %99 : vector<15x32xf32>
      %c1_i32_86 = arith.constant 1 : i32
      %101 = arith.addi %20, %c1_i32_86 : i32
      %c0_87 = arith.constant 0 : index
      %102 = arith.index_cast %101 : i32 to index
      %c1_88 = arith.constant 1 : index
      %c0_89 = arith.constant 0 : index
      %103 = vector.load %arg1[%c0_87, %102, %c1_88, %c0_89] : memref<1x32x16x16xf32, #tpu.memory_space<vmem>>, vector<1x1x15x16xf32>
      %104 = vector.shape_cast %103 : vector<1x1x15x16xf32> to vector<15x16xf32>
      %cst_90 = arith.constant dense<0.000000e+00> : vector<15x32xf32>
      %105 = tpu.matmul %104, %10, %cst_90 {dimension_numbers = #tpu.dot_dimension_numbers<[1], [0], [0], [1], [0, 0, 1, 1], [], []>} : vector<15x16xf32>, vector<16x32xf32>, vector<15x32xf32> -> vector<15x32xf32>
      %106 = arith.addf %100, %105 : vector<15x32xf32>
      %c1_i32_91 = arith.constant 1 : i32
      %107 = arith.addi %20, %c1_i32_91 : i32
      %c0_92 = arith.constant 0 : index
      %108 = arith.index_cast %107 : i32 to index
      %c1_93 = arith.constant 1 : index
      %c0_94 = arith.constant 0 : index
      %109 = vector.load %arg2[%c0_92, %108, %c1_93, %c0_94] : memref<1x32x16x16xf32, #tpu.memory_space<vmem>>, vector<1x1x15x16xf32>
      %110 = vector.shape_cast %109 : vector<1x1x15x16xf32> to vector<15x16xf32>
      %cst_95 = arith.constant dense<0.000000e+00> : vector<15x32xf32>
      %111 = tpu.matmul %110, %12, %cst_95 {dimension_numbers = #tpu.dot_dimension_numbers<[1], [0], [0], [1], [0, 0, 1, 1], [], []>} : vector<15x16xf32>, vector<16x32xf32>, vector<15x32xf32> -> vector<15x32xf32>
      %112 = arith.addf %106, %111 : vector<15x32xf32>
      %c2_i32_96 = arith.constant 2 : i32
      %113 = arith.addi %20, %c2_i32_96 : i32
      %c0_97 = arith.constant 0 : index
      %114 = arith.index_cast %113 : i32 to index
      %c0_98 = arith.constant 0 : index
      %c0_99 = arith.constant 0 : index
      %115 = vector.load %arg2[%c0_97, %114, %c0_98, %c0_99] : memref<1x32x16x16xf32, #tpu.memory_space<vmem>>, vector<1x1x15x16xf32>
      %116 = vector.shape_cast %115 : vector<1x1x15x16xf32> to vector<15x16xf32>
      %cst_100 = arith.constant dense<0.000000e+00> : vector<15x32xf32>
      %117 = tpu.matmul %116, %14, %cst_100 {dimension_numbers = #tpu.dot_dimension_numbers<[1], [0], [0], [1], [0, 0, 1, 1], [], []>} : vector<15x16xf32>, vector<16x32xf32>, vector<15x32xf32> -> vector<15x32xf32>
      %118 = arith.addf %112, %117 : vector<15x32xf32>
      %c2_i32_101 = arith.constant 2 : i32
      %119 = arith.addi %20, %c2_i32_101 : i32
      %c0_102 = arith.constant 0 : index
      %120 = arith.index_cast %119 : i32 to index
      %c1_103 = arith.constant 1 : index
      %c0_104 = arith.constant 0 : index
      %121 = vector.load %arg1[%c0_102, %120, %c1_103, %c0_104] : memref<1x32x16x16xf32, #tpu.memory_space<vmem>>, vector<1x1x15x16xf32>
      %122 = vector.shape_cast %121 : vector<1x1x15x16xf32> to vector<15x16xf32>
      %cst_105 = arith.constant dense<0.000000e+00> : vector<15x32xf32>
      %123 = tpu.matmul %122, %16, %cst_105 {dimension_numbers = #tpu.dot_dimension_numbers<[1], [0], [0], [1], [0, 0, 1, 1], [], []>} : vector<15x16xf32>, vector<16x32xf32>, vector<15x32xf32> -> vector<15x32xf32>
      %124 = arith.addf %118, %123 : vector<15x32xf32>
      %c2_i32_106 = arith.constant 2 : i32
      %125 = arith.addi %20, %c2_i32_106 : i32
      %c0_107 = arith.constant 0 : index
      %126 = arith.index_cast %125 : i32 to index
      %c1_108 = arith.constant 1 : index
      %c0_109 = arith.constant 0 : index
      %127 = vector.load %arg2[%c0_107, %126, %c1_108, %c0_109] : memref<1x32x16x16xf32, #tpu.memory_space<vmem>>, vector<1x1x15x16xf32>
      %128 = vector.shape_cast %127 : vector<1x1x15x16xf32> to vector<15x16xf32>
      %cst_110 = arith.constant dense<0.000000e+00> : vector<15x32xf32>
      %129 = tpu.matmul %128, %18, %cst_110 {dimension_numbers = #tpu.dot_dimension_numbers<[1], [0], [0], [1], [0, 0, 1, 1], [], []>} : vector<15x16xf32>, vector<16x32xf32>, vector<15x32xf32> -> vector<15x32xf32>
      %130 = arith.addf %124, %129 : vector<15x32xf32>
      %131 = vector.broadcast %0 : vector<1x32xf32> to vector<15x32xf32>
      %132 = arith.addf %130, %131 : vector<15x32xf32>
      %cst_111 = arith.constant 0.000000e+00 : f32
      %133 = vector.broadcast %cst_111 : f32 to vector<15x32xf32>
      %134 = arith.maximumf %132, %133 : vector<15x32xf32>
      %135 = arith.maximumf %77, %134 : vector<15x32xf32>
      %c1_i32_112 = arith.constant 1 : i32
      %136 = arith.addi %20, %c1_i32_112 : i32
      %c0_i32_113 = arith.constant 0 : i32
      %137 = arith.addi %136, %c0_i32_113 : i32
      %c0_114 = arith.constant 0 : index
      %138 = arith.index_cast %137 : i32 to index
      %c0_115 = arith.constant 0 : index
      %c0_116 = arith.constant 0 : index
      %139 = vector.load %arg1[%c0_114, %138, %c0_115, %c0_116] : memref<1x32x16x16xf32, #tpu.memory_space<vmem>>, vector<1x1x15x16xf32>
      %140 = vector.shape_cast %139 : vector<1x1x15x16xf32> to vector<15x16xf32>
      %cst_117 = arith.constant dense<0.000000e+00> : vector<15x32xf32>
      %141 = tpu.matmul %140, %2, %cst_117 {dimension_numbers = #tpu.dot_dimension_numbers<[1], [0], [0], [1], [0, 0, 1, 1], [], []>} : vector<15x16xf32>, vector<16x32xf32>, vector<15x32xf32> -> vector<15x32xf32>
      %c0_i32_118 = arith.constant 0 : i32
      %142 = arith.addi %136, %c0_i32_118 : i32
      %c0_119 = arith.constant 0 : index
      %143 = arith.index_cast %142 : i32 to index
      %c0_120 = arith.constant 0 : index
      %c0_121 = arith.constant 0 : index
      %144 = vector.load %arg2[%c0_119, %143, %c0_120, %c0_121] : memref<1x32x16x16xf32, #tpu.memory_space<vmem>>, vector<1x1x15x16xf32>
      %145 = vector.shape_cast %144 : vector<1x1x15x16xf32> to vector<15x16xf32>
      %cst_122 = arith.constant dense<0.000000e+00> : vector<15x32xf32>
      %146 = tpu.matmul %145, %4, %cst_122 {dimension_numbers = #tpu.dot_dimension_numbers<[1], [0], [0], [1], [0, 0, 1, 1], [], []>} : vector<15x16xf32>, vector<16x32xf32>, vector<15x32xf32> -> vector<15x32xf32>
      %147 = arith.addf %141, %146 : vector<15x32xf32>
      %c0_i32_123 = arith.constant 0 : i32
      %148 = arith.addi %136, %c0_i32_123 : i32
      %c0_124 = arith.constant 0 : index
      %149 = arith.index_cast %148 : i32 to index
      %c1_125 = arith.constant 1 : index
      %c0_126 = arith.constant 0 : index
      %150 = vector.load %arg1[%c0_124, %149, %c1_125, %c0_126] : memref<1x32x16x16xf32, #tpu.memory_space<vmem>>, vector<1x1x15x16xf32>
      %151 = vector.shape_cast %150 : vector<1x1x15x16xf32> to vector<15x16xf32>
      %cst_127 = arith.constant dense<0.000000e+00> : vector<15x32xf32>
      %152 = tpu.matmul %151, %6, %cst_127 {dimension_numbers = #tpu.dot_dimension_numbers<[1], [0], [0], [1], [0, 0, 1, 1], [], []>} : vector<15x16xf32>, vector<16x32xf32>, vector<15x32xf32> -> vector<15x32xf32>
      %153 = arith.addf %147, %152 : vector<15x32xf32>
      %c1_i32_128 = arith.constant 1 : i32
      %154 = arith.addi %136, %c1_i32_128 : i32
      %c0_129 = arith.constant 0 : index
      %155 = arith.index_cast %154 : i32 to index
      %c0_130 = arith.constant 0 : index
      %c0_131 = arith.constant 0 : index
      %156 = vector.load %arg1[%c0_129, %155, %c0_130, %c0_131] : memref<1x32x16x16xf32, #tpu.memory_space<vmem>>, vector<1x1x15x16xf32>
      %157 = vector.shape_cast %156 : vector<1x1x15x16xf32> to vector<15x16xf32>
      %cst_132 = arith.constant dense<0.000000e+00> : vector<15x32xf32>
      %158 = tpu.matmul %157, %8, %cst_132 {dimension_numbers = #tpu.dot_dimension_numbers<[1], [0], [0], [1], [0, 0, 1, 1], [], []>} : vector<15x16xf32>, vector<16x32xf32>, vector<15x32xf32> -> vector<15x32xf32>
      %159 = arith.addf %153, %158 : vector<15x32xf32>
      %c1_i32_133 = arith.constant 1 : i32
      %160 = arith.addi %136, %c1_i32_133 : i32
      %c0_134 = arith.constant 0 : index
      %161 = arith.index_cast %160 : i32 to index
      %c0_135 = arith.constant 0 : index
      %c0_136 = arith.constant 0 : index
      %162 = vector.load %arg2[%c0_134, %161, %c0_135, %c0_136] : memref<1x32x16x16xf32, #tpu.memory_space<vmem>>, vector<1x1x15x16xf32>
      %163 = vector.shape_cast %162 : vector<1x1x15x16xf32> to vector<15x16xf32>
      %cst_137 = arith.constant dense<0.000000e+00> : vector<15x32xf32>
      %164 = tpu.matmul %163, %10, %cst_137 {dimension_numbers = #tpu.dot_dimension_numbers<[1], [0], [0], [1], [0, 0, 1, 1], [], []>} : vector<15x16xf32>, vector<16x32xf32>, vector<15x32xf32> -> vector<15x32xf32>
      %165 = arith.addf %159, %164 : vector<15x32xf32>
      %c1_i32_138 = arith.constant 1 : i32
      %166 = arith.addi %136, %c1_i32_138 : i32
      %c0_139 = arith.constant 0 : index
      %167 = arith.index_cast %166 : i32 to index
      %c1_140 = arith.constant 1 : index
      %c0_141 = arith.constant 0 : index
      %168 = vector.load %arg1[%c0_139, %167, %c1_140, %c0_141] : memref<1x32x16x16xf32, #tpu.memory_space<vmem>>, vector<1x1x15x16xf32>
      %169 = vector.shape_cast %168 : vector<1x1x15x16xf32> to vector<15x16xf32>
      %cst_142 = arith.constant dense<0.000000e+00> : vector<15x32xf32>
      %170 = tpu.matmul %169, %12, %cst_142 {dimension_numbers = #tpu.dot_dimension_numbers<[1], [0], [0], [1], [0, 0, 1, 1], [], []>} : vector<15x16xf32>, vector<16x32xf32>, vector<15x32xf32> -> vector<15x32xf32>
      %171 = arith.addf %165, %170 : vector<15x32xf32>
      %c2_i32_143 = arith.constant 2 : i32
      %172 = arith.addi %136, %c2_i32_143 : i32
      %c0_144 = arith.constant 0 : index
      %173 = arith.index_cast %172 : i32 to index
      %c0_145 = arith.constant 0 : index
      %c0_146 = arith.constant 0 : index
      %174 = vector.load %arg1[%c0_144, %173, %c0_145, %c0_146] : memref<1x32x16x16xf32, #tpu.memory_space<vmem>>, vector<1x1x15x16xf32>
      %175 = vector.shape_cast %174 : vector<1x1x15x16xf32> to vector<15x16xf32>
      %cst_147 = arith.constant dense<0.000000e+00> : vector<15x32xf32>
      %176 = tpu.matmul %175, %14, %cst_147 {dimension_numbers = #tpu.dot_dimension_numbers<[1], [0], [0], [1], [0, 0, 1, 1], [], []>} : vector<15x16xf32>, vector<16x32xf32>, vector<15x32xf32> -> vector<15x32xf32>
      %177 = arith.addf %171, %176 : vector<15x32xf32>
      %c2_i32_148 = arith.constant 2 : i32
      %178 = arith.addi %136, %c2_i32_148 : i32
      %c0_149 = arith.constant 0 : index
      %179 = arith.index_cast %178 : i32 to index
      %c0_150 = arith.constant 0 : index
      %c0_151 = arith.constant 0 : index
      %180 = vector.load %arg2[%c0_149, %179, %c0_150, %c0_151] : memref<1x32x16x16xf32, #tpu.memory_space<vmem>>, vector<1x1x15x16xf32>
      %181 = vector.shape_cast %180 : vector<1x1x15x16xf32> to vector<15x16xf32>
      %cst_152 = arith.constant dense<0.000000e+00> : vector<15x32xf32>
      %182 = tpu.matmul %181, %16, %cst_152 {dimension_numbers = #tpu.dot_dimension_numbers<[1], [0], [0], [1], [0, 0, 1, 1], [], []>} : vector<15x16xf32>, vector<16x32xf32>, vector<15x32xf32> -> vector<15x32xf32>
      %183 = arith.addf %177, %182 : vector<15x32xf32>
      %c2_i32_153 = arith.constant 2 : i32
      %184 = arith.addi %136, %c2_i32_153 : i32
      %c0_154 = arith.constant 0 : index
      %185 = arith.index_cast %184 : i32 to index
      %c1_155 = arith.constant 1 : index
      %c0_156 = arith.constant 0 : index
      %186 = vector.load %arg1[%c0_154, %185, %c1_155, %c0_156] : memref<1x32x16x16xf32, #tpu.memory_space<vmem>>, vector<1x1x15x16xf32>
      %187 = vector.shape_cast %186 : vector<1x1x15x16xf32> to vector<15x16xf32>
      %cst_157 = arith.constant dense<0.000000e+00> : vector<15x32xf32>
      %188 = tpu.matmul %187, %18, %cst_157 {dimension_numbers = #tpu.dot_dimension_numbers<[1], [0], [0], [1], [0, 0, 1, 1], [], []>} : vector<15x16xf32>, vector<16x32xf32>, vector<15x32xf32> -> vector<15x32xf32>
      %189 = arith.addf %183, %188 : vector<15x32xf32>
      %190 = vector.broadcast %0 : vector<1x32xf32> to vector<15x32xf32>
      %191 = arith.addf %189, %190 : vector<15x32xf32>
      %cst_158 = arith.constant 0.000000e+00 : f32
      %192 = vector.broadcast %cst_158 : f32 to vector<15x32xf32>
      %193 = arith.maximumf %191, %192 : vector<15x32xf32>
      %c1_i32_159 = arith.constant 1 : i32
      %194 = arith.addi %20, %c1_i32_159 : i32
      %c0_i32_160 = arith.constant 0 : i32
      %195 = arith.addi %194, %c0_i32_160 : i32
      %c0_161 = arith.constant 0 : index
      %196 = arith.index_cast %195 : i32 to index
      %c0_162 = arith.constant 0 : index
      %c0_163 = arith.constant 0 : index
      %197 = vector.load %arg2[%c0_161, %196, %c0_162, %c0_163] : memref<1x32x16x16xf32, #tpu.memory_space<vmem>>, vector<1x1x15x16xf32>
      %198 = vector.shape_cast %197 : vector<1x1x15x16xf32> to vector<15x16xf32>
      %cst_164 = arith.constant dense<0.000000e+00> : vector<15x32xf32>
      %199 = tpu.matmul %198, %2, %cst_164 {dimension_numbers = #tpu.dot_dimension_numbers<[1], [0], [0], [1], [0, 0, 1, 1], [], []>} : vector<15x16xf32>, vector<16x32xf32>, vector<15x32xf32> -> vector<15x32xf32>
      %c0_i32_165 = arith.constant 0 : i32
      %200 = arith.addi %194, %c0_i32_165 : i32
      %c0_166 = arith.constant 0 : index
      %201 = arith.index_cast %200 : i32 to index
      %c1_167 = arith.constant 1 : index
      %c0_168 = arith.constant 0 : index
      %202 = vector.load %arg1[%c0_166, %201, %c1_167, %c0_168] : memref<1x32x16x16xf32, #tpu.memory_space<vmem>>, vector<1x1x15x16xf32>
      %203 = vector.shape_cast %202 : vector<1x1x15x16xf32> to vector<15x16xf32>
      %cst_169 = arith.constant dense<0.000000e+00> : vector<15x32xf32>
      %204 = tpu.matmul %203, %4, %cst_169 {dimension_numbers = #tpu.dot_dimension_numbers<[1], [0], [0], [1], [0, 0, 1, 1], [], []>} : vector<15x16xf32>, vector<16x32xf32>, vector<15x32xf32> -> vector<15x32xf32>
      %205 = arith.addf %199, %204 : vector<15x32xf32>
      %c0_i32_170 = arith.constant 0 : i32
      %206 = arith.addi %194, %c0_i32_170 : i32
      %c0_171 = arith.constant 0 : index
      %207 = arith.index_cast %206 : i32 to index
      %c1_172 = arith.constant 1 : index
      %c0_173 = arith.constant 0 : index
      %208 = vector.load %arg2[%c0_171, %207, %c1_172, %c0_173] : memref<1x32x16x16xf32, #tpu.memory_space<vmem>>, vector<1x1x15x16xf32>
      %209 = vector.shape_cast %208 : vector<1x1x15x16xf32> to vector<15x16xf32>
      %cst_174 = arith.constant dense<0.000000e+00> : vector<15x32xf32>
      %210 = tpu.matmul %209, %6, %cst_174 {dimension_numbers = #tpu.dot_dimension_numbers<[1], [0], [0], [1], [0, 0, 1, 1], [], []>} : vector<15x16xf32>, vector<16x32xf32>, vector<15x32xf32> -> vector<15x32xf32>
      %211 = arith.addf %205, %210 : vector<15x32xf32>
      %c1_i32_175 = arith.constant 1 : i32
      %212 = arith.addi %194, %c1_i32_175 : i32
      %c0_176 = arith.constant 0 : index
      %213 = arith.index_cast %212 : i32 to index
      %c0_177 = arith.constant 0 : index
      %c0_178 = arith.constant 0 : index
      %214 = vector.load %arg2[%c0_176, %213, %c0_177, %c0_178] : memref<1x32x16x16xf32, #tpu.memory_space<vmem>>, vector<1x1x15x16xf32>
      %215 = vector.shape_cast %214 : vector<1x1x15x16xf32> to vector<15x16xf32>
      %cst_179 = arith.constant dense<0.000000e+00> : vector<15x32xf32>
      %216 = tpu.matmul %215, %8, %cst_179 {dimension_numbers = #tpu.dot_dimension_numbers<[1], [0], [0], [1], [0, 0, 1, 1], [], []>} : vector<15x16xf32>, vector<16x32xf32>, vector<15x32xf32> -> vector<15x32xf32>
      %217 = arith.addf %211, %216 : vector<15x32xf32>
      %c1_i32_180 = arith.constant 1 : i32
      %218 = arith.addi %194, %c1_i32_180 : i32
      %c0_181 = arith.constant 0 : index
      %219 = arith.index_cast %218 : i32 to index
      %c1_182 = arith.constant 1 : index
      %c0_183 = arith.constant 0 : index
      %220 = vector.load %arg1[%c0_181, %219, %c1_182, %c0_183] : memref<1x32x16x16xf32, #tpu.memory_space<vmem>>, vector<1x1x15x16xf32>
      %221 = vector.shape_cast %220 : vector<1x1x15x16xf32> to vector<15x16xf32>
      %cst_184 = arith.constant dense<0.000000e+00> : vector<15x32xf32>
      %222 = tpu.matmul %221, %10, %cst_184 {dimension_numbers = #tpu.dot_dimension_numbers<[1], [0], [0], [1], [0, 0, 1, 1], [], []>} : vector<15x16xf32>, vector<16x32xf32>, vector<15x32xf32> -> vector<15x32xf32>
      %223 = arith.addf %217, %222 : vector<15x32xf32>
      %c1_i32_185 = arith.constant 1 : i32
      %224 = arith.addi %194, %c1_i32_185 : i32
      %c0_186 = arith.constant 0 : index
      %225 = arith.index_cast %224 : i32 to index
      %c1_187 = arith.constant 1 : index
      %c0_188 = arith.constant 0 : index
      %226 = vector.load %arg2[%c0_186, %225, %c1_187, %c0_188] : memref<1x32x16x16xf32, #tpu.memory_space<vmem>>, vector<1x1x15x16xf32>
      %227 = vector.shape_cast %226 : vector<1x1x15x16xf32> to vector<15x16xf32>
      %cst_189 = arith.constant dense<0.000000e+00> : vector<15x32xf32>
      %228 = tpu.matmul %227, %12, %cst_189 {dimension_numbers = #tpu.dot_dimension_numbers<[1], [0], [0], [1], [0, 0, 1, 1], [], []>} : vector<15x16xf32>, vector<16x32xf32>, vector<15x32xf32> -> vector<15x32xf32>
      %229 = arith.addf %223, %228 : vector<15x32xf32>
      %c2_i32_190 = arith.constant 2 : i32
      %230 = arith.addi %194, %c2_i32_190 : i32
      %c0_191 = arith.constant 0 : index
      %231 = arith.index_cast %230 : i32 to index
      %c0_192 = arith.constant 0 : index
      %c0_193 = arith.constant 0 : index
      %232 = vector.load %arg2[%c0_191, %231, %c0_192, %c0_193] : memref<1x32x16x16xf32, #tpu.memory_space<vmem>>, vector<1x1x15x16xf32>
      %233 = vector.shape_cast %232 : vector<1x1x15x16xf32> to vector<15x16xf32>
      %cst_194 = arith.constant dense<0.000000e+00> : vector<15x32xf32>
      %234 = tpu.matmul %233, %14, %cst_194 {dimension_numbers = #tpu.dot_dimension_numbers<[1], [0], [0], [1], [0, 0, 1, 1], [], []>} : vector<15x16xf32>, vector<16x32xf32>, vector<15x32xf32> -> vector<15x32xf32>
      %235 = arith.addf %229, %234 : vector<15x32xf32>
      %c2_i32_195 = arith.constant 2 : i32
      %236 = arith.addi %194, %c2_i32_195 : i32
      %c0_196 = arith.constant 0 : index
      %237 = arith.index_cast %236 : i32 to index
      %c1_197 = arith.constant 1 : index
      %c0_198 = arith.constant 0 : index
      %238 = vector.load %arg1[%c0_196, %237, %c1_197, %c0_198] : memref<1x32x16x16xf32, #tpu.memory_space<vmem>>, vector<1x1x15x16xf32>
      %239 = vector.shape_cast %238 : vector<1x1x15x16xf32> to vector<15x16xf32>
      %cst_199 = arith.constant dense<0.000000e+00> : vector<15x32xf32>
      %240 = tpu.matmul %239, %16, %cst_199 {dimension_numbers = #tpu.dot_dimension_numbers<[1], [0], [0], [1], [0, 0, 1, 1], [], []>} : vector<15x16xf32>, vector<16x32xf32>, vector<15x32xf32> -> vector<15x32xf32>
      %241 = arith.addf %235, %240 : vector<15x32xf32>
      %c2_i32_200 = arith.constant 2 : i32
      %242 = arith.addi %194, %c2_i32_200 : i32
      %c0_201 = arith.constant 0 : index
      %243 = arith.index_cast %242 : i32 to index
      %c1_202 = arith.constant 1 : index
      %c0_203 = arith.constant 0 : index
      %244 = vector.load %arg2[%c0_201, %243, %c1_202, %c0_203] : memref<1x32x16x16xf32, #tpu.memory_space<vmem>>, vector<1x1x15x16xf32>
      %245 = vector.shape_cast %244 : vector<1x1x15x16xf32> to vector<15x16xf32>
      %cst_204 = arith.constant dense<0.000000e+00> : vector<15x32xf32>
      %246 = tpu.matmul %245, %18, %cst_204 {dimension_numbers = #tpu.dot_dimension_numbers<[1], [0], [0], [1], [0, 0, 1, 1], [], []>} : vector<15x16xf32>, vector<16x32xf32>, vector<15x32xf32> -> vector<15x32xf32>
      %247 = arith.addf %241, %246 : vector<15x32xf32>
      %248 = vector.broadcast %0 : vector<1x32xf32> to vector<15x32xf32>
      %249 = arith.addf %247, %248 : vector<15x32xf32>
      %cst_205 = arith.constant 0.000000e+00 : f32
      %250 = vector.broadcast %cst_205 : f32 to vector<15x32xf32>
      %251 = arith.maximumf %249, %250 : vector<15x32xf32>
      %252 = arith.maximumf %193, %251 : vector<15x32xf32>
      %253 = arith.maximumf %135, %252 : vector<15x32xf32>
      %c0_206 = arith.constant 0 : index
      %254 = arith.index_cast %arg6 : i32 to index
      %c0_207 = arith.constant 0 : index
      %c0_208 = arith.constant 0 : index
      %255 = vector.load %arg5[%c0_206, %254, %c0_207, %c0_208] : memref<1x15x15x32xf32, #tpu.memory_space<vmem>>, vector<1x1x15x32xf32>
      %256 = vector.shape_cast %255 : vector<1x1x15x32xf32> to vector<15x32xf32>
      %257 = vector.shape_cast %253 : vector<15x32xf32> to vector<1x1x15x32xf32>
      tpu.vector_store %arg5[%c0_206, %254, %c0_207, %c0_208], %257 {strides = array<i32>} : memref<1x15x15x32xf32, #tpu.memory_space<vmem>>, vector<1x1x15x32xf32>,
    }
    %c15_i32_20 = arith.constant 15 : i32
    return
  }
  func.func @transform_0(%arg0: i32) -> (i32, i32, i32, i32) {
    %c0_i32 = arith.constant 0 : i32
    %c0_i32_0 = arith.constant 0 : i32
    %c0_i32_1 = arith.constant 0 : i32
    %c0_i32_2 = arith.constant 0 : i32
    return %arg0, %c0_i32, %c0_i32_0, %c0_i32_1 : i32, i32, i32, i32
  }
  func.func @transform_1(%arg0: i32) -> (i32, i32, i32, i32) {
    %c0_i32 = arith.constant 0 : i32
    %c0_i32_0 = arith.constant 0 : i32
    %c0_i32_1 = arith.constant 0 : i32
    %c0_i32_2 = arith.constant 0 : i32
    return %arg0, %c0_i32, %c0_i32_0, %c0_i32_1 : i32, i32, i32, i32
  }
  func.func @transform_2(%arg0: i32) -> (i32, i32, i32) {
    %c0_i32 = arith.constant 0 : i32
    %c0_i32_0 = arith.constant 0 : i32
    %c0_i32_1 = arith.constant 0 : i32
    %c0_i32_2 = arith.constant 0 : i32
    return %c0_i32, %c0_i32_0, %c0_i32_1 : i32, i32, i32
  }
  func.func @transform_3(%arg0: i32) -> (i32, i32) {
    %c0_i32 = arith.constant 0 : i32
    %c0_i32_0 = arith.constant 0 : i32
    %c0_i32_1 = arith.constant 0 : i32
    return %c0_i32, %c0_i32_0 : i32, i32
  }
  func.func @transform_4(%arg0: i32) -> (i32, i32, i32, i32) {
    %c0_i32 = arith.constant 0 : i32
    %c0_i32_0 = arith.constant 0 : i32
    %c0_i32_1 = arith.constant 0 : i32
    %c0_i32_2 = arith.constant 0 : i32
    return %arg0, %c0_i32, %c0_i32_0, %c0_i32_1 : i32, i32, i32, i32
  }
}

module attributes {stable_mosaic.version = 11 : i64} {
  func.func @_mlp_kernel(%arg0: i32, %arg1: memref<2x7200xf32, #tpu.memory_space<vmem>>, %arg2: memref<7200x128xf32, #tpu.memory_space<vmem>>, %arg3: memref<1x128xf32, #tpu.memory_space<vmem>>, %arg4: memref<128x5xf32, #tpu.memory_space<vmem>>, %arg5: memref<1x5xf32, #tpu.memory_space<vmem>>, %arg6: memref<2x5xf32, #tpu.memory_space<vmem>>) attributes {dimension_semantics = [#tpu.dimension_semantics<parallel>], iteration_bounds = array<i64: 1>, scalar_prefetch = 0 : i64, scratch_operands = 0 : i64, tpu.core_type = #tpu.core_type<tc>, window_params = [{transform_indices = @transform_0, window_bounds = array<i64: 2, 7200>}, {pipeline_mode = #tpu.pipeline_mode<synchronous>, transform_indices = @transform_1, window_bounds = array<i64: 7200, 128>}, {pipeline_mode = #tpu.pipeline_mode<synchronous>, transform_indices = @transform_2, window_bounds = array<i64: 1, 128>}, {pipeline_mode = #tpu.pipeline_mode<synchronous>, transform_indices = @transform_3, window_bounds = array<i64: 128, 5>}, {pipeline_mode = #tpu.pipeline_mode<synchronous>, transform_indices = @transform_4, window_bounds = array<i64: 1, 5>}, {transform_indices = @transform_5, window_bounds = array<i64: 2, 5>}]} {
    %c0 = arith.constant 0 : index
    %c0_0 = arith.constant 0 : index
    %0 = vector.load %arg1[%c0, %c0_0] : memref<2x7200xf32, #tpu.memory_space<vmem>>, vector<2x7200xf32>
    %c0_1 = arith.constant 0 : index
    %c0_2 = arith.constant 0 : index
    %1 = vector.load %arg2[%c0_1, %c0_2] : memref<7200x128xf32, #tpu.memory_space<vmem>>, vector<7200x128xf32>
    %cst = arith.constant dense<0.000000e+00> : vector<2x128xf32>
    %2 = tpu.matmul %0, %1, %cst {dimension_numbers = #tpu.dot_dimension_numbers<[1], [0], [0], [1], [0, 0, 1, 1], [], []>} : vector<2x7200xf32>, vector<7200x128xf32>, vector<2x128xf32> -> vector<2x128xf32>
    %c0_3 = arith.constant 0 : index
    %c0_4 = arith.constant 0 : index
    %3 = vector.load %arg3[%c0_3, %c0_4] : memref<1x128xf32, #tpu.memory_space<vmem>>, vector<1x128xf32>
    %4 = vector.broadcast %3 : vector<1x128xf32> to vector<2x128xf32>
    %5 = arith.addf %2, %4 : vector<2x128xf32>
    %cst_5 = arith.constant 0.000000e+00 : f32
    %6 = vector.broadcast %cst_5 : f32 to vector<2x128xf32>
    %7 = arith.maximumf %5, %6 : vector<2x128xf32>
    %c0_6 = arith.constant 0 : index
    %c0_7 = arith.constant 0 : index
    %8 = vector.load %arg4[%c0_6, %c0_7] : memref<128x5xf32, #tpu.memory_space<vmem>>, vector<128x5xf32>
    %cst_8 = arith.constant dense<0.000000e+00> : vector<2x5xf32>
    %9 = tpu.matmul %7, %8, %cst_8 {dimension_numbers = #tpu.dot_dimension_numbers<[1], [0], [0], [1], [0, 0, 1, 1], [], []>} : vector<2x128xf32>, vector<128x5xf32>, vector<2x5xf32> -> vector<2x5xf32>
    %c0_9 = arith.constant 0 : index
    %c0_10 = arith.constant 0 : index
    %10 = vector.load %arg5[%c0_9, %c0_10] : memref<1x5xf32, #tpu.memory_space<vmem>>, vector<1x5xf32>
    %11 = vector.broadcast %10 : vector<1x5xf32> to vector<2x5xf32>
    %12 = arith.addf %9, %11 : vector<2x5xf32>
    %c0_11 = arith.constant 0 : index
    %c0_12 = arith.constant 0 : index
    %13 = vector.load %arg6[%c0_11, %c0_12] : memref<2x5xf32, #tpu.memory_space<vmem>>, vector<2x5xf32>
    tpu.vector_store %arg6[%c0_11, %c0_12], %12 {strides = array<i32>} : memref<2x5xf32, #tpu.memory_space<vmem>>, vector<2x5xf32>,
    return
  }
  func.func @transform_0(%arg0: i32) -> (i32, i32) {
    %c0_i32 = arith.constant 0 : i32
    %c0_i32_0 = arith.constant 0 : i32
    return %arg0, %c0_i32 : i32, i32
  }
  func.func @transform_1(%arg0: i32) -> (i32, i32) {
    %c0_i32 = arith.constant 0 : i32
    %c0_i32_0 = arith.constant 0 : i32
    %c0_i32_1 = arith.constant 0 : i32
    return %c0_i32, %c0_i32_0 : i32, i32
  }
  func.func @transform_2(%arg0: i32) -> (i32, i32) {
    %c0_i32 = arith.constant 0 : i32
    %c0_i32_0 = arith.constant 0 : i32
    %c0_i32_1 = arith.constant 0 : i32
    return %c0_i32, %c0_i32_0 : i32, i32
  }
  func.func @transform_3(%arg0: i32) -> (i32, i32) {
    %c0_i32 = arith.constant 0 : i32
    %c0_i32_0 = arith.constant 0 : i32
    %c0_i32_1 = arith.constant 0 : i32
    return %c0_i32, %c0_i32_0 : i32, i32
  }
  func.func @transform_4(%arg0: i32) -> (i32, i32) {
    %c0_i32 = arith.constant 0 : i32
    %c0_i32_0 = arith.constant 0 : i32
    %c0_i32_1 = arith.constant 0 : i32
    return %c0_i32, %c0_i32_0 : i32, i32
  }
  func.func @transform_5(%arg0: i32) -> (i32, i32) {
    %c0_i32 = arith.constant 0 : i32
    %c0_i32_0 = arith.constant 0 : i32
    return %arg0, %c0_i32 : i32, i32
  }
}

</mosaic_0001>

<llo_original>
// kernel: simple_cnn_forward.3
$region0: #{simple_cnn_forward.3}
  #allocation0 [shape = 'u32[]', space=smem, size = 0x4, offset = 0x4, fixed_abs, tag = 'smem constant byte address 0x4 - core index']
  #allocation1 [shape = 'u32[72,128]{1,0:T(1,128)}', space=vmem, size = 0x9000, scoped, tag = 'internal scratch']
  %s0 = inlined_call_operand.vmem [shape: f32[2,62,31,3], index: 0, kind: input, shape index: {}]
  %s1 = inlined_call_operand.vmem [shape: f32[2,62,31,3], index: 1, kind: input, shape index: {}]
  %s2 = inlined_call_operand.vmem [shape: f32[9,3,16], index: 2, kind: input, shape index: {}]
  %s3 = inlined_call_operand.vmem [shape: f32[1,16], index: 3, kind: input, shape index: {}]
  %s4 = inlined_call_operand.vmem [shape: f32[2,30,30,16], index: 4, kind: output, shape index: {}]
  %s5 = sld [smem:[#allocation0]]
  $region56: #{simple_cnn_forward.3} parent=0
    _
  %s7 = ssub.s32 1, %s5
  %s8 = scalar_select 0, %s7, %s5
  loop: start=0, step=1, limit=4
  $region2: #{simple_cnn_forward.3} parent=0 // loop_pre_header
    _
  $region3: #{simple_cnn_forward.3} parent=0 // loop_header
    %s10 = sphi 0, %s14
    %p11 = scmp.ge.s32.totalorder %s10, 4
    %s20 = sphi 0, %s22
    %s23 = sphi 0, %s20
    %s24 = sphi 0, %s23
    %s40 = sphi 0, %s24
    %s46 = sphi 0, %s48
    %s49 = sphi 0, %s46
    %s50 = sphi 0, %s49
    %s66 = sphi 0, %s50
    %s70 = sphi 0, %s70
    %s72 = sphi 0, %s70
    %s73 = sphi 0, %s72
    %s87 = sphi 0, %s73
    %s91 = sphi 0, %s91
    %s93 = sphi 0, %s91
    %s94 = sphi 0, %s93
    %s108 = sphi 0, %s94
    %s114 = sphi 0, %s116
    %s117 = sphi 0, %s114
    %s118 = sphi 0, %s117
    %s134 = sphi 0, %s118
  $region4: #{simple_cnn_forward.3} parent=0 // loop_header_branch
    %13 = sbr.rel (%p11) target = $region8
  $region5: #{simple_cnn_forward.3} parent=0 // loop_body
    %s15 = ssub.s32 %s10, 1
    %s16 = ssub.s32 %s10, 2
    %s17 = sadd.s32 %s10, 1
    %s18 = ssub.s32 %s10, %s17
    %p19 = scmp.eq.s32.totalorder %s18, 0
    %s21 = sadd.s32 %s20, 1
    %s22 = scalar_select %p19, %s20, %s21
    %p25 = pneg %p19
    %p26 = scmp.eq.s32.totalorder %s10, 1
    %p27 = por %p25, %p26
    %p28 = scmp.ne.s32.totalorder %s20, %s23
    %p29 = scmp.eq.s32.totalorder %s10, 0
    %p30 = por %p28, %p29
    %p31 = scmp.ne.s32.totalorder %s20, %s23
    %p32 = scmp.eq.s32.totalorder %s15, 1
    %p33 = por %p31, %p32
    %p34 = scmp.ne.s32.totalorder %s23, %s24
    %p35 = scmp.eq.s32.totalorder %s15, 0
    %p36 = por %p34, %p35
    %p37 = scmp.ne.s32.totalorder %s23, %s24
    %p38 = scmp.eq.s32.totalorder %s16, 1
    %p39 = por %p37, %p38
    %p41 = scmp.ne.s32.totalorder %s24, %s40
    %p42 = scmp.eq.s32.totalorder %s16, 0
    %p43 = por %p41, %p42
    %s44 = ssub.s32 %s10, %s17
    %p45 = scmp.eq.s32.totalorder %s44, 0
    %s47 = sadd.s32 %s46, 1
    %s48 = scalar_select %p45, %s46, %s47
    %p51 = pneg %p45
    %p52 = scmp.eq.s32.totalorder %s10, 1
    %p53 = por %p51, %p52
    %p54 = scmp.ne.s32.totalorder %s46, %s49
    %p55 = scmp.eq.s32.totalorder %s10, 0
    %p56 = por %p54, %p55
    %p57 = scmp.ne.s32.totalorder %s46, %s49
    %p58 = scmp.eq.s32.totalorder %s15, 1
    %p59 = por %p57, %p58
    %p60 = scmp.ne.s32.totalorder %s49, %s50
    %p61 = scmp.eq.s32.totalorder %s15, 0
    %p62 = por %p60, %p61
    %p63 = scmp.ne.s32.totalorder %s49, %s50
    %p64 = scmp.eq.s32.totalorder %s16, 1
    %p65 = por %p63, %p64
    %p67 = scmp.ne.s32.totalorder %s50, %s66
    %p68 = scmp.eq.s32.totalorder %s16, 0
    %p69 = por %p67, %p68
    %s71 = sadd.s32 %s70, 1
    %p74 = scmp.eq.s32.totalorder %s10, 1
    %p75 = scmp.ne.s32.totalorder %s70, %s72
    %p76 = scmp.eq.s32.totalorder %s10, 0
    %p77 = por %p75, %p76
    %p78 = scmp.ne.s32.totalorder %s70, %s72
    %p79 = scmp.eq.s32.totalorder %s15, 1
    %p80 = por %p78, %p79
    %p81 = scmp.ne.s32.totalorder %s72, %s73
    %p82 = scmp.eq.s32.totalorder %s15, 0
    %p83 = por %p81, %p82
    %p84 = scmp.ne.s32.totalorder %s72, %s73
    %p85 = scmp.eq.s32.totalorder %s16, 1
    %p86 = por %p84, %p85
    %p88 = scmp.ne.s32.totalorder %s73, %s87
    %p89 = scmp.eq.s32.totalorder %s16, 0
    %p90 = por %p88, %p89
    %s92 = sadd.s32 %s91, 1
    %p95 = scmp.eq.s32.totalorder %s10, 1
    %p96 = scmp.ne.s32.totalorder %s91, %s93
    %p97 = scmp.eq.s32.totalorder %s10, 0
    %p98 = por %p96, %p97
    %p99 = scmp.ne.s32.totalorder %s91, %s93
    %p100 = scmp.eq.s32.totalorder %s15, 1
    %p101 = por %p99, %p100
    %p102 = scmp.ne.s32.totalorder %s93, %s94
    %p103 = scmp.eq.s32.totalorder %s15, 0
    %p104 = por %p102, %p103
    %p105 = scmp.ne.s32.totalorder %s93, %s94
    %p106 = scmp.eq.s32.totalorder %s16, 1
    %p107 = por %p105, %p106
    %p109 = scmp.ne.s32.totalorder %s94, %s108
    %p110 = scmp.eq.s32.totalorder %s16, 0
    %p111 = por %p109, %p110
    %s112 = ssub.s32 %s10, %s17
    %p113 = scmp.eq.s32.totalorder %s112, 0
    %s115 = sadd.s32 %s114, 1
    %s116 = scalar_select %p113, %s114, %s115
    %p119 = pneg %p113
    %p120 = scmp.eq.s32.totalorder %s10, 1
    %p121 = por %p119, %p120
    %p122 = scmp.ne.s32.totalorder %s114, %s117
    %p123 = scmp.eq.s32.totalorder %s10, 0
    %p124 = por %p122, %p123
    %p125 = scmp.ne.s32.totalorder %s114, %s117
    %p126 = scmp.eq.s32.totalorder %s15, 1
    %p127 = por %p125, %p126
    %p128 = scmp.ne.s32.totalorder %s117, %s118
    %p129 = scmp.eq.s32.totalorder %s15, 0
    %p130 = por %p128, %p129
    %p131 = scmp.ne.s32.totalorder %s117, %s118
    %p132 = scmp.eq.s32.totalorder %s16, 1
    %p133 = por %p131, %p132
    %p135 = scmp.ne.s32.totalorder %s118, %s134
    %p136 = scmp.eq.s32.totalorder %s16, 0
    %p137 = por %p135, %p136
    %p138 = scmp.le.s32.totalorder 1, %s10
    %p139 = scmp.lt.s32.totalorder %s10, 3
    %p140 = pnand %p138, %p139
    %p141 = pneg %p140
    // Predicated region
    $region9: #{simple_cnn_forward.3} parent=5 // pred_check
      _
    $region10: #{simple_cnn_forward.3} parent=5 // pred_check_branch
      %143 = sbr.rel (%p140) target = $region12
    $region11: #{simple_cnn_forward.3} parent=5 // pred_region
      %s144 = ssub.s32 %s10, 1
      // Predicated region
      $region13: #{simple_cnn_forward.3} parent=11 // pred_check
        %p145 = pneg %p83
      $region14: #{simple_cnn_forward.3} parent=11 // pred_check_branch
        %147 = sbr.rel (%p145) target = $region16
      $region15: #{simple_cnn_forward.3} parent=11 // pred_region
        _
      $region16: #{simple_cnn_forward.3} parent=11 // pred_fallthru
        _
      // Predicated region
      $region17: #{simple_cnn_forward.3} parent=11 // pred_check
        %p148 = pneg %p104
      $region18: #{simple_cnn_forward.3} parent=11 // pred_check_branch
        %150 = sbr.rel (%p148) target = $region20
      $region19: #{simple_cnn_forward.3} parent=11 // pred_region
        _
      $region20: #{simple_cnn_forward.3} parent=11 // pred_fallthru
        _
    $region12: #{simple_cnn_forward.3} parent=5 // pred_fallthru
      _
    %p151 = scmp.lt.s32.totalorder %s10, 2
    // Predicated region
    $region21: #{simple_cnn_forward.3} parent=5 // pred_check
      %p152 = pneg %p151
    $region22: #{simple_cnn_forward.3} parent=5 // pred_check_branch
      %154 = sbr.rel (%p152) target = $region24
    $region23: #{simple_cnn_forward.3} parent=5 // pred_region
      // Predicated region
      $region25: #{simple_cnn_forward.3} parent=23 // pred_check
        %p155 = pneg %p30
      $region26: #{simple_cnn_forward.3} parent=23 // pred_check_branch
        %157 = sbr.rel (%p155) target = $region28
      $region27: #{simple_cnn_forward.3} parent=23 // pred_region
        %p158 = scmp.lt.s32.totalorder %s10, 1
        %s159 = scalar_select %p158, %s10, 1
        %s160 = smul.addr %s159, 248
        %s161 = smul.addr %s160, 8
        %s162 = scalar_lea.vmem %s0, %s161
      $region28: #{simple_cnn_forward.3} parent=23 // pred_fallthru
        _
      // Predicated region
      $region29: #{simple_cnn_forward.3} parent=23 // pred_check
        %p163 = pneg %p56
      $region30: #{simple_cnn_forward.3} parent=23 // pred_check_branch
        %165 = sbr.rel (%p163) target = $region32
      $region31: #{simple_cnn_forward.3} parent=23 // pred_region
        %p166 = scmp.lt.s32.totalorder %s10, 1
        %s167 = scalar_select %p166, %s10, 1
        %s168 = smul.addr %s167, 248
        %s169 = smul.addr %s168, 8
        %s170 = scalar_lea.vmem %s1, %s169
      $region32: #{simple_cnn_forward.3} parent=23 // pred_fallthru
        _
    $region24: #{simple_cnn_forward.3} parent=5 // pred_fallthru
      _
    %p171 = scmp.le.s32.totalorder 1, %s10
    %p172 = scmp.lt.s32.totalorder %s10, 3
    %p173 = pnand %p171, %p172
    %p174 = pneg %p173
    // Predicated region
    $region33: #{simple_cnn_forward.3} parent=5 // pred_check
      _
    $region34: #{simple_cnn_forward.3} parent=5 // pred_check_branch
      %176 = sbr.rel (%p173) target = $region36
    $region35: #{simple_cnn_forward.3} parent=5 // pred_region
      %s177 = ssub.s32 %s10, 1
      %p178 = scmp.lt.s32.totalorder %s15, 1
      %s179 = scalar_select %p178, %s15, 1
      %s180 = smul.addr %s179, 248
      %s181 = smul.addr %s180, 8
      %s182 = scalar_lea.vmem %s0, %s181
      %p183 = pneg %p36
      %p184 = pneg %p33
      %p185 = scmp.lt.s32.totalorder %s15, 1
      %s186 = scalar_select %p185, %s15, 1
      %s187 = smul.addr %s186, 248
      %s188 = smul.addr %s187, 8
      %s189 = scalar_lea.vmem %s1, %s188
      %p190 = pneg %p62
      %p191 = pneg %p59
      %p192 = pneg %p83
      %p193 = pneg %p80
      %p194 = pneg %p104
      %p195 = pneg %p101
      %p196 = pneg %p130
      %p197 = pneg %p127
      %p198 = scmp.lt.s32.totalorder %s15, 1
      %s199 = scalar_select %p198, %s15, 1
      %s200 = smul.addr %s199, 120
      %s201 = smul.addr %s200, 8
      %s202 = scalar_lea.vmem %s4, %s201
      %p203 = scmp.lt.s32.totalorder %s15, 1
      %s204 = scalar_select %p203, %s15, 1
      %s205 = smul.addr %s204, 248
      %s206 = smul.addr %s205, 8
      %s207 = scalar_lea.vmem %s0, %s206
      %p208 = scmp.lt.s32.totalorder %s15, 1
      %s209 = scalar_select %p208, %s15, 1
      %s210 = smul.addr %s209, 248
      %s211 = smul.addr %s210, 8
      %s212 = scalar_lea.vmem %s1, %s211
      %p213 = scmp.lt.s32.totalorder %s15, 1
      %s214 = scalar_select %p213, %s15, 1
      %s215 = smul.addr %s214, 120
      %s216 = smul.addr %s215, 8
      %s217 = scalar_lea.vmem %s4, %s216
      %v218 = vld [vmem:[%s3] sm:$0x1]
      %v219 = vld [vmem:[%s2] sm:$0x7]
      %s220 = scalar_lea.vmem %s2, 4
      %v221 = vld [vmem:[%s220] sm:$0x7]
      %s222 = scalar_lea.vmem %s2, 8
      %v223 = vld [vmem:[%s222] sm:$0x7]
      %s224 = scalar_lea.vmem %s2, 12
      %v225 = vld [vmem:[%s224] sm:$0x7]
      %s226 = scalar_lea.vmem %s2, 16
      %v227 = vld [vmem:[%s226] sm:$0x7]
      %s228 = scalar_lea.vmem %s2, 20
      %v229 = vld [vmem:[%s228] sm:$0x7]
      %s230 = scalar_lea.vmem %s2, 24
      %v231 = vld [vmem:[%s230] sm:$0x7]
      %s232 = scalar_lea.vmem %s2, 28
      %v233 = vld [vmem:[%s232] sm:$0x7]
      %s234 = scalar_lea.vmem %s2, 32
      %v235 = vld [vmem:[%s234] sm:$0x7]
      loop: start=0, step=1, limit=30
      $region37: #{simple_cnn_forward.3} parent=35 // loop_pre_header
        _
      $region38: #{simple_cnn_forward.3} parent=35 // loop_header
        %s237 = sphi 0, %s241
        %p238 = scmp.ge.s32.totalorder %s237, 30
      $region39: #{simple_cnn_forward.3} parent=35 // loop_header_branch
        %240 = sbr.rel (%p238) target = $region43
      $region40: #{simple_cnn_forward.3} parent=35 // loop_body
        %s242 = smul.u32 %s237, 2
        %s243 = smul.u32 %s242, 32
        %s244 = scalar_lea.vmem %s207, %s243
        %v245 = vld [vmem:[%s244] sm:$0xff]
        %v246 = vld [vmem:[%s244 + $0x8] sm:$0xff]
        %v247 = vld [vmem:[%s244 + $0x10] sm:$0xff]
        %v248 = vld [vmem:[%s244 + $0x18] sm:$0x3f]
        %s249 = scalar_lea.vmem %s212, %s243
        %v250 = vld [vmem:[%s249] sm:$0xff]
        %v251 = vld [vmem:[%s249 + $0x8] sm:$0xff]
        %v252 = vld [vmem:[%s249 + $0x10] sm:$0xff]
        %v253 = vld [vmem:[%s249 + $0x18] sm:$0x3f]
        %vm254 = vcmask 23552
        %v256 = vsel %vm254, %v250, 0
        %v259 = vsel %vm254, %v251, 0
        %v262 = vsel %vm254, %v252, 0
        %v265 = vsel %vm254, %v253, 0
        %vm267 = vcmask 1042432
        %v269 = vsel %vm267, %v221, 0
        %271 = vmatpush.msra.mxu0 0.0
        %272 = vmatpush.msra.mxu0 0.0
        %273 = vmatpush.msra.mxu0 0.0
        %274 = vmatpush.msra.mxu0 0.0
        %275 = vmatpush.msra.mxu0 0.0
        %276 = vmatpush.msra.mxu0 0.0
        %277 = vmatpush.msra.mxu0 0.0
        %278 = vmatpush.msra.mxu0 0.0
        %279 = vmatpush.msra.mxu0 0.0
        %280 = vmatpush.msra.mxu0 0.0
        %281 = vmatpush.msra.mxu0 0.0
        %282 = vmatpush.msra.mxu0 0.0
        %283 = vmatpush.msra.mxu0 0.0
        %284 = vmatpush.msra.mxu0 0.0
        %285 = vmatpush.msra.mxu0 0.0
        %286 = vmatpush.msra.mxu0 %v269
        %287 = vmatmul.f32.gmra.mxu0 %v256
        %v288 = vpop.f32.mrf.mxu0
        %v289 = vadd.f32 0.0, %v288
        %290 = vmatmul.f32.gmra.mxu0 %v259
        %v291 = vpop.f32.mrf.mxu0
        %v292 = vadd.f32 0.0, %v291
        %293 = vmatmul.f32.gmra.mxu0 %v262
        %v294 = vpop.f32.mrf.mxu0
        %v295 = vadd.f32 0.0, %v294
        %296 = vmatmul.f32.gmra.mxu0 %v265
        %v297 = vpop.f32.mrf.mxu0
        %v298 = vadd.f32 0.0, %v297
        %299 = vdwg.mxu0
        %v301 = vsel %vm254, %v245, 0
        %v304 = vsel %vm254, %v246, 0
        %v307 = vsel %vm254, %v247, 0
        %v310 = vsel %vm254, %v248, 0
        %v313 = vsel %vm267, %v219, 0
        %315 = vmatpush.msra.mxu0 0.0
        %316 = vmatpush.msra.mxu0 0.0
        %317 = vmatpush.msra.mxu0 0.0
        %318 = vmatpush.msra.mxu0 0.0
        %319 = vmatpush.msra.mxu0 0.0
        %320 = vmatpush.msra.mxu0 0.0
        %321 = vmatpush.msra.mxu0 0.0
        %322 = vmatpush.msra.mxu0 0.0
        %323 = vmatpush.msra.mxu0 0.0
        %324 = vmatpush.msra.mxu0 0.0
        %325 = vmatpush.msra.mxu0 0.0
        %326 = vmatpush.msra.mxu0 0.0
        %327 = vmatpush.msra.mxu0 0.0
        %328 = vmatpush.msra.mxu0 0.0
        %329 = vmatpush.msra.mxu0 0.0
        %330 = vmatpush.msra.mxu0 %v313
        %331 = vmatmul.f32.gmra.mxu0 %v301
        %v332 = vpop.f32.mrf.mxu0
        %v333 = vadd.f32 %v289, %v332
        %334 = vmatmul.f32.gmra.mxu0 %v304
        %v335 = vpop.f32.mrf.mxu0
        %v336 = vadd.f32 %v292, %v335
        %337 = vmatmul.f32.gmra.mxu0 %v307
        %v338 = vpop.f32.mrf.mxu0
        %v339 = vadd.f32 %v295, %v338
        %340 = vmatmul.f32.gmra.mxu0 %v310
        %v341 = vpop.f32.mrf.mxu0
        %v342 = vadd.f32 %v298, %v341
        %343 = vdwg.mxu0
        %v344 = vld [vmem:[%s244 + $0x1] sm:$0xff]
        %v345 = vld [vmem:[%s244 + $0x9] sm:$0xff]
        %v346 = vld [vmem:[%s244 + $0x11] sm:$0xff]
        %v347 = vld [vmem:[%s244 + $0x19] sm:$0x3f]
        %v349 = vsel %vm254, %v344, 0
        %v352 = vsel %vm254, %v345, 0
        %v355 = vsel %vm254, %v346, 0
        %v358 = vsel %vm254, %v347, 0
        %v361 = vsel %vm267, %v223, 0
        %363 = vmatpush.msra.mxu0 0.0
        %364 = vmatpush.msra.mxu0 0.0
        %365 = vmatpush.msra.mxu0 0.0
        %366 = vmatpush.msra.mxu0 0.0
        %367 = vmatpush.msra.mxu0 0.0
        %368 = vmatpush.msra.mxu0 0.0
        %369 = vmatpush.msra.mxu0 0.0
        %370 = vmatpush.msra.mxu0 0.0
        %371 = vmatpush.msra.mxu0 0.0
        %372 = vmatpush.msra.mxu0 0.0
        %373 = vmatpush.msra.mxu0 0.0
        %374 = vmatpush.msra.mxu0 0.0
        %375 = vmatpush.msra.mxu0 0.0
        %376 = vmatpush.msra.mxu0 0.0
        %377 = vmatpush.msra.mxu0 0.0
        %378 = vmatpush.msra.mxu0 %v361
        %379 = vmatmul.f32.gmra.mxu0 %v349
        %v380 = vpop.f32.mrf.mxu0
        %v381 = vadd.f32 0.0, %v380
        %382 = vmatmul.f32.gmra.mxu0 %v352
        %v383 = vpop.f32.mrf.mxu0
        %v384 = vadd.f32 0.0, %v383
        %385 = vmatmul.f32.gmra.mxu0 %v355
        %v386 = vpop.f32.mrf.mxu0
        %v387 = vadd.f32 0.0, %v386
        %388 = vmatmul.f32.gmra.mxu0 %v358
        %v389 = vpop.f32.mrf.mxu0
        %v390 = vadd.f32 0.0, %v389
        %391 = vdwg.mxu0
        %v392 = vadd.f32 %v333, %v381
        %v393 = vadd.f32 %v336, %v384
        %v394 = vadd.f32 %v339, %v387
        %v395 = vadd.f32 %v342, %v390
        %s396 = sadd.s32 %s242, 1
        %s397 = smul.u32 %s396, 32
        %s398 = scalar_lea.vmem %s207, %s397
        %v399 = vld [vmem:[%s398] sm:$0xff]
        %v400 = vld [vmem:[%s398 + $0x8] sm:$0xff]
        %v401 = vld [vmem:[%s398 + $0x10] sm:$0xff]
        %v402 = vld [vmem:[%s398 + $0x18] sm:$0x3f]
        %v404 = vsel %vm254, %v399, 0
        %v407 = vsel %vm254, %v400, 0
        %v410 = vsel %vm254, %v401, 0
        %v413 = vsel %vm254, %v402, 0
        %v416 = vsel %vm267, %v225, 0
        %418 = vmatpush.msra.mxu0 0.0
        %419 = vmatpush.msra.mxu0 0.0
        %420 = vmatpush.msra.mxu0 0.0
        %421 = vmatpush.msra.mxu0 0.0
        %422 = vmatpush.msra.mxu0 0.0
        %423 = vmatpush.msra.mxu0 0.0
        %424 = vmatpush.msra.mxu0 0.0
        %425 = vmatpush.msra.mxu0 0.0
        %426 = vmatpush.msra.mxu0 0.0
        %427 = vmatpush.msra.mxu0 0.0
        %428 = vmatpush.msra.mxu0 0.0
        %429 = vmatpush.msra.mxu0 0.0
        %430 = vmatpush.msra.mxu0 0.0
        %431 = vmatpush.msra.mxu0 0.0
        %432 = vmatpush.msra.mxu0 0.0
        %433 = vmatpush.msra.mxu0 %v416
        %434 = vmatmul.f32.gmra.mxu0 %v404
        %v435 = vpop.f32.mrf.mxu0
        %v436 = vadd.f32 0.0, %v435
        %437 = vmatmul.f32.gmra.mxu0 %v407
        %v438 = vpop.f32.mrf.mxu0
        %v439 = vadd.f32 0.0, %v438
        %440 = vmatmul.f32.gmra.mxu0 %v410
        %v441 = vpop.f32.mrf.mxu0
        %v442 = vadd.f32 0.0, %v441
        %443 = vmatmul.f32.gmra.mxu0 %v413
        %v444 = vpop.f32.mrf.mxu0
        %v445 = vadd.f32 0.0, %v444
        %446 = vdwg.mxu0
        %v447 = vadd.f32 %v392, %v436
        %v448 = vadd.f32 %v393, %v439
        %v449 = vadd.f32 %v394, %v442
        %v450 = vadd.f32 %v395, %v445
        %s451 = scalar_lea.vmem %s212, %s397
        %v452 = vld [vmem:[%s451] sm:$0xff]
        %v453 = vld [vmem:[%s451 + $0x8] sm:$0xff]
        %v454 = vld [vmem:[%s451 + $0x10] sm:$0xff]
        %v455 = vld [vmem:[%s451 + $0x18] sm:$0x3f]
        %v457 = vsel %vm254, %v452, 0
        %v460 = vsel %vm254, %v453, 0
        %v463 = vsel %vm254, %v454, 0
        %v466 = vsel %vm254, %v455, 0
        %v469 = vsel %vm267, %v227, 0
        %471 = vmatpush.msra.mxu0 0.0
        %472 = vmatpush.msra.mxu0 0.0
        %473 = vmatpush.msra.mxu0 0.0
        %474 = vmatpush.msra.mxu0 0.0
        %475 = vmatpush.msra.mxu0 0.0
        %476 = vmatpush.msra.mxu0 0.0
        %477 = vmatpush.msra.mxu0 0.0
        %478 = vmatpush.msra.mxu0 0.0
        %479 = vmatpush.msra.mxu0 0.0
        %480 = vmatpush.msra.mxu0 0.0
        %481 = vmatpush.msra.mxu0 0.0
        %482 = vmatpush.msra.mxu0 0.0
        %483 = vmatpush.msra.mxu0 0.0
        %484 = vmatpush.msra.mxu0 0.0
        %485 = vmatpush.msra.mxu0 0.0
        %486 = vmatpush.msra.mxu0 %v469
        %487 = vmatmul.f32.gmra.mxu0 %v457
        %v488 = vpop.f32.mrf.mxu0
        %v489 = vadd.f32 0.0, %v488
        %490 = vmatmul.f32.gmra.mxu0 %v460
        %v491 = vpop.f32.mrf.mxu0
        %v492 = vadd.f32 0.0, %v491
        %493 = vmatmul.f32.gmra.mxu0 %v463
        %v494 = vpop.f32.mrf.mxu0
        %v495 = vadd.f32 0.0, %v494
        %496 = vmatmul.f32.gmra.mxu0 %v466
        %v497 = vpop.f32.mrf.mxu0
        %v498 = vadd.f32 0.0, %v497
        %499 = vdwg.mxu0
        %v500 = vadd.f32 %v447, %v489
        %v501 = vadd.f32 %v448, %v492
        %v502 = vadd.f32 %v449, %v495
        %v503 = vadd.f32 %v450, %v498
        %v504 = vld [vmem:[%s398 + $0x1] sm:$0xff]
        %v505 = vld [vmem:[%s398 + $0x9] sm:$0xff]
        %v506 = vld [vmem:[%s398 + $0x11] sm:$0xff]
        %v507 = vld [vmem:[%s398 + $0x19] sm:$0x3f]
        %v509 = vsel %vm254, %v504, 0
        %v512 = vsel %vm254, %v505, 0
        %v515 = vsel %vm254, %v506, 0
        %v518 = vsel %vm254, %v507, 0
        %v521 = vsel %vm267, %v229, 0
        %523 = vmatpush.msra.mxu0 0.0
        %524 = vmatpush.msra.mxu0 0.0
        %525 = vmatpush.msra.mxu0 0.0
        %526 = vmatpush.msra.mxu0 0.0
        %527 = vmatpush.msra.mxu0 0.0
        %528 = vmatpush.msra.mxu0 0.0
        %529 = vmatpush.msra.mxu0 0.0
        %530 = vmatpush.msra.mxu0 0.0
        %531 = vmatpush.msra.mxu0 0.0
        %532 = vmatpush.msra.mxu0 0.0
        %533 = vmatpush.msra.mxu0 0.0
        %534 = vmatpush.msra.mxu0 0.0
        %535 = vmatpush.msra.mxu0 0.0
        %536 = vmatpush.msra.mxu0 0.0
        %537 = vmatpush.msra.mxu0 0.0
        %538 = vmatpush.msra.mxu0 %v521
        %539 = vmatmul.f32.gmra.mxu0 %v509
        %v540 = vpop.f32.mrf.mxu0
        %v541 = vadd.f32 0.0, %v540
        %542 = vmatmul.f32.gmra.mxu0 %v512
        %v543 = vpop.f32.mrf.mxu0
        %v544 = vadd.f32 0.0, %v543
        %545 = vmatmul.f32.gmra.mxu0 %v515
        %v546 = vpop.f32.mrf.mxu0
        %v547 = vadd.f32 0.0, %v546
        %548 = vmatmul.f32.gmra.mxu0 %v518
        %v549 = vpop.f32.mrf.mxu0
        %v550 = vadd.f32 0.0, %v549
        %551 = vdwg.mxu0
        %v552 = vadd.f32 %v500, %v541
        %v553 = vadd.f32 %v501, %v544
        %v554 = vadd.f32 %v502, %v547
        %v555 = vadd.f32 %v503, %v550
        %s556 = sadd.s32 %s242, 2
        %s557 = smul.u32 %s556, 32
        %s558 = scalar_lea.vmem %s207, %s557
        %v559 = vld [vmem:[%s558] sm:$0xff]
        %v560 = vld [vmem:[%s558 + $0x8] sm:$0xff]
        %v561 = vld [vmem:[%s558 + $0x10] sm:$0xff]
        %v562 = vld [vmem:[%s558 + $0x18] sm:$0x3f]
        %v564 = vsel %vm254, %v559, 0
        %v567 = vsel %vm254, %v560, 0
        %v570 = vsel %vm254, %v561, 0
        %v573 = vsel %vm254, %v562, 0
        %v576 = vsel %vm267, %v231, 0
        %578 = vmatpush.msra.mxu0 0.0
        %579 = vmatpush.msra.mxu0 0.0
        %580 = vmatpush.msra.mxu0 0.0
        %581 = vmatpush.msra.mxu0 0.0
        %582 = vmatpush.msra.mxu0 0.0
        %583 = vmatpush.msra.mxu0 0.0
        %584 = vmatpush.msra.mxu0 0.0
        %585 = vmatpush.msra.mxu0 0.0
        %586 = vmatpush.msra.mxu0 0.0
        %587 = vmatpush.msra.mxu0 0.0
        %588 = vmatpush.msra.mxu0 0.0
        %589 = vmatpush.msra.mxu0 0.0
        %590 = vmatpush.msra.mxu0 0.0
        %591 = vmatpush.msra.mxu0 0.0
        %592 = vmatpush.msra.mxu0 0.0
        %593 = vmatpush.msra.mxu0 %v576
        %594 = vmatmul.f32.gmra.mxu0 %v564
        %v595 = vpop.f32.mrf.mxu0
        %v596 = vadd.f32 0.0, %v595
        %597 = vmatmul.f32.gmra.mxu0 %v567
        %v598 = vpop.f32.mrf.mxu0
        %v599 = vadd.f32 0.0, %v598
        %600 = vmatmul.f32.gmra.mxu0 %v570
        %v601 = vpop.f32.mrf.mxu0
        %v602 = vadd.f32 0.0, %v601
        %603 = vmatmul.f32.gmra.mxu0 %v573
        %v604 = vpop.f32.mrf.mxu0
        %v605 = vadd.f32 0.0, %v604
        %606 = vdwg.mxu0
        %v607 = vadd.f32 %v552, %v596
        %v608 = vadd.f32 %v553, %v599
        %v609 = vadd.f32 %v554, %v602
        %v610 = vadd.f32 %v555, %v605
        %s611 = scalar_lea.vmem %s212, %s557
        %v612 = vld [vmem:[%s611] sm:$0xff]
        %v613 = vld [vmem:[%s611 + $0x8] sm:$0xff]
        %v614 = vld [vmem:[%s611 + $0x10] sm:$0xff]
        %v615 = vld [vmem:[%s611 + $0x18] sm:$0x3f]
        %v617 = vsel %vm254, %v612, 0
        %v620 = vsel %vm254, %v613, 0
        %v623 = vsel %vm254, %v614, 0
        %v626 = vsel %vm254, %v615, 0
        %v629 = vsel %vm267, %v233, 0
        %631 = vmatpush.msra.mxu0 0.0
        %632 = vmatpush.msra.mxu0 0.0
        %633 = vmatpush.msra.mxu0 0.0
        %634 = vmatpush.msra.mxu0 0.0
        %635 = vmatpush.msra.mxu0 0.0
        %636 = vmatpush.msra.mxu0 0.0
        %637 = vmatpush.msra.mxu0 0.0
        %638 = vmatpush.msra.mxu0 0.0
        %639 = vmatpush.msra.mxu0 0.0
        %640 = vmatpush.msra.mxu0 0.0
        %641 = vmatpush.msra.mxu0 0.0
        %642 = vmatpush.msra.mxu0 0.0
        %643 = vmatpush.msra.mxu0 0.0
        %644 = vmatpush.msra.mxu0 0.0
        %645 = vmatpush.msra.mxu0 0.0
        %646 = vmatpush.msra.mxu0 %v629
        %647 = vmatmul.f32.gmra.mxu0 %v617
        %v648 = vpop.f32.mrf.mxu0
        %v649 = vadd.f32 0.0, %v648
        %650 = vmatmul.f32.gmra.mxu0 %v620
        %v651 = vpop.f32.mrf.mxu0
        %v652 = vadd.f32 0.0, %v651
        %653 = vmatmul.f32.gmra.mxu0 %v623
        %v654 = vpop.f32.mrf.mxu0
        %v655 = vadd.f32 0.0, %v654
        %656 = vmatmul.f32.gmra.mxu0 %v626
        %v657 = vpop.f32.mrf.mxu0
        %v658 = vadd.f32 0.0, %v657
        %659 = vdwg.mxu0
        %v660 = vadd.f32 %v607, %v649
        %v661 = vadd.f32 %v608, %v652
        %v662 = vadd.f32 %v609, %v655
        %v663 = vadd.f32 %v610, %v658
        %v664 = vld [vmem:[%s558 + $0x1] sm:$0xff]
        %v665 = vld [vmem:[%s558 + $0x9] sm:$0xff]
        %v666 = vld [vmem:[%s558 + $0x11] sm:$0xff]
        %v667 = vld [vmem:[%s558 + $0x19] sm:$0x3f]
        %v669 = vsel %vm254, %v664, 0
        %v672 = vsel %vm254, %v665, 0
        %v675 = vsel %vm254, %v666, 0
        %v678 = vsel %vm254, %v667, 0
        %v681 = vsel %vm267, %v235, 0
        %683 = vmatpush.msra.mxu0 0.0
        %684 = vmatpush.msra.mxu0 0.0
        %685 = vmatpush.msra.mxu0 0.0
        %686 = vmatpush.msra.mxu0 0.0
        %687 = vmatpush.msra.mxu0 0.0
        %688 = vmatpush.msra.mxu0 0.0
        %689 = vmatpush.msra.mxu0 0.0
        %690 = vmatpush.msra.mxu0 0.0
        %691 = vmatpush.msra.mxu0 0.0
        %692 = vmatpush.msra.mxu0 0.0
        %693 = vmatpush.msra.mxu0 0.0
        %694 = vmatpush.msra.mxu0 0.0
        %695 = vmatpush.msra.mxu0 0.0
        %696 = vmatpush.msra.mxu0 0.0
        %697 = vmatpush.msra.mxu0 0.0
        %698 = vmatpush.msra.mxu0 %v681
        %699 = vmatmul.f32.gmra.mxu0 %v669
        %v700 = vpop.f32.mrf.mxu0
        %v701 = vadd.f32 0.0, %v700
        %702 = vmatmul.f32.gmra.mxu0 %v672
        %v703 = vpop.f32.mrf.mxu0
        %v704 = vadd.f32 0.0, %v703
        %705 = vmatmul.f32.gmra.mxu0 %v675
        %v706 = vpop.f32.mrf.mxu0
        %v707 = vadd.f32 0.0, %v706
        %708 = vmatmul.f32.gmra.mxu0 %v678
        %v709 = vpop.f32.mrf.mxu0
        %v710 = vadd.f32 0.0, %v709
        %711 = vdwg.mxu0
        %v712 = vadd.f32 %v660, %v701
        %v713 = vadd.f32 %v661, %v704
        %v714 = vadd.f32 %v662, %v707
        %v715 = vadd.f32 %v663, %v710
        %v717 = vperm.slane %v218, 0
        %v719 = vadd.f32 %v712, %v717
        %v720 = vadd.f32 %v713, %v717
        %v721 = vadd.f32 %v714, %v717
        %v722 = vadd.f32 %v715, %v717
        %v723 = vmax.f32 %v719, 0.0
        %v724 = vmax.f32 %v720, 0.0
        %v725 = vmax.f32 %v721, 0.0
        %v726 = vmax.f32 %v722, 0.0
        %727 = vmatpush.msra.mxu0 0.0
        %728 = vmatpush.msra.mxu0 0.0
        %729 = vmatpush.msra.mxu0 0.0
        %730 = vmatpush.msra.mxu0 0.0
        %731 = vmatpush.msra.mxu0 0.0
        %732 = vmatpush.msra.mxu0 0.0
        %733 = vmatpush.msra.mxu0 0.0
        %734 = vmatpush.msra.mxu0 0.0
        %735 = vmatpush.msra.mxu0 0.0
        %736 = vmatpush.msra.mxu0 0.0
        %737 = vmatpush.msra.mxu0 0.0
        %738 = vmatpush.msra.mxu0 0.0
        %739 = vmatpush.msra.mxu0 0.0
        %740 = vmatpush.msra.mxu0 0.0
        %741 = vmatpush.msra.mxu0 0.0
        %742 = vmatpush.msra.mxu0 %v269
        %743 = vmatmul.f32.gmra.mxu0 %v349
        %v744 = vpop.f32.mrf.mxu0
        %v745 = vadd.f32 0.0, %v744
        %746 = vmatmul.f32.gmra.mxu0 %v352
        %v747 = vpop.f32.mrf.mxu0
        %v748 = vadd.f32 0.0, %v747
        %749 = vmatmul.f32.gmra.mxu0 %v355
        %v750 = vpop.f32.mrf.mxu0
        %v751 = vadd.f32 0.0, %v750
        %752 = vmatmul.f32.gmra.mxu0 %v358
        %v753 = vpop.f32.mrf.mxu0
        %v754 = vadd.f32 0.0, %v753
        %755 = vdwg.mxu0
        %756 = vmatpush.msra.mxu0 0.0
        %757 = vmatpush.msra.mxu0 0.0
        %758 = vmatpush.msra.mxu0 0.0
        %759 = vmatpush.msra.mxu0 0.0
        %760 = vmatpush.msra.mxu0 0.0
        %761 = vmatpush.msra.mxu0 0.0
        %762 = vmatpush.msra.mxu0 0.0
        %763 = vmatpush.msra.mxu0 0.0
        %764 = vmatpush.msra.mxu0 0.0
        %765 = vmatpush.msra.mxu0 0.0
        %766 = vmatpush.msra.mxu0 0.0
        %767 = vmatpush.msra.mxu0 0.0
        %768 = vmatpush.msra.mxu0 0.0
        %769 = vmatpush.msra.mxu0 0.0
        %770 = vmatpush.msra.mxu0 0.0
        %771 = vmatpush.msra.mxu0 %v313
        %772 = vmatmul.f32.gmra.mxu0 %v256
        %v773 = vpop.f32.mrf.mxu0
        %v774 = vadd.f32 %v745, %v773
        %775 = vmatmul.f32.gmra.mxu0 %v259
        %v776 = vpop.f32.mrf.mxu0
        %v777 = vadd.f32 %v748, %v776
        %778 = vmatmul.f32.gmra.mxu0 %v262
        %v779 = vpop.f32.mrf.mxu0
        %v780 = vadd.f32 %v751, %v779
        %781 = vmatmul.f32.gmra.mxu0 %v265
        %v782 = vpop.f32.mrf.mxu0
        %v783 = vadd.f32 %v754, %v782
        %784 = vdwg.mxu0
        %v785 = vld [vmem:[%s249 + $0x1] sm:$0xff]
        %v786 = vld [vmem:[%s249 + $0x9] sm:$0xff]
        %v787 = vld [vmem:[%s249 + $0x11] sm:$0xff]
        %v788 = vld [vmem:[%s249 + $0x19] sm:$0x3f]
        %v790 = vsel %vm254, %v785, 0
        %v793 = vsel %vm254, %v786, 0
        %v796 = vsel %vm254, %v787, 0
        %v799 = vsel %vm254, %v788, 0
        %801 = vmatpush.msra.mxu0 0.0
        %802 = vmatpush.msra.mxu0 0.0
        %803 = vmatpush.msra.mxu0 0.0
        %804 = vmatpush.msra.mxu0 0.0
        %805 = vmatpush.msra.mxu0 0.0
        %806 = vmatpush.msra.mxu0 0.0
        %807 = vmatpush.msra.mxu0 0.0
        %808 = vmatpush.msra.mxu0 0.0
        %809 = vmatpush.msra.mxu0 0.0
        %810 = vmatpush.msra.mxu0 0.0
        %811 = vmatpush.msra.mxu0 0.0
        %812 = vmatpush.msra.mxu0 0.0
        %813 = vmatpush.msra.mxu0 0.0
        %814 = vmatpush.msra.mxu0 0.0
        %815 = vmatpush.msra.mxu0 0.0
        %816 = vmatpush.msra.mxu0 %v361
        %817 = vmatmul.f32.gmra.mxu0 %v790
        %v818 = vpop.f32.mrf.mxu0
        %v819 = vadd.f32 0.0, %v818
        %820 = vmatmul.f32.gmra.mxu0 %v793
        %v821 = vpop.f32.mrf.mxu0
        %v822 = vadd.f32 0.0, %v821
        %823 = vmatmul.f32.gmra.mxu0 %v796
        %v824 = vpop.f32.mrf.mxu0
        %v825 = vadd.f32 0.0, %v824
        %826 = vmatmul.f32.gmra.mxu0 %v799
        %v827 = vpop.f32.mrf.mxu0
        %v828 = vadd.f32 0.0, %v827
        %829 = vdwg.mxu0
        %v830 = vadd.f32 %v774, %v819
        %v831 = vadd.f32 %v777, %v822
        %v832 = vadd.f32 %v780, %v825
        %v833 = vadd.f32 %v783, %v828
        %834 = vmatpush.msra.mxu0 0.0
        %835 = vmatpush.msra.mxu0 0.0
        %836 = vmatpush.msra.mxu0 0.0
        %837 = vmatpush.msra.mxu0 0.0
        %838 = vmatpush.msra.mxu0 0.0
        %839 = vmatpush.msra.mxu0 0.0
        %840 = vmatpush.msra.mxu0 0.0
        %841 = vmatpush.msra.mxu0 0.0
        %842 = vmatpush.msra.mxu0 0.0
        %843 = vmatpush.msra.mxu0 0.0
        %844 = vmatpush.msra.mxu0 0.0
        %845 = vmatpush.msra.mxu0 0.0
        %846 = vmatpush.msra.mxu0 0.0
        %847 = vmatpush.msra.mxu0 0.0
        %848 = vmatpush.msra.mxu0 0.0
        %849 = vmatpush.msra.mxu0 %v416
        %850 = vmatmul.f32.gmra.mxu0 %v457
        %v851 = vpop.f32.mrf.mxu0
        %v852 = vadd.f32 0.0, %v851
        %853 = vmatmul.f32.gmra.mxu0 %v460
        %v854 = vpop.f32.mrf.mxu0
        %v855 = vadd.f32 0.0, %v854
        %856 = vmatmul.f32.gmra.mxu0 %v463
        %v857 = vpop.f32.mrf.mxu0
        %v858 = vadd.f32 0.0, %v857
        %859 = vmatmul.f32.gmra.mxu0 %v466
        %v860 = vpop.f32.mrf.mxu0
        %v861 = vadd.f32 0.0, %v860
        %862 = vdwg.mxu0
        %v863 = vadd.f32 %v830, %v852
        %v864 = vadd.f32 %v831, %v855
        %v865 = vadd.f32 %v832, %v858
        %v866 = vadd.f32 %v833, %v861
        %867 = vmatpush.msra.mxu0 0.0
        %868 = vmatpush.msra.mxu0 0.0
        %869 = vmatpush.msra.mxu0 0.0
        %870 = vmatpush.msra.mxu0 0.0
        %871 = vmatpush.msra.mxu0 0.0
        %872 = vmatpush.msra.mxu0 0.0
        %873 = vmatpush.msra.mxu0 0.0
        %874 = vmatpush.msra.mxu0 0.0
        %875 = vmatpush.msra.mxu0 0.0
        %876 = vmatpush.msra.mxu0 0.0
        %877 = vmatpush.msra.mxu0 0.0
        %878 = vmatpush.msra.mxu0 0.0
        %879 = vmatpush.msra.mxu0 0.0
        %880 = vmatpush.msra.mxu0 0.0
        %881 = vmatpush.msra.mxu0 0.0
        %882 = vmatpush.msra.mxu0 %v469
        %883 = vmatmul.f32.gmra.mxu0 %v509
        %v884 = vpop.f32.mrf.mxu0
        %v885 = vadd.f32 0.0, %v884
        %886 = vmatmul.f32.gmra.mxu0 %v512
        %v887 = vpop.f32.mrf.mxu0
        %v888 = vadd.f32 0.0, %v887
        %889 = vmatmul.f32.gmra.mxu0 %v515
        %v890 = vpop.f32.mrf.mxu0
        %v891 = vadd.f32 0.0, %v890
        %892 = vmatmul.f32.gmra.mxu0 %v518
        %v893 = vpop.f32.mrf.mxu0
        %v894 = vadd.f32 0.0, %v893
        %895 = vdwg.mxu0
        %v896 = vadd.f32 %v863, %v885
        %v897 = vadd.f32 %v864, %v888
        %v898 = vadd.f32 %v865, %v891
        %v899 = vadd.f32 %v866, %v894
        %v900 = vld [vmem:[%s451 + $0x1] sm:$0xff]
        %v901 = vld [vmem:[%s451 + $0x9] sm:$0xff]
        %v902 = vld [vmem:[%s451 + $0x11] sm:$0xff]
        %v903 = vld [vmem:[%s451 + $0x19] sm:$0x3f]
        %v905 = vsel %vm254, %v900, 0
        %v908 = vsel %vm254, %v901, 0
        %v911 = vsel %vm254, %v902, 0
        %v914 = vsel %vm254, %v903, 0
        %916 = vmatpush.msra.mxu0 0.0
        %917 = vmatpush.msra.mxu0 0.0
        %918 = vmatpush.msra.mxu0 0.0
        %919 = vmatpush.msra.mxu0 0.0
        %920 = vmatpush.msra.mxu0 0.0
        %921 = vmatpush.msra.mxu0 0.0
        %922 = vmatpush.msra.mxu0 0.0
        %923 = vmatpush.msra.mxu0 0.0
        %924 = vmatpush.msra.mxu0 0.0
        %925 = vmatpush.msra.mxu0 0.0
        %926 = vmatpush.msra.mxu0 0.0
        %927 = vmatpush.msra.mxu0 0.0
        %928 = vmatpush.msra.mxu0 0.0
        %929 = vmatpush.msra.mxu0 0.0
        %930 = vmatpush.msra.mxu0 0.0
        %931 = vmatpush.msra.mxu0 %v521
        %932 = vmatmul.f32.gmra.mxu0 %v905
        %v933 = vpop.f32.mrf.mxu0
        %v934 = vadd.f32 0.0, %v933
        %935 = vmatmul.f32.gmra.mxu0 %v908
        %v936 = vpop.f32.mrf.mxu0
        %v937 = vadd.f32 0.0, %v936
        %938 = vmatmul.f32.gmra.mxu0 %v911
        %v939 = vpop.f32.mrf.mxu0
        %v940 = vadd.f32 0.0, %v939
        %941 = vmatmul.f32.gmra.mxu0 %v914
        %v942 = vpop.f32.mrf.mxu0
        %v943 = vadd.f32 0.0, %v942
        %944 = vdwg.mxu0
        %v945 = vadd.f32 %v896, %v934
        %v946 = vadd.f32 %v897, %v937
        %v947 = vadd.f32 %v898, %v940
        %v948 = vadd.f32 %v899, %v943
        %949 = vmatpush.msra.mxu0 0.0
        %950 = vmatpush.msra.mxu0 0.0
        %951 = vmatpush.msra.mxu0 0.0
        %952 = vmatpush.msra.mxu0 0.0
        %953 = vmatpush.msra.mxu0 0.0
        %954 = vmatpush.msra.mxu0 0.0
        %955 = vmatpush.msra.mxu0 0.0
        %956 = vmatpush.msra.mxu0 0.0
        %957 = vmatpush.msra.mxu0 0.0
        %958 = vmatpush.msra.mxu0 0.0
        %959 = vmatpush.msra.mxu0 0.0
        %960 = vmatpush.msra.mxu0 0.0
        %961 = vmatpush.msra.mxu0 0.0
        %962 = vmatpush.msra.mxu0 0.0
        %963 = vmatpush.msra.mxu0 0.0
        %964 = vmatpush.msra.mxu0 %v576
        %965 = vmatmul.f32.gmra.mxu0 %v617
        %v966 = vpop.f32.mrf.mxu0
        %v967 = vadd.f32 0.0, %v966
        %968 = vmatmul.f32.gmra.mxu0 %v620
        %v969 = vpop.f32.mrf.mxu0
        %v970 = vadd.f32 0.0, %v969
        %971 = vmatmul.f32.gmra.mxu0 %v623
        %v972 = vpop.f32.mrf.mxu0
        %v973 = vadd.f32 0.0, %v972
        %974 = vmatmul.f32.gmra.mxu0 %v626
        %v975 = vpop.f32.mrf.mxu0
        %v976 = vadd.f32 0.0, %v975
        %977 = vdwg.mxu0
        %v978 = vadd.f32 %v945, %v967
        %v979 = vadd.f32 %v946, %v970
        %v980 = vadd.f32 %v947, %v973
        %v981 = vadd.f32 %v948, %v976
        %982 = vmatpush.msra.mxu0 0.0
        %983 = vmatpush.msra.mxu0 0.0
        %984 = vmatpush.msra.mxu0 0.0
        %985 = vmatpush.msra.mxu0 0.0
        %986 = vmatpush.msra.mxu0 0.0
        %987 = vmatpush.msra.mxu0 0.0
        %988 = vmatpush.msra.mxu0 0.0
        %989 = vmatpush.msra.mxu0 0.0
        %990 = vmatpush.msra.mxu0 0.0
        %991 = vmatpush.msra.mxu0 0.0
        %992 = vmatpush.msra.mxu0 0.0
        %993 = vmatpush.msra.mxu0 0.0
        %994 = vmatpush.msra.mxu0 0.0
        %995 = vmatpush.msra.mxu0 0.0
        %996 = vmatpush.msra.mxu0 0.0
        %997 = vmatpush.msra.mxu0 %v629
        %998 = vmatmul.f32.gmra.mxu0 %v669
        %v999 = vpop.f32.mrf.mxu0
        %v1000 = vadd.f32 0.0, %v999
        %1001 = vmatmul.f32.gmra.mxu0 %v672
        %v1002 = vpop.f32.mrf.mxu0
        %v1003 = vadd.f32 0.0, %v1002
        %1004 = vmatmul.f32.gmra.mxu0 %v675
        %v1005 = vpop.f32.mrf.mxu0
        %v1006 = vadd.f32 0.0, %v1005
        %1007 = vmatmul.f32.gmra.mxu0 %v678
        %v1008 = vpop.f32.mrf.mxu0
        %v1009 = vadd.f32 0.0, %v1008
        %1010 = vdwg.mxu0
        %v1011 = vadd.f32 %v978, %v1000
        %v1012 = vadd.f32 %v979, %v1003
        %v1013 = vadd.f32 %v980, %v1006
        %v1014 = vadd.f32 %v981, %v1009
        %v1015 = vld [vmem:[%s611 + $0x1] sm:$0xff]
        %v1016 = vld [vmem:[%s611 + $0x9] sm:$0xff]
        %v1017 = vld [vmem:[%s611 + $0x11] sm:$0xff]
        %v1018 = vld [vmem:[%s611 + $0x19] sm:$0x3f]
        %v1020 = vsel %vm254, %v1015, 0
        %v1023 = vsel %vm254, %v1016, 0
        %v1026 = vsel %vm254, %v1017, 0
        %v1029 = vsel %vm254, %v1018, 0
        %1031 = vmatpush.msra.mxu0 0.0
        %1032 = vmatpush.msra.mxu0 0.0
        %1033 = vmatpush.msra.mxu0 0.0
        %1034 = vmatpush.msra.mxu0 0.0
        %1035 = vmatpush.msra.mxu0 0.0
        %1036 = vmatpush.msra.mxu0 0.0
        %1037 = vmatpush.msra.mxu0 0.0
        %1038 = vmatpush.msra.mxu0 0.0
        %1039 = vmatpush.msra.mxu0 0.0
        %1040 = vmatpush.msra.mxu0 0.0
        %1041 = vmatpush.msra.mxu0 0.0
        %1042 = vmatpush.msra.mxu0 0.0
        %1043 = vmatpush.msra.mxu0 0.0
        %1044 = vmatpush.msra.mxu0 0.0
        %1045 = vmatpush.msra.mxu0 0.0
        %1046 = vmatpush.msra.mxu0 %v681
        %1047 = vmatmul.f32.gmra.mxu0 %v1020
        %v1048 = vpop.f32.mrf.mxu0
        %v1049 = vadd.f32 0.0, %v1048
        %1050 = vmatmul.f32.gmra.mxu0 %v1023
        %v1051 = vpop.f32.mrf.mxu0
        %v1052 = vadd.f32 0.0, %v1051
        %1053 = vmatmul.f32.gmra.mxu0 %v1026
        %v1054 = vpop.f32.mrf.mxu0
        %v1055 = vadd.f32 0.0, %v1054
        %1056 = vmatmul.f32.gmra.mxu0 %v1029
        %v1057 = vpop.f32.mrf.mxu0
        %v1058 = vadd.f32 0.0, %v1057
        %1059 = vdwg.mxu0
        %v1060 = vadd.f32 %v1011, %v1049
        %v1061 = vadd.f32 %v1012, %v1052
        %v1062 = vadd.f32 %v1013, %v1055
        %v1063 = vadd.f32 %v1014, %v1058
        %v1064 = vadd.f32 %v1060, %v717
        %v1065 = vadd.f32 %v1061, %v717
        %v1066 = vadd.f32 %v1062, %v717
        %v1067 = vadd.f32 %v1063, %v717
        %v1068 = vmax.f32 %v1064, 0.0
        %v1069 = vmax.f32 %v1065, 0.0
        %v1070 = vmax.f32 %v1066, 0.0
        %v1071 = vmax.f32 %v1067, 0.0
        %v1072 = vmax.f32 %v723, %v1068
        %v1073 = vmax.f32 %v724, %v1069
        %v1074 = vmax.f32 %v725, %v1070
        %v1075 = vmax.f32 %v726, %v1071
        %1076 = vmatpush.msra.mxu0 0.0
        %1077 = vmatpush.msra.mxu0 0.0
        %1078 = vmatpush.msra.mxu0 0.0
        %1079 = vmatpush.msra.mxu0 0.0
        %1080 = vmatpush.msra.mxu0 0.0
        %1081 = vmatpush.msra.mxu0 0.0
        %1082 = vmatpush.msra.mxu0 0.0
        %1083 = vmatpush.msra.mxu0 0.0
        %1084 = vmatpush.msra.mxu0 0.0
        %1085 = vmatpush.msra.mxu0 0.0
        %1086 = vmatpush.msra.mxu0 0.0
        %1087 = vmatpush.msra.mxu0 0.0
        %1088 = vmatpush.msra.mxu0 0.0
        %1089 = vmatpush.msra.mxu0 0.0
        %1090 = vmatpush.msra.mxu0 0.0
        %1091 = vmatpush.msra.mxu0 %v269
        %1092 = vmatmul.f32.gmra.mxu0 %v457
        %v1093 = vpop.f32.mrf.mxu0
        %v1094 = vadd.f32 0.0, %v1093
        %1095 = vmatmul.f32.gmra.mxu0 %v460
        %v1096 = vpop.f32.mrf.mxu0
        %v1097 = vadd.f32 0.0, %v1096
        %1098 = vmatmul.f32.gmra.mxu0 %v463
        %v1099 = vpop.f32.mrf.mxu0
        %v1100 = vadd.f32 0.0, %v1099
        %1101 = vmatmul.f32.gmra.mxu0 %v466
        %v1102 = vpop.f32.mrf.mxu0
        %v1103 = vadd.f32 0.0, %v1102
        %1104 = vdwg.mxu0
        %1105 = vmatpush.msra.mxu0 0.0
        %1106 = vmatpush.msra.mxu0 0.0
        %1107 = vmatpush.msra.mxu0 0.0
        %1108 = vmatpush.msra.mxu0 0.0
        %1109 = vmatpush.msra.mxu0 0.0
        %1110 = vmatpush.msra.mxu0 0.0
        %1111 = vmatpush.msra.mxu0 0.0
        %1112 = vmatpush.msra.mxu0 0.0
        %1113 = vmatpush.msra.mxu0 0.0
        %1114 = vmatpush.msra.mxu0 0.0
        %1115 = vmatpush.msra.mxu0 0.0
        %1116 = vmatpush.msra.mxu0 0.0
        %1117 = vmatpush.msra.mxu0 0.0
        %1118 = vmatpush.msra.mxu0 0.0
        %1119 = vmatpush.msra.mxu0 0.0
        %1120 = vmatpush.msra.mxu0 %v313
        %1121 = vmatmul.f32.gmra.mxu0 %v404
        %v1122 = vpop.f32.mrf.mxu0
        %v1123 = vadd.f32 %v1094, %v1122
        %1124 = vmatmul.f32.gmra.mxu0 %v407
        %v1125 = vpop.f32.mrf.mxu0
        %v1126 = vadd.f32 %v1097, %v1125
        %1127 = vmatmul.f32.gmra.mxu0 %v410
        %v1128 = vpop.f32.mrf.mxu0
        %v1129 = vadd.f32 %v1100, %v1128
        %1130 = vmatmul.f32.gmra.mxu0 %v413
        %v1131 = vpop.f32.mrf.mxu0
        %v1132 = vadd.f32 %v1103, %v1131
        %1133 = vdwg.mxu0
        %1134 = vmatpush.msra.mxu0 0.0
        %1135 = vmatpush.msra.mxu0 0.0
        %1136 = vmatpush.msra.mxu0 0.0
        %1137 = vmatpush.msra.mxu0 0.0
        %1138 = vmatpush.msra.mxu0 0.0
        %1139 = vmatpush.msra.mxu0 0.0
        %1140 = vmatpush.msra.mxu0 0.0
        %1141 = vmatpush.msra.mxu0 0.0
        %1142 = vmatpush.msra.mxu0 0.0
        %1143 = vmatpush.msra.mxu0 0.0
        %1144 = vmatpush.msra.mxu0 0.0
        %1145 = vmatpush.msra.mxu0 0.0
        %1146 = vmatpush.msra.mxu0 0.0
        %1147 = vmatpush.msra.mxu0 0.0
        %1148 = vmatpush.msra.mxu0 0.0
        %1149 = vmatpush.msra.mxu0 %v361
        %1150 = vmatmul.f32.gmra.mxu0 %v509
        %v1151 = vpop.f32.mrf.mxu0
        %v1152 = vadd.f32 0.0, %v1151
        %1153 = vmatmul.f32.gmra.mxu0 %v512
        %v1154 = vpop.f32.mrf.mxu0
        %v1155 = vadd.f32 0.0, %v1154
        %1156 = vmatmul.f32.gmra.mxu0 %v515
        %v1157 = vpop.f32.mrf.mxu0
        %v1158 = vadd.f32 0.0, %v1157
        %1159 = vmatmul.f32.gmra.mxu0 %v518
        %v1160 = vpop.f32.mrf.mxu0
        %v1161 = vadd.f32 0.0, %v1160
        %1162 = vdwg.mxu0
        %v1163 = vadd.f32 %v1123, %v1152
        %v1164 = vadd.f32 %v1126, %v1155
        %v1165 = vadd.f32 %v1129, %v1158
        %v1166 = vadd.f32 %v1132, %v1161
        %1167 = vmatpush.msra.mxu0 0.0
        %1168 = vmatpush.msra.mxu0 0.0
        %1169 = vmatpush.msra.mxu0 0.0
        %1170 = vmatpush.msra.mxu0 0.0
        %1171 = vmatpush.msra.mxu0 0.0
        %1172 = vmatpush.msra.mxu0 0.0
        %1173 = vmatpush.msra.mxu0 0.0
        %1174 = vmatpush.msra.mxu0 0.0
        %1175 = vmatpush.msra.mxu0 0.0
        %1176 = vmatpush.msra.mxu0 0.0
        %1177 = vmatpush.msra.mxu0 0.0
        %1178 = vmatpush.msra.mxu0 0.0
        %1179 = vmatpush.msra.mxu0 0.0
        %1180 = vmatpush.msra.mxu0 0.0
        %1181 = vmatpush.msra.mxu0 0.0
        %1182 = vmatpush.msra.mxu0 %v416
        %1183 = vmatmul.f32.gmra.mxu0 %v564
        %v1184 = vpop.f32.mrf.mxu0
        %v1185 = vadd.f32 0.0, %v1184
        %1186 = vmatmul.f32.gmra.mxu0 %v567
        %v1187 = vpop.f32.mrf.mxu0
        %v1188 = vadd.f32 0.0, %v1187
        %1189 = vmatmul.f32.gmra.mxu0 %v570
        %v1190 = vpop.f32.mrf.mxu0
        %v1191 = vadd.f32 0.0, %v1190
        %1192 = vmatmul.f32.gmra.mxu0 %v573
        %v1193 = vpop.f32.mrf.mxu0
        %v1194 = vadd.f32 0.0, %v1193
        %1195 = vdwg.mxu0
        %v1196 = vadd.f32 %v1163, %v1185
        %v1197 = vadd.f32 %v1164, %v1188
        %v1198 = vadd.f32 %v1165, %v1191
        %v1199 = vadd.f32 %v1166, %v1194
        %1200 = vmatpush.msra.mxu0 0.0
        %1201 = vmatpush.msra.mxu0 0.0
        %1202 = vmatpush.msra.mxu0 0.0
        %1203 = vmatpush.msra.mxu0 0.0
        %1204 = vmatpush.msra.mxu0 0.0
        %1205 = vmatpush.msra.mxu0 0.0
        %1206 = vmatpush.msra.mxu0 0.0
        %1207 = vmatpush.msra.mxu0 0.0
        %1208 = vmatpush.msra.mxu0 0.0
        %1209 = vmatpush.msra.mxu0 0.0
        %1210 = vmatpush.msra.mxu0 0.0
        %1211 = vmatpush.msra.mxu0 0.0
        %1212 = vmatpush.msra.mxu0 0.0
        %1213 = vmatpush.msra.mxu0 0.0
        %1214 = vmatpush.msra.mxu0 0.0
        %1215 = vmatpush.msra.mxu0 %v469
        %1216 = vmatmul.f32.gmra.mxu0 %v617
        %v1217 = vpop.f32.mrf.mxu0
        %v1218 = vadd.f32 0.0, %v1217
        %1219 = vmatmul.f32.gmra.mxu0 %v620
        %v1220 = vpop.f32.mrf.mxu0
        %v1221 = vadd.f32 0.0, %v1220
        %1222 = vmatmul.f32.gmra.mxu0 %v623
        %v1223 = vpop.f32.mrf.mxu0
        %v1224 = vadd.f32 0.0, %v1223
        %1225 = vmatmul.f32.gmra.mxu0 %v626
        %v1226 = vpop.f32.mrf.mxu0
        %v1227 = vadd.f32 0.0, %v1226
        %1228 = vdwg.mxu0
        %v1229 = vadd.f32 %v1196, %v1218
        %v1230 = vadd.f32 %v1197, %v1221
        %v1231 = vadd.f32 %v1198, %v1224
        %v1232 = vadd.f32 %v1199, %v1227
        %1233 = vmatpush.msra.mxu0 0.0
        %1234 = vmatpush.msra.mxu0 0.0
        %1235 = vmatpush.msra.mxu0 0.0
        %1236 = vmatpush.msra.mxu0 0.0
        %1237 = vmatpush.msra.mxu0 0.0
        %1238 = vmatpush.msra.mxu0 0.0
        %1239 = vmatpush.msra.mxu0 0.0
        %1240 = vmatpush.msra.mxu0 0.0
        %1241 = vmatpush.msra.mxu0 0.0
        %1242 = vmatpush.msra.mxu0 0.0
        %1243 = vmatpush.msra.mxu0 0.0
        %1244 = vmatpush.msra.mxu0 0.0
        %1245 = vmatpush.msra.mxu0 0.0
        %1246 = vmatpush.msra.mxu0 0.0
        %1247 = vmatpush.msra.mxu0 0.0
        %1248 = vmatpush.msra.mxu0 %v521
        %1249 = vmatmul.f32.gmra.mxu0 %v669
        %v1250 = vpop.f32.mrf.mxu0
        %v1251 = vadd.f32 0.0, %v1250
        %1252 = vmatmul.f32.gmra.mxu0 %v672
        %v1253 = vpop.f32.mrf.mxu0
        %v1254 = vadd.f32 0.0, %v1253
        %1255 = vmatmul.f32.gmra.mxu0 %v675
        %v1256 = vpop.f32.mrf.mxu0
        %v1257 = vadd.f32 0.0, %v1256
        %1258 = vmatmul.f32.gmra.mxu0 %v678
        %v1259 = vpop.f32.mrf.mxu0
        %v1260 = vadd.f32 0.0, %v1259
        %1261 = vdwg.mxu0
        %v1262 = vadd.f32 %v1229, %v1251
        %v1263 = vadd.f32 %v1230, %v1254
        %v1264 = vadd.f32 %v1231, %v1257
        %v1265 = vadd.f32 %v1232, %v1260
        %s1266 = sadd.s32 %s242, 3
        %s1267 = smul.u32 %s1266, 32
        %s1268 = scalar_lea.vmem %s207, %s1267
        %v1269 = vld [vmem:[%s1268] sm:$0xff]
        %v1270 = vld [vmem:[%s1268 + $0x8] sm:$0xff]
        %v1271 = vld [vmem:[%s1268 + $0x10] sm:$0xff]
        %v1272 = vld [vmem:[%s1268 + $0x18] sm:$0x3f]
        %v1274 = vsel %vm254, %v1269, 0
        %v1277 = vsel %vm254, %v1270, 0
        %v1280 = vsel %vm254, %v1271, 0
        %v1283 = vsel %vm254, %v1272, 0
        %1285 = vmatpush.msra.mxu0 0.0
        %1286 = vmatpush.msra.mxu0 0.0
        %1287 = vmatpush.msra.mxu0 0.0
        %1288 = vmatpush.msra.mxu0 0.0
        %1289 = vmatpush.msra.mxu0 0.0
        %1290 = vmatpush.msra.mxu0 0.0
        %1291 = vmatpush.msra.mxu0 0.0
        %1292 = vmatpush.msra.mxu0 0.0
        %1293 = vmatpush.msra.mxu0 0.0
        %1294 = vmatpush.msra.mxu0 0.0
        %1295 = vmatpush.msra.mxu0 0.0
        %1296 = vmatpush.msra.mxu0 0.0
        %1297 = vmatpush.msra.mxu0 0.0
        %1298 = vmatpush.msra.mxu0 0.0
        %1299 = vmatpush.msra.mxu0 0.0
        %1300 = vmatpush.msra.mxu0 %v576
        %1301 = vmatmul.f32.gmra.mxu0 %v1274
        %v1302 = vpop.f32.mrf.mxu0
        %v1303 = vadd.f32 0.0, %v1302
        %1304 = vmatmul.f32.gmra.mxu0 %v1277
        %v1305 = vpop.f32.mrf.mxu0
        %v1306 = vadd.f32 0.0, %v1305
        %1307 = vmatmul.f32.gmra.mxu0 %v1280
        %v1308 = vpop.f32.mrf.mxu0
        %v1309 = vadd.f32 0.0, %v1308
        %1310 = vmatmul.f32.gmra.mxu0 %v1283
        %v1311 = vpop.f32.mrf.mxu0
        %v1312 = vadd.f32 0.0, %v1311
        %1313 = vdwg.mxu0
        %v1314 = vadd.f32 %v1262, %v1303
        %v1315 = vadd.f32 %v1263, %v1306
        %v1316 = vadd.f32 %v1264, %v1309
        %v1317 = vadd.f32 %v1265, %v1312
        %s1318 = scalar_lea.vmem %s212, %s1267
        %v1319 = vld [vmem:[%s1318] sm:$0xff]
        %v1320 = vld [vmem:[%s1318 + $0x8] sm:$0xff]
        %v1321 = vld [vmem:[%s1318 + $0x10] sm:$0xff]
        %v1322 = vld [vmem:[%s1318 + $0x18] sm:$0x3f]
        %v1324 = vsel %vm254, %v1319, 0
        %v1327 = vsel %vm254, %v1320, 0
        %v1330 = vsel %vm254, %v1321, 0
        %v1333 = vsel %vm254, %v1322, 0
        %1335 = vmatpush.msra.mxu0 0.0
        %1336 = vmatpush.msra.mxu0 0.0
        %1337 = vmatpush.msra.mxu0 0.0
        %1338 = vmatpush.msra.mxu0 0.0
        %1339 = vmatpush.msra.mxu0 0.0
        %1340 = vmatpush.msra.mxu0 0.0
        %1341 = vmatpush.msra.mxu0 0.0
        %1342 = vmatpush.msra.mxu0 0.0
        %1343 = vmatpush.msra.mxu0 0.0
        %1344 = vmatpush.msra.mxu0 0.0
        %1345 = vmatpush.msra.mxu0 0.0
        %1346 = vmatpush.msra.mxu0 0.0
        %1347 = vmatpush.msra.mxu0 0.0
        %1348 = vmatpush.msra.mxu0 0.0
        %1349 = vmatpush.msra.mxu0 0.0
        %1350 = vmatpush.msra.mxu0 %v629
        %1351 = vmatmul.f32.gmra.mxu0 %v1324
        %v1352 = vpop.f32.mrf.mxu0
        %v1353 = vadd.f32 0.0, %v1352
        %1354 = vmatmul.f32.gmra.mxu0 %v1327
        %v1355 = vpop.f32.mrf.mxu0
        %v1356 = vadd.f32 0.0, %v1355
        %1357 = vmatmul.f32.gmra.mxu0 %v1330
        %v1358 = vpop.f32.mrf.mxu0
        %v1359 = vadd.f32 0.0, %v1358
        %1360 = vmatmul.f32.gmra.mxu0 %v1333
        %v1361 = vpop.f32.mrf.mxu0
        %v1362 = vadd.f32 0.0, %v1361
        %1363 = vdwg.mxu0
        %v1364 = vadd.f32 %v1314, %v1353
        %v1365 = vadd.f32 %v1315, %v1356
        %v1366 = vadd.f32 %v1316, %v1359
        %v1367 = vadd.f32 %v1317, %v1362
        %v1368 = vld [vmem:[%s1268 + $0x1] sm:$0xff]
        %v1369 = vld [vmem:[%s1268 + $0x9] sm:$0xff]
        %v1370 = vld [vmem:[%s1268 + $0x11] sm:$0xff]
        %v1371 = vld [vmem:[%s1268 + $0x19] sm:$0x3f]
        %v1373 = vsel %vm254, %v1368, 0
        %v1376 = vsel %vm254, %v1369, 0
        %v1379 = vsel %vm254, %v1370, 0
        %v1382 = vsel %vm254, %v1371, 0
        %1384 = vmatpush.msra.mxu0 0.0
        %1385 = vmatpush.msra.mxu0 0.0
        %1386 = vmatpush.msra.mxu0 0.0
        %1387 = vmatpush.msra.mxu0 0.0
        %1388 = vmatpush.msra.mxu0 0.0
        %1389 = vmatpush.msra.mxu0 0.0
        %1390 = vmatpush.msra.mxu0 0.0
        %1391 = vmatpush.msra.mxu0 0.0
        %1392 = vmatpush.msra.mxu0 0.0
        %1393 = vmatpush.msra.mxu0 0.0
        %1394 = vmatpush.msra.mxu0 0.0
        %1395 = vmatpush.msra.mxu0 0.0
        %1396 = vmatpush.msra.mxu0 0.0
        %1397 = vmatpush.msra.mxu0 0.0
        %1398 = vmatpush.msra.mxu0 0.0
        %1399 = vmatpush.msra.mxu0 %v681
        %1400 = vmatmul.f32.gmra.mxu0 %v1373
        %v1401 = vpop.f32.mrf.mxu0
        %v1402 = vadd.f32 0.0, %v1401
        %1403 = vmatmul.f32.gmra.mxu0 %v1376
        %v1404 = vpop.f32.mrf.mxu0
        %v1405 = vadd.f32 0.0, %v1404
        %1406 = vmatmul.f32.gmra.mxu0 %v1379
        %v1407 = vpop.f32.mrf.mxu0
        %v1408 = vadd.f32 0.0, %v1407
        %1409 = vmatmul.f32.gmra.mxu0 %v1382
        %v1410 = vpop.f32.mrf.mxu0
        %v1411 = vadd.f32 0.0, %v1410
        %1412 = vdwg.mxu0
        %v1413 = vadd.f32 %v1364, %v1402
        %v1414 = vadd.f32 %v1365, %v1405
        %v1415 = vadd.f32 %v1366, %v1408
        %v1416 = vadd.f32 %v1367, %v1411
        %v1417 = vadd.f32 %v1413, %v717
        %v1418 = vadd.f32 %v1414, %v717
        %v1419 = vadd.f32 %v1415, %v717
        %v1420 = vadd.f32 %v1416, %v717
        %v1421 = vmax.f32 %v1417, 0.0
        %v1422 = vmax.f32 %v1418, 0.0
        %v1423 = vmax.f32 %v1419, 0.0
        %v1424 = vmax.f32 %v1420, 0.0
        %1425 = vmatpush.msra.mxu0 0.0
        %1426 = vmatpush.msra.mxu0 0.0
        %1427 = vmatpush.msra.mxu0 0.0
        %1428 = vmatpush.msra.mxu0 0.0
        %1429 = vmatpush.msra.mxu0 0.0
        %1430 = vmatpush.msra.mxu0 0.0
        %1431 = vmatpush.msra.mxu0 0.0
        %1432 = vmatpush.msra.mxu0 0.0
        %1433 = vmatpush.msra.mxu0 0.0
        %1434 = vmatpush.msra.mxu0 0.0
        %1435 = vmatpush.msra.mxu0 0.0
        %1436 = vmatpush.msra.mxu0 0.0
        %1437 = vmatpush.msra.mxu0 0.0
        %1438 = vmatpush.msra.mxu0 0.0
        %1439 = vmatpush.msra.mxu0 0.0
        %1440 = vmatpush.msra.mxu0 %v269
        %1441 = vmatmul.f32.gmra.mxu0 %v509
        %v1442 = vpop.f32.mrf.mxu0
        %v1443 = vadd.f32 0.0, %v1442
        %1444 = vmatmul.f32.gmra.mxu0 %v512
        %v1445 = vpop.f32.mrf.mxu0
        %v1446 = vadd.f32 0.0, %v1445
        %1447 = vmatmul.f32.gmra.mxu0 %v515
        %v1448 = vpop.f32.mrf.mxu0
        %v1449 = vadd.f32 0.0, %v1448
        %1450 = vmatmul.f32.gmra.mxu0 %v518
        %v1451 = vpop.f32.mrf.mxu0
        %v1452 = vadd.f32 0.0, %v1451
        %1453 = vdwg.mxu0
        %1454 = vmatpush.msra.mxu0 0.0
        %1455 = vmatpush.msra.mxu0 0.0
        %1456 = vmatpush.msra.mxu0 0.0
        %1457 = vmatpush.msra.mxu0 0.0
        %1458 = vmatpush.msra.mxu0 0.0
        %1459 = vmatpush.msra.mxu0 0.0
        %1460 = vmatpush.msra.mxu0 0.0
        %1461 = vmatpush.msra.mxu0 0.0
        %1462 = vmatpush.msra.mxu0 0.0
        %1463 = vmatpush.msra.mxu0 0.0
        %1464 = vmatpush.msra.mxu0 0.0
        %1465 = vmatpush.msra.mxu0 0.0
        %1466 = vmatpush.msra.mxu0 0.0
        %1467 = vmatpush.msra.mxu0 0.0
        %1468 = vmatpush.msra.mxu0 0.0
        %1469 = vmatpush.msra.mxu0 %v313
        %1470 = vmatmul.f32.gmra.mxu0 %v457
        %v1471 = vpop.f32.mrf.mxu0
        %v1472 = vadd.f32 %v1443, %v1471
        %1473 = vmatmul.f32.gmra.mxu0 %v460
        %v1474 = vpop.f32.mrf.mxu0
        %v1475 = vadd.f32 %v1446, %v1474
        %1476 = vmatmul.f32.gmra.mxu0 %v463
        %v1477 = vpop.f32.mrf.mxu0
        %v1478 = vadd.f32 %v1449, %v1477
        %1479 = vmatmul.f32.gmra.mxu0 %v466
        %v1480 = vpop.f32.mrf.mxu0
        %v1481 = vadd.f32 %v1452, %v1480
        %1482 = vdwg.mxu0
        %1483 = vmatpush.msra.mxu0 0.0
        %1484 = vmatpush.msra.mxu0 0.0
        %1485 = vmatpush.msra.mxu0 0.0
        %1486 = vmatpush.msra.mxu0 0.0
        %1487 = vmatpush.msra.mxu0 0.0
        %1488 = vmatpush.msra.mxu0 0.0
        %1489 = vmatpush.msra.mxu0 0.0
        %1490 = vmatpush.msra.mxu0 0.0
        %1491 = vmatpush.msra.mxu0 0.0
        %1492 = vmatpush.msra.mxu0 0.0
        %1493 = vmatpush.msra.mxu0 0.0
        %1494 = vmatpush.msra.mxu0 0.0
        %1495 = vmatpush.msra.mxu0 0.0
        %1496 = vmatpush.msra.mxu0 0.0
        %1497 = vmatpush.msra.mxu0 0.0
        %1498 = vmatpush.msra.mxu0 %v361
        %1499 = vmatmul.f32.gmra.mxu0 %v905
        %v1500 = vpop.f32.mrf.mxu0
        %v1501 = vadd.f32 0.0, %v1500
        %1502 = vmatmul.f32.gmra.mxu0 %v908
        %v1503 = vpop.f32.mrf.mxu0
        %v1504 = vadd.f32 0.0, %v1503
        %1505 = vmatmul.f32.gmra.mxu0 %v911
        %v1506 = vpop.f32.mrf.mxu0
        %v1507 = vadd.f32 0.0, %v1506
        %1508 = vmatmul.f32.gmra.mxu0 %v914
        %v1509 = vpop.f32.mrf.mxu0
        %v1510 = vadd.f32 0.0, %v1509
        %1511 = vdwg.mxu0
        %v1512 = vadd.f32 %v1472, %v1501
        %v1513 = vadd.f32 %v1475, %v1504
        %v1514 = vadd.f32 %v1478, %v1507
        %v1515 = vadd.f32 %v1481, %v1510
        %1516 = vmatpush.msra.mxu0 0.0
        %1517 = vmatpush.msra.mxu0 0.0
        %1518 = vmatpush.msra.mxu0 0.0
        %1519 = vmatpush.msra.mxu0 0.0
        %1520 = vmatpush.msra.mxu0 0.0
        %1521 = vmatpush.msra.mxu0 0.0
        %1522 = vmatpush.msra.mxu0 0.0
        %1523 = vmatpush.msra.mxu0 0.0
        %1524 = vmatpush.msra.mxu0 0.0
        %1525 = vmatpush.msra.mxu0 0.0
        %1526 = vmatpush.msra.mxu0 0.0
        %1527 = vmatpush.msra.mxu0 0.0
        %1528 = vmatpush.msra.mxu0 0.0
        %1529 = vmatpush.msra.mxu0 0.0
        %1530 = vmatpush.msra.mxu0 0.0
        %1531 = vmatpush.msra.mxu0 %v416
        %1532 = vmatmul.f32.gmra.mxu0 %v617
        %v1533 = vpop.f32.mrf.mxu0
        %v1534 = vadd.f32 0.0, %v1533
        %1535 = vmatmul.f32.gmra.mxu0 %v620
        %v1536 = vpop.f32.mrf.mxu0
        %v1537 = vadd.f32 0.0, %v1536
        %1538 = vmatmul.f32.gmra.mxu0 %v623
        %v1539 = vpop.f32.mrf.mxu0
        %v1540 = vadd.f32 0.0, %v1539
        %1541 = vmatmul.f32.gmra.mxu0 %v626
        %v1542 = vpop.f32.mrf.mxu0
        %v1543 = vadd.f32 0.0, %v1542
        %1544 = vdwg.mxu0
        %v1545 = vadd.f32 %v1512, %v1534
        %v1546 = vadd.f32 %v1513, %v1537
        %v1547 = vadd.f32 %v1514, %v1540
        %v1548 = vadd.f32 %v1515, %v1543
        %1549 = vmatpush.msra.mxu0 0.0
        %1550 = vmatpush.msra.mxu0 0.0
        %1551 = vmatpush.msra.mxu0 0.0
        %1552 = vmatpush.msra.mxu0 0.0
        %1553 = vmatpush.msra.mxu0 0.0
        %1554 = vmatpush.msra.mxu0 0.0
        %1555 = vmatpush.msra.mxu0 0.0
        %1556 = vmatpush.msra.mxu0 0.0
        %1557 = vmatpush.msra.mxu0 0.0
        %1558 = vmatpush.msra.mxu0 0.0
        %1559 = vmatpush.msra.mxu0 0.0
        %1560 = vmatpush.msra.mxu0 0.0
        %1561 = vmatpush.msra.mxu0 0.0
        %1562 = vmatpush.msra.mxu0 0.0
        %1563 = vmatpush.msra.mxu0 0.0
        %1564 = vmatpush.msra.mxu0 %v469
        %1565 = vmatmul.f32.gmra.mxu0 %v669
        %v1566 = vpop.f32.mrf.mxu0
        %v1567 = vadd.f32 0.0, %v1566
        %1568 = vmatmul.f32.gmra.mxu0 %v672
        %v1569 = vpop.f32.mrf.mxu0
        %v1570 = vadd.f32 0.0, %v1569
        %1571 = vmatmul.f32.gmra.mxu0 %v675
        %v1572 = vpop.f32.mrf.mxu0
        %v1573 = vadd.f32 0.0, %v1572
        %1574 = vmatmul.f32.gmra.mxu0 %v678
        %v1575 = vpop.f32.mrf.mxu0
        %v1576 = vadd.f32 0.0, %v1575
        %1577 = vdwg.mxu0
        %v1578 = vadd.f32 %v1545, %v1567
        %v1579 = vadd.f32 %v1546, %v1570
        %v1580 = vadd.f32 %v1547, %v1573
        %v1581 = vadd.f32 %v1548, %v1576
        %1582 = vmatpush.msra.mxu0 0.0
        %1583 = vmatpush.msra.mxu0 0.0
        %1584 = vmatpush.msra.mxu0 0.0
        %1585 = vmatpush.msra.mxu0 0.0
        %1586 = vmatpush.msra.mxu0 0.0
        %1587 = vmatpush.msra.mxu0 0.0
        %1588 = vmatpush.msra.mxu0 0.0
        %1589 = vmatpush.msra.mxu0 0.0
        %1590 = vmatpush.msra.mxu0 0.0
        %1591 = vmatpush.msra.mxu0 0.0
        %1592 = vmatpush.msra.mxu0 0.0
        %1593 = vmatpush.msra.mxu0 0.0
        %1594 = vmatpush.msra.mxu0 0.0
        %1595 = vmatpush.msra.mxu0 0.0
        %1596 = vmatpush.msra.mxu0 0.0
        %1597 = vmatpush.msra.mxu0 %v521
        %1598 = vmatmul.f32.gmra.mxu0 %v1020
        %v1599 = vpop.f32.mrf.mxu0
        %v1600 = vadd.f32 0.0, %v1599
        %1601 = vmatmul.f32.gmra.mxu0 %v1023
        %v1602 = vpop.f32.mrf.mxu0
        %v1603 = vadd.f32 0.0, %v1602
        %1604 = vmatmul.f32.gmra.mxu0 %v1026
        %v1605 = vpop.f32.mrf.mxu0
        %v1606 = vadd.f32 0.0, %v1605
        %1607 = vmatmul.f32.gmra.mxu0 %v1029
        %v1608 = vpop.f32.mrf.mxu0
        %v1609 = vadd.f32 0.0, %v1608
        %1610 = vdwg.mxu0
        %v1611 = vadd.f32 %v1578, %v1600
        %v1612 = vadd.f32 %v1579, %v1603
        %v1613 = vadd.f32 %v1580, %v1606
        %v1614 = vadd.f32 %v1581, %v1609
        %1615 = vmatpush.msra.mxu0 0.0
        %1616 = vmatpush.msra.mxu0 0.0
        %1617 = vmatpush.msra.mxu0 0.0
        %1618 = vmatpush.msra.mxu0 0.0
        %1619 = vmatpush.msra.mxu0 0.0
        %1620 = vmatpush.msra.mxu0 0.0
        %1621 = vmatpush.msra.mxu0 0.0
        %1622 = vmatpush.msra.mxu0 0.0
        %1623 = vmatpush.msra.mxu0 0.0
        %1624 = vmatpush.msra.mxu0 0.0
        %1625 = vmatpush.msra.mxu0 0.0
        %1626 = vmatpush.msra.mxu0 0.0
        %1627 = vmatpush.msra.mxu0 0.0
        %1628 = vmatpush.msra.mxu0 0.0
        %1629 = vmatpush.msra.mxu0 0.0
        %1630 = vmatpush.msra.mxu0 %v576
        %1631 = vmatmul.f32.gmra.mxu0 %v1324
        %v1632 = vpop.f32.mrf.mxu0
        %v1633 = vadd.f32 0.0, %v1632
        %1634 = vmatmul.f32.gmra.mxu0 %v1327
        %v1635 = vpop.f32.mrf.mxu0
        %v1636 = vadd.f32 0.0, %v1635
        %1637 = vmatmul.f32.gmra.mxu0 %v1330
        %v1638 = vpop.f32.mrf.mxu0
        %v1639 = vadd.f32 0.0, %v1638
        %1640 = vmatmul.f32.gmra.mxu0 %v1333
        %v1641 = vpop.f32.mrf.mxu0
        %v1642 = vadd.f32 0.0, %v1641
        %1643 = vdwg.mxu0
        %v1644 = vadd.f32 %v1611, %v1633
        %v1645 = vadd.f32 %v1612, %v1636
        %v1646 = vadd.f32 %v1613, %v1639
        %v1647 = vadd.f32 %v1614, %v1642
        %1648 = vmatpush.msra.mxu0 0.0
        %1649 = vmatpush.msra.mxu0 0.0
        %1650 = vmatpush.msra.mxu0 0.0
        %1651 = vmatpush.msra.mxu0 0.0
        %1652 = vmatpush.msra.mxu0 0.0
        %1653 = vmatpush.msra.mxu0 0.0
        %1654 = vmatpush.msra.mxu0 0.0
        %1655 = vmatpush.msra.mxu0 0.0
        %1656 = vmatpush.msra.mxu0 0.0
        %1657 = vmatpush.msra.mxu0 0.0
        %1658 = vmatpush.msra.mxu0 0.0
        %1659 = vmatpush.msra.mxu0 0.0
        %1660 = vmatpush.msra.mxu0 0.0
        %1661 = vmatpush.msra.mxu0 0.0
        %1662 = vmatpush.msra.mxu0 0.0
        %1663 = vmatpush.msra.mxu0 %v629
        %1664 = vmatmul.f32.gmra.mxu0 %v1373
        %v1665 = vpop.f32.mrf.mxu0
        %v1666 = vadd.f32 0.0, %v1665
        %1667 = vmatmul.f32.gmra.mxu0 %v1376
        %v1668 = vpop.f32.mrf.mxu0
        %v1669 = vadd.f32 0.0, %v1668
        %1670 = vmatmul.f32.gmra.mxu0 %v1379
        %v1671 = vpop.f32.mrf.mxu0
        %v1672 = vadd.f32 0.0, %v1671
        %1673 = vmatmul.f32.gmra.mxu0 %v1382
        %v1674 = vpop.f32.mrf.mxu0
        %v1675 = vadd.f32 0.0, %v1674
        %1676 = vdwg.mxu0
        %v1677 = vadd.f32 %v1644, %v1666
        %v1678 = vadd.f32 %v1645, %v1669
        %v1679 = vadd.f32 %v1646, %v1672
        %v1680 = vadd.f32 %v1647, %v1675
        %v1681 = vld [vmem:[%s1318 + $0x1] sm:$0xff]
        %v1682 = vld [vmem:[%s1318 + $0x9] sm:$0xff]
        %v1683 = vld [vmem:[%s1318 + $0x11] sm:$0xff]
        %v1684 = vld [vmem:[%s1318 + $0x19] sm:$0x3f]
        %v1686 = vsel %vm254, %v1681, 0
        %v1689 = vsel %vm254, %v1682, 0
        %v1692 = vsel %vm254, %v1683, 0
        %v1695 = vsel %vm254, %v1684, 0
        %1697 = vmatpush.msra.mxu0 0.0
        %1698 = vmatpush.msra.mxu0 0.0
        %1699 = vmatpush.msra.mxu0 0.0
        %1700 = vmatpush.msra.mxu0 0.0
        %1701 = vmatpush.msra.mxu0 0.0
        %1702 = vmatpush.msra.mxu0 0.0
        %1703 = vmatpush.msra.mxu0 0.0
        %1704 = vmatpush.msra.mxu0 0.0
        %1705 = vmatpush.msra.mxu0 0.0
        %1706 = vmatpush.msra.mxu0 0.0
        %1707 = vmatpush.msra.mxu0 0.0
        %1708 = vmatpush.msra.mxu0 0.0
        %1709 = vmatpush.msra.mxu0 0.0
        %1710 = vmatpush.msra.mxu0 0.0
        %1711 = vmatpush.msra.mxu0 0.0
        %1712 = vmatpush.msra.mxu0 %v681
        %1713 = vmatmul.f32.gmra.mxu0 %v1686
        %v1714 = vpop.f32.mrf.mxu0
        %v1715 = vadd.f32 0.0, %v1714
        %1716 = vmatmul.f32.gmra.mxu0 %v1689
        %v1717 = vpop.f32.mrf.mxu0
        %v1718 = vadd.f32 0.0, %v1717
        %1719 = vmatmul.f32.gmra.mxu0 %v1692
        %v1720 = vpop.f32.mrf.mxu0
        %v1721 = vadd.f32 0.0, %v1720
        %1722 = vmatmul.f32.gmra.mxu0 %v1695
        %v1723 = vpop.f32.mrf.mxu0
        %v1724 = vadd.f32 0.0, %v1723
        %1725 = vdwg.mxu0
        %v1726 = vadd.f32 %v1677, %v1715
        %v1727 = vadd.f32 %v1678, %v1718
        %v1728 = vadd.f32 %v1679, %v1721
        %v1729 = vadd.f32 %v1680, %v1724
        %v1730 = vadd.f32 %v1726, %v717
        %v1731 = vadd.f32 %v1727, %v717
        %v1732 = vadd.f32 %v1728, %v717
        %v1733 = vadd.f32 %v1729, %v717
        %v1734 = vmax.f32 %v1730, 0.0
        %v1735 = vmax.f32 %v1731, 0.0
        %v1736 = vmax.f32 %v1732, 0.0
        %v1737 = vmax.f32 %v1733, 0.0
        %v1738 = vmax.f32 %v1421, %v1734
        %v1739 = vmax.f32 %v1422, %v1735
        %v1740 = vmax.f32 %v1423, %v1736
        %v1741 = vmax.f32 %v1424, %v1737
        %v1742 = vmax.f32 %v1072, %v1738
        %v1743 = vmax.f32 %v1073, %v1739
        %v1744 = vmax.f32 %v1074, %v1740
        %v1745 = vmax.f32 %v1075, %v1741
        %s1746 = smul.u32 %s237, 32
        %s1747 = scalar_lea.vmem %s217, %s1746
        %vm1748 = vcmask 130048
        %1749 = vst.msk [vmem:[%s1747] sm:$0xff] %vm1748, %v1742
        %1750 = vst.msk [vmem:[%s1747 + $0x8] sm:$0xff] %vm1748, %v1743
        %1751 = vst.msk [vmem:[%s1747 + $0x10] sm:$0xff] %vm1748, %v1744
        %vm1752 = vcmask 128000
        %1753 = vst.msk [vmem:[%s1747 + $0x18] sm:$0x3f] %vm1752, %v1745
      $region41: #{simple_cnn_forward.3} parent=35 // loop_footer
        %s241 = sadd.s32 1, %s237
      $region42: #{simple_cnn_forward.3} parent=35 // loop_footer_branch
        %236 = sbr.rel target = $region38
      $region43: #{simple_cnn_forward.3} parent=35 // loop_exit
        _
      %p1754 = scmp.lt.s32.totalorder %s15, 1
      %s1755 = scalar_select %p1754, %s15, 1
      %s1756 = smul.addr %s1755, 120
      %s1757 = smul.addr %s1756, 8
      %s1758 = scalar_lea.vmem %s4, %s1757
      // Predicated region
      $region44: #{simple_cnn_forward.3} parent=35 // pred_check
        %p1759 = pneg %p127
      $region45: #{simple_cnn_forward.3} parent=35 // pred_check_branch
        %1761 = sbr.rel (%p1759) target = $region47
      $region46: #{simple_cnn_forward.3} parent=35 // pred_region
        _
      $region47: #{simple_cnn_forward.3} parent=35 // pred_fallthru
        _
    $region36: #{simple_cnn_forward.3} parent=5 // pred_fallthru
      _
    %p1762 = scmp.le.s32.totalorder 2, %s10
    // Predicated region
    $region48: #{simple_cnn_forward.3} parent=5 // pred_check
      %p1763 = pneg %p1762
    $region49: #{simple_cnn_forward.3} parent=5 // pred_check_branch
      %1765 = sbr.rel (%p1763) target = $region51
    $region50: #{simple_cnn_forward.3} parent=5 // pred_region
      %s1766 = ssub.s32 %s10, 2
      // Predicated region
      $region52: #{simple_cnn_forward.3} parent=50 // pred_check
        %p1767 = pneg %p133
      $region53: #{simple_cnn_forward.3} parent=50 // pred_check_branch
        %1769 = sbr.rel (%p1767) target = $region55
      $region54: #{simple_cnn_forward.3} parent=50 // pred_region
        %p1770 = scmp.lt.s32.totalorder %s16, 1
        %s1771 = scalar_select %p1770, %s16, 1
        %s1772 = smul.addr %s1771, 120
        %s1773 = smul.addr %s1772, 8
        %s1774 = scalar_lea.vmem %s4, %s1773
      $region55: #{simple_cnn_forward.3} parent=50 // pred_fallthru
        _
    $region51: #{simple_cnn_forward.3} parent=5 // pred_fallthru
      _
  $region6: #{simple_cnn_forward.3} parent=0 // loop_footer
    %s14 = sadd.s32 1, %s10
  $region7: #{simple_cnn_forward.3} parent=0 // loop_footer_branch
    %9 = sbr.rel target = $region3
  $region8: #{simple_cnn_forward.3} parent=0 // loop_exit
    _

// kernel: simple_cnn_forward.4
$region0: #{simple_cnn_forward.4}
  #allocation0 [shape = 'u32[]', space=smem, size = 0x4, offset = 0x4, fixed_abs, tag = 'smem constant byte address 0x4 - core index']
  #allocation1 [shape = 'u32[72,128]{1,0:T(1,128)}', space=vmem, size = 0x9000, scoped, tag = 'internal scratch']
  %s0 = inlined_call_operand.vmem [shape: f32[2,32,16,16], index: 0, kind: input, shape index: {}]
  %s1 = inlined_call_operand.vmem [shape: f32[2,32,16,16], index: 1, kind: input, shape index: {}]
  %s2 = inlined_call_operand.vmem [shape: f32[9,16,32], index: 2, kind: input, shape index: {}]
  %s3 = inlined_call_operand.vmem [shape: f32[1,32], index: 3, kind: input, shape index: {}]
  %s4 = inlined_call_operand.vmem [shape: f32[2,15,15,32], index: 4, kind: output, shape index: {}]
  %s5 = sld [smem:[#allocation0]]
  $region56: #{simple_cnn_forward.4} parent=0
    _
  %s7 = ssub.s32 1, %s5
  %s8 = scalar_select 0, %s7, %s5
  loop: start=0, step=1, limit=4
  $region2: #{simple_cnn_forward.4} parent=0 // loop_pre_header
    _
  $region3: #{simple_cnn_forward.4} parent=0 // loop_header
    %s10 = sphi 0, %s14
    %p11 = scmp.ge.s32.totalorder %s10, 4
    %s20 = sphi 0, %s22
    %s23 = sphi 0, %s20
    %s24 = sphi 0, %s23
    %s40 = sphi 0, %s24
    %s46 = sphi 0, %s48
    %s49 = sphi 0, %s46
    %s50 = sphi 0, %s49
    %s66 = sphi 0, %s50
    %s70 = sphi 0, %s70
    %s72 = sphi 0, %s70
    %s73 = sphi 0, %s72
    %s87 = sphi 0, %s73
    %s91 = sphi 0, %s91
    %s93 = sphi 0, %s91
    %s94 = sphi 0, %s93
    %s108 = sphi 0, %s94
    %s114 = sphi 0, %s116
    %s117 = sphi 0, %s114
    %s118 = sphi 0, %s117
    %s134 = sphi 0, %s118
  $region4: #{simple_cnn_forward.4} parent=0 // loop_header_branch
    %13 = sbr.rel (%p11) target = $region8
  $region5: #{simple_cnn_forward.4} parent=0 // loop_body
    %s15 = ssub.s32 %s10, 1
    %s16 = ssub.s32 %s10, 2
    %s17 = sadd.s32 %s10, 1
    %s18 = ssub.s32 %s10, %s17
    %p19 = scmp.eq.s32.totalorder %s18, 0
    %s21 = sadd.s32 %s20, 1
    %s22 = scalar_select %p19, %s20, %s21
    %p25 = pneg %p19
    %p26 = scmp.eq.s32.totalorder %s10, 1
    %p27 = por %p25, %p26
    %p28 = scmp.ne.s32.totalorder %s20, %s23
    %p29 = scmp.eq.s32.totalorder %s10, 0
    %p30 = por %p28, %p29
    %p31 = scmp.ne.s32.totalorder %s20, %s23
    %p32 = scmp.eq.s32.totalorder %s15, 1
    %p33 = por %p31, %p32
    %p34 = scmp.ne.s32.totalorder %s23, %s24
    %p35 = scmp.eq.s32.totalorder %s15, 0
    %p36 = por %p34, %p35
    %p37 = scmp.ne.s32.totalorder %s23, %s24
    %p38 = scmp.eq.s32.totalorder %s16, 1
    %p39 = por %p37, %p38
    %p41 = scmp.ne.s32.totalorder %s24, %s40
    %p42 = scmp.eq.s32.totalorder %s16, 0
    %p43 = por %p41, %p42
    %s44 = ssub.s32 %s10, %s17
    %p45 = scmp.eq.s32.totalorder %s44, 0
    %s47 = sadd.s32 %s46, 1
    %s48 = scalar_select %p45, %s46, %s47
    %p51 = pneg %p45
    %p52 = scmp.eq.s32.totalorder %s10, 1
    %p53 = por %p51, %p52
    %p54 = scmp.ne.s32.totalorder %s46, %s49
    %p55 = scmp.eq.s32.totalorder %s10, 0
    %p56 = por %p54, %p55
    %p57 = scmp.ne.s32.totalorder %s46, %s49
    %p58 = scmp.eq.s32.totalorder %s15, 1
    %p59 = por %p57, %p58
    %p60 = scmp.ne.s32.totalorder %s49, %s50
    %p61 = scmp.eq.s32.totalorder %s15, 0
    %p62 = por %p60, %p61
    %p63 = scmp.ne.s32.totalorder %s49, %s50
    %p64 = scmp.eq.s32.totalorder %s16, 1
    %p65 = por %p63, %p64
    %p67 = scmp.ne.s32.totalorder %s50, %s66
    %p68 = scmp.eq.s32.totalorder %s16, 0
    %p69 = por %p67, %p68
    %s71 = sadd.s32 %s70, 1
    %p74 = scmp.eq.s32.totalorder %s10, 1
    %p75 = scmp.ne.s32.totalorder %s70, %s72
    %p76 = scmp.eq.s32.totalorder %s10, 0
    %p77 = por %p75, %p76
    %p78 = scmp.ne.s32.totalorder %s70, %s72
    %p79 = scmp.eq.s32.totalorder %s15, 1
    %p80 = por %p78, %p79
    %p81 = scmp.ne.s32.totalorder %s72, %s73
    %p82 = scmp.eq.s32.totalorder %s15, 0
    %p83 = por %p81, %p82
    %p84 = scmp.ne.s32.totalorder %s72, %s73
    %p85 = scmp.eq.s32.totalorder %s16, 1
    %p86 = por %p84, %p85
    %p88 = scmp.ne.s32.totalorder %s73, %s87
    %p89 = scmp.eq.s32.totalorder %s16, 0
    %p90 = por %p88, %p89
    %s92 = sadd.s32 %s91, 1
    %p95 = scmp.eq.s32.totalorder %s10, 1
    %p96 = scmp.ne.s32.totalorder %s91, %s93
    %p97 = scmp.eq.s32.totalorder %s10, 0
    %p98 = por %p96, %p97
    %p99 = scmp.ne.s32.totalorder %s91, %s93
    %p100 = scmp.eq.s32.totalorder %s15, 1
    %p101 = por %p99, %p100
    %p102 = scmp.ne.s32.totalorder %s93, %s94
    %p103 = scmp.eq.s32.totalorder %s15, 0
    %p104 = por %p102, %p103
    %p105 = scmp.ne.s32.totalorder %s93, %s94
    %p106 = scmp.eq.s32.totalorder %s16, 1
    %p107 = por %p105, %p106
    %p109 = scmp.ne.s32.totalorder %s94, %s108
    %p110 = scmp.eq.s32.totalorder %s16, 0
    %p111 = por %p109, %p110
    %s112 = ssub.s32 %s10, %s17
    %p113 = scmp.eq.s32.totalorder %s112, 0
    %s115 = sadd.s32 %s114, 1
    %s116 = scalar_select %p113, %s114, %s115
    %p119 = pneg %p113
    %p120 = scmp.eq.s32.totalorder %s10, 1
    %p121 = por %p119, %p120
    %p122 = scmp.ne.s32.totalorder %s114, %s117
    %p123 = scmp.eq.s32.totalorder %s10, 0
    %p124 = por %p122, %p123
    %p125 = scmp.ne.s32.totalorder %s114, %s117
    %p126 = scmp.eq.s32.totalorder %s15, 1
    %p127 = por %p125, %p126
    %p128 = scmp.ne.s32.totalorder %s117, %s118
    %p129 = scmp.eq.s32.totalorder %s15, 0
    %p130 = por %p128, %p129
    %p131 = scmp.ne.s32.totalorder %s117, %s118
    %p132 = scmp.eq.s32.totalorder %s16, 1
    %p133 = por %p131, %p132
    %p135 = scmp.ne.s32.totalorder %s118, %s134
    %p136 = scmp.eq.s32.totalorder %s16, 0
    %p137 = por %p135, %p136
    %p138 = scmp.le.s32.totalorder 1, %s10
    %p139 = scmp.lt.s32.totalorder %s10, 3
    %p140 = pnand %p138, %p139
    %p141 = pneg %p140
    // Predicated region
    $region9: #{simple_cnn_forward.4} parent=5 // pred_check
      _
    $region10: #{simple_cnn_forward.4} parent=5 // pred_check_branch
      %143 = sbr.rel (%p140) target = $region12
    $region11: #{simple_cnn_forward.4} parent=5 // pred_region
      %s144 = ssub.s32 %s10, 1
      // Predicated region
      $region13: #{simple_cnn_forward.4} parent=11 // pred_check
        %p145 = pneg %p83
      $region14: #{simple_cnn_forward.4} parent=11 // pred_check_branch
        %147 = sbr.rel (%p145) target = $region16
      $region15: #{simple_cnn_forward.4} parent=11 // pred_region
        _
      $region16: #{simple_cnn_forward.4} parent=11 // pred_fallthru
        _
      // Predicated region
      $region17: #{simple_cnn_forward.4} parent=11 // pred_check
        %p148 = pneg %p104
      $region18: #{simple_cnn_forward.4} parent=11 // pred_check_branch
        %150 = sbr.rel (%p148) target = $region20
      $region19: #{simple_cnn_forward.4} parent=11 // pred_region
        _
      $region20: #{simple_cnn_forward.4} parent=11 // pred_fallthru
        _
    $region12: #{simple_cnn_forward.4} parent=5 // pred_fallthru
      _
    %p151 = scmp.lt.s32.totalorder %s10, 2
    // Predicated region
    $region21: #{simple_cnn_forward.4} parent=5 // pred_check
      %p152 = pneg %p151
    $region22: #{simple_cnn_forward.4} parent=5 // pred_check_branch
      %154 = sbr.rel (%p152) target = $region24
    $region23: #{simple_cnn_forward.4} parent=5 // pred_region
      // Predicated region
      $region25: #{simple_cnn_forward.4} parent=23 // pred_check
        %p155 = pneg %p30
      $region26: #{simple_cnn_forward.4} parent=23 // pred_check_branch
        %157 = sbr.rel (%p155) target = $region28
      $region27: #{simple_cnn_forward.4} parent=23 // pred_region
        %p158 = scmp.lt.s32.totalorder %s10, 1
        %s159 = scalar_select %p158, %s10, 1
        %s160 = smul.addr %s159, 64
        %s161 = smul.addr %s160, 8
        %s162 = scalar_lea.vmem %s0, %s161
      $region28: #{simple_cnn_forward.4} parent=23 // pred_fallthru
        _
      // Predicated region
      $region29: #{simple_cnn_forward.4} parent=23 // pred_check
        %p163 = pneg %p56
      $region30: #{simple_cnn_forward.4} parent=23 // pred_check_branch
        %165 = sbr.rel (%p163) target = $region32
      $region31: #{simple_cnn_forward.4} parent=23 // pred_region
        %p166 = scmp.lt.s32.totalorder %s10, 1
        %s167 = scalar_select %p166, %s10, 1
        %s168 = smul.addr %s167, 64
        %s169 = smul.addr %s168, 8
        %s170 = scalar_lea.vmem %s1, %s169
      $region32: #{simple_cnn_forward.4} parent=23 // pred_fallthru
        _
    $region24: #{simple_cnn_forward.4} parent=5 // pred_fallthru
      _
    %p171 = scmp.le.s32.totalorder 1, %s10
    %p172 = scmp.lt.s32.totalorder %s10, 3
    %p173 = pnand %p171, %p172
    %p174 = pneg %p173
    // Predicated region
    $region33: #{simple_cnn_forward.4} parent=5 // pred_check
      _
    $region34: #{simple_cnn_forward.4} parent=5 // pred_check_branch
      %176 = sbr.rel (%p173) target = $region36
    $region35: #{simple_cnn_forward.4} parent=5 // pred_region
      %s177 = ssub.s32 %s10, 1
      %p178 = scmp.lt.s32.totalorder %s15, 1
      %s179 = scalar_select %p178, %s15, 1
      %s180 = smul.addr %s179, 64
      %s181 = smul.addr %s180, 8
      %s182 = scalar_lea.vmem %s0, %s181
      %p183 = pneg %p36
      %p184 = pneg %p33
      %p185 = scmp.lt.s32.totalorder %s15, 1
      %s186 = scalar_select %p185, %s15, 1
      %s187 = smul.addr %s186, 64
      %s188 = smul.addr %s187, 8
      %s189 = scalar_lea.vmem %s1, %s188
      %p190 = pneg %p62
      %p191 = pneg %p59
      %p192 = pneg %p83
      %p193 = pneg %p80
      %p194 = pneg %p104
      %p195 = pneg %p101
      %p196 = pneg %p130
      %p197 = pneg %p127
      %p198 = scmp.lt.s32.totalorder %s15, 1
      %s199 = scalar_select %p198, %s15, 1
      %s200 = smul.addr %s199, 30
      %s201 = smul.addr %s200, 8
      %s202 = scalar_lea.vmem %s4, %s201
      %p203 = scmp.lt.s32.totalorder %s15, 1
      %s204 = scalar_select %p203, %s15, 1
      %s205 = smul.addr %s204, 64
      %s206 = smul.addr %s205, 8
      %s207 = scalar_lea.vmem %s0, %s206
      %p208 = scmp.lt.s32.totalorder %s15, 1
      %s209 = scalar_select %p208, %s15, 1
      %s210 = smul.addr %s209, 64
      %s211 = smul.addr %s210, 8
      %s212 = scalar_lea.vmem %s1, %s211
      %p213 = scmp.lt.s32.totalorder %s15, 1
      %s214 = scalar_select %p213, %s15, 1
      %s215 = smul.addr %s214, 30
      %s216 = smul.addr %s215, 8
      %s217 = scalar_lea.vmem %s4, %s216
      %v218 = vld [vmem:[%s3] sm:$0x1]
      %v219 = vld [vmem:[%s2] sm:$0xff]
      %v220 = vld [vmem:[%s2 + $0x8] sm:$0xff]
      %s221 = scalar_lea.vmem %s2, 16
      %v222 = vld [vmem:[%s221] sm:$0xff]
      %v223 = vld [vmem:[%s221 + $0x8] sm:$0xff]
      %s224 = scalar_lea.vmem %s2, 32
      %v225 = vld [vmem:[%s224] sm:$0xff]
      %v226 = vld [vmem:[%s224 + $0x8] sm:$0xff]
      %s227 = scalar_lea.vmem %s2, 48
      %v228 = vld [vmem:[%s227] sm:$0xff]
      %v229 = vld [vmem:[%s227 + $0x8] sm:$0xff]
      %s230 = scalar_lea.vmem %s2, 64
      %v231 = vld [vmem:[%s230] sm:$0xff]
      %v232 = vld [vmem:[%s230 + $0x8] sm:$0xff]
      %s233 = scalar_lea.vmem %s2, 80
      %v234 = vld [vmem:[%s233] sm:$0xff]
      %v235 = vld [vmem:[%s233 + $0x8] sm:$0xff]
      %s236 = scalar_lea.vmem %s2, 96
      %v237 = vld [vmem:[%s236] sm:$0xff]
      %v238 = vld [vmem:[%s236 + $0x8] sm:$0xff]
      %s239 = scalar_lea.vmem %s2, 112
      %v240 = vld [vmem:[%s239] sm:$0xff]
      %v241 = vld [vmem:[%s239 + $0x8] sm:$0xff]
      %s242 = scalar_lea.vmem %s2, 128
      %v243 = vld [vmem:[%s242] sm:$0xff]
      %v244 = vld [vmem:[%s242 + $0x8] sm:$0xff]
      loop: start=0, step=1, limit=15
      $region37: #{simple_cnn_forward.4} parent=35 // loop_pre_header
        _
      $region38: #{simple_cnn_forward.4} parent=35 // loop_header
        %s246 = sphi 0, %s250
        %p247 = scmp.ge.s32.totalorder %s246, 15
      $region39: #{simple_cnn_forward.4} parent=35 // loop_header_branch
        %249 = sbr.rel (%p247) target = $region43
      $region40: #{simple_cnn_forward.4} parent=35 // loop_body
        %s251 = smul.u32 %s246, 2
        %s252 = smul.u32 %s251, 16
        %s253 = scalar_lea.vmem %s207, %s252
        %v254 = vld [vmem:[%s253] sm:$0xff]
        %v255 = vld [vmem:[%s253 + $0x8] sm:$0x7f]
        %s256 = scalar_lea.vmem %s212, %s252
        %v257 = vld [vmem:[%s256] sm:$0xff]
        %v258 = vld [vmem:[%s256 + $0x8] sm:$0x7f]
        %vm259 = vcmask 130048
        %v261 = vsel %vm259, %v257, 0
        %v264 = vsel %vm259, %v258, 0
        %266 = vmatpush.msra.mxu0 0.0
        %267 = vmatpush.msra.mxu0 0.0
        %268 = vmatpush.msra.mxu0 0.0
        %269 = vmatpush.msra.mxu0 0.0
        %270 = vmatpush.msra.mxu0 0.0
        %271 = vmatpush.msra.mxu0 0.0
        %272 = vmatpush.msra.mxu0 0.0
        %273 = vmatpush.msra.mxu0 0.0
        %274 = vmatpush.msra.mxu0 0.0
        %275 = vmatpush.msra.mxu0 0.0
        %276 = vmatpush.msra.mxu0 0.0
        %277 = vmatpush.msra.mxu0 0.0
        %278 = vmatpush.msra.mxu0 0.0
        %279 = vmatpush.msra.mxu0 0.0
        %280 = vmatpush.msra.mxu0 %v223
        %281 = vmatpush.msra.mxu0 %v222
        %282 = vmatmul.f32.gmra.mxu0 %v261
        %v283 = vpop.f32.mrf.mxu0
        %v284 = vadd.f32 0.0, %v283
        %285 = vmatmul.f32.gmra.mxu0 %v264
        %v286 = vpop.f32.mrf.mxu0
        %v287 = vadd.f32 0.0, %v286
        %288 = vdwg.mxu0
        %v290 = vsel %vm259, %v254, 0
        %v293 = vsel %vm259, %v255, 0
        %295 = vmatpush.msra.mxu0 0.0
        %296 = vmatpush.msra.mxu0 0.0
        %297 = vmatpush.msra.mxu0 0.0
        %298 = vmatpush.msra.mxu0 0.0
        %299 = vmatpush.msra.mxu0 0.0
        %300 = vmatpush.msra.mxu0 0.0
        %301 = vmatpush.msra.mxu0 0.0
        %302 = vmatpush.msra.mxu0 0.0
        %303 = vmatpush.msra.mxu0 0.0
        %304 = vmatpush.msra.mxu0 0.0
        %305 = vmatpush.msra.mxu0 0.0
        %306 = vmatpush.msra.mxu0 0.0
        %307 = vmatpush.msra.mxu0 0.0
        %308 = vmatpush.msra.mxu0 0.0
        %309 = vmatpush.msra.mxu0 %v220
        %310 = vmatpush.msra.mxu0 %v219
        %311 = vmatmul.f32.gmra.mxu0 %v290
        %v312 = vpop.f32.mrf.mxu0
        %v313 = vadd.f32 %v284, %v312
        %314 = vmatmul.f32.gmra.mxu0 %v293
        %v315 = vpop.f32.mrf.mxu0
        %v316 = vadd.f32 %v287, %v315
        %317 = vdwg.mxu0
        %v318 = vld [vmem:[%s253 + $0x1] sm:$0xff]
        %v319 = vld [vmem:[%s253 + $0x9] sm:$0x7f]
        %v321 = vsel %vm259, %v318, 0
        %v324 = vsel %vm259, %v319, 0
        %326 = vmatpush.msra.mxu0 0.0
        %327 = vmatpush.msra.mxu0 0.0
        %328 = vmatpush.msra.mxu0 0.0
        %329 = vmatpush.msra.mxu0 0.0
        %330 = vmatpush.msra.mxu0 0.0
        %331 = vmatpush.msra.mxu0 0.0
        %332 = vmatpush.msra.mxu0 0.0
        %333 = vmatpush.msra.mxu0 0.0
        %334 = vmatpush.msra.mxu0 0.0
        %335 = vmatpush.msra.mxu0 0.0
        %336 = vmatpush.msra.mxu0 0.0
        %337 = vmatpush.msra.mxu0 0.0
        %338 = vmatpush.msra.mxu0 0.0
        %339 = vmatpush.msra.mxu0 0.0
        %340 = vmatpush.msra.mxu0 %v226
        %341 = vmatpush.msra.mxu0 %v225
        %342 = vmatmul.f32.gmra.mxu0 %v321
        %v343 = vpop.f32.mrf.mxu0
        %v344 = vadd.f32 0.0, %v343
        %345 = vmatmul.f32.gmra.mxu0 %v324
        %v346 = vpop.f32.mrf.mxu0
        %v347 = vadd.f32 0.0, %v346
        %348 = vdwg.mxu0
        %v349 = vadd.f32 %v313, %v344
        %v350 = vadd.f32 %v316, %v347
        %s351 = sadd.s32 %s251, 1
        %s352 = smul.u32 %s351, 16
        %s353 = scalar_lea.vmem %s207, %s352
        %v354 = vld [vmem:[%s353] sm:$0xff]
        %v355 = vld [vmem:[%s353 + $0x8] sm:$0x7f]
        %v357 = vsel %vm259, %v354, 0
        %v360 = vsel %vm259, %v355, 0
        %362 = vmatpush.msra.mxu0 0.0
        %363 = vmatpush.msra.mxu0 0.0
        %364 = vmatpush.msra.mxu0 0.0
        %365 = vmatpush.msra.mxu0 0.0
        %366 = vmatpush.msra.mxu0 0.0
        %367 = vmatpush.msra.mxu0 0.0
        %368 = vmatpush.msra.mxu0 0.0
        %369 = vmatpush.msra.mxu0 0.0
        %370 = vmatpush.msra.mxu0 0.0
        %371 = vmatpush.msra.mxu0 0.0
        %372 = vmatpush.msra.mxu0 0.0
        %373 = vmatpush.msra.mxu0 0.0
        %374 = vmatpush.msra.mxu0 0.0
        %375 = vmatpush.msra.mxu0 0.0
        %376 = vmatpush.msra.mxu0 %v229
        %377 = vmatpush.msra.mxu0 %v228
        %378 = vmatmul.f32.gmra.mxu0 %v357
        %v379 = vpop.f32.mrf.mxu0
        %v380 = vadd.f32 0.0, %v379
        %381 = vmatmul.f32.gmra.mxu0 %v360
        %v382 = vpop.f32.mrf.mxu0
        %v383 = vadd.f32 0.0, %v382
        %384 = vdwg.mxu0
        %v385 = vadd.f32 %v349, %v380
        %v386 = vadd.f32 %v350, %v383
        %s387 = scalar_lea.vmem %s212, %s352
        %v388 = vld [vmem:[%s387] sm:$0xff]
        %v389 = vld [vmem:[%s387 + $0x8] sm:$0x7f]
        %v391 = vsel %vm259, %v388, 0
        %v394 = vsel %vm259, %v389, 0
        %396 = vmatpush.msra.mxu0 0.0
        %397 = vmatpush.msra.mxu0 0.0
        %398 = vmatpush.msra.mxu0 0.0
        %399 = vmatpush.msra.mxu0 0.0
        %400 = vmatpush.msra.mxu0 0.0
        %401 = vmatpush.msra.mxu0 0.0
        %402 = vmatpush.msra.mxu0 0.0
        %403 = vmatpush.msra.mxu0 0.0
        %404 = vmatpush.msra.mxu0 0.0
        %405 = vmatpush.msra.mxu0 0.0
        %406 = vmatpush.msra.mxu0 0.0
        %407 = vmatpush.msra.mxu0 0.0
        %408 = vmatpush.msra.mxu0 0.0
        %409 = vmatpush.msra.mxu0 0.0
        %410 = vmatpush.msra.mxu0 %v232
        %411 = vmatpush.msra.mxu0 %v231
        %412 = vmatmul.f32.gmra.mxu0 %v391
        %v413 = vpop.f32.mrf.mxu0
        %v414 = vadd.f32 0.0, %v413
        %415 = vmatmul.f32.gmra.mxu0 %v394
        %v416 = vpop.f32.mrf.mxu0
        %v417 = vadd.f32 0.0, %v416
        %418 = vdwg.mxu0
        %v419 = vadd.f32 %v385, %v414
        %v420 = vadd.f32 %v386, %v417
        %v421 = vld [vmem:[%s353 + $0x1] sm:$0xff]
        %v422 = vld [vmem:[%s353 + $0x9] sm:$0x7f]
        %v424 = vsel %vm259, %v421, 0
        %v427 = vsel %vm259, %v422, 0
        %429 = vmatpush.msra.mxu0 0.0
        %430 = vmatpush.msra.mxu0 0.0
        %431 = vmatpush.msra.mxu0 0.0
        %432 = vmatpush.msra.mxu0 0.0
        %433 = vmatpush.msra.mxu0 0.0
        %434 = vmatpush.msra.mxu0 0.0
        %435 = vmatpush.msra.mxu0 0.0
        %436 = vmatpush.msra.mxu0 0.0
        %437 = vmatpush.msra.mxu0 0.0
        %438 = vmatpush.msra.mxu0 0.0
        %439 = vmatpush.msra.mxu0 0.0
        %440 = vmatpush.msra.mxu0 0.0
        %441 = vmatpush.msra.mxu0 0.0
        %442 = vmatpush.msra.mxu0 0.0
        %443 = vmatpush.msra.mxu0 %v235
        %444 = vmatpush.msra.mxu0 %v234
        %445 = vmatmul.f32.gmra.mxu0 %v424
        %v446 = vpop.f32.mrf.mxu0
        %v447 = vadd.f32 0.0, %v446
        %448 = vmatmul.f32.gmra.mxu0 %v427
        %v449 = vpop.f32.mrf.mxu0
        %v450 = vadd.f32 0.0, %v449
        %451 = vdwg.mxu0
        %v452 = vadd.f32 %v419, %v447
        %v453 = vadd.f32 %v420, %v450
        %s454 = sadd.s32 %s251, 2
        %s455 = smul.u32 %s454, 16
        %s456 = scalar_lea.vmem %s207, %s455
        %v457 = vld [vmem:[%s456] sm:$0xff]
        %v458 = vld [vmem:[%s456 + $0x8] sm:$0x7f]
        %v460 = vsel %vm259, %v457, 0
        %v463 = vsel %vm259, %v458, 0
        %465 = vmatpush.msra.mxu0 0.0
        %466 = vmatpush.msra.mxu0 0.0
        %467 = vmatpush.msra.mxu0 0.0
        %468 = vmatpush.msra.mxu0 0.0
        %469 = vmatpush.msra.mxu0 0.0
        %470 = vmatpush.msra.mxu0 0.0
        %471 = vmatpush.msra.mxu0 0.0
        %472 = vmatpush.msra.mxu0 0.0
        %473 = vmatpush.msra.mxu0 0.0
        %474 = vmatpush.msra.mxu0 0.0
        %475 = vmatpush.msra.mxu0 0.0
        %476 = vmatpush.msra.mxu0 0.0
        %477 = vmatpush.msra.mxu0 0.0
        %478 = vmatpush.msra.mxu0 0.0
        %479 = vmatpush.msra.mxu0 %v238
        %480 = vmatpush.msra.mxu0 %v237
        %481 = vmatmul.f32.gmra.mxu0 %v460
        %v482 = vpop.f32.mrf.mxu0
        %v483 = vadd.f32 0.0, %v482
        %484 = vmatmul.f32.gmra.mxu0 %v463
        %v485 = vpop.f32.mrf.mxu0
        %v486 = vadd.f32 0.0, %v485
        %487 = vdwg.mxu0
        %v488 = vadd.f32 %v452, %v483
        %v489 = vadd.f32 %v453, %v486
        %s490 = scalar_lea.vmem %s212, %s455
        %v491 = vld [vmem:[%s490] sm:$0xff]
        %v492 = vld [vmem:[%s490 + $0x8] sm:$0x7f]
        %v494 = vsel %vm259, %v491, 0
        %v497 = vsel %vm259, %v492, 0
        %499 = vmatpush.msra.mxu0 0.0
        %500 = vmatpush.msra.mxu0 0.0
        %501 = vmatpush.msra.mxu0 0.0
        %502 = vmatpush.msra.mxu0 0.0
        %503 = vmatpush.msra.mxu0 0.0
        %504 = vmatpush.msra.mxu0 0.0
        %505 = vmatpush.msra.mxu0 0.0
        %506 = vmatpush.msra.mxu0 0.0
        %507 = vmatpush.msra.mxu0 0.0
        %508 = vmatpush.msra.mxu0 0.0
        %509 = vmatpush.msra.mxu0 0.0
        %510 = vmatpush.msra.mxu0 0.0
        %511 = vmatpush.msra.mxu0 0.0
        %512 = vmatpush.msra.mxu0 0.0
        %513 = vmatpush.msra.mxu0 %v241
        %514 = vmatpush.msra.mxu0 %v240
        %515 = vmatmul.f32.gmra.mxu0 %v494
        %v516 = vpop.f32.mrf.mxu0
        %v517 = vadd.f32 0.0, %v516
        %518 = vmatmul.f32.gmra.mxu0 %v497
        %v519 = vpop.f32.mrf.mxu0
        %v520 = vadd.f32 0.0, %v519
        %521 = vdwg.mxu0
        %v522 = vadd.f32 %v488, %v517
        %v523 = vadd.f32 %v489, %v520
        %v524 = vld [vmem:[%s456 + $0x1] sm:$0xff]
        %v525 = vld [vmem:[%s456 + $0x9] sm:$0x7f]
        %v527 = vsel %vm259, %v524, 0
        %v530 = vsel %vm259, %v525, 0
        %532 = vmatpush.msra.mxu0 0.0
        %533 = vmatpush.msra.mxu0 0.0
        %534 = vmatpush.msra.mxu0 0.0
        %535 = vmatpush.msra.mxu0 0.0
        %536 = vmatpush.msra.mxu0 0.0
        %537 = vmatpush.msra.mxu0 0.0
        %538 = vmatpush.msra.mxu0 0.0
        %539 = vmatpush.msra.mxu0 0.0
        %540 = vmatpush.msra.mxu0 0.0
        %541 = vmatpush.msra.mxu0 0.0
        %542 = vmatpush.msra.mxu0 0.0
        %543 = vmatpush.msra.mxu0 0.0
        %544 = vmatpush.msra.mxu0 0.0
        %545 = vmatpush.msra.mxu0 0.0
        %546 = vmatpush.msra.mxu0 %v244
        %547 = vmatpush.msra.mxu0 %v243
        %548 = vmatmul.f32.gmra.mxu0 %v527
        %v549 = vpop.f32.mrf.mxu0
        %v550 = vadd.f32 0.0, %v549
        %551 = vmatmul.f32.gmra.mxu0 %v530
        %v552 = vpop.f32.mrf.mxu0
        %v553 = vadd.f32 0.0, %v552
        %554 = vdwg.mxu0
        %v555 = vadd.f32 %v522, %v550
        %v556 = vadd.f32 %v523, %v553
        %v558 = vperm.slane %v218, 0
        %v560 = vadd.f32 %v555, %v558
        %v561 = vadd.f32 %v556, %v558
        %v562 = vmax.f32 %v560, 0.0
        %v563 = vmax.f32 %v561, 0.0
        %564 = vmatpush.msra.mxu0 0.0
        %565 = vmatpush.msra.mxu0 0.0
        %566 = vmatpush.msra.mxu0 0.0
        %567 = vmatpush.msra.mxu0 0.0
        %568 = vmatpush.msra.mxu0 0.0
        %569 = vmatpush.msra.mxu0 0.0
        %570 = vmatpush.msra.mxu0 0.0
        %571 = vmatpush.msra.mxu0 0.0
        %572 = vmatpush.msra.mxu0 0.0
        %573 = vmatpush.msra.mxu0 0.0
        %574 = vmatpush.msra.mxu0 0.0
        %575 = vmatpush.msra.mxu0 0.0
        %576 = vmatpush.msra.mxu0 0.0
        %577 = vmatpush.msra.mxu0 0.0
        %578 = vmatpush.msra.mxu0 %v223
        %579 = vmatpush.msra.mxu0 %v222
        %580 = vmatmul.f32.gmra.mxu0 %v321
        %v581 = vpop.f32.mrf.mxu0
        %v582 = vadd.f32 0.0, %v581
        %583 = vmatmul.f32.gmra.mxu0 %v324
        %v584 = vpop.f32.mrf.mxu0
        %v585 = vadd.f32 0.0, %v584
        %586 = vdwg.mxu0
        %587 = vmatpush.msra.mxu0 0.0
        %588 = vmatpush.msra.mxu0 0.0
        %589 = vmatpush.msra.mxu0 0.0
        %590 = vmatpush.msra.mxu0 0.0
        %591 = vmatpush.msra.mxu0 0.0
        %592 = vmatpush.msra.mxu0 0.0
        %593 = vmatpush.msra.mxu0 0.0
        %594 = vmatpush.msra.mxu0 0.0
        %595 = vmatpush.msra.mxu0 0.0
        %596 = vmatpush.msra.mxu0 0.0
        %597 = vmatpush.msra.mxu0 0.0
        %598 = vmatpush.msra.mxu0 0.0
        %599 = vmatpush.msra.mxu0 0.0
        %600 = vmatpush.msra.mxu0 0.0
        %601 = vmatpush.msra.mxu0 %v220
        %602 = vmatpush.msra.mxu0 %v219
        %603 = vmatmul.f32.gmra.mxu0 %v261
        %v604 = vpop.f32.mrf.mxu0
        %v605 = vadd.f32 %v582, %v604
        %606 = vmatmul.f32.gmra.mxu0 %v264
        %v607 = vpop.f32.mrf.mxu0
        %v608 = vadd.f32 %v585, %v607
        %609 = vdwg.mxu0
        %v610 = vld [vmem:[%s256 + $0x1] sm:$0xff]
        %v611 = vld [vmem:[%s256 + $0x9] sm:$0x7f]
        %v613 = vsel %vm259, %v610, 0
        %v616 = vsel %vm259, %v611, 0
        %618 = vmatpush.msra.mxu0 0.0
        %619 = vmatpush.msra.mxu0 0.0
        %620 = vmatpush.msra.mxu0 0.0
        %621 = vmatpush.msra.mxu0 0.0
        %622 = vmatpush.msra.mxu0 0.0
        %623 = vmatpush.msra.mxu0 0.0
        %624 = vmatpush.msra.mxu0 0.0
        %625 = vmatpush.msra.mxu0 0.0
        %626 = vmatpush.msra.mxu0 0.0
        %627 = vmatpush.msra.mxu0 0.0
        %628 = vmatpush.msra.mxu0 0.0
        %629 = vmatpush.msra.mxu0 0.0
        %630 = vmatpush.msra.mxu0 0.0
        %631 = vmatpush.msra.mxu0 0.0
        %632 = vmatpush.msra.mxu0 %v226
        %633 = vmatpush.msra.mxu0 %v225
        %634 = vmatmul.f32.gmra.mxu0 %v613
        %v635 = vpop.f32.mrf.mxu0
        %v636 = vadd.f32 0.0, %v635
        %637 = vmatmul.f32.gmra.mxu0 %v616
        %v638 = vpop.f32.mrf.mxu0
        %v639 = vadd.f32 0.0, %v638
        %640 = vdwg.mxu0
        %v641 = vadd.f32 %v605, %v636
        %v642 = vadd.f32 %v608, %v639
        %643 = vmatpush.msra.mxu0 0.0
        %644 = vmatpush.msra.mxu0 0.0
        %645 = vmatpush.msra.mxu0 0.0
        %646 = vmatpush.msra.mxu0 0.0
        %647 = vmatpush.msra.mxu0 0.0
        %648 = vmatpush.msra.mxu0 0.0
        %649 = vmatpush.msra.mxu0 0.0
        %650 = vmatpush.msra.mxu0 0.0
        %651 = vmatpush.msra.mxu0 0.0
        %652 = vmatpush.msra.mxu0 0.0
        %653 = vmatpush.msra.mxu0 0.0
        %654 = vmatpush.msra.mxu0 0.0
        %655 = vmatpush.msra.mxu0 0.0
        %656 = vmatpush.msra.mxu0 0.0
        %657 = vmatpush.msra.mxu0 %v229
        %658 = vmatpush.msra.mxu0 %v228
        %659 = vmatmul.f32.gmra.mxu0 %v391
        %v660 = vpop.f32.mrf.mxu0
        %v661 = vadd.f32 0.0, %v660
        %662 = vmatmul.f32.gmra.mxu0 %v394
        %v663 = vpop.f32.mrf.mxu0
        %v664 = vadd.f32 0.0, %v663
        %665 = vdwg.mxu0
        %v666 = vadd.f32 %v641, %v661
        %v667 = vadd.f32 %v642, %v664
        %668 = vmatpush.msra.mxu0 0.0
        %669 = vmatpush.msra.mxu0 0.0
        %670 = vmatpush.msra.mxu0 0.0
        %671 = vmatpush.msra.mxu0 0.0
        %672 = vmatpush.msra.mxu0 0.0
        %673 = vmatpush.msra.mxu0 0.0
        %674 = vmatpush.msra.mxu0 0.0
        %675 = vmatpush.msra.mxu0 0.0
        %676 = vmatpush.msra.mxu0 0.0
        %677 = vmatpush.msra.mxu0 0.0
        %678 = vmatpush.msra.mxu0 0.0
        %679 = vmatpush.msra.mxu0 0.0
        %680 = vmatpush.msra.mxu0 0.0
        %681 = vmatpush.msra.mxu0 0.0
        %682 = vmatpush.msra.mxu0 %v232
        %683 = vmatpush.msra.mxu0 %v231
        %684 = vmatmul.f32.gmra.mxu0 %v424
        %v685 = vpop.f32.mrf.mxu0
        %v686 = vadd.f32 0.0, %v685
        %687 = vmatmul.f32.gmra.mxu0 %v427
        %v688 = vpop.f32.mrf.mxu0
        %v689 = vadd.f32 0.0, %v688
        %690 = vdwg.mxu0
        %v691 = vadd.f32 %v666, %v686
        %v692 = vadd.f32 %v667, %v689
        %v693 = vld [vmem:[%s387 + $0x1] sm:$0xff]
        %v694 = vld [vmem:[%s387 + $0x9] sm:$0x7f]
        %v696 = vsel %vm259, %v693, 0
        %v699 = vsel %vm259, %v694, 0
        %701 = vmatpush.msra.mxu0 0.0
        %702 = vmatpush.msra.mxu0 0.0
        %703 = vmatpush.msra.mxu0 0.0
        %704 = vmatpush.msra.mxu0 0.0
        %705 = vmatpush.msra.mxu0 0.0
        %706 = vmatpush.msra.mxu0 0.0
        %707 = vmatpush.msra.mxu0 0.0
        %708 = vmatpush.msra.mxu0 0.0
        %709 = vmatpush.msra.mxu0 0.0
        %710 = vmatpush.msra.mxu0 0.0
        %711 = vmatpush.msra.mxu0 0.0
        %712 = vmatpush.msra.mxu0 0.0
        %713 = vmatpush.msra.mxu0 0.0
        %714 = vmatpush.msra.mxu0 0.0
        %715 = vmatpush.msra.mxu0 %v235
        %716 = vmatpush.msra.mxu0 %v234
        %717 = vmatmul.f32.gmra.mxu0 %v696
        %v718 = vpop.f32.mrf.mxu0
        %v719 = vadd.f32 0.0, %v718
        %720 = vmatmul.f32.gmra.mxu0 %v699
        %v721 = vpop.f32.mrf.mxu0
        %v722 = vadd.f32 0.0, %v721
        %723 = vdwg.mxu0
        %v724 = vadd.f32 %v691, %v719
        %v725 = vadd.f32 %v692, %v722
        %726 = vmatpush.msra.mxu0 0.0
        %727 = vmatpush.msra.mxu0 0.0
        %728 = vmatpush.msra.mxu0 0.0
        %729 = vmatpush.msra.mxu0 0.0
        %730 = vmatpush.msra.mxu0 0.0
        %731 = vmatpush.msra.mxu0 0.0
        %732 = vmatpush.msra.mxu0 0.0
        %733 = vmatpush.msra.mxu0 0.0
        %734 = vmatpush.msra.mxu0 0.0
        %735 = vmatpush.msra.mxu0 0.0
        %736 = vmatpush.msra.mxu0 0.0
        %737 = vmatpush.msra.mxu0 0.0
        %738 = vmatpush.msra.mxu0 0.0
        %739 = vmatpush.msra.mxu0 0.0
        %740 = vmatpush.msra.mxu0 %v238
        %741 = vmatpush.msra.mxu0 %v237
        %742 = vmatmul.f32.gmra.mxu0 %v494
        %v743 = vpop.f32.mrf.mxu0
        %v744 = vadd.f32 0.0, %v743
        %745 = vmatmul.f32.gmra.mxu0 %v497
        %v746 = vpop.f32.mrf.mxu0
        %v747 = vadd.f32 0.0, %v746
        %748 = vdwg.mxu0
        %v749 = vadd.f32 %v724, %v744
        %v750 = vadd.f32 %v725, %v747
        %751 = vmatpush.msra.mxu0 0.0
        %752 = vmatpush.msra.mxu0 0.0
        %753 = vmatpush.msra.mxu0 0.0
        %754 = vmatpush.msra.mxu0 0.0
        %755 = vmatpush.msra.mxu0 0.0
        %756 = vmatpush.msra.mxu0 0.0
        %757 = vmatpush.msra.mxu0 0.0
        %758 = vmatpush.msra.mxu0 0.0
        %759 = vmatpush.msra.mxu0 0.0
        %760 = vmatpush.msra.mxu0 0.0
        %761 = vmatpush.msra.mxu0 0.0
        %762 = vmatpush.msra.mxu0 0.0
        %763 = vmatpush.msra.mxu0 0.0
        %764 = vmatpush.msra.mxu0 0.0
        %765 = vmatpush.msra.mxu0 %v241
        %766 = vmatpush.msra.mxu0 %v240
        %767 = vmatmul.f32.gmra.mxu0 %v527
        %v768 = vpop.f32.mrf.mxu0
        %v769 = vadd.f32 0.0, %v768
        %770 = vmatmul.f32.gmra.mxu0 %v530
        %v771 = vpop.f32.mrf.mxu0
        %v772 = vadd.f32 0.0, %v771
        %773 = vdwg.mxu0
        %v774 = vadd.f32 %v749, %v769
        %v775 = vadd.f32 %v750, %v772
        %v776 = vld [vmem:[%s490 + $0x1] sm:$0xff]
        %v777 = vld [vmem:[%s490 + $0x9] sm:$0x7f]
        %v779 = vsel %vm259, %v776, 0
        %v782 = vsel %vm259, %v777, 0
        %784 = vmatpush.msra.mxu0 0.0
        %785 = vmatpush.msra.mxu0 0.0
        %786 = vmatpush.msra.mxu0 0.0
        %787 = vmatpush.msra.mxu0 0.0
        %788 = vmatpush.msra.mxu0 0.0
        %789 = vmatpush.msra.mxu0 0.0
        %790 = vmatpush.msra.mxu0 0.0
        %791 = vmatpush.msra.mxu0 0.0
        %792 = vmatpush.msra.mxu0 0.0
        %793 = vmatpush.msra.mxu0 0.0
        %794 = vmatpush.msra.mxu0 0.0
        %795 = vmatpush.msra.mxu0 0.0
        %796 = vmatpush.msra.mxu0 0.0
        %797 = vmatpush.msra.mxu0 0.0
        %798 = vmatpush.msra.mxu0 %v244
        %799 = vmatpush.msra.mxu0 %v243
        %800 = vmatmul.f32.gmra.mxu0 %v779
        %v801 = vpop.f32.mrf.mxu0
        %v802 = vadd.f32 0.0, %v801
        %803 = vmatmul.f32.gmra.mxu0 %v782
        %v804 = vpop.f32.mrf.mxu0
        %v805 = vadd.f32 0.0, %v804
        %806 = vdwg.mxu0
        %v807 = vadd.f32 %v774, %v802
        %v808 = vadd.f32 %v775, %v805
        %v809 = vadd.f32 %v807, %v558
        %v810 = vadd.f32 %v808, %v558
        %v811 = vmax.f32 %v809, 0.0
        %v812 = vmax.f32 %v810, 0.0
        %v813 = vmax.f32 %v562, %v811
        %v814 = vmax.f32 %v563, %v812
        %815 = vmatpush.msra.mxu0 0.0
        %816 = vmatpush.msra.mxu0 0.0
        %817 = vmatpush.msra.mxu0 0.0
        %818 = vmatpush.msra.mxu0 0.0
        %819 = vmatpush.msra.mxu0 0.0
        %820 = vmatpush.msra.mxu0 0.0
        %821 = vmatpush.msra.mxu0 0.0
        %822 = vmatpush.msra.mxu0 0.0
        %823 = vmatpush.msra.mxu0 0.0
        %824 = vmatpush.msra.mxu0 0.0
        %825 = vmatpush.msra.mxu0 0.0
        %826 = vmatpush.msra.mxu0 0.0
        %827 = vmatpush.msra.mxu0 0.0
        %828 = vmatpush.msra.mxu0 0.0
        %829 = vmatpush.msra.mxu0 %v223
        %830 = vmatpush.msra.mxu0 %v222
        %831 = vmatmul.f32.gmra.mxu0 %v391
        %v832 = vpop.f32.mrf.mxu0
        %v833 = vadd.f32 0.0, %v832
        %834 = vmatmul.f32.gmra.mxu0 %v394
        %v835 = vpop.f32.mrf.mxu0
        %v836 = vadd.f32 0.0, %v835
        %837 = vdwg.mxu0
        %838 = vmatpush.msra.mxu0 0.0
        %839 = vmatpush.msra.mxu0 0.0
        %840 = vmatpush.msra.mxu0 0.0
        %841 = vmatpush.msra.mxu0 0.0
        %842 = vmatpush.msra.mxu0 0.0
        %843 = vmatpush.msra.mxu0 0.0
        %844 = vmatpush.msra.mxu0 0.0
        %845 = vmatpush.msra.mxu0 0.0
        %846 = vmatpush.msra.mxu0 0.0
        %847 = vmatpush.msra.mxu0 0.0
        %848 = vmatpush.msra.mxu0 0.0
        %849 = vmatpush.msra.mxu0 0.0
        %850 = vmatpush.msra.mxu0 0.0
        %851 = vmatpush.msra.mxu0 0.0
        %852 = vmatpush.msra.mxu0 %v220
        %853 = vmatpush.msra.mxu0 %v219
        %854 = vmatmul.f32.gmra.mxu0 %v357
        %v855 = vpop.f32.mrf.mxu0
        %v856 = vadd.f32 %v833, %v855
        %857 = vmatmul.f32.gmra.mxu0 %v360
        %v858 = vpop.f32.mrf.mxu0
        %v859 = vadd.f32 %v836, %v858
        %860 = vdwg.mxu0
        %861 = vmatpush.msra.mxu0 0.0
        %862 = vmatpush.msra.mxu0 0.0
        %863 = vmatpush.msra.mxu0 0.0
        %864 = vmatpush.msra.mxu0 0.0
        %865 = vmatpush.msra.mxu0 0.0
        %866 = vmatpush.msra.mxu0 0.0
        %867 = vmatpush.msra.mxu0 0.0
        %868 = vmatpush.msra.mxu0 0.0
        %869 = vmatpush.msra.mxu0 0.0
        %870 = vmatpush.msra.mxu0 0.0
        %871 = vmatpush.msra.mxu0 0.0
        %872 = vmatpush.msra.mxu0 0.0
        %873 = vmatpush.msra.mxu0 0.0
        %874 = vmatpush.msra.mxu0 0.0
        %875 = vmatpush.msra.mxu0 %v226
        %876 = vmatpush.msra.mxu0 %v225
        %877 = vmatmul.f32.gmra.mxu0 %v424
        %v878 = vpop.f32.mrf.mxu0
        %v879 = vadd.f32 0.0, %v878
        %880 = vmatmul.f32.gmra.mxu0 %v427
        %v881 = vpop.f32.mrf.mxu0
        %v882 = vadd.f32 0.0, %v881
        %883 = vdwg.mxu0
        %v884 = vadd.f32 %v856, %v879
        %v885 = vadd.f32 %v859, %v882
        %886 = vmatpush.msra.mxu0 0.0
        %887 = vmatpush.msra.mxu0 0.0
        %888 = vmatpush.msra.mxu0 0.0
        %889 = vmatpush.msra.mxu0 0.0
        %890 = vmatpush.msra.mxu0 0.0
        %891 = vmatpush.msra.mxu0 0.0
        %892 = vmatpush.msra.mxu0 0.0
        %893 = vmatpush.msra.mxu0 0.0
        %894 = vmatpush.msra.mxu0 0.0
        %895 = vmatpush.msra.mxu0 0.0
        %896 = vmatpush.msra.mxu0 0.0
        %897 = vmatpush.msra.mxu0 0.0
        %898 = vmatpush.msra.mxu0 0.0
        %899 = vmatpush.msra.mxu0 0.0
        %900 = vmatpush.msra.mxu0 %v229
        %901 = vmatpush.msra.mxu0 %v228
        %902 = vmatmul.f32.gmra.mxu0 %v460
        %v903 = vpop.f32.mrf.mxu0
        %v904 = vadd.f32 0.0, %v903
        %905 = vmatmul.f32.gmra.mxu0 %v463
        %v906 = vpop.f32.mrf.mxu0
        %v907 = vadd.f32 0.0, %v906
        %908 = vdwg.mxu0
        %v909 = vadd.f32 %v884, %v904
        %v910 = vadd.f32 %v885, %v907
        %911 = vmatpush.msra.mxu0 0.0
        %912 = vmatpush.msra.mxu0 0.0
        %913 = vmatpush.msra.mxu0 0.0
        %914 = vmatpush.msra.mxu0 0.0
        %915 = vmatpush.msra.mxu0 0.0
        %916 = vmatpush.msra.mxu0 0.0
        %917 = vmatpush.msra.mxu0 0.0
        %918 = vmatpush.msra.mxu0 0.0
        %919 = vmatpush.msra.mxu0 0.0
        %920 = vmatpush.msra.mxu0 0.0
        %921 = vmatpush.msra.mxu0 0.0
        %922 = vmatpush.msra.mxu0 0.0
        %923 = vmatpush.msra.mxu0 0.0
        %924 = vmatpush.msra.mxu0 0.0
        %925 = vmatpush.msra.mxu0 %v232
        %926 = vmatpush.msra.mxu0 %v231
        %927 = vmatmul.f32.gmra.mxu0 %v494
        %v928 = vpop.f32.mrf.mxu0
        %v929 = vadd.f32 0.0, %v928
        %930 = vmatmul.f32.gmra.mxu0 %v497
        %v931 = vpop.f32.mrf.mxu0
        %v932 = vadd.f32 0.0, %v931
        %933 = vdwg.mxu0
        %v934 = vadd.f32 %v909, %v929
        %v935 = vadd.f32 %v910, %v932
        %936 = vmatpush.msra.mxu0 0.0
        %937 = vmatpush.msra.mxu0 0.0
        %938 = vmatpush.msra.mxu0 0.0
        %939 = vmatpush.msra.mxu0 0.0
        %940 = vmatpush.msra.mxu0 0.0
        %941 = vmatpush.msra.mxu0 0.0
        %942 = vmatpush.msra.mxu0 0.0
        %943 = vmatpush.msra.mxu0 0.0
        %944 = vmatpush.msra.mxu0 0.0
        %945 = vmatpush.msra.mxu0 0.0
        %946 = vmatpush.msra.mxu0 0.0
        %947 = vmatpush.msra.mxu0 0.0
        %948 = vmatpush.msra.mxu0 0.0
        %949 = vmatpush.msra.mxu0 0.0
        %950 = vmatpush.msra.mxu0 %v235
        %951 = vmatpush.msra.mxu0 %v234
        %952 = vmatmul.f32.gmra.mxu0 %v527
        %v953 = vpop.f32.mrf.mxu0
        %v954 = vadd.f32 0.0, %v953
        %955 = vmatmul.f32.gmra.mxu0 %v530
        %v956 = vpop.f32.mrf.mxu0
        %v957 = vadd.f32 0.0, %v956
        %958 = vdwg.mxu0
        %v959 = vadd.f32 %v934, %v954
        %v960 = vadd.f32 %v935, %v957
        %s961 = sadd.s32 %s251, 3
        %s962 = smul.u32 %s961, 16
        %s963 = scalar_lea.vmem %s207, %s962
        %v964 = vld [vmem:[%s963] sm:$0xff]
        %v965 = vld [vmem:[%s963 + $0x8] sm:$0x7f]
        %v967 = vsel %vm259, %v964, 0
        %v970 = vsel %vm259, %v965, 0
        %972 = vmatpush.msra.mxu0 0.0
        %973 = vmatpush.msra.mxu0 0.0
        %974 = vmatpush.msra.mxu0 0.0
        %975 = vmatpush.msra.mxu0 0.0
        %976 = vmatpush.msra.mxu0 0.0
        %977 = vmatpush.msra.mxu0 0.0
        %978 = vmatpush.msra.mxu0 0.0
        %979 = vmatpush.msra.mxu0 0.0
        %980 = vmatpush.msra.mxu0 0.0
        %981 = vmatpush.msra.mxu0 0.0
        %982 = vmatpush.msra.mxu0 0.0
        %983 = vmatpush.msra.mxu0 0.0
        %984 = vmatpush.msra.mxu0 0.0
        %985 = vmatpush.msra.mxu0 0.0
        %986 = vmatpush.msra.mxu0 %v238
        %987 = vmatpush.msra.mxu0 %v237
        %988 = vmatmul.f32.gmra.mxu0 %v967
        %v989 = vpop.f32.mrf.mxu0
        %v990 = vadd.f32 0.0, %v989
        %991 = vmatmul.f32.gmra.mxu0 %v970
        %v992 = vpop.f32.mrf.mxu0
        %v993 = vadd.f32 0.0, %v992
        %994 = vdwg.mxu0
        %v995 = vadd.f32 %v959, %v990
        %v996 = vadd.f32 %v960, %v993
        %s997 = scalar_lea.vmem %s212, %s962
        %v998 = vld [vmem:[%s997] sm:$0xff]
        %v999 = vld [vmem:[%s997 + $0x8] sm:$0x7f]
        %v1001 = vsel %vm259, %v998, 0
        %v1004 = vsel %vm259, %v999, 0
        %1006 = vmatpush.msra.mxu0 0.0
        %1007 = vmatpush.msra.mxu0 0.0
        %1008 = vmatpush.msra.mxu0 0.0
        %1009 = vmatpush.msra.mxu0 0.0
        %1010 = vmatpush.msra.mxu0 0.0
        %1011 = vmatpush.msra.mxu0 0.0
        %1012 = vmatpush.msra.mxu0 0.0
        %1013 = vmatpush.msra.mxu0 0.0
        %1014 = vmatpush.msra.mxu0 0.0
        %1015 = vmatpush.msra.mxu0 0.0
        %1016 = vmatpush.msra.mxu0 0.0
        %1017 = vmatpush.msra.mxu0 0.0
        %1018 = vmatpush.msra.mxu0 0.0
        %1019 = vmatpush.msra.mxu0 0.0
        %1020 = vmatpush.msra.mxu0 %v241
        %1021 = vmatpush.msra.mxu0 %v240
        %1022 = vmatmul.f32.gmra.mxu0 %v1001
        %v1023 = vpop.f32.mrf.mxu0
        %v1024 = vadd.f32 0.0, %v1023
        %1025 = vmatmul.f32.gmra.mxu0 %v1004
        %v1026 = vpop.f32.mrf.mxu0
        %v1027 = vadd.f32 0.0, %v1026
        %1028 = vdwg.mxu0
        %v1029 = vadd.f32 %v995, %v1024
        %v1030 = vadd.f32 %v996, %v1027
        %v1031 = vld [vmem:[%s963 + $0x1] sm:$0xff]
        %v1032 = vld [vmem:[%s963 + $0x9] sm:$0x7f]
        %v1034 = vsel %vm259, %v1031, 0
        %v1037 = vsel %vm259, %v1032, 0
        %1039 = vmatpush.msra.mxu0 0.0
        %1040 = vmatpush.msra.mxu0 0.0
        %1041 = vmatpush.msra.mxu0 0.0
        %1042 = vmatpush.msra.mxu0 0.0
        %1043 = vmatpush.msra.mxu0 0.0
        %1044 = vmatpush.msra.mxu0 0.0
        %1045 = vmatpush.msra.mxu0 0.0
        %1046 = vmatpush.msra.mxu0 0.0
        %1047 = vmatpush.msra.mxu0 0.0
        %1048 = vmatpush.msra.mxu0 0.0
        %1049 = vmatpush.msra.mxu0 0.0
        %1050 = vmatpush.msra.mxu0 0.0
        %1051 = vmatpush.msra.mxu0 0.0
        %1052 = vmatpush.msra.mxu0 0.0
        %1053 = vmatpush.msra.mxu0 %v244
        %1054 = vmatpush.msra.mxu0 %v243
        %1055 = vmatmul.f32.gmra.mxu0 %v1034
        %v1056 = vpop.f32.mrf.mxu0
        %v1057 = vadd.f32 0.0, %v1056
        %1058 = vmatmul.f32.gmra.mxu0 %v1037
        %v1059 = vpop.f32.mrf.mxu0
        %v1060 = vadd.f32 0.0, %v1059
        %1061 = vdwg.mxu0
        %v1062 = vadd.f32 %v1029, %v1057
        %v1063 = vadd.f32 %v1030, %v1060
        %v1064 = vadd.f32 %v1062, %v558
        %v1065 = vadd.f32 %v1063, %v558
        %v1066 = vmax.f32 %v1064, 0.0
        %v1067 = vmax.f32 %v1065, 0.0
        %1068 = vmatpush.msra.mxu0 0.0
        %1069 = vmatpush.msra.mxu0 0.0
        %1070 = vmatpush.msra.mxu0 0.0
        %1071 = vmatpush.msra.mxu0 0.0
        %1072 = vmatpush.msra.mxu0 0.0
        %1073 = vmatpush.msra.mxu0 0.0
        %1074 = vmatpush.msra.mxu0 0.0
        %1075 = vmatpush.msra.mxu0 0.0
        %1076 = vmatpush.msra.mxu0 0.0
        %1077 = vmatpush.msra.mxu0 0.0
        %1078 = vmatpush.msra.mxu0 0.0
        %1079 = vmatpush.msra.mxu0 0.0
        %1080 = vmatpush.msra.mxu0 0.0
        %1081 = vmatpush.msra.mxu0 0.0
        %1082 = vmatpush.msra.mxu0 %v223
        %1083 = vmatpush.msra.mxu0 %v222
        %1084 = vmatmul.f32.gmra.mxu0 %v424
        %v1085 = vpop.f32.mrf.mxu0
        %v1086 = vadd.f32 0.0, %v1085
        %1087 = vmatmul.f32.gmra.mxu0 %v427
        %v1088 = vpop.f32.mrf.mxu0
        %v1089 = vadd.f32 0.0, %v1088
        %1090 = vdwg.mxu0
        %1091 = vmatpush.msra.mxu0 0.0
        %1092 = vmatpush.msra.mxu0 0.0
        %1093 = vmatpush.msra.mxu0 0.0
        %1094 = vmatpush.msra.mxu0 0.0
        %1095 = vmatpush.msra.mxu0 0.0
        %1096 = vmatpush.msra.mxu0 0.0
        %1097 = vmatpush.msra.mxu0 0.0
        %1098 = vmatpush.msra.mxu0 0.0
        %1099 = vmatpush.msra.mxu0 0.0
        %1100 = vmatpush.msra.mxu0 0.0
        %1101 = vmatpush.msra.mxu0 0.0
        %1102 = vmatpush.msra.mxu0 0.0
        %1103 = vmatpush.msra.mxu0 0.0
        %1104 = vmatpush.msra.mxu0 0.0
        %1105 = vmatpush.msra.mxu0 %v220
        %1106 = vmatpush.msra.mxu0 %v219
        %1107 = vmatmul.f32.gmra.mxu0 %v391
        %v1108 = vpop.f32.mrf.mxu0
        %v1109 = vadd.f32 %v1086, %v1108
        %1110 = vmatmul.f32.gmra.mxu0 %v394
        %v1111 = vpop.f32.mrf.mxu0
        %v1112 = vadd.f32 %v1089, %v1111
        %1113 = vdwg.mxu0
        %1114 = vmatpush.msra.mxu0 0.0
        %1115 = vmatpush.msra.mxu0 0.0
        %1116 = vmatpush.msra.mxu0 0.0
        %1117 = vmatpush.msra.mxu0 0.0
        %1118 = vmatpush.msra.mxu0 0.0
        %1119 = vmatpush.msra.mxu0 0.0
        %1120 = vmatpush.msra.mxu0 0.0
        %1121 = vmatpush.msra.mxu0 0.0
        %1122 = vmatpush.msra.mxu0 0.0
        %1123 = vmatpush.msra.mxu0 0.0
        %1124 = vmatpush.msra.mxu0 0.0
        %1125 = vmatpush.msra.mxu0 0.0
        %1126 = vmatpush.msra.mxu0 0.0
        %1127 = vmatpush.msra.mxu0 0.0
        %1128 = vmatpush.msra.mxu0 %v226
        %1129 = vmatpush.msra.mxu0 %v225
        %1130 = vmatmul.f32.gmra.mxu0 %v696
        %v1131 = vpop.f32.mrf.mxu0
        %v1132 = vadd.f32 0.0, %v1131
        %1133 = vmatmul.f32.gmra.mxu0 %v699
        %v1134 = vpop.f32.mrf.mxu0
        %v1135 = vadd.f32 0.0, %v1134
        %1136 = vdwg.mxu0
        %v1137 = vadd.f32 %v1109, %v1132
        %v1138 = vadd.f32 %v1112, %v1135
        %1139 = vmatpush.msra.mxu0 0.0
        %1140 = vmatpush.msra.mxu0 0.0
        %1141 = vmatpush.msra.mxu0 0.0
        %1142 = vmatpush.msra.mxu0 0.0
        %1143 = vmatpush.msra.mxu0 0.0
        %1144 = vmatpush.msra.mxu0 0.0
        %1145 = vmatpush.msra.mxu0 0.0
        %1146 = vmatpush.msra.mxu0 0.0
        %1147 = vmatpush.msra.mxu0 0.0
        %1148 = vmatpush.msra.mxu0 0.0
        %1149 = vmatpush.msra.mxu0 0.0
        %1150 = vmatpush.msra.mxu0 0.0
        %1151 = vmatpush.msra.mxu0 0.0
        %1152 = vmatpush.msra.mxu0 0.0
        %1153 = vmatpush.msra.mxu0 %v229
        %1154 = vmatpush.msra.mxu0 %v228
        %1155 = vmatmul.f32.gmra.mxu0 %v494
        %v1156 = vpop.f32.mrf.mxu0
        %v1157 = vadd.f32 0.0, %v1156
        %1158 = vmatmul.f32.gmra.mxu0 %v497
        %v1159 = vpop.f32.mrf.mxu0
        %v1160 = vadd.f32 0.0, %v1159
        %1161 = vdwg.mxu0
        %v1162 = vadd.f32 %v1137, %v1157
        %v1163 = vadd.f32 %v1138, %v1160
        %1164 = vmatpush.msra.mxu0 0.0
        %1165 = vmatpush.msra.mxu0 0.0
        %1166 = vmatpush.msra.mxu0 0.0
        %1167 = vmatpush.msra.mxu0 0.0
        %1168 = vmatpush.msra.mxu0 0.0
        %1169 = vmatpush.msra.mxu0 0.0
        %1170 = vmatpush.msra.mxu0 0.0
        %1171 = vmatpush.msra.mxu0 0.0
        %1172 = vmatpush.msra.mxu0 0.0
        %1173 = vmatpush.msra.mxu0 0.0
        %1174 = vmatpush.msra.mxu0 0.0
        %1175 = vmatpush.msra.mxu0 0.0
        %1176 = vmatpush.msra.mxu0 0.0
        %1177 = vmatpush.msra.mxu0 0.0
        %1178 = vmatpush.msra.mxu0 %v232
        %1179 = vmatpush.msra.mxu0 %v231
        %1180 = vmatmul.f32.gmra.mxu0 %v527
        %v1181 = vpop.f32.mrf.mxu0
        %v1182 = vadd.f32 0.0, %v1181
        %1183 = vmatmul.f32.gmra.mxu0 %v530
        %v1184 = vpop.f32.mrf.mxu0
        %v1185 = vadd.f32 0.0, %v1184
        %1186 = vdwg.mxu0
        %v1187 = vadd.f32 %v1162, %v1182
        %v1188 = vadd.f32 %v1163, %v1185
        %1189 = vmatpush.msra.mxu0 0.0
        %1190 = vmatpush.msra.mxu0 0.0
        %1191 = vmatpush.msra.mxu0 0.0
        %1192 = vmatpush.msra.mxu0 0.0
        %1193 = vmatpush.msra.mxu0 0.0
        %1194 = vmatpush.msra.mxu0 0.0
        %1195 = vmatpush.msra.mxu0 0.0
        %1196 = vmatpush.msra.mxu0 0.0
        %1197 = vmatpush.msra.mxu0 0.0
        %1198 = vmatpush.msra.mxu0 0.0
        %1199 = vmatpush.msra.mxu0 0.0
        %1200 = vmatpush.msra.mxu0 0.0
        %1201 = vmatpush.msra.mxu0 0.0
        %1202 = vmatpush.msra.mxu0 0.0
        %1203 = vmatpush.msra.mxu0 %v235
        %1204 = vmatpush.msra.mxu0 %v234
        %1205 = vmatmul.f32.gmra.mxu0 %v779
        %v1206 = vpop.f32.mrf.mxu0
        %v1207 = vadd.f32 0.0, %v1206
        %1208 = vmatmul.f32.gmra.mxu0 %v782
        %v1209 = vpop.f32.mrf.mxu0
        %v1210 = vadd.f32 0.0, %v1209
        %1211 = vdwg.mxu0
        %v1212 = vadd.f32 %v1187, %v1207
        %v1213 = vadd.f32 %v1188, %v1210
        %1214 = vmatpush.msra.mxu0 0.0
        %1215 = vmatpush.msra.mxu0 0.0
        %1216 = vmatpush.msra.mxu0 0.0
        %1217 = vmatpush.msra.mxu0 0.0
        %1218 = vmatpush.msra.mxu0 0.0
        %1219 = vmatpush.msra.mxu0 0.0
        %1220 = vmatpush.msra.mxu0 0.0
        %1221 = vmatpush.msra.mxu0 0.0
        %1222 = vmatpush.msra.mxu0 0.0
        %1223 = vmatpush.msra.mxu0 0.0
        %1224 = vmatpush.msra.mxu0 0.0
        %1225 = vmatpush.msra.mxu0 0.0
        %1226 = vmatpush.msra.mxu0 0.0
        %1227 = vmatpush.msra.mxu0 0.0
        %1228 = vmatpush.msra.mxu0 %v238
        %1229 = vmatpush.msra.mxu0 %v237
        %1230 = vmatmul.f32.gmra.mxu0 %v1001
        %v1231 = vpop.f32.mrf.mxu0
        %v1232 = vadd.f32 0.0, %v1231
        %1233 = vmatmul.f32.gmra.mxu0 %v1004
        %v1234 = vpop.f32.mrf.mxu0
        %v1235 = vadd.f32 0.0, %v1234
        %1236 = vdwg.mxu0
        %v1237 = vadd.f32 %v1212, %v1232
        %v1238 = vadd.f32 %v1213, %v1235
        %1239 = vmatpush.msra.mxu0 0.0
        %1240 = vmatpush.msra.mxu0 0.0
        %1241 = vmatpush.msra.mxu0 0.0
        %1242 = vmatpush.msra.mxu0 0.0
        %1243 = vmatpush.msra.mxu0 0.0
        %1244 = vmatpush.msra.mxu0 0.0
        %1245 = vmatpush.msra.mxu0 0.0
        %1246 = vmatpush.msra.mxu0 0.0
        %1247 = vmatpush.msra.mxu0 0.0
        %1248 = vmatpush.msra.mxu0 0.0
        %1249 = vmatpush.msra.mxu0 0.0
        %1250 = vmatpush.msra.mxu0 0.0
        %1251 = vmatpush.msra.mxu0 0.0
        %1252 = vmatpush.msra.mxu0 0.0
        %1253 = vmatpush.msra.mxu0 %v241
        %1254 = vmatpush.msra.mxu0 %v240
        %1255 = vmatmul.f32.gmra.mxu0 %v1034
        %v1256 = vpop.f32.mrf.mxu0
        %v1257 = vadd.f32 0.0, %v1256
        %1258 = vmatmul.f32.gmra.mxu0 %v1037
        %v1259 = vpop.f32.mrf.mxu0
        %v1260 = vadd.f32 0.0, %v1259
        %1261 = vdwg.mxu0
        %v1262 = vadd.f32 %v1237, %v1257
        %v1263 = vadd.f32 %v1238, %v1260
        %v1264 = vld [vmem:[%s997 + $0x1] sm:$0xff]
        %v1265 = vld [vmem:[%s997 + $0x9] sm:$0x7f]
        %v1267 = vsel %vm259, %v1264, 0
        %v1270 = vsel %vm259, %v1265, 0
        %1272 = vmatpush.msra.mxu0 0.0
        %1273 = vmatpush.msra.mxu0 0.0
        %1274 = vmatpush.msra.mxu0 0.0
        %1275 = vmatpush.msra.mxu0 0.0
        %1276 = vmatpush.msra.mxu0 0.0
        %1277 = vmatpush.msra.mxu0 0.0
        %1278 = vmatpush.msra.mxu0 0.0
        %1279 = vmatpush.msra.mxu0 0.0
        %1280 = vmatpush.msra.mxu0 0.0
        %1281 = vmatpush.msra.mxu0 0.0
        %1282 = vmatpush.msra.mxu0 0.0
        %1283 = vmatpush.msra.mxu0 0.0
        %1284 = vmatpush.msra.mxu0 0.0
        %1285 = vmatpush.msra.mxu0 0.0
        %1286 = vmatpush.msra.mxu0 %v244
        %1287 = vmatpush.msra.mxu0 %v243
        %1288 = vmatmul.f32.gmra.mxu0 %v1267
        %v1289 = vpop.f32.mrf.mxu0
        %v1290 = vadd.f32 0.0, %v1289
        %1291 = vmatmul.f32.gmra.mxu0 %v1270
        %v1292 = vpop.f32.mrf.mxu0
        %v1293 = vadd.f32 0.0, %v1292
        %1294 = vdwg.mxu0
        %v1295 = vadd.f32 %v1262, %v1290
        %v1296 = vadd.f32 %v1263, %v1293
        %v1297 = vadd.f32 %v1295, %v558
        %v1298 = vadd.f32 %v1296, %v558
        %v1299 = vmax.f32 %v1297, 0.0
        %v1300 = vmax.f32 %v1298, 0.0
        %v1301 = vmax.f32 %v1066, %v1299
        %v1302 = vmax.f32 %v1067, %v1300
        %v1303 = vmax.f32 %v813, %v1301
        %v1304 = vmax.f32 %v814, %v1302
        %s1305 = smul.u32 %s246, 16
        %s1306 = scalar_lea.vmem %s217, %s1305
        %vm1307 = vcmask 261120
        %1308 = vst.msk [vmem:[%s1306] sm:$0xff] %vm1307, %v1303
        %vm1309 = vcmask 260096
        %1310 = vst.msk [vmem:[%s1306 + $0x8] sm:$0x7f] %vm1309, %v1304
      $region41: #{simple_cnn_forward.4} parent=35 // loop_footer
        %s250 = sadd.s32 1, %s246
      $region42: #{simple_cnn_forward.4} parent=35 // loop_footer_branch
        %245 = sbr.rel target = $region38
      $region43: #{simple_cnn_forward.4} parent=35 // loop_exit
        _
      %p1311 = scmp.lt.s32.totalorder %s15, 1
      %s1312 = scalar_select %p1311, %s15, 1
      %s1313 = smul.addr %s1312, 30
      %s1314 = smul.addr %s1313, 8
      %s1315 = scalar_lea.vmem %s4, %s1314
      // Predicated region
      $region44: #{simple_cnn_forward.4} parent=35 // pred_check
        %p1316 = pneg %p127
      $region45: #{simple_cnn_forward.4} parent=35 // pred_check_branch
        %1318 = sbr.rel (%p1316) target = $region47
      $region46: #{simple_cnn_forward.4} parent=35 // pred_region
        _
      $region47: #{simple_cnn_forward.4} parent=35 // pred_fallthru
        _
    $region36: #{simple_cnn_forward.4} parent=5 // pred_fallthru
      _
    %p1319 = scmp.le.s32.totalorder 2, %s10
    // Predicated region
    $region48: #{simple_cnn_forward.4} parent=5 // pred_check
      %p1320 = pneg %p1319
    $region49: #{simple_cnn_forward.4} parent=5 // pred_check_branch
      %1322 = sbr.rel (%p1320) target = $region51
    $region50: #{simple_cnn_forward.4} parent=5 // pred_region
      %s1323 = ssub.s32 %s10, 2
      // Predicated region
      $region52: #{simple_cnn_forward.4} parent=50 // pred_check
        %p1324 = pneg %p133
      $region53: #{simple_cnn_forward.4} parent=50 // pred_check_branch
        %1326 = sbr.rel (%p1324) target = $region55
      $region54: #{simple_cnn_forward.4} parent=50 // pred_region
        %p1327 = scmp.lt.s32.totalorder %s16, 1
        %s1328 = scalar_select %p1327, %s16, 1
        %s1329 = smul.addr %s1328, 30
        %s1330 = smul.addr %s1329, 8
        %s1331 = scalar_lea.vmem %s4, %s1330
      $region55: #{simple_cnn_forward.4} parent=50 // pred_fallthru
        _
    $region51: #{simple_cnn_forward.4} parent=5 // pred_fallthru
      _
  $region6: #{simple_cnn_forward.4} parent=0 // loop_footer
    %s14 = sadd.s32 1, %s10
  $region7: #{simple_cnn_forward.4} parent=0 // loop_footer_branch
    %9 = sbr.rel target = $region3
  $region8: #{simple_cnn_forward.4} parent=0 // loop_exit
    _

// kernel: simple_cnn_forward.5
$region0: #{simple_cnn_forward.5}
  #allocation0 [shape = 'u32[]', space=smem, size = 0x4, offset = 0x4, fixed_abs, tag = 'smem constant byte address 0x4 - core index']
  #allocation1 [shape = 'u32[72,128]{1,0:T(1,128)}', space=vmem, size = 0x9000, scoped, tag = 'internal scratch']
  %s0 = inlined_call_operand.vmem [shape: f32[2,7200], index: 0, kind: input, shape index: {}]
  %s1 = inlined_call_operand.vmem [shape: f32[7200,128], index: 1, kind: input, shape index: {}]
  %s2 = inlined_call_operand.vmem [shape: f32[1,128], index: 2, kind: input, shape index: {}]
  %s3 = inlined_call_operand.vmem [shape: f32[128,5], index: 3, kind: input, shape index: {}]
  %s4 = inlined_call_operand.vmem [shape: f32[1,5], index: 4, kind: input, shape index: {}]
  %s5 = inlined_call_operand.hbm [shape: f32[2,5], index: 5, kind: output, shape index: {}]
  %s6 = sld [smem:[#allocation0]]
  $region30: #{simple_cnn_forward.5} parent=0
    _
  %s8 = ssub.s32 1, %s6
  %s9 = scalar_select 0, %s8, %s6
  $region1: #{simple_cnn_forward.5} parent=0
    #allocation2 [shape = 'u8[1024]{0}', space=vmem, size = 0x400, scoped, tag = 'output window, operand 0, single buffered']
    #allocation3 [shape = 's32[1]{0}', space=sflag, size = 0x4, scoped, tag = 'scoped memory for simple_cnn_forward.5']
    %10 = vsyncpa [#allocation3], 0
    // Predicated region
    $region2: #{simple_cnn_forward.5} parent=1 // pred_check
      _
    $region3: #{simple_cnn_forward.5} parent=1 // pred_check_branch
      %12 = sbr.rel (0) target = $region5
    $region4: #{simple_cnn_forward.5} parent=1 // pred_region
      _
    $region5: #{simple_cnn_forward.5} parent=1 // pred_fallthru
      _
    // Predicated region
    $region6: #{simple_cnn_forward.5} parent=1 // pred_check
      _
    $region7: #{simple_cnn_forward.5} parent=1 // pred_check_branch
      %14 = sbr.rel (0) target = $region9
    $region8: #{simple_cnn_forward.5} parent=1 // pred_region
      _
    $region9: #{simple_cnn_forward.5} parent=1 // pred_fallthru
      _
    // Predicated region
    $region10: #{simple_cnn_forward.5} parent=1 // pred_check
      _
    $region11: #{simple_cnn_forward.5} parent=1 // pred_check_branch
      %16 = sbr.rel (0) target = $region13
    $region12: #{simple_cnn_forward.5} parent=1 // pred_region
      _
    $region13: #{simple_cnn_forward.5} parent=1 // pred_fallthru
      _
    // Predicated region
    $region14: #{simple_cnn_forward.5} parent=1 // pred_check
      _
    $region15: #{simple_cnn_forward.5} parent=1 // pred_check_branch
      %18 = sbr.rel (0) target = $region17
    $region16: #{simple_cnn_forward.5} parent=1 // pred_region
      _
    $region17: #{simple_cnn_forward.5} parent=1 // pred_fallthru
      _
    // Predicated region
    $region18: #{simple_cnn_forward.5} parent=1 // pred_check
      _
    $region19: #{simple_cnn_forward.5} parent=1 // pred_check_branch
      %20 = sbr.rel (0) target = $region21
    $region20: #{simple_cnn_forward.5} parent=1 // pred_region
      _
    $region21: #{simple_cnn_forward.5} parent=1 // pred_fallthru
      _
    %v21 = vld [vmem:[%s0] sm:$0xff]
    %v22 = vld [vmem:[%s0 + $0x8] sm:$0xff]
    %v23 = vld [vmem:[%s0 + $0x10] sm:$0xff]
    %v24 = vld [vmem:[%s0 + $0x18] sm:$0xff]
    %v25 = vld [vmem:[%s0 + $0x20] sm:$0xff]
    %v26 = vld [vmem:[%s0 + $0x28] sm:$0xff]
    %v27 = vld [vmem:[%s0 + $0x30] sm:$0xff]
    %v28 = vld [vmem:[%s0 + $0x38] sm:$0xff]
    %v29 = vld [vmem:[%s0 + $0x40] sm:$0xff]
    %v30 = vld [vmem:[%s0 + $0x48] sm:$0xff]
    %v31 = vld [vmem:[%s0 + $0x50] sm:$0xff]
    %v32 = vld [vmem:[%s0 + $0x58] sm:$0xff]
    %v33 = vld [vmem:[%s0 + $0x60] sm:$0xff]
    %v34 = vld [vmem:[%s0 + $0x68] sm:$0xff]
    %v35 = vld [vmem:[%s0 + $0x70] sm:$0x3]
    %v36 = vld [vmem:[%s1] sm:$0xff]
    %v37 = vld [vmem:[%s1 + $0x8] sm:$0xff]
    %v38 = vld [vmem:[%s1 + $0x10] sm:$0xff]
    %v39 = vld [vmem:[%s1 + $0x18] sm:$0xff]
    %v40 = vld [vmem:[%s1 + $0x20] sm:$0xff]
    %v41 = vld [vmem:[%s1 + $0x28] sm:$0xff]
    %v42 = vld [vmem:[%s1 + $0x30] sm:$0xff]
    %v43 = vld [vmem:[%s1 + $0x38] sm:$0xff]
    %v44 = vld [vmem:[%s1 + $0x40] sm:$0xff]
    %v45 = vld [vmem:[%s1 + $0x48] sm:$0xff]
    %v46 = vld [vmem:[%s1 + $0x50] sm:$0xff]
    %v47 = vld [vmem:[%s1 + $0x58] sm:$0xff]
    %v48 = vld [vmem:[%s1 + $0x60] sm:$0xff]
    %v49 = vld [vmem:[%s1 + $0x68] sm:$0xff]
    %v50 = vld [vmem:[%s1 + $0x70] sm:$0xff]
    %v51 = vld [vmem:[%s1 + $0x78] sm:$0xff]
    %v52 = vld [vmem:[%s1 + $0x80] sm:$0xff]
    %v53 = vld [vmem:[%s1 + $0x88] sm:$0xff]
    %v54 = vld [vmem:[%s1 + $0x90] sm:$0xff]
    %v55 = vld [vmem:[%s1 + $0x98] sm:$0xff]
    %v56 = vld [vmem:[%s1 + $0xa0] sm:$0xff]
    %v57 = vld [vmem:[%s1 + $0xa8] sm:$0xff]
    %v58 = vld [vmem:[%s1 + $0xb0] sm:$0xff]
    %v59 = vld [vmem:[%s1 + $0xb8] sm:$0xff]
    %v60 = vld [vmem:[%s1 + $0xc0] sm:$0xff]
    %v61 = vld [vmem:[%s1 + $0xc8] sm:$0xff]
    %v62 = vld [vmem:[%s1 + $0xd0] sm:$0xff]
    %v63 = vld [vmem:[%s1 + $0xd8] sm:$0xff]
    %v64 = vld [vmem:[%s1 + $0xe0] sm:$0xff]
    %v65 = vld [vmem:[%s1 + $0xe8] sm:$0xff]
    %v66 = vld [vmem:[%s1 + $0xf0] sm:$0xff]
    %v67 = vld [vmem:[%s1 + $0xf8] sm:$0xff]
    %v68 = vld [vmem:[%s1 + $0x100] sm:$0xff]
    %v69 = vld [vmem:[%s1 + $0x108] sm:$0xff]
    %v70 = vld [vmem:[%s1 + $0x110] sm:$0xff]
    %v71 = vld [vmem:[%s1 + $0x118] sm:$0xff]
    %v72 = vld [vmem:[%s1 + $0x120] sm:$0xff]
    %v73 = vld [vmem:[%s1 + $0x128] sm:$0xff]
    %v74 = vld [vmem:[%s1 + $0x130] sm:$0xff]
    %v75 = vld [vmem:[%s1 + $0x138] sm:$0xff]
    %v76 = vld [vmem:[%s1 + $0x140] sm:$0xff]
    %v77 = vld [vmem:[%s1 + $0x148] sm:$0xff]
    %v78 = vld [vmem:[%s1 + $0x150] sm:$0xff]
    %v79 = vld [vmem:[%s1 + $0x158] sm:$0xff]
    %v80 = vld [vmem:[%s1 + $0x160] sm:$0xff]
    %v81 = vld [vmem:[%s1 + $0x168] sm:$0xff]
    %v82 = vld [vmem:[%s1 + $0x170] sm:$0xff]
    %v83 = vld [vmem:[%s1 + $0x178] sm:$0xff]
    %v84 = vld [vmem:[%s1 + $0x180] sm:$0xff]
    %v85 = vld [vmem:[%s1 + $0x188] sm:$0xff]
    %v86 = vld [vmem:[%s1 + $0x190] sm:$0xff]
    %v87 = vld [vmem:[%s1 + $0x198] sm:$0xff]
    %v88 = vld [vmem:[%s1 + $0x1a0] sm:$0xff]
    %v89 = vld [vmem:[%s1 + $0x1a8] sm:$0xff]
    %v90 = vld [vmem:[%s1 + $0x1b0] sm:$0xff]
    %v91 = vld [vmem:[%s1 + $0x1b8] sm:$0xff]
    %v92 = vld [vmem:[%s1 + $0x1c0] sm:$0xff]
    %v93 = vld [vmem:[%s1 + $0x1c8] sm:$0xff]
    %v94 = vld [vmem:[%s1 + $0x1d0] sm:$0xff]
    %v95 = vld [vmem:[%s1 + $0x1d8] sm:$0xff]
    %v96 = vld [vmem:[%s1 + $0x1e0] sm:$0xff]
    %v97 = vld [vmem:[%s1 + $0x1e8] sm:$0xff]
    %v98 = vld [vmem:[%s1 + $0x1f0] sm:$0xff]
    %v99 = vld [vmem:[%s1 + $0x1f8] sm:$0xff]
    %v100 = vld [vmem:[%s1 + $0x200] sm:$0xff]
    %v101 = vld [vmem:[%s1 + $0x208] sm:$0xff]
    %v102 = vld [vmem:[%s1 + $0x210] sm:$0xff]
    %v103 = vld [vmem:[%s1 + $0x218] sm:$0xff]
    %v104 = vld [vmem:[%s1 + $0x220] sm:$0xff]
    %v105 = vld [vmem:[%s1 + $0x228] sm:$0xff]
    %v106 = vld [vmem:[%s1 + $0x230] sm:$0xff]
    %v107 = vld [vmem:[%s1 + $0x238] sm:$0xff]
    %v108 = vld [vmem:[%s1 + $0x240] sm:$0xff]
    %v109 = vld [vmem:[%s1 + $0x248] sm:$0xff]
    %v110 = vld [vmem:[%s1 + $0x250] sm:$0xff]
    %v111 = vld [vmem:[%s1 + $0x258] sm:$0xff]
    %v112 = vld [vmem:[%s1 + $0x260] sm:$0xff]
    %v113 = vld [vmem:[%s1 + $0x268] sm:$0xff]
    %v114 = vld [vmem:[%s1 + $0x270] sm:$0xff]
    %v115 = vld [vmem:[%s1 + $0x278] sm:$0xff]
    %v116 = vld [vmem:[%s1 + $0x280] sm:$0xff]
    %v117 = vld [vmem:[%s1 + $0x288] sm:$0xff]
    %v118 = vld [vmem:[%s1 + $0x290] sm:$0xff]
    %v119 = vld [vmem:[%s1 + $0x298] sm:$0xff]
    %v120 = vld [vmem:[%s1 + $0x2a0] sm:$0xff]
    %v121 = vld [vmem:[%s1 + $0x2a8] sm:$0xff]
    %v122 = vld [vmem:[%s1 + $0x2b0] sm:$0xff]
    %v123 = vld [vmem:[%s1 + $0x2b8] sm:$0xff]
    %v124 = vld [vmem:[%s1 + $0x2c0] sm:$0xff]
    %v125 = vld [vmem:[%s1 + $0x2c8] sm:$0xff]
    %v126 = vld [vmem:[%s1 + $0x2d0] sm:$0xff]
    %v127 = vld [vmem:[%s1 + $0x2d8] sm:$0xff]
    %v128 = vld [vmem:[%s1 + $0x2e0] sm:$0xff]
    %v129 = vld [vmem:[%s1 + $0x2e8] sm:$0xff]
    %v130 = vld [vmem:[%s1 + $0x2f0] sm:$0xff]
    %v131 = vld [vmem:[%s1 + $0x2f8] sm:$0xff]
    %v132 = vld [vmem:[%s1 + $0x300] sm:$0xff]
    %v133 = vld [vmem:[%s1 + $0x308] sm:$0xff]
    %v134 = vld [vmem:[%s1 + $0x310] sm:$0xff]
    %v135 = vld [vmem:[%s1 + $0x318] sm:$0xff]
    %v136 = vld [vmem:[%s1 + $0x320] sm:$0xff]
    %v137 = vld [vmem:[%s1 + $0x328] sm:$0xff]
    %v138 = vld [vmem:[%s1 + $0x330] sm:$0xff]
    %v139 = vld [vmem:[%s1 + $0x338] sm:$0xff]
    %v140 = vld [vmem:[%s1 + $0x340] sm:$0xff]
    %v141 = vld [vmem:[%s1 + $0x348] sm:$0xff]
    %v142 = vld [vmem:[%s1 + $0x350] sm:$0xff]
    %v143 = vld [vmem:[%s1 + $0x358] sm:$0xff]
    %v144 = vld [vmem:[%s1 + $0x360] sm:$0xff]
    %v145 = vld [vmem:[%s1 + $0x368] sm:$0xff]
    %v146 = vld [vmem:[%s1 + $0x370] sm:$0xff]
    %v147 = vld [vmem:[%s1 + $0x378] sm:$0xff]
    %v148 = vld [vmem:[%s1 + $0x380] sm:$0xff]
    %v149 = vld [vmem:[%s1 + $0x388] sm:$0xff]
    %v150 = vld [vmem:[%s1 + $0x390] sm:$0xff]
    %v151 = vld [vmem:[%s1 + $0x398] sm:$0xff]
    %v152 = vld [vmem:[%s1 + $0x3a0] sm:$0xff]
    %v153 = vld [vmem:[%s1 + $0x3a8] sm:$0xff]
    %v154 = vld [vmem:[%s1 + $0x3b0] sm:$0xff]
    %v155 = vld [vmem:[%s1 + $0x3b8] sm:$0xff]
    %v156 = vld [vmem:[%s1 + $0x3c0] sm:$0xff]
    %v157 = vld [vmem:[%s1 + $0x3c8] sm:$0xff]
    %v158 = vld [vmem:[%s1 + $0x3d0] sm:$0xff]
    %v159 = vld [vmem:[%s1 + $0x3d8] sm:$0xff]
    %v160 = vld [vmem:[%s1 + $0x3e0] sm:$0xff]
    %v161 = vld [vmem:[%s1 + $0x3e8] sm:$0xff]
    %v162 = vld [vmem:[%s1 + $0x3f0] sm:$0xff]
    %v163 = vld [vmem:[%s1 + $0x3f8] sm:$0xff]
    %v164 = vld [vmem:[%s1 + $0x400] sm:$0xff]
    %v165 = vld [vmem:[%s1 + $0x408] sm:$0xff]
    %v166 = vld [vmem:[%s1 + $0x410] sm:$0xff]
    %v167 = vld [vmem:[%s1 + $0x418] sm:$0xff]
    %v168 = vld [vmem:[%s1 + $0x420] sm:$0xff]
    %v169 = vld [vmem:[%s1 + $0x428] sm:$0xff]
    %v170 = vld [vmem:[%s1 + $0x430] sm:$0xff]
    %v171 = vld [vmem:[%s1 + $0x438] sm:$0xff]
    %v172 = vld [vmem:[%s1 + $0x440] sm:$0xff]
    %v173 = vld [vmem:[%s1 + $0x448] sm:$0xff]
    %v174 = vld [vmem:[%s1 + $0x450] sm:$0xff]
    %v175 = vld [vmem:[%s1 + $0x458] sm:$0xff]
    %v176 = vld [vmem:[%s1 + $0x460] sm:$0xff]
    %v177 = vld [vmem:[%s1 + $0x468] sm:$0xff]
    %v178 = vld [vmem:[%s1 + $0x470] sm:$0xff]
    %v179 = vld [vmem:[%s1 + $0x478] sm:$0xff]
    %v180 = vld [vmem:[%s1 + $0x480] sm:$0xff]
    %v181 = vld [vmem:[%s1 + $0x488] sm:$0xff]
    %v182 = vld [vmem:[%s1 + $0x490] sm:$0xff]
    %v183 = vld [vmem:[%s1 + $0x498] sm:$0xff]
    %v184 = vld [vmem:[%s1 + $0x4a0] sm:$0xff]
    %v185 = vld [vmem:[%s1 + $0x4a8] sm:$0xff]
    %v186 = vld [vmem:[%s1 + $0x4b0] sm:$0xff]
    %v187 = vld [vmem:[%s1 + $0x4b8] sm:$0xff]
    %v188 = vld [vmem:[%s1 + $0x4c0] sm:$0xff]
    %v189 = vld [vmem:[%s1 + $0x4c8] sm:$0xff]
    %v190 = vld [vmem:[%s1 + $0x4d0] sm:$0xff]
    %v191 = vld [vmem:[%s1 + $0x4d8] sm:$0xff]
    %v192 = vld [vmem:[%s1 + $0x4e0] sm:$0xff]
    %v193 = vld [vmem:[%s1 + $0x4e8] sm:$0xff]
    %v194 = vld [vmem:[%s1 + $0x4f0] sm:$0xff]
    %v195 = vld [vmem:[%s1 + $0x4f8] sm:$0xff]
    %v196 = vld [vmem:[%s1 + $0x500] sm:$0xff]
    %v197 = vld [vmem:[%s1 + $0x508] sm:$0xff]
    %v198 = vld [vmem:[%s1 + $0x510] sm:$0xff]
    %v199 = vld [vmem:[%s1 + $0x518] sm:$0xff]
    %v200 = vld [vmem:[%s1 + $0x520] sm:$0xff]
    %v201 = vld [vmem:[%s1 + $0x528] sm:$0xff]
    %v202 = vld [vmem:[%s1 + $0x530] sm:$0xff]
    %v203 = vld [vmem:[%s1 + $0x538] sm:$0xff]
    %v204 = vld [vmem:[%s1 + $0x540] sm:$0xff]
    %v205 = vld [vmem:[%s1 + $0x548] sm:$0xff]
    %v206 = vld [vmem:[%s1 + $0x550] sm:$0xff]
    %v207 = vld [vmem:[%s1 + $0x558] sm:$0xff]
    %v208 = vld [vmem:[%s1 + $0x560] sm:$0xff]
    %v209 = vld [vmem:[%s1 + $0x568] sm:$0xff]
    %v210 = vld [vmem:[%s1 + $0x570] sm:$0xff]
    %v211 = vld [vmem:[%s1 + $0x578] sm:$0xff]
    %v212 = vld [vmem:[%s1 + $0x580] sm:$0xff]
    %v213 = vld [vmem:[%s1 + $0x588] sm:$0xff]
    %v214 = vld [vmem:[%s1 + $0x590] sm:$0xff]
    %v215 = vld [vmem:[%s1 + $0x598] sm:$0xff]
    %v216 = vld [vmem:[%s1 + $0x5a0] sm:$0xff]
    %v217 = vld [vmem:[%s1 + $0x5a8] sm:$0xff]
    %v218 = vld [vmem:[%s1 + $0x5b0] sm:$0xff]
    %v219 = vld [vmem:[%s1 + $0x5b8] sm:$0xff]
    %v220 = vld [vmem:[%s1 + $0x5c0] sm:$0xff]
    %v221 = vld [vmem:[%s1 + $0x5c8] sm:$0xff]
    %v222 = vld [vmem:[%s1 + $0x5d0] sm:$0xff]
    %v223 = vld [vmem:[%s1 + $0x5d8] sm:$0xff]
    %v224 = vld [vmem:[%s1 + $0x5e0] sm:$0xff]
    %v225 = vld [vmem:[%s1 + $0x5e8] sm:$0xff]
    %v226 = vld [vmem:[%s1 + $0x5f0] sm:$0xff]
    %v227 = vld [vmem:[%s1 + $0x5f8] sm:$0xff]
    %v228 = vld [vmem:[%s1 + $0x600] sm:$0xff]
    %v229 = vld [vmem:[%s1 + $0x608] sm:$0xff]
    %v230 = vld [vmem:[%s1 + $0x610] sm:$0xff]
    %v231 = vld [vmem:[%s1 + $0x618] sm:$0xff]
    %v232 = vld [vmem:[%s1 + $0x620] sm:$0xff]
    %v233 = vld [vmem:[%s1 + $0x628] sm:$0xff]
    %v234 = vld [vmem:[%s1 + $0x630] sm:$0xff]
    %v235 = vld [vmem:[%s1 + $0x638] sm:$0xff]
    %v236 = vld [vmem:[%s1 + $0x640] sm:$0xff]
    %v237 = vld [vmem:[%s1 + $0x648] sm:$0xff]
    %v238 = vld [vmem:[%s1 + $0x650] sm:$0xff]
    %v239 = vld [vmem:[%s1 + $0x658] sm:$0xff]
    %v240 = vld [vmem:[%s1 + $0x660] sm:$0xff]
    %v241 = vld [vmem:[%s1 + $0x668] sm:$0xff]
    %v242 = vld [vmem:[%s1 + $0x670] sm:$0xff]
    %v243 = vld [vmem:[%s1 + $0x678] sm:$0xff]
    %v244 = vld [vmem:[%s1 + $0x680] sm:$0xff]
    %v245 = vld [vmem:[%s1 + $0x688] sm:$0xff]
    %v246 = vld [vmem:[%s1 + $0x690] sm:$0xff]
    %v247 = vld [vmem:[%s1 + $0x698] sm:$0xff]
    %v248 = vld [vmem:[%s1 + $0x6a0] sm:$0xff]
    %v249 = vld [vmem:[%s1 + $0x6a8] sm:$0xff]
    %v250 = vld [vmem:[%s1 + $0x6b0] sm:$0xff]
    %v251 = vld [vmem:[%s1 + $0x6b8] sm:$0xff]
    %v252 = vld [vmem:[%s1 + $0x6c0] sm:$0xff]
    %v253 = vld [vmem:[%s1 + $0x6c8] sm:$0xff]
    %v254 = vld [vmem:[%s1 + $0x6d0] sm:$0xff]
    %v255 = vld [vmem:[%s1 + $0x6d8] sm:$0xff]
    %v256 = vld [vmem:[%s1 + $0x6e0] sm:$0xff]
    %v257 = vld [vmem:[%s1 + $0x6e8] sm:$0xff]
    %v258 = vld [vmem:[%s1 + $0x6f0] sm:$0xff]
    %v259 = vld [vmem:[%s1 + $0x6f8] sm:$0xff]
    %v260 = vld [vmem:[%s1 + $0x700] sm:$0xff]
    %v261 = vld [vmem:[%s1 + $0x708] sm:$0xff]
    %v262 = vld [vmem:[%s1 + $0x710] sm:$0xff]
    %v263 = vld [vmem:[%s1 + $0x718] sm:$0xff]
    %v264 = vld [vmem:[%s1 + $0x720] sm:$0xff]
    %v265 = vld [vmem:[%s1 + $0x728] sm:$0xff]
    %v266 = vld [vmem:[%s1 + $0x730] sm:$0xff]
    %v267 = vld [vmem:[%s1 + $0x738] sm:$0xff]
    %v268 = vld [vmem:[%s1 + $0x740] sm:$0xff]
    %v269 = vld [vmem:[%s1 + $0x748] sm:$0xff]
    %v270 = vld [vmem:[%s1 + $0x750] sm:$0xff]
    %v271 = vld [vmem:[%s1 + $0x758] sm:$0xff]
    %v272 = vld [vmem:[%s1 + $0x760] sm:$0xff]
    %v273 = vld [vmem:[%s1 + $0x768] sm:$0xff]
    %v274 = vld [vmem:[%s1 + $0x770] sm:$0xff]
    %v275 = vld [vmem:[%s1 + $0x778] sm:$0xff]
    %v276 = vld [vmem:[%s1 + $0x780] sm:$0xff]
    %v277 = vld [vmem:[%s1 + $0x788] sm:$0xff]
    %v278 = vld [vmem:[%s1 + $0x790] sm:$0xff]
    %v279 = vld [vmem:[%s1 + $0x798] sm:$0xff]
    %v280 = vld [vmem:[%s1 + $0x7a0] sm:$0xff]
    %v281 = vld [vmem:[%s1 + $0x7a8] sm:$0xff]
    %v282 = vld [vmem:[%s1 + $0x7b0] sm:$0xff]
    %v283 = vld [vmem:[%s1 + $0x7b8] sm:$0xff]
    %v284 = vld [vmem:[%s1 + $0x7c0] sm:$0xff]
    %v285 = vld [vmem:[%s1 + $0x7c8] sm:$0xff]
    %v286 = vld [vmem:[%s1 + $0x7d0] sm:$0xff]
    %v287 = vld [vmem:[%s1 + $0x7d8] sm:$0xff]
    %v288 = vld [vmem:[%s1 + $0x7e0] sm:$0xff]
    %v289 = vld [vmem:[%s1 + $0x7e8] sm:$0xff]
    %v290 = vld [vmem:[%s1 + $0x7f0] sm:$0xff]
    %v291 = vld [vmem:[%s1 + $0x7f8] sm:$0xff]
    %v292 = vld [vmem:[%s1 + $0x800] sm:$0xff]
    %v293 = vld [vmem:[%s1 + $0x808] sm:$0xff]
    %v294 = vld [vmem:[%s1 + $0x810] sm:$0xff]
    %v295 = vld [vmem:[%s1 + $0x818] sm:$0xff]
    %v296 = vld [vmem:[%s1 + $0x820] sm:$0xff]
    %v297 = vld [vmem:[%s1 + $0x828] sm:$0xff]
    %v298 = vld [vmem:[%s1 + $0x830] sm:$0xff]
    %v299 = vld [vmem:[%s1 + $0x838] sm:$0xff]
    %v300 = vld [vmem:[%s1 + $0x840] sm:$0xff]
    %v301 = vld [vmem:[%s1 + $0x848] sm:$0xff]
    %v302 = vld [vmem:[%s1 + $0x850] sm:$0xff]
    %v303 = vld [vmem:[%s1 + $0x858] sm:$0xff]
    %v304 = vld [vmem:[%s1 + $0x860] sm:$0xff]
    %v305 = vld [vmem:[%s1 + $0x868] sm:$0xff]
    %v306 = vld [vmem:[%s1 + $0x870] sm:$0xff]
    %v307 = vld [vmem:[%s1 + $0x878] sm:$0xff]
    %v308 = vld [vmem:[%s1 + $0x880] sm:$0xff]
    %v309 = vld [vmem:[%s1 + $0x888] sm:$0xff]
    %v310 = vld [vmem:[%s1 + $0x890] sm:$0xff]
    %v311 = vld [vmem:[%s1 + $0x898] sm:$0xff]
    %v312 = vld [vmem:[%s1 + $0x8a0] sm:$0xff]
    %v313 = vld [vmem:[%s1 + $0x8a8] sm:$0xff]
    %v314 = vld [vmem:[%s1 + $0x8b0] sm:$0xff]
    %v315 = vld [vmem:[%s1 + $0x8b8] sm:$0xff]
    %v316 = vld [vmem:[%s1 + $0x8c0] sm:$0xff]
    %v317 = vld [vmem:[%s1 + $0x8c8] sm:$0xff]
    %v318 = vld [vmem:[%s1 + $0x8d0] sm:$0xff]
    %v319 = vld [vmem:[%s1 + $0x8d8] sm:$0xff]
    %v320 = vld [vmem:[%s1 + $0x8e0] sm:$0xff]
    %v321 = vld [vmem:[%s1 + $0x8e8] sm:$0xff]
    %v322 = vld [vmem:[%s1 + $0x8f0] sm:$0xff]
    %v323 = vld [vmem:[%s1 + $0x8f8] sm:$0xff]
    %v324 = vld [vmem:[%s1 + $0x900] sm:$0xff]
    %v325 = vld [vmem:[%s1 + $0x908] sm:$0xff]
    %v326 = vld [vmem:[%s1 + $0x910] sm:$0xff]
    %v327 = vld [vmem:[%s1 + $0x918] sm:$0xff]
    %v328 = vld [vmem:[%s1 + $0x920] sm:$0xff]
    %v329 = vld [vmem:[%s1 + $0x928] sm:$0xff]
    %v330 = vld [vmem:[%s1 + $0x930] sm:$0xff]
    %v331 = vld [vmem:[%s1 + $0x938] sm:$0xff]
    %v332 = vld [vmem:[%s1 + $0x940] sm:$0xff]
    %v333 = vld [vmem:[%s1 + $0x948] sm:$0xff]
    %v334 = vld [vmem:[%s1 + $0x950] sm:$0xff]
    %v335 = vld [vmem:[%s1 + $0x958] sm:$0xff]
    %v336 = vld [vmem:[%s1 + $0x960] sm:$0xff]
    %v337 = vld [vmem:[%s1 + $0x968] sm:$0xff]
    %v338 = vld [vmem:[%s1 + $0x970] sm:$0xff]
    %v339 = vld [vmem:[%s1 + $0x978] sm:$0xff]
    %v340 = vld [vmem:[%s1 + $0x980] sm:$0xff]
    %v341 = vld [vmem:[%s1 + $0x988] sm:$0xff]
    %v342 = vld [vmem:[%s1 + $0x990] sm:$0xff]
    %v343 = vld [vmem:[%s1 + $0x998] sm:$0xff]
    %v344 = vld [vmem:[%s1 + $0x9a0] sm:$0xff]
    %v345 = vld [vmem:[%s1 + $0x9a8] sm:$0xff]
    %v346 = vld [vmem:[%s1 + $0x9b0] sm:$0xff]
    %v347 = vld [vmem:[%s1 + $0x9b8] sm:$0xff]
    %v348 = vld [vmem:[%s1 + $0x9c0] sm:$0xff]
    %v349 = vld [vmem:[%s1 + $0x9c8] sm:$0xff]
    %v350 = vld [vmem:[%s1 + $0x9d0] sm:$0xff]
    %v351 = vld [vmem:[%s1 + $0x9d8] sm:$0xff]
    %v352 = vld [vmem:[%s1 + $0x9e0] sm:$0xff]
    %v353 = vld [vmem:[%s1 + $0x9e8] sm:$0xff]
    %v354 = vld [vmem:[%s1 + $0x9f0] sm:$0xff]
    %v355 = vld [vmem:[%s1 + $0x9f8] sm:$0xff]
    %v356 = vld [vmem:[%s1 + $0xa00] sm:$0xff]
    %v357 = vld [vmem:[%s1 + $0xa08] sm:$0xff]
    %v358 = vld [vmem:[%s1 + $0xa10] sm:$0xff]
    %v359 = vld [vmem:[%s1 + $0xa18] sm:$0xff]
    %v360 = vld [vmem:[%s1 + $0xa20] sm:$0xff]
    %v361 = vld [vmem:[%s1 + $0xa28] sm:$0xff]
    %v362 = vld [vmem:[%s1 + $0xa30] sm:$0xff]
    %v363 = vld [vmem:[%s1 + $0xa38] sm:$0xff]
    %v364 = vld [vmem:[%s1 + $0xa40] sm:$0xff]
    %v365 = vld [vmem:[%s1 + $0xa48] sm:$0xff]
    %v366 = vld [vmem:[%s1 + $0xa50] sm:$0xff]
    %v367 = vld [vmem:[%s1 + $0xa58] sm:$0xff]
    %v368 = vld [vmem:[%s1 + $0xa60] sm:$0xff]
    %v369 = vld [vmem:[%s1 + $0xa68] sm:$0xff]
    %v370 = vld [vmem:[%s1 + $0xa70] sm:$0xff]
    %v371 = vld [vmem:[%s1 + $0xa78] sm:$0xff]
    %v372 = vld [vmem:[%s1 + $0xa80] sm:$0xff]
    %v373 = vld [vmem:[%s1 + $0xa88] sm:$0xff]
    %v374 = vld [vmem:[%s1 + $0xa90] sm:$0xff]
    %v375 = vld [vmem:[%s1 + $0xa98] sm:$0xff]
    %v376 = vld [vmem:[%s1 + $0xaa0] sm:$0xff]
    %v377 = vld [vmem:[%s1 + $0xaa8] sm:$0xff]
    %v378 = vld [vmem:[%s1 + $0xab0] sm:$0xff]
    %v379 = vld [vmem:[%s1 + $0xab8] sm:$0xff]
    %v380 = vld [vmem:[%s1 + $0xac0] sm:$0xff]
    %v381 = vld [vmem:[%s1 + $0xac8] sm:$0xff]
    %v382 = vld [vmem:[%s1 + $0xad0] sm:$0xff]
    %v383 = vld [vmem:[%s1 + $0xad8] sm:$0xff]
    %v384 = vld [vmem:[%s1 + $0xae0] sm:$0xff]
    %v385 = vld [vmem:[%s1 + $0xae8] sm:$0xff]
    %v386 = vld [vmem:[%s1 + $0xaf0] sm:$0xff]
    %v387 = vld [vmem:[%s1 + $0xaf8] sm:$0xff]
    %v388 = vld [vmem:[%s1 + $0xb00] sm:$0xff]
    %v389 = vld [vmem:[%s1 + $0xb08] sm:$0xff]
    %v390 = vld [vmem:[%s1 + $0xb10] sm:$0xff]
    %v391 = vld [vmem:[%s1 + $0xb18] sm:$0xff]
    %v392 = vld [vmem:[%s1 + $0xb20] sm:$0xff]
    %v393 = vld [vmem:[%s1 + $0xb28] sm:$0xff]
    %v394 = vld [vmem:[%s1 + $0xb30] sm:$0xff]
    %v395 = vld [vmem:[%s1 + $0xb38] sm:$0xff]
    %v396 = vld [vmem:[%s1 + $0xb40] sm:$0xff]
    %v397 = vld [vmem:[%s1 + $0xb48] sm:$0xff]
    %v398 = vld [vmem:[%s1 + $0xb50] sm:$0xff]
    %v399 = vld [vmem:[%s1 + $0xb58] sm:$0xff]
    %v400 = vld [vmem:[%s1 + $0xb60] sm:$0xff]
    %v401 = vld [vmem:[%s1 + $0xb68] sm:$0xff]
    %v402 = vld [vmem:[%s1 + $0xb70] sm:$0xff]
    %v403 = vld [vmem:[%s1 + $0xb78] sm:$0xff]
    %v404 = vld [vmem:[%s1 + $0xb80] sm:$0xff]
    %v405 = vld [vmem:[%s1 + $0xb88] sm:$0xff]
    %v406 = vld [vmem:[%s1 + $0xb90] sm:$0xff]
    %v407 = vld [vmem:[%s1 + $0xb98] sm:$0xff]
    %v408 = vld [vmem:[%s1 + $0xba0] sm:$0xff]
    %v409 = vld [vmem:[%s1 + $0xba8] sm:$0xff]
    %v410 = vld [vmem:[%s1 + $0xbb0] sm:$0xff]
    %v411 = vld [vmem:[%s1 + $0xbb8] sm:$0xff]
    %v412 = vld [vmem:[%s1 + $0xbc0] sm:$0xff]
    %v413 = vld [vmem:[%s1 + $0xbc8] sm:$0xff]
    %v414 = vld [vmem:[%s1 + $0xbd0] sm:$0xff]
    %v415 = vld [vmem:[%s1 + $0xbd8] sm:$0xff]
    %v416 = vld [vmem:[%s1 + $0xbe0] sm:$0xff]
    %v417 = vld [vmem:[%s1 + $0xbe8] sm:$0xff]
    %v418 = vld [vmem:[%s1 + $0xbf0] sm:$0xff]
    %v419 = vld [vmem:[%s1 + $0xbf8] sm:$0xff]
    %v420 = vld [vmem:[%s1 + $0xc00] sm:$0xff]
    %v421 = vld [vmem:[%s1 + $0xc08] sm:$0xff]
    %v422 = vld [vmem:[%s1 + $0xc10] sm:$0xff]
    %v423 = vld [vmem:[%s1 + $0xc18] sm:$0xff]
    %v424 = vld [vmem:[%s1 + $0xc20] sm:$0xff]
    %v425 = vld [vmem:[%s1 + $0xc28] sm:$0xff]
    %v426 = vld [vmem:[%s1 + $0xc30] sm:$0xff]
    %v427 = vld [vmem:[%s1 + $0xc38] sm:$0xff]
    %v428 = vld [vmem:[%s1 + $0xc40] sm:$0xff]
    %v429 = vld [vmem:[%s1 + $0xc48] sm:$0xff]
    %v430 = vld [vmem:[%s1 + $0xc50] sm:$0xff]
    %v431 = vld [vmem:[%s1 + $0xc58] sm:$0xff]
    %v432 = vld [vmem:[%s1 + $0xc60] sm:$0xff]
    %v433 = vld [vmem:[%s1 + $0xc68] sm:$0xff]
    %v434 = vld [vmem:[%s1 + $0xc70] sm:$0xff]
    %v435 = vld [vmem:[%s1 + $0xc78] sm:$0xff]
    %v436 = vld [vmem:[%s1 + $0xc80] sm:$0xff]
    %v437 = vld [vmem:[%s1 + $0xc88] sm:$0xff]
    %v438 = vld [vmem:[%s1 + $0xc90] sm:$0xff]
    %v439 = vld [vmem:[%s1 + $0xc98] sm:$0xff]
    %v440 = vld [vmem:[%s1 + $0xca0] sm:$0xff]
    %v441 = vld [vmem:[%s1 + $0xca8] sm:$0xff]
    %v442 = vld [vmem:[%s1 + $0xcb0] sm:$0xff]
    %v443 = vld [vmem:[%s1 + $0xcb8] sm:$0xff]
    %v444 = vld [vmem:[%s1 + $0xcc0] sm:$0xff]
    %v445 = vld [vmem:[%s1 + $0xcc8] sm:$0xff]
    %v446 = vld [vmem:[%s1 + $0xcd0] sm:$0xff]
    %v447 = vld [vmem:[%s1 + $0xcd8] sm:$0xff]
    %v448 = vld [vmem:[%s1 + $0xce0] sm:$0xff]
    %v449 = vld [vmem:[%s1 + $0xce8] sm:$0xff]
    %v450 = vld [vmem:[%s1 + $0xcf0] sm:$0xff]
    %v451 = vld [vmem:[%s1 + $0xcf8] sm:$0xff]
    %v452 = vld [vmem:[%s1 + $0xd00] sm:$0xff]
    %v453 = vld [vmem:[%s1 + $0xd08] sm:$0xff]
    %v454 = vld [vmem:[%s1 + $0xd10] sm:$0xff]
    %v455 = vld [vmem:[%s1 + $0xd18] sm:$0xff]
    %v456 = vld [vmem:[%s1 + $0xd20] sm:$0xff]
    %v457 = vld [vmem:[%s1 + $0xd28] sm:$0xff]
    %v458 = vld [vmem:[%s1 + $0xd30] sm:$0xff]
    %v459 = vld [vmem:[%s1 + $0xd38] sm:$0xff]
    %v460 = vld [vmem:[%s1 + $0xd40] sm:$0xff]
    %v461 = vld [vmem:[%s1 + $0xd48] sm:$0xff]
    %v462 = vld [vmem:[%s1 + $0xd50] sm:$0xff]
    %v463 = vld [vmem:[%s1 + $0xd58] sm:$0xff]
    %v464 = vld [vmem:[%s1 + $0xd60] sm:$0xff]
    %v465 = vld [vmem:[%s1 + $0xd68] sm:$0xff]
    %v466 = vld [vmem:[%s1 + $0xd70] sm:$0xff]
    %v467 = vld [vmem:[%s1 + $0xd78] sm:$0xff]
    %v468 = vld [vmem:[%s1 + $0xd80] sm:$0xff]
    %v469 = vld [vmem:[%s1 + $0xd88] sm:$0xff]
    %v470 = vld [vmem:[%s1 + $0xd90] sm:$0xff]
    %v471 = vld [vmem:[%s1 + $0xd98] sm:$0xff]
    %v472 = vld [vmem:[%s1 + $0xda0] sm:$0xff]
    %v473 = vld [vmem:[%s1 + $0xda8] sm:$0xff]
    %v474 = vld [vmem:[%s1 + $0xdb0] sm:$0xff]
    %v475 = vld [vmem:[%s1 + $0xdb8] sm:$0xff]
    %v476 = vld [vmem:[%s1 + $0xdc0] sm:$0xff]
    %v477 = vld [vmem:[%s1 + $0xdc8] sm:$0xff]
    %v478 = vld [vmem:[%s1 + $0xdd0] sm:$0xff]
    %v479 = vld [vmem:[%s1 + $0xdd8] sm:$0xff]
    %v480 = vld [vmem:[%s1 + $0xde0] sm:$0xff]
    %v481 = vld [vmem:[%s1 + $0xde8] sm:$0xff]
    %v482 = vld [vmem:[%s1 + $0xdf0] sm:$0xff]
    %v483 = vld [vmem:[%s1 + $0xdf8] sm:$0xff]
    %v484 = vld [vmem:[%s1 + $0xe00] sm:$0xff]
    %v485 = vld [vmem:[%s1 + $0xe08] sm:$0xff]
    %v486 = vld [vmem:[%s1 + $0xe10] sm:$0xff]
    %v487 = vld [vmem:[%s1 + $0xe18] sm:$0xff]
    %v488 = vld [vmem:[%s1 + $0xe20] sm:$0xff]
    %v489 = vld [vmem:[%s1 + $0xe28] sm:$0xff]
    %v490 = vld [vmem:[%s1 + $0xe30] sm:$0xff]
    %v491 = vld [vmem:[%s1 + $0xe38] sm:$0xff]
    %v492 = vld [vmem:[%s1 + $0xe40] sm:$0xff]
    %v493 = vld [vmem:[%s1 + $0xe48] sm:$0xff]
    %v494 = vld [vmem:[%s1 + $0xe50] sm:$0xff]
    %v495 = vld [vmem:[%s1 + $0xe58] sm:$0xff]
    %v496 = vld [vmem:[%s1 + $0xe60] sm:$0xff]
    %v497 = vld [vmem:[%s1 + $0xe68] sm:$0xff]
    %v498 = vld [vmem:[%s1 + $0xe70] sm:$0xff]
    %v499 = vld [vmem:[%s1 + $0xe78] sm:$0xff]
    %v500 = vld [vmem:[%s1 + $0xe80] sm:$0xff]
    %v501 = vld [vmem:[%s1 + $0xe88] sm:$0xff]
    %v502 = vld [vmem:[%s1 + $0xe90] sm:$0xff]
    %v503 = vld [vmem:[%s1 + $0xe98] sm:$0xff]
    %v504 = vld [vmem:[%s1 + $0xea0] sm:$0xff]
    %v505 = vld [vmem:[%s1 + $0xea8] sm:$0xff]
    %v506 = vld [vmem:[%s1 + $0xeb0] sm:$0xff]
    %v507 = vld [vmem:[%s1 + $0xeb8] sm:$0xff]
    %v508 = vld [vmem:[%s1 + $0xec0] sm:$0xff]
    %v509 = vld [vmem:[%s1 + $0xec8] sm:$0xff]
    %v510 = vld [vmem:[%s1 + $0xed0] sm:$0xff]
    %v511 = vld [vmem:[%s1 + $0xed8] sm:$0xff]
    %v512 = vld [vmem:[%s1 + $0xee0] sm:$0xff]
    %v513 = vld [vmem:[%s1 + $0xee8] sm:$0xff]
    %v514 = vld [vmem:[%s1 + $0xef0] sm:$0xff]
    %v515 = vld [vmem:[%s1 + $0xef8] sm:$0xff]
    %v516 = vld [vmem:[%s1 + $0xf00] sm:$0xff]
    %v517 = vld [vmem:[%s1 + $0xf08] sm:$0xff]
    %v518 = vld [vmem:[%s1 + $0xf10] sm:$0xff]
    %v519 = vld [vmem:[%s1 + $0xf18] sm:$0xff]
    %v520 = vld [vmem:[%s1 + $0xf20] sm:$0xff]
    %v521 = vld [vmem:[%s1 + $0xf28] sm:$0xff]
    %v522 = vld [vmem:[%s1 + $0xf30] sm:$0xff]
    %v523 = vld [vmem:[%s1 + $0xf38] sm:$0xff]
    %v524 = vld [vmem:[%s1 + $0xf40] sm:$0xff]
    %v525 = vld [vmem:[%s1 + $0xf48] sm:$0xff]
    %v526 = vld [vmem:[%s1 + $0xf50] sm:$0xff]
    %v527 = vld [vmem:[%s1 + $0xf58] sm:$0xff]
    %v528 = vld [vmem:[%s1 + $0xf60] sm:$0xff]
    %v529 = vld [vmem:[%s1 + $0xf68] sm:$0xff]
    %v530 = vld [vmem:[%s1 + $0xf70] sm:$0xff]
    %v531 = vld [vmem:[%s1 + $0xf78] sm:$0xff]
    %v532 = vld [vmem:[%s1 + $0xf80] sm:$0xff]
    %v533 = vld [vmem:[%s1 + $0xf88] sm:$0xff]
    %v534 = vld [vmem:[%s1 + $0xf90] sm:$0xff]
    %v535 = vld [vmem:[%s1 + $0xf98] sm:$0xff]
    %v536 = vld [vmem:[%s1 + $0xfa0] sm:$0xff]
    %v537 = vld [vmem:[%s1 + $0xfa8] sm:$0xff]
    %v538 = vld [vmem:[%s1 + $0xfb0] sm:$0xff]
    %v539 = vld [vmem:[%s1 + $0xfb8] sm:$0xff]
    %v540 = vld [vmem:[%s1 + $0xfc0] sm:$0xff]
    %v541 = vld [vmem:[%s1 + $0xfc8] sm:$0xff]
    %v542 = vld [vmem:[%s1 + $0xfd0] sm:$0xff]
    %v543 = vld [vmem:[%s1 + $0xfd8] sm:$0xff]
    %v544 = vld [vmem:[%s1 + $0xfe0] sm:$0xff]
    %v545 = vld [vmem:[%s1 + $0xfe8] sm:$0xff]
    %v546 = vld [vmem:[%s1 + $0xff0] sm:$0xff]
    %v547 = vld [vmem:[%s1 + $0xff8] sm:$0xff]
    %v548 = vld [vmem:[%s1 + $0x1000] sm:$0xff]
    %v549 = vld [vmem:[%s1 + $0x1008] sm:$0xff]
    %v550 = vld [vmem:[%s1 + $0x1010] sm:$0xff]
    %v551 = vld [vmem:[%s1 + $0x1018] sm:$0xff]
    %v552 = vld [vmem:[%s1 + $0x1020] sm:$0xff]
    %v553 = vld [vmem:[%s1 + $0x1028] sm:$0xff]
    %v554 = vld [vmem:[%s1 + $0x1030] sm:$0xff]
    %v555 = vld [vmem:[%s1 + $0x1038] sm:$0xff]
    %v556 = vld [vmem:[%s1 + $0x1040] sm:$0xff]
    %v557 = vld [vmem:[%s1 + $0x1048] sm:$0xff]
    %v558 = vld [vmem:[%s1 + $0x1050] sm:$0xff]
    %v559 = vld [vmem:[%s1 + $0x1058] sm:$0xff]
    %v560 = vld [vmem:[%s1 + $0x1060] sm:$0xff]
    %v561 = vld [vmem:[%s1 + $0x1068] sm:$0xff]
    %v562 = vld [vmem:[%s1 + $0x1070] sm:$0xff]
    %v563 = vld [vmem:[%s1 + $0x1078] sm:$0xff]
    %v564 = vld [vmem:[%s1 + $0x1080] sm:$0xff]
    %v565 = vld [vmem:[%s1 + $0x1088] sm:$0xff]
    %v566 = vld [vmem:[%s1 + $0x1090] sm:$0xff]
    %v567 = vld [vmem:[%s1 + $0x1098] sm:$0xff]
    %v568 = vld [vmem:[%s1 + $0x10a0] sm:$0xff]
    %v569 = vld [vmem:[%s1 + $0x10a8] sm:$0xff]
    %v570 = vld [vmem:[%s1 + $0x10b0] sm:$0xff]
    %v571 = vld [vmem:[%s1 + $0x10b8] sm:$0xff]
    %v572 = vld [vmem:[%s1 + $0x10c0] sm:$0xff]
    %v573 = vld [vmem:[%s1 + $0x10c8] sm:$0xff]
    %v574 = vld [vmem:[%s1 + $0x10d0] sm:$0xff]
    %v575 = vld [vmem:[%s1 + $0x10d8] sm:$0xff]
    %v576 = vld [vmem:[%s1 + $0x10e0] sm:$0xff]
    %v577 = vld [vmem:[%s1 + $0x10e8] sm:$0xff]
    %v578 = vld [vmem:[%s1 + $0x10f0] sm:$0xff]
    %v579 = vld [vmem:[%s1 + $0x10f8] sm:$0xff]
    %v580 = vld [vmem:[%s1 + $0x1100] sm:$0xff]
    %v581 = vld [vmem:[%s1 + $0x1108] sm:$0xff]
    %v582 = vld [vmem:[%s1 + $0x1110] sm:$0xff]
    %v583 = vld [vmem:[%s1 + $0x1118] sm:$0xff]
    %v584 = vld [vmem:[%s1 + $0x1120] sm:$0xff]
    %v585 = vld [vmem:[%s1 + $0x1128] sm:$0xff]
    %v586 = vld [vmem:[%s1 + $0x1130] sm:$0xff]
    %v587 = vld [vmem:[%s1 + $0x1138] sm:$0xff]
    %v588 = vld [vmem:[%s1 + $0x1140] sm:$0xff]
    %v589 = vld [vmem:[%s1 + $0x1148] sm:$0xff]
    %v590 = vld [vmem:[%s1 + $0x1150] sm:$0xff]
    %v591 = vld [vmem:[%s1 + $0x1158] sm:$0xff]
    %v592 = vld [vmem:[%s1 + $0x1160] sm:$0xff]
    %v593 = vld [vmem:[%s1 + $0x1168] sm:$0xff]
    %v594 = vld [vmem:[%s1 + $0x1170] sm:$0xff]
    %v595 = vld [vmem:[%s1 + $0x1178] sm:$0xff]
    %v596 = vld [vmem:[%s1 + $0x1180] sm:$0xff]
    %v597 = vld [vmem:[%s1 + $0x1188] sm:$0xff]
    %v598 = vld [vmem:[%s1 + $0x1190] sm:$0xff]
    %v599 = vld [vmem:[%s1 + $0x1198] sm:$0xff]
    %v600 = vld [vmem:[%s1 + $0x11a0] sm:$0xff]
    %v601 = vld [vmem:[%s1 + $0x11a8] sm:$0xff]
    %v602 = vld [vmem:[%s1 + $0x11b0] sm:$0xff]
    %v603 = vld [vmem:[%s1 + $0x11b8] sm:$0xff]
    %v604 = vld [vmem:[%s1 + $0x11c0] sm:$0xff]
    %v605 = vld [vmem:[%s1 + $0x11c8] sm:$0xff]
    %v606 = vld [vmem:[%s1 + $0x11d0] sm:$0xff]
    %v607 = vld [vmem:[%s1 + $0x11d8] sm:$0xff]
    %v608 = vld [vmem:[%s1 + $0x11e0] sm:$0xff]
    %v609 = vld [vmem:[%s1 + $0x11e8] sm:$0xff]
    %v610 = vld [vmem:[%s1 + $0x11f0] sm:$0xff]
    %v611 = vld [vmem:[%s1 + $0x11f8] sm:$0xff]
    %v612 = vld [vmem:[%s1 + $0x1200] sm:$0xff]
    %v613 = vld [vmem:[%s1 + $0x1208] sm:$0xff]
    %v614 = vld [vmem:[%s1 + $0x1210] sm:$0xff]
    %v615 = vld [vmem:[%s1 + $0x1218] sm:$0xff]
    %v616 = vld [vmem:[%s1 + $0x1220] sm:$0xff]
    %v617 = vld [vmem:[%s1 + $0x1228] sm:$0xff]
    %v618 = vld [vmem:[%s1 + $0x1230] sm:$0xff]
    %v619 = vld [vmem:[%s1 + $0x1238] sm:$0xff]
    %v620 = vld [vmem:[%s1 + $0x1240] sm:$0xff]
    %v621 = vld [vmem:[%s1 + $0x1248] sm:$0xff]
    %v622 = vld [vmem:[%s1 + $0x1250] sm:$0xff]
    %v623 = vld [vmem:[%s1 + $0x1258] sm:$0xff]
    %v624 = vld [vmem:[%s1 + $0x1260] sm:$0xff]
    %v625 = vld [vmem:[%s1 + $0x1268] sm:$0xff]
    %v626 = vld [vmem:[%s1 + $0x1270] sm:$0xff]
    %v627 = vld [vmem:[%s1 + $0x1278] sm:$0xff]
    %v628 = vld [vmem:[%s1 + $0x1280] sm:$0xff]
    %v629 = vld [vmem:[%s1 + $0x1288] sm:$0xff]
    %v630 = vld [vmem:[%s1 + $0x1290] sm:$0xff]
    %v631 = vld [vmem:[%s1 + $0x1298] sm:$0xff]
    %v632 = vld [vmem:[%s1 + $0x12a0] sm:$0xff]
    %v633 = vld [vmem:[%s1 + $0x12a8] sm:$0xff]
    %v634 = vld [vmem:[%s1 + $0x12b0] sm:$0xff]
    %v635 = vld [vmem:[%s1 + $0x12b8] sm:$0xff]
    %v636 = vld [vmem:[%s1 + $0x12c0] sm:$0xff]
    %v637 = vld [vmem:[%s1 + $0x12c8] sm:$0xff]
    %v638 = vld [vmem:[%s1 + $0x12d0] sm:$0xff]
    %v639 = vld [vmem:[%s1 + $0x12d8] sm:$0xff]
    %v640 = vld [vmem:[%s1 + $0x12e0] sm:$0xff]
    %v641 = vld [vmem:[%s1 + $0x12e8] sm:$0xff]
    %v642 = vld [vmem:[%s1 + $0x12f0] sm:$0xff]
    %v643 = vld [vmem:[%s1 + $0x12f8] sm:$0xff]
    %v644 = vld [vmem:[%s1 + $0x1300] sm:$0xff]
    %v645 = vld [vmem:[%s1 + $0x1308] sm:$0xff]
    %v646 = vld [vmem:[%s1 + $0x1310] sm:$0xff]
    %v647 = vld [vmem:[%s1 + $0x1318] sm:$0xff]
    %v648 = vld [vmem:[%s1 + $0x1320] sm:$0xff]
    %v649 = vld [vmem:[%s1 + $0x1328] sm:$0xff]
    %v650 = vld [vmem:[%s1 + $0x1330] sm:$0xff]
    %v651 = vld [vmem:[%s1 + $0x1338] sm:$0xff]
    %v652 = vld [vmem:[%s1 + $0x1340] sm:$0xff]
    %v653 = vld [vmem:[%s1 + $0x1348] sm:$0xff]
    %v654 = vld [vmem:[%s1 + $0x1350] sm:$0xff]
    %v655 = vld [vmem:[%s1 + $0x1358] sm:$0xff]
    %v656 = vld [vmem:[%s1 + $0x1360] sm:$0xff]
    %v657 = vld [vmem:[%s1 + $0x1368] sm:$0xff]
    %v658 = vld [vmem:[%s1 + $0x1370] sm:$0xff]
    %v659 = vld [vmem:[%s1 + $0x1378] sm:$0xff]
    %v660 = vld [vmem:[%s1 + $0x1380] sm:$0xff]
    %v661 = vld [vmem:[%s1 + $0x1388] sm:$0xff]
    %v662 = vld [vmem:[%s1 + $0x1390] sm:$0xff]
    %v663 = vld [vmem:[%s1 + $0x1398] sm:$0xff]
    %v664 = vld [vmem:[%s1 + $0x13a0] sm:$0xff]
    %v665 = vld [vmem:[%s1 + $0x13a8] sm:$0xff]
    %v666 = vld [vmem:[%s1 + $0x13b0] sm:$0xff]
    %v667 = vld [vmem:[%s1 + $0x13b8] sm:$0xff]
    %v668 = vld [vmem:[%s1 + $0x13c0] sm:$0xff]
    %v669 = vld [vmem:[%s1 + $0x13c8] sm:$0xff]
    %v670 = vld [vmem:[%s1 + $0x13d0] sm:$0xff]
    %v671 = vld [vmem:[%s1 + $0x13d8] sm:$0xff]
    %v672 = vld [vmem:[%s1 + $0x13e0] sm:$0xff]
    %v673 = vld [vmem:[%s1 + $0x13e8] sm:$0xff]
    %v674 = vld [vmem:[%s1 + $0x13f0] sm:$0xff]
    %v675 = vld [vmem:[%s1 + $0x13f8] sm:$0xff]
    %v676 = vld [vmem:[%s1 + $0x1400] sm:$0xff]
    %v677 = vld [vmem:[%s1 + $0x1408] sm:$0xff]
    %v678 = vld [vmem:[%s1 + $0x1410] sm:$0xff]
    %v679 = vld [vmem:[%s1 + $0x1418] sm:$0xff]
    %v680 = vld [vmem:[%s1 + $0x1420] sm:$0xff]
    %v681 = vld [vmem:[%s1 + $0x1428] sm:$0xff]
    %v682 = vld [vmem:[%s1 + $0x1430] sm:$0xff]
    %v683 = vld [vmem:[%s1 + $0x1438] sm:$0xff]
    %v684 = vld [vmem:[%s1 + $0x1440] sm:$0xff]
    %v685 = vld [vmem:[%s1 + $0x1448] sm:$0xff]
    %v686 = vld [vmem:[%s1 + $0x1450] sm:$0xff]
    %v687 = vld [vmem:[%s1 + $0x1458] sm:$0xff]
    %v688 = vld [vmem:[%s1 + $0x1460] sm:$0xff]
    %v689 = vld [vmem:[%s1 + $0x1468] sm:$0xff]
    %v690 = vld [vmem:[%s1 + $0x1470] sm:$0xff]
    %v691 = vld [vmem:[%s1 + $0x1478] sm:$0xff]
    %v692 = vld [vmem:[%s1 + $0x1480] sm:$0xff]
    %v693 = vld [vmem:[%s1 + $0x1488] sm:$0xff]
    %v694 = vld [vmem:[%s1 + $0x1490] sm:$0xff]
    %v695 = vld [vmem:[%s1 + $0x1498] sm:$0xff]
    %v696 = vld [vmem:[%s1 + $0x14a0] sm:$0xff]
    %v697 = vld [vmem:[%s1 + $0x14a8] sm:$0xff]
    %v698 = vld [vmem:[%s1 + $0x14b0] sm:$0xff]
    %v699 = vld [vmem:[%s1 + $0x14b8] sm:$0xff]
    %v700 = vld [vmem:[%s1 + $0x14c0] sm:$0xff]
    %v701 = vld [vmem:[%s1 + $0x14c8] sm:$0xff]
    %v702 = vld [vmem:[%s1 + $0x14d0] sm:$0xff]
    %v703 = vld [vmem:[%s1 + $0x14d8] sm:$0xff]
    %v704 = vld [vmem:[%s1 + $0x14e0] sm:$0xff]
    %v705 = vld [vmem:[%s1 + $0x14e8] sm:$0xff]
    %v706 = vld [vmem:[%s1 + $0x14f0] sm:$0xff]
    %v707 = vld [vmem:[%s1 + $0x14f8] sm:$0xff]
    %v708 = vld [vmem:[%s1 + $0x1500] sm:$0xff]
    %v709 = vld [vmem:[%s1 + $0x1508] sm:$0xff]
    %v710 = vld [vmem:[%s1 + $0x1510] sm:$0xff]
    %v711 = vld [vmem:[%s1 + $0x1518] sm:$0xff]
    %v712 = vld [vmem:[%s1 + $0x1520] sm:$0xff]
    %v713 = vld [vmem:[%s1 + $0x1528] sm:$0xff]
    %v714 = vld [vmem:[%s1 + $0x1530] sm:$0xff]
    %v715 = vld [vmem:[%s1 + $0x1538] sm:$0xff]
    %v716 = vld [vmem:[%s1 + $0x1540] sm:$0xff]
    %v717 = vld [vmem:[%s1 + $0x1548] sm:$0xff]
    %v718 = vld [vmem:[%s1 + $0x1550] sm:$0xff]
    %v719 = vld [vmem:[%s1 + $0x1558] sm:$0xff]
    %v720 = vld [vmem:[%s1 + $0x1560] sm:$0xff]
    %v721 = vld [vmem:[%s1 + $0x1568] sm:$0xff]
    %v722 = vld [vmem:[%s1 + $0x1570] sm:$0xff]
    %v723 = vld [vmem:[%s1 + $0x1578] sm:$0xff]
    %v724 = vld [vmem:[%s1 + $0x1580] sm:$0xff]
    %v725 = vld [vmem:[%s1 + $0x1588] sm:$0xff]
    %v726 = vld [vmem:[%s1 + $0x1590] sm:$0xff]
    %v727 = vld [vmem:[%s1 + $0x1598] sm:$0xff]
    %v728 = vld [vmem:[%s1 + $0x15a0] sm:$0xff]
    %v729 = vld [vmem:[%s1 + $0x15a8] sm:$0xff]
    %v730 = vld [vmem:[%s1 + $0x15b0] sm:$0xff]
    %v731 = vld [vmem:[%s1 + $0x15b8] sm:$0xff]
    %v732 = vld [vmem:[%s1 + $0x15c0] sm:$0xff]
    %v733 = vld [vmem:[%s1 + $0x15c8] sm:$0xff]
    %v734 = vld [vmem:[%s1 + $0x15d0] sm:$0xff]
    %v735 = vld [vmem:[%s1 + $0x15d8] sm:$0xff]
    %v736 = vld [vmem:[%s1 + $0x15e0] sm:$0xff]
    %v737 = vld [vmem:[%s1 + $0x15e8] sm:$0xff]
    %v738 = vld [vmem:[%s1 + $0x15f0] sm:$0xff]
    %v739 = vld [vmem:[%s1 + $0x15f8] sm:$0xff]
    %v740 = vld [vmem:[%s1 + $0x1600] sm:$0xff]
    %v741 = vld [vmem:[%s1 + $0x1608] sm:$0xff]
    %v742 = vld [vmem:[%s1 + $0x1610] sm:$0xff]
    %v743 = vld [vmem:[%s1 + $0x1618] sm:$0xff]
    %v744 = vld [vmem:[%s1 + $0x1620] sm:$0xff]
    %v745 = vld [vmem:[%s1 + $0x1628] sm:$0xff]
    %v746 = vld [vmem:[%s1 + $0x1630] sm:$0xff]
    %v747 = vld [vmem:[%s1 + $0x1638] sm:$0xff]
    %v748 = vld [vmem:[%s1 + $0x1640] sm:$0xff]
    %v749 = vld [vmem:[%s1 + $0x1648] sm:$0xff]
    %v750 = vld [vmem:[%s1 + $0x1650] sm:$0xff]
    %v751 = vld [vmem:[%s1 + $0x1658] sm:$0xff]
    %v752 = vld [vmem:[%s1 + $0x1660] sm:$0xff]
    %v753 = vld [vmem:[%s1 + $0x1668] sm:$0xff]
    %v754 = vld [vmem:[%s1 + $0x1670] sm:$0xff]
    %v755 = vld [vmem:[%s1 + $0x1678] sm:$0xff]
    %v756 = vld [vmem:[%s1 + $0x1680] sm:$0xff]
    %v757 = vld [vmem:[%s1 + $0x1688] sm:$0xff]
    %v758 = vld [vmem:[%s1 + $0x1690] sm:$0xff]
    %v759 = vld [vmem:[%s1 + $0x1698] sm:$0xff]
    %v760 = vld [vmem:[%s1 + $0x16a0] sm:$0xff]
    %v761 = vld [vmem:[%s1 + $0x16a8] sm:$0xff]
    %v762 = vld [vmem:[%s1 + $0x16b0] sm:$0xff]
    %v763 = vld [vmem:[%s1 + $0x16b8] sm:$0xff]
    %v764 = vld [vmem:[%s1 + $0x16c0] sm:$0xff]
    %v765 = vld [vmem:[%s1 + $0x16c8] sm:$0xff]
    %v766 = vld [vmem:[%s1 + $0x16d0] sm:$0xff]
    %v767 = vld [vmem:[%s1 + $0x16d8] sm:$0xff]
    %v768 = vld [vmem:[%s1 + $0x16e0] sm:$0xff]
    %v769 = vld [vmem:[%s1 + $0x16e8] sm:$0xff]
    %v770 = vld [vmem:[%s1 + $0x16f0] sm:$0xff]
    %v771 = vld [vmem:[%s1 + $0x16f8] sm:$0xff]
    %v772 = vld [vmem:[%s1 + $0x1700] sm:$0xff]
    %v773 = vld [vmem:[%s1 + $0x1708] sm:$0xff]
    %v774 = vld [vmem:[%s1 + $0x1710] sm:$0xff]
    %v775 = vld [vmem:[%s1 + $0x1718] sm:$0xff]
    %v776 = vld [vmem:[%s1 + $0x1720] sm:$0xff]
    %v777 = vld [vmem:[%s1 + $0x1728] sm:$0xff]
    %v778 = vld [vmem:[%s1 + $0x1730] sm:$0xff]
    %v779 = vld [vmem:[%s1 + $0x1738] sm:$0xff]
    %v780 = vld [vmem:[%s1 + $0x1740] sm:$0xff]
    %v781 = vld [vmem:[%s1 + $0x1748] sm:$0xff]
    %v782 = vld [vmem:[%s1 + $0x1750] sm:$0xff]
    %v783 = vld [vmem:[%s1 + $0x1758] sm:$0xff]
    %v784 = vld [vmem:[%s1 + $0x1760] sm:$0xff]
    %v785 = vld [vmem:[%s1 + $0x1768] sm:$0xff]
    %v786 = vld [vmem:[%s1 + $0x1770] sm:$0xff]
    %v787 = vld [vmem:[%s1 + $0x1778] sm:$0xff]
    %v788 = vld [vmem:[%s1 + $0x1780] sm:$0xff]
    %v789 = vld [vmem:[%s1 + $0x1788] sm:$0xff]
    %v790 = vld [vmem:[%s1 + $0x1790] sm:$0xff]
    %v791 = vld [vmem:[%s1 + $0x1798] sm:$0xff]
    %v792 = vld [vmem:[%s1 + $0x17a0] sm:$0xff]
    %v793 = vld [vmem:[%s1 + $0x17a8] sm:$0xff]
    %v794 = vld [vmem:[%s1 + $0x17b0] sm:$0xff]
    %v795 = vld [vmem:[%s1 + $0x17b8] sm:$0xff]
    %v796 = vld [vmem:[%s1 + $0x17c0] sm:$0xff]
    %v797 = vld [vmem:[%s1 + $0x17c8] sm:$0xff]
    %v798 = vld [vmem:[%s1 + $0x17d0] sm:$0xff]
    %v799 = vld [vmem:[%s1 + $0x17d8] sm:$0xff]
    %v800 = vld [vmem:[%s1 + $0x17e0] sm:$0xff]
    %v801 = vld [vmem:[%s1 + $0x17e8] sm:$0xff]
    %v802 = vld [vmem:[%s1 + $0x17f0] sm:$0xff]
    %v803 = vld [vmem:[%s1 + $0x17f8] sm:$0xff]
    %v804 = vld [vmem:[%s1 + $0x1800] sm:$0xff]
    %v805 = vld [vmem:[%s1 + $0x1808] sm:$0xff]
    %v806 = vld [vmem:[%s1 + $0x1810] sm:$0xff]
    %v807 = vld [vmem:[%s1 + $0x1818] sm:$0xff]
    %v808 = vld [vmem:[%s1 + $0x1820] sm:$0xff]
    %v809 = vld [vmem:[%s1 + $0x1828] sm:$0xff]
    %v810 = vld [vmem:[%s1 + $0x1830] sm:$0xff]
    %v811 = vld [vmem:[%s1 + $0x1838] sm:$0xff]
    %v812 = vld [vmem:[%s1 + $0x1840] sm:$0xff]
    %v813 = vld [vmem:[%s1 + $0x1848] sm:$0xff]
    %v814 = vld [vmem:[%s1 + $0x1850] sm:$0xff]
    %v815 = vld [vmem:[%s1 + $0x1858] sm:$0xff]
    %v816 = vld [vmem:[%s1 + $0x1860] sm:$0xff]
    %v817 = vld [vmem:[%s1 + $0x1868] sm:$0xff]
    %v818 = vld [vmem:[%s1 + $0x1870] sm:$0xff]
    %v819 = vld [vmem:[%s1 + $0x1878] sm:$0xff]
    %v820 = vld [vmem:[%s1 + $0x1880] sm:$0xff]
    %v821 = vld [vmem:[%s1 + $0x1888] sm:$0xff]
    %v822 = vld [vmem:[%s1 + $0x1890] sm:$0xff]
    %v823 = vld [vmem:[%s1 + $0x1898] sm:$0xff]
    %v824 = vld [vmem:[%s1 + $0x18a0] sm:$0xff]
    %v825 = vld [vmem:[%s1 + $0x18a8] sm:$0xff]
    %v826 = vld [vmem:[%s1 + $0x18b0] sm:$0xff]
    %v827 = vld [vmem:[%s1 + $0x18b8] sm:$0xff]
    %v828 = vld [vmem:[%s1 + $0x18c0] sm:$0xff]
    %v829 = vld [vmem:[%s1 + $0x18c8] sm:$0xff]
    %v830 = vld [vmem:[%s1 + $0x18d0] sm:$0xff]
    %v831 = vld [vmem:[%s1 + $0x18d8] sm:$0xff]
    %v832 = vld [vmem:[%s1 + $0x18e0] sm:$0xff]
    %v833 = vld [vmem:[%s1 + $0x18e8] sm:$0xff]
    %v834 = vld [vmem:[%s1 + $0x18f0] sm:$0xff]
    %v835 = vld [vmem:[%s1 + $0x18f8] sm:$0xff]
    %v836 = vld [vmem:[%s1 + $0x1900] sm:$0xff]
    %v837 = vld [vmem:[%s1 + $0x1908] sm:$0xff]
    %v838 = vld [vmem:[%s1 + $0x1910] sm:$0xff]
    %v839 = vld [vmem:[%s1 + $0x1918] sm:$0xff]
    %v840 = vld [vmem:[%s1 + $0x1920] sm:$0xff]
    %v841 = vld [vmem:[%s1 + $0x1928] sm:$0xff]
    %v842 = vld [vmem:[%s1 + $0x1930] sm:$0xff]
    %v843 = vld [vmem:[%s1 + $0x1938] sm:$0xff]
    %v844 = vld [vmem:[%s1 + $0x1940] sm:$0xff]
    %v845 = vld [vmem:[%s1 + $0x1948] sm:$0xff]
    %v846 = vld [vmem:[%s1 + $0x1950] sm:$0xff]
    %v847 = vld [vmem:[%s1 + $0x1958] sm:$0xff]
    %v848 = vld [vmem:[%s1 + $0x1960] sm:$0xff]
    %v849 = vld [vmem:[%s1 + $0x1968] sm:$0xff]
    %v850 = vld [vmem:[%s1 + $0x1970] sm:$0xff]
    %v851 = vld [vmem:[%s1 + $0x1978] sm:$0xff]
    %v852 = vld [vmem:[%s1 + $0x1980] sm:$0xff]
    %v853 = vld [vmem:[%s1 + $0x1988] sm:$0xff]
    %v854 = vld [vmem:[%s1 + $0x1990] sm:$0xff]
    %v855 = vld [vmem:[%s1 + $0x1998] sm:$0xff]
    %v856 = vld [vmem:[%s1 + $0x19a0] sm:$0xff]
    %v857 = vld [vmem:[%s1 + $0x19a8] sm:$0xff]
    %v858 = vld [vmem:[%s1 + $0x19b0] sm:$0xff]
    %v859 = vld [vmem:[%s1 + $0x19b8] sm:$0xff]
    %v860 = vld [vmem:[%s1 + $0x19c0] sm:$0xff]
    %v861 = vld [vmem:[%s1 + $0x19c8] sm:$0xff]
    %v862 = vld [vmem:[%s1 + $0x19d0] sm:$0xff]
    %v863 = vld [vmem:[%s1 + $0x19d8] sm:$0xff]
    %v864 = vld [vmem:[%s1 + $0x19e0] sm:$0xff]
    %v865 = vld [vmem:[%s1 + $0x19e8] sm:$0xff]
    %v866 = vld [vmem:[%s1 + $0x19f0] sm:$0xff]
    %v867 = vld [vmem:[%s1 + $0x19f8] sm:$0xff]
    %v868 = vld [vmem:[%s1 + $0x1a00] sm:$0xff]
    %v869 = vld [vmem:[%s1 + $0x1a08] sm:$0xff]
    %v870 = vld [vmem:[%s1 + $0x1a10] sm:$0xff]
    %v871 = vld [vmem:[%s1 + $0x1a18] sm:$0xff]
    %v872 = vld [vmem:[%s1 + $0x1a20] sm:$0xff]
    %v873 = vld [vmem:[%s1 + $0x1a28] sm:$0xff]
    %v874 = vld [vmem:[%s1 + $0x1a30] sm:$0xff]
    %v875 = vld [vmem:[%s1 + $0x1a38] sm:$0xff]
    %v876 = vld [vmem:[%s1 + $0x1a40] sm:$0xff]
    %v877 = vld [vmem:[%s1 + $0x1a48] sm:$0xff]
    %v878 = vld [vmem:[%s1 + $0x1a50] sm:$0xff]
    %v879 = vld [vmem:[%s1 + $0x1a58] sm:$0xff]
    %v880 = vld [vmem:[%s1 + $0x1a60] sm:$0xff]
    %v881 = vld [vmem:[%s1 + $0x1a68] sm:$0xff]
    %v882 = vld [vmem:[%s1 + $0x1a70] sm:$0xff]
    %v883 = vld [vmem:[%s1 + $0x1a78] sm:$0xff]
    %v884 = vld [vmem:[%s1 + $0x1a80] sm:$0xff]
    %v885 = vld [vmem:[%s1 + $0x1a88] sm:$0xff]
    %v886 = vld [vmem:[%s1 + $0x1a90] sm:$0xff]
    %v887 = vld [vmem:[%s1 + $0x1a98] sm:$0xff]
    %v888 = vld [vmem:[%s1 + $0x1aa0] sm:$0xff]
    %v889 = vld [vmem:[%s1 + $0x1aa8] sm:$0xff]
    %v890 = vld [vmem:[%s1 + $0x1ab0] sm:$0xff]
    %v891 = vld [vmem:[%s1 + $0x1ab8] sm:$0xff]
    %v892 = vld [vmem:[%s1 + $0x1ac0] sm:$0xff]
    %v893 = vld [vmem:[%s1 + $0x1ac8] sm:$0xff]
    %v894 = vld [vmem:[%s1 + $0x1ad0] sm:$0xff]
    %v895 = vld [vmem:[%s1 + $0x1ad8] sm:$0xff]
    %v896 = vld [vmem:[%s1 + $0x1ae0] sm:$0xff]
    %v897 = vld [vmem:[%s1 + $0x1ae8] sm:$0xff]
    %v898 = vld [vmem:[%s1 + $0x1af0] sm:$0xff]
    %v899 = vld [vmem:[%s1 + $0x1af8] sm:$0xff]
    %v900 = vld [vmem:[%s1 + $0x1b00] sm:$0xff]
    %v901 = vld [vmem:[%s1 + $0x1b08] sm:$0xff]
    %v902 = vld [vmem:[%s1 + $0x1b10] sm:$0xff]
    %v903 = vld [vmem:[%s1 + $0x1b18] sm:$0xff]
    %v904 = vld [vmem:[%s1 + $0x1b20] sm:$0xff]
    %v905 = vld [vmem:[%s1 + $0x1b28] sm:$0xff]
    %v906 = vld [vmem:[%s1 + $0x1b30] sm:$0xff]
    %v907 = vld [vmem:[%s1 + $0x1b38] sm:$0xff]
    %v908 = vld [vmem:[%s1 + $0x1b40] sm:$0xff]
    %v909 = vld [vmem:[%s1 + $0x1b48] sm:$0xff]
    %v910 = vld [vmem:[%s1 + $0x1b50] sm:$0xff]
    %v911 = vld [vmem:[%s1 + $0x1b58] sm:$0xff]
    %v912 = vld [vmem:[%s1 + $0x1b60] sm:$0xff]
    %v913 = vld [vmem:[%s1 + $0x1b68] sm:$0xff]
    %v914 = vld [vmem:[%s1 + $0x1b70] sm:$0xff]
    %v915 = vld [vmem:[%s1 + $0x1b78] sm:$0xff]
    %v916 = vld [vmem:[%s1 + $0x1b80] sm:$0xff]
    %v917 = vld [vmem:[%s1 + $0x1b88] sm:$0xff]
    %v918 = vld [vmem:[%s1 + $0x1b90] sm:$0xff]
    %v919 = vld [vmem:[%s1 + $0x1b98] sm:$0xff]
    %v920 = vld [vmem:[%s1 + $0x1ba0] sm:$0xff]
    %v921 = vld [vmem:[%s1 + $0x1ba8] sm:$0xff]
    %v922 = vld [vmem:[%s1 + $0x1bb0] sm:$0xff]
    %v923 = vld [vmem:[%s1 + $0x1bb8] sm:$0xff]
    %v924 = vld [vmem:[%s1 + $0x1bc0] sm:$0xff]
    %v925 = vld [vmem:[%s1 + $0x1bc8] sm:$0xff]
    %v926 = vld [vmem:[%s1 + $0x1bd0] sm:$0xff]
    %v927 = vld [vmem:[%s1 + $0x1bd8] sm:$0xff]
    %v928 = vld [vmem:[%s1 + $0x1be0] sm:$0xff]
    %v929 = vld [vmem:[%s1 + $0x1be8] sm:$0xff]
    %v930 = vld [vmem:[%s1 + $0x1bf0] sm:$0xff]
    %v931 = vld [vmem:[%s1 + $0x1bf8] sm:$0xff]
    %v932 = vld [vmem:[%s1 + $0x1c00] sm:$0xff]
    %v933 = vld [vmem:[%s1 + $0x1c08] sm:$0xff]
    %v934 = vld [vmem:[%s1 + $0x1c10] sm:$0xff]
    %v935 = vld [vmem:[%s1 + $0x1c18] sm:$0xff]
    %v936 = vld [vmem:[%s2] sm:$0x1]
    %v938 = vperm.slane %v936, 0
    %955 = vst [vmem:[#allocation1] ss:$4 sm:$0xff] %v21
    %s956 = scalar_lea.vmem [#allocation1], 32
    %957 = vst [vmem:[%s956] ss:$4 sm:$0xff] %v22
    %v958 = vld.sshfl [vmem:[#allocation1] sm:$0xff pattern:$0x73625140]
    %v959 = vld.sshfl [vmem:[#allocation1 + $0x8] sm:$0xff pattern:$0x73625140]
    %v960 = vld.sshfl [vmem:[#allocation1 + $0x10] sm:$0xff pattern:$0x73625140]
    %v961 = vld.sshfl [vmem:[#allocation1 + $0x18] sm:$0xff pattern:$0x73625140]
    %v962 = vld.sshfl [vmem:[#allocation1 + $0x20] sm:$0xff pattern:$0x73625140]
    %v963 = vld.sshfl [vmem:[#allocation1 + $0x28] sm:$0xff pattern:$0x73625140]
    %v964 = vld.sshfl [vmem:[#allocation1 + $0x30] sm:$0xff pattern:$0x73625140]
    %v965 = vld.sshfl [vmem:[#allocation1 + $0x38] sm:$0xff pattern:$0x73625140]
    %966 = vst [vmem:[#allocation1] ss:$4 sm:$0xff] %v23
    %967 = vst [vmem:[%s956] ss:$4 sm:$0xff] %v24
    %v968 = vld.sshfl [vmem:[#allocation1] sm:$0xff pattern:$0x73625140]
    %v969 = vld.sshfl [vmem:[#allocation1 + $0x8] sm:$0xff pattern:$0x73625140]
    %v970 = vld.sshfl [vmem:[#allocation1 + $0x10] sm:$0xff pattern:$0x73625140]
    %v971 = vld.sshfl [vmem:[#allocation1 + $0x18] sm:$0xff pattern:$0x73625140]
    %v972 = vld.sshfl [vmem:[#allocation1 + $0x20] sm:$0xff pattern:$0x73625140]
    %v973 = vld.sshfl [vmem:[#allocation1 + $0x28] sm:$0xff pattern:$0x73625140]
    %v974 = vld.sshfl [vmem:[#allocation1 + $0x30] sm:$0xff pattern:$0x73625140]
    %v975 = vld.sshfl [vmem:[#allocation1 + $0x38] sm:$0xff pattern:$0x73625140]
    %976 = vst [vmem:[#allocation1] ss:$4 sm:$0xff] %v25
    %977 = vst [vmem:[%s956] ss:$4 sm:$0xff] %v26
    %v978 = vld.sshfl [vmem:[#allocation1] sm:$0xff pattern:$0x73625140]
    %v979 = vld.sshfl [vmem:[#allocation1 + $0x8] sm:$0xff pattern:$0x73625140]
    %v980 = vld.sshfl [vmem:[#allocation1 + $0x10] sm:$0xff pattern:$0x73625140]
    %v981 = vld.sshfl [vmem:[#allocation1 + $0x18] sm:$0xff pattern:$0x73625140]
    %v982 = vld.sshfl [vmem:[#allocation1 + $0x20] sm:$0xff pattern:$0x73625140]
    %v983 = vld.sshfl [vmem:[#allocation1 + $0x28] sm:$0xff pattern:$0x73625140]
    %v984 = vld.sshfl [vmem:[#allocation1 + $0x30] sm:$0xff pattern:$0x73625140]
    %v985 = vld.sshfl [vmem:[#allocation1 + $0x38] sm:$0xff pattern:$0x73625140]
    %986 = vst [vmem:[#allocation1] ss:$4 sm:$0xff] %v27
    %987 = vst [vmem:[%s956] ss:$4 sm:$0xff] %v28
    %v988 = vld.sshfl [vmem:[#allocation1] sm:$0xff pattern:$0x73625140]
    %v989 = vld.sshfl [vmem:[#allocation1 + $0x8] sm:$0xff pattern:$0x73625140]
    %v990 = vld.sshfl [vmem:[#allocation1 + $0x10] sm:$0xff pattern:$0x73625140]
    %v991 = vld.sshfl [vmem:[#allocation1 + $0x18] sm:$0xff pattern:$0x73625140]
    %v992 = vld.sshfl [vmem:[#allocation1 + $0x20] sm:$0xff pattern:$0x73625140]
    %v993 = vld.sshfl [vmem:[#allocation1 + $0x28] sm:$0xff pattern:$0x73625140]
    %v994 = vld.sshfl [vmem:[#allocation1 + $0x30] sm:$0xff pattern:$0x73625140]
    %v995 = vld.sshfl [vmem:[#allocation1 + $0x38] sm:$0xff pattern:$0x73625140]
    %996 = vst [vmem:[#allocation1] ss:$4 sm:$0xff] %v29
    %997 = vst [vmem:[%s956] ss:$4 sm:$0xff] %v30
    %v998 = vld.sshfl [vmem:[#allocation1] sm:$0xff pattern:$0x73625140]
    %v999 = vld.sshfl [vmem:[#allocation1 + $0x8] sm:$0xff pattern:$0x73625140]
    %v1000 = vld.sshfl [vmem:[#allocation1 + $0x10] sm:$0xff pattern:$0x73625140]
    %v1001 = vld.sshfl [vmem:[#allocation1 + $0x18] sm:$0xff pattern:$0x73625140]
    %v1002 = vld.sshfl [vmem:[#allocation1 + $0x20] sm:$0xff pattern:$0x73625140]
    %v1003 = vld.sshfl [vmem:[#allocation1 + $0x28] sm:$0xff pattern:$0x73625140]
    %v1004 = vld.sshfl [vmem:[#allocation1 + $0x30] sm:$0xff pattern:$0x73625140]
    %v1005 = vld.sshfl [vmem:[#allocation1 + $0x38] sm:$0xff pattern:$0x73625140]
    %1006 = vst [vmem:[#allocation1] ss:$4 sm:$0xff] %v31
    %1007 = vst [vmem:[%s956] ss:$4 sm:$0xff] %v32
    %v1008 = vld.sshfl [vmem:[#allocation1] sm:$0xff pattern:$0x73625140]
    %v1009 = vld.sshfl [vmem:[#allocation1 + $0x8] sm:$0xff pattern:$0x73625140]
    %v1010 = vld.sshfl [vmem:[#allocation1 + $0x10] sm:$0xff pattern:$0x73625140]
    %v1011 = vld.sshfl [vmem:[#allocation1 + $0x18] sm:$0xff pattern:$0x73625140]
    %v1012 = vld.sshfl [vmem:[#allocation1 + $0x20] sm:$0xff pattern:$0x73625140]
    %v1013 = vld.sshfl [vmem:[#allocation1 + $0x28] sm:$0xff pattern:$0x73625140]
    %v1014 = vld.sshfl [vmem:[#allocation1 + $0x30] sm:$0xff pattern:$0x73625140]
    %v1015 = vld.sshfl [vmem:[#allocation1 + $0x38] sm:$0xff pattern:$0x73625140]
    %1016 = vst [vmem:[#allocation1] ss:$4 sm:$0xff] %v33
    %1017 = vst [vmem:[%s956] ss:$4 sm:$0xff] %v34
    %v1018 = vld.sshfl [vmem:[#allocation1] sm:$0xff pattern:$0x73625140]
    %v1019 = vld.sshfl [vmem:[#allocation1 + $0x8] sm:$0xff pattern:$0x73625140]
    %v1020 = vld.sshfl [vmem:[#allocation1 + $0x10] sm:$0xff pattern:$0x73625140]
    %v1021 = vld.sshfl [vmem:[#allocation1 + $0x18] sm:$0xff pattern:$0x73625140]
    %v1022 = vld.sshfl [vmem:[#allocation1 + $0x20] sm:$0xff pattern:$0x73625140]
    %v1023 = vld.sshfl [vmem:[#allocation1 + $0x28] sm:$0xff pattern:$0x73625140]
    %v1024 = vld.sshfl [vmem:[#allocation1 + $0x30] sm:$0xff pattern:$0x73625140]
    %v1025 = vld.sshfl [vmem:[#allocation1 + $0x38] sm:$0xff pattern:$0x73625140]
    %1026 = vst [vmem:[#allocation1] ss:$4 sm:$0xff] %v35
    %v1027 = vld.sshfl [vmem:[#allocation1] sm:$0xff pattern:$0x73625140]
    %vm1084 = vcmask 261120
    %v1085 = vsel %vm1084, %v1027, 0
    %1087 = vmatpush.msra.mxu0 %v51
    %1088 = vmatpush.msra.mxu0 %v50
    %1089 = vmatpush.msra.mxu0 %v49
    %1090 = vmatpush.msra.mxu0 %v48
    %1091 = vmatpush.msra.mxu0 %v47
    %1092 = vmatpush.msra.mxu0 %v46
    %1093 = vmatpush.msra.mxu0 %v45
    %1094 = vmatpush.msra.mxu0 %v44
    %1095 = vmatpush.msra.mxu0 %v43
    %1096 = vmatpush.msra.mxu0 %v42
    %1097 = vmatpush.msra.mxu0 %v41
    %1098 = vmatpush.msra.mxu0 %v40
    %1099 = vmatpush.msra.mxu0 %v39
    %1100 = vmatpush.msra.mxu0 %v38
    %1101 = vmatpush.msra.mxu0 %v37
    %1102 = vmatpush.msra.mxu0 %v36
    %1103 = vmatmul.f32.gmra.mxu0 %v958
    %v1104 = vpop.f32.mrf.mxu0
    %v1105 = vadd.f32 %v938, %v1104
    %1106 = vdwg.mxu0
    %1107 = vmatpush.msra.mxu0 %v67
    %1108 = vmatpush.msra.mxu0 %v66
    %1109 = vmatpush.msra.mxu0 %v65
    %1110 = vmatpush.msra.mxu0 %v64
    %1111 = vmatpush.msra.mxu0 %v63
    %1112 = vmatpush.msra.mxu0 %v62
    %1113 = vmatpush.msra.mxu0 %v61
    %1114 = vmatpush.msra.mxu0 %v60
    %1115 = vmatpush.msra.mxu0 %v59
    %1116 = vmatpush.msra.mxu0 %v58
    %1117 = vmatpush.msra.mxu0 %v57
    %1118 = vmatpush.msra.mxu0 %v56
    %1119 = vmatpush.msra.mxu0 %v55
    %1120 = vmatpush.msra.mxu0 %v54
    %1121 = vmatpush.msra.mxu0 %v53
    %1122 = vmatpush.msra.mxu0 %v52
    %1123 = vmatmul.f32.gmra.mxu0 %v959
    %v1124 = vpop.f32.mrf.mxu0
    %v1125 = vadd.f32 %v1105, %v1124
    %1126 = vdwg.mxu0
    %1127 = vmatpush.msra.mxu0 %v83
    %1128 = vmatpush.msra.mxu0 %v82
    %1129 = vmatpush.msra.mxu0 %v81
    %1130 = vmatpush.msra.mxu0 %v80
    %1131 = vmatpush.msra.mxu0 %v79
    %1132 = vmatpush.msra.mxu0 %v78
    %1133 = vmatpush.msra.mxu0 %v77
    %1134 = vmatpush.msra.mxu0 %v76
    %1135 = vmatpush.msra.mxu0 %v75
    %1136 = vmatpush.msra.mxu0 %v74
    %1137 = vmatpush.msra.mxu0 %v73
    %1138 = vmatpush.msra.mxu0 %v72
    %1139 = vmatpush.msra.mxu0 %v71
    %1140 = vmatpush.msra.mxu0 %v70
    %1141 = vmatpush.msra.mxu0 %v69
    %1142 = vmatpush.msra.mxu0 %v68
    %1143 = vmatmul.f32.gmra.mxu0 %v960
    %v1144 = vpop.f32.mrf.mxu0
    %v1145 = vadd.f32 %v1125, %v1144
    %1146 = vdwg.mxu0
    %1147 = vmatpush.msra.mxu0 %v99
    %1148 = vmatpush.msra.mxu0 %v98
    %1149 = vmatpush.msra.mxu0 %v97
    %1150 = vmatpush.msra.mxu0 %v96
    %1151 = vmatpush.msra.mxu0 %v95
    %1152 = vmatpush.msra.mxu0 %v94
    %1153 = vmatpush.msra.mxu0 %v93
    %1154 = vmatpush.msra.mxu0 %v92
    %1155 = vmatpush.msra.mxu0 %v91
    %1156 = vmatpush.msra.mxu0 %v90
    %1157 = vmatpush.msra.mxu0 %v89
    %1158 = vmatpush.msra.mxu0 %v88
    %1159 = vmatpush.msra.mxu0 %v87
    %1160 = vmatpush.msra.mxu0 %v86
    %1161 = vmatpush.msra.mxu0 %v85
    %1162 = vmatpush.msra.mxu0 %v84
    %1163 = vmatmul.f32.gmra.mxu0 %v961
    %v1164 = vpop.f32.mrf.mxu0
    %v1165 = vadd.f32 %v1145, %v1164
    %1166 = vdwg.mxu0
    %1167 = vmatpush.msra.mxu0 %v115
    %1168 = vmatpush.msra.mxu0 %v114
    %1169 = vmatpush.msra.mxu0 %v113
    %1170 = vmatpush.msra.mxu0 %v112
    %1171 = vmatpush.msra.mxu0 %v111
    %1172 = vmatpush.msra.mxu0 %v110
    %1173 = vmatpush.msra.mxu0 %v109
    %1174 = vmatpush.msra.mxu0 %v108
    %1175 = vmatpush.msra.mxu0 %v107
    %1176 = vmatpush.msra.mxu0 %v106
    %1177 = vmatpush.msra.mxu0 %v105
    %1178 = vmatpush.msra.mxu0 %v104
    %1179 = vmatpush.msra.mxu0 %v103
    %1180 = vmatpush.msra.mxu0 %v102
    %1181 = vmatpush.msra.mxu0 %v101
    %1182 = vmatpush.msra.mxu0 %v100
    %1183 = vmatmul.f32.gmra.mxu0 %v962
    %v1184 = vpop.f32.mrf.mxu0
    %v1185 = vadd.f32 %v1165, %v1184
    %1186 = vdwg.mxu0
    %1187 = vmatpush.msra.mxu0 %v131
    %1188 = vmatpush.msra.mxu0 %v130
    %1189 = vmatpush.msra.mxu0 %v129
    %1190 = vmatpush.msra.mxu0 %v128
    %1191 = vmatpush.msra.mxu0 %v127
    %1192 = vmatpush.msra.mxu0 %v126
    %1193 = vmatpush.msra.mxu0 %v125
    %1194 = vmatpush.msra.mxu0 %v124
    %1195 = vmatpush.msra.mxu0 %v123
    %1196 = vmatpush.msra.mxu0 %v122
    %1197 = vmatpush.msra.mxu0 %v121
    %1198 = vmatpush.msra.mxu0 %v120
    %1199 = vmatpush.msra.mxu0 %v119
    %1200 = vmatpush.msra.mxu0 %v118
    %1201 = vmatpush.msra.mxu0 %v117
    %1202 = vmatpush.msra.mxu0 %v116
    %1203 = vmatmul.f32.gmra.mxu0 %v963
    %v1204 = vpop.f32.mrf.mxu0
    %v1205 = vadd.f32 %v1185, %v1204
    %1206 = vdwg.mxu0
    %1207 = vmatpush.msra.mxu0 %v147
    %1208 = vmatpush.msra.mxu0 %v146
    %1209 = vmatpush.msra.mxu0 %v145
    %1210 = vmatpush.msra.mxu0 %v144
    %1211 = vmatpush.msra.mxu0 %v143
    %1212 = vmatpush.msra.mxu0 %v142
    %1213 = vmatpush.msra.mxu0 %v141
    %1214 = vmatpush.msra.mxu0 %v140
    %1215 = vmatpush.msra.mxu0 %v139
    %1216 = vmatpush.msra.mxu0 %v138
    %1217 = vmatpush.msra.mxu0 %v137
    %1218 = vmatpush.msra.mxu0 %v136
    %1219 = vmatpush.msra.mxu0 %v135
    %1220 = vmatpush.msra.mxu0 %v134
    %1221 = vmatpush.msra.mxu0 %v133
    %1222 = vmatpush.msra.mxu0 %v132
    %1223 = vmatmul.f32.gmra.mxu0 %v964
    %v1224 = vpop.f32.mrf.mxu0
    %v1225 = vadd.f32 %v1205, %v1224
    %1226 = vdwg.mxu0
    %1227 = vmatpush.msra.mxu0 %v163
    %1228 = vmatpush.msra.mxu0 %v162
    %1229 = vmatpush.msra.mxu0 %v161
    %1230 = vmatpush.msra.mxu0 %v160
    %1231 = vmatpush.msra.mxu0 %v159
    %1232 = vmatpush.msra.mxu0 %v158
    %1233 = vmatpush.msra.mxu0 %v157
    %1234 = vmatpush.msra.mxu0 %v156
    %1235 = vmatpush.msra.mxu0 %v155
    %1236 = vmatpush.msra.mxu0 %v154
    %1237 = vmatpush.msra.mxu0 %v153
    %1238 = vmatpush.msra.mxu0 %v152
    %1239 = vmatpush.msra.mxu0 %v151
    %1240 = vmatpush.msra.mxu0 %v150
    %1241 = vmatpush.msra.mxu0 %v149
    %1242 = vmatpush.msra.mxu0 %v148
    %1243 = vmatmul.f32.gmra.mxu0 %v965
    %v1244 = vpop.f32.mrf.mxu0
    %v1245 = vadd.f32 %v1225, %v1244
    %1246 = vdwg.mxu0
    %1247 = vmatpush.msra.mxu0 %v179
    %1248 = vmatpush.msra.mxu0 %v178
    %1249 = vmatpush.msra.mxu0 %v177
    %1250 = vmatpush.msra.mxu0 %v176
    %1251 = vmatpush.msra.mxu0 %v175
    %1252 = vmatpush.msra.mxu0 %v174
    %1253 = vmatpush.msra.mxu0 %v173
    %1254 = vmatpush.msra.mxu0 %v172
    %1255 = vmatpush.msra.mxu0 %v171
    %1256 = vmatpush.msra.mxu0 %v170
    %1257 = vmatpush.msra.mxu0 %v169
    %1258 = vmatpush.msra.mxu0 %v168
    %1259 = vmatpush.msra.mxu0 %v167
    %1260 = vmatpush.msra.mxu0 %v166
    %1261 = vmatpush.msra.mxu0 %v165
    %1262 = vmatpush.msra.mxu0 %v164
    %1263 = vmatmul.f32.gmra.mxu0 %v968
    %v1264 = vpop.f32.mrf.mxu0
    %v1265 = vadd.f32 %v1245, %v1264
    %1266 = vdwg.mxu0
    %1267 = vmatpush.msra.mxu0 %v195
    %1268 = vmatpush.msra.mxu0 %v194
    %1269 = vmatpush.msra.mxu0 %v193
    %1270 = vmatpush.msra.mxu0 %v192
    %1271 = vmatpush.msra.mxu0 %v191
    %1272 = vmatpush.msra.mxu0 %v190
    %1273 = vmatpush.msra.mxu0 %v189
    %1274 = vmatpush.msra.mxu0 %v188
    %1275 = vmatpush.msra.mxu0 %v187
    %1276 = vmatpush.msra.mxu0 %v186
    %1277 = vmatpush.msra.mxu0 %v185
    %1278 = vmatpush.msra.mxu0 %v184
    %1279 = vmatpush.msra.mxu0 %v183
    %1280 = vmatpush.msra.mxu0 %v182
    %1281 = vmatpush.msra.mxu0 %v181
    %1282 = vmatpush.msra.mxu0 %v180
    %1283 = vmatmul.f32.gmra.mxu0 %v969
    %v1284 = vpop.f32.mrf.mxu0
    %v1285 = vadd.f32 %v1265, %v1284
    %1286 = vdwg.mxu0
    %1287 = vmatpush.msra.mxu0 %v211
    %1288 = vmatpush.msra.mxu0 %v210
    %1289 = vmatpush.msra.mxu0 %v209
    %1290 = vmatpush.msra.mxu0 %v208
    %1291 = vmatpush.msra.mxu0 %v207
    %1292 = vmatpush.msra.mxu0 %v206
    %1293 = vmatpush.msra.mxu0 %v205
    %1294 = vmatpush.msra.mxu0 %v204
    %1295 = vmatpush.msra.mxu0 %v203
    %1296 = vmatpush.msra.mxu0 %v202
    %1297 = vmatpush.msra.mxu0 %v201
    %1298 = vmatpush.msra.mxu0 %v200
    %1299 = vmatpush.msra.mxu0 %v199
    %1300 = vmatpush.msra.mxu0 %v198
    %1301 = vmatpush.msra.mxu0 %v197
    %1302 = vmatpush.msra.mxu0 %v196
    %1303 = vmatmul.f32.gmra.mxu0 %v970
    %v1304 = vpop.f32.mrf.mxu0
    %v1305 = vadd.f32 %v1285, %v1304
    %1306 = vdwg.mxu0
    %1307 = vmatpush.msra.mxu0 %v227
    %1308 = vmatpush.msra.mxu0 %v226
    %1309 = vmatpush.msra.mxu0 %v225
    %1310 = vmatpush.msra.mxu0 %v224
    %1311 = vmatpush.msra.mxu0 %v223
    %1312 = vmatpush.msra.mxu0 %v222
    %1313 = vmatpush.msra.mxu0 %v221
    %1314 = vmatpush.msra.mxu0 %v220
    %1315 = vmatpush.msra.mxu0 %v219
    %1316 = vmatpush.msra.mxu0 %v218
    %1317 = vmatpush.msra.mxu0 %v217
    %1318 = vmatpush.msra.mxu0 %v216
    %1319 = vmatpush.msra.mxu0 %v215
    %1320 = vmatpush.msra.mxu0 %v214
    %1321 = vmatpush.msra.mxu0 %v213
    %1322 = vmatpush.msra.mxu0 %v212
    %1323 = vmatmul.f32.gmra.mxu0 %v971
    %v1324 = vpop.f32.mrf.mxu0
    %v1325 = vadd.f32 %v1305, %v1324
    %1326 = vdwg.mxu0
    %1327 = vmatpush.msra.mxu0 %v243
    %1328 = vmatpush.msra.mxu0 %v242
    %1329 = vmatpush.msra.mxu0 %v241
    %1330 = vmatpush.msra.mxu0 %v240
    %1331 = vmatpush.msra.mxu0 %v239
    %1332 = vmatpush.msra.mxu0 %v238
    %1333 = vmatpush.msra.mxu0 %v237
    %1334 = vmatpush.msra.mxu0 %v236
    %1335 = vmatpush.msra.mxu0 %v235
    %1336 = vmatpush.msra.mxu0 %v234
    %1337 = vmatpush.msra.mxu0 %v233
    %1338 = vmatpush.msra.mxu0 %v232
    %1339 = vmatpush.msra.mxu0 %v231
    %1340 = vmatpush.msra.mxu0 %v230
    %1341 = vmatpush.msra.mxu0 %v229
    %1342 = vmatpush.msra.mxu0 %v228
    %1343 = vmatmul.f32.gmra.mxu0 %v972
    %v1344 = vpop.f32.mrf.mxu0
    %v1345 = vadd.f32 %v1325, %v1344
    %1346 = vdwg.mxu0
    %1347 = vmatpush.msra.mxu0 %v259
    %1348 = vmatpush.msra.mxu0 %v258
    %1349 = vmatpush.msra.mxu0 %v257
    %1350 = vmatpush.msra.mxu0 %v256
    %1351 = vmatpush.msra.mxu0 %v255
    %1352 = vmatpush.msra.mxu0 %v254
    %1353 = vmatpush.msra.mxu0 %v253
    %1354 = vmatpush.msra.mxu0 %v252
    %1355 = vmatpush.msra.mxu0 %v251
    %1356 = vmatpush.msra.mxu0 %v250
    %1357 = vmatpush.msra.mxu0 %v249
    %1358 = vmatpush.msra.mxu0 %v248
    %1359 = vmatpush.msra.mxu0 %v247
    %1360 = vmatpush.msra.mxu0 %v246
    %1361 = vmatpush.msra.mxu0 %v245
    %1362 = vmatpush.msra.mxu0 %v244
    %1363 = vmatmul.f32.gmra.mxu0 %v973
    %v1364 = vpop.f32.mrf.mxu0
    %v1365 = vadd.f32 %v1345, %v1364
    %1366 = vdwg.mxu0
    %1367 = vmatpush.msra.mxu0 %v275
    %1368 = vmatpush.msra.mxu0 %v274
    %1369 = vmatpush.msra.mxu0 %v273
    %1370 = vmatpush.msra.mxu0 %v272
    %1371 = vmatpush.msra.mxu0 %v271
    %1372 = vmatpush.msra.mxu0 %v270
    %1373 = vmatpush.msra.mxu0 %v269
    %1374 = vmatpush.msra.mxu0 %v268
    %1375 = vmatpush.msra.mxu0 %v267
    %1376 = vmatpush.msra.mxu0 %v266
    %1377 = vmatpush.msra.mxu0 %v265
    %1378 = vmatpush.msra.mxu0 %v264
    %1379 = vmatpush.msra.mxu0 %v263
    %1380 = vmatpush.msra.mxu0 %v262
    %1381 = vmatpush.msra.mxu0 %v261
    %1382 = vmatpush.msra.mxu0 %v260
    %1383 = vmatmul.f32.gmra.mxu0 %v974
    %v1384 = vpop.f32.mrf.mxu0
    %v1385 = vadd.f32 %v1365, %v1384
    %1386 = vdwg.mxu0
    %1387 = vmatpush.msra.mxu0 %v291
    %1388 = vmatpush.msra.mxu0 %v290
    %1389 = vmatpush.msra.mxu0 %v289
    %1390 = vmatpush.msra.mxu0 %v288
    %1391 = vmatpush.msra.mxu0 %v287
    %1392 = vmatpush.msra.mxu0 %v286
    %1393 = vmatpush.msra.mxu0 %v285
    %1394 = vmatpush.msra.mxu0 %v284
    %1395 = vmatpush.msra.mxu0 %v283
    %1396 = vmatpush.msra.mxu0 %v282
    %1397 = vmatpush.msra.mxu0 %v281
    %1398 = vmatpush.msra.mxu0 %v280
    %1399 = vmatpush.msra.mxu0 %v279
    %1400 = vmatpush.msra.mxu0 %v278
    %1401 = vmatpush.msra.mxu0 %v277
    %1402 = vmatpush.msra.mxu0 %v276
    %1403 = vmatmul.f32.gmra.mxu0 %v975
    %v1404 = vpop.f32.mrf.mxu0
    %v1405 = vadd.f32 %v1385, %v1404
    %1406 = vdwg.mxu0
    %1407 = vmatpush.msra.mxu0 %v307
    %1408 = vmatpush.msra.mxu0 %v306
    %1409 = vmatpush.msra.mxu0 %v305
    %1410 = vmatpush.msra.mxu0 %v304
    %1411 = vmatpush.msra.mxu0 %v303
    %1412 = vmatpush.msra.mxu0 %v302
    %1413 = vmatpush.msra.mxu0 %v301
    %1414 = vmatpush.msra.mxu0 %v300
    %1415 = vmatpush.msra.mxu0 %v299
    %1416 = vmatpush.msra.mxu0 %v298
    %1417 = vmatpush.msra.mxu0 %v297
    %1418 = vmatpush.msra.mxu0 %v296
    %1419 = vmatpush.msra.mxu0 %v295
    %1420 = vmatpush.msra.mxu0 %v294
    %1421 = vmatpush.msra.mxu0 %v293
    %1422 = vmatpush.msra.mxu0 %v292
    %1423 = vmatmul.f32.gmra.mxu0 %v978
    %v1424 = vpop.f32.mrf.mxu0
    %v1425 = vadd.f32 %v1405, %v1424
    %1426 = vdwg.mxu0
    %1427 = vmatpush.msra.mxu0 %v323
    %1428 = vmatpush.msra.mxu0 %v322
    %1429 = vmatpush.msra.mxu0 %v321
    %1430 = vmatpush.msra.mxu0 %v320
    %1431 = vmatpush.msra.mxu0 %v319
    %1432 = vmatpush.msra.mxu0 %v318
    %1433 = vmatpush.msra.mxu0 %v317
    %1434 = vmatpush.msra.mxu0 %v316
    %1435 = vmatpush.msra.mxu0 %v315
    %1436 = vmatpush.msra.mxu0 %v314
    %1437 = vmatpush.msra.mxu0 %v313
    %1438 = vmatpush.msra.mxu0 %v312
    %1439 = vmatpush.msra.mxu0 %v311
    %1440 = vmatpush.msra.mxu0 %v310
    %1441 = vmatpush.msra.mxu0 %v309
    %1442 = vmatpush.msra.mxu0 %v308
    %1443 = vmatmul.f32.gmra.mxu0 %v979
    %v1444 = vpop.f32.mrf.mxu0
    %v1445 = vadd.f32 %v1425, %v1444
    %1446 = vdwg.mxu0
    %1447 = vmatpush.msra.mxu0 %v339
    %1448 = vmatpush.msra.mxu0 %v338
    %1449 = vmatpush.msra.mxu0 %v337
    %1450 = vmatpush.msra.mxu0 %v336
    %1451 = vmatpush.msra.mxu0 %v335
    %1452 = vmatpush.msra.mxu0 %v334
    %1453 = vmatpush.msra.mxu0 %v333
    %1454 = vmatpush.msra.mxu0 %v332
    %1455 = vmatpush.msra.mxu0 %v331
    %1456 = vmatpush.msra.mxu0 %v330
    %1457 = vmatpush.msra.mxu0 %v329
    %1458 = vmatpush.msra.mxu0 %v328
    %1459 = vmatpush.msra.mxu0 %v327
    %1460 = vmatpush.msra.mxu0 %v326
    %1461 = vmatpush.msra.mxu0 %v325
    %1462 = vmatpush.msra.mxu0 %v324
    %1463 = vmatmul.f32.gmra.mxu0 %v980
    %v1464 = vpop.f32.mrf.mxu0
    %v1465 = vadd.f32 %v1445, %v1464
    %1466 = vdwg.mxu0
    %1467 = vmatpush.msra.mxu0 %v355
    %1468 = vmatpush.msra.mxu0 %v354
    %1469 = vmatpush.msra.mxu0 %v353
    %1470 = vmatpush.msra.mxu0 %v352
    %1471 = vmatpush.msra.mxu0 %v351
    %1472 = vmatpush.msra.mxu0 %v350
    %1473 = vmatpush.msra.mxu0 %v349
    %1474 = vmatpush.msra.mxu0 %v348
    %1475 = vmatpush.msra.mxu0 %v347
    %1476 = vmatpush.msra.mxu0 %v346
    %1477 = vmatpush.msra.mxu0 %v345
    %1478 = vmatpush.msra.mxu0 %v344
    %1479 = vmatpush.msra.mxu0 %v343
    %1480 = vmatpush.msra.mxu0 %v342
    %1481 = vmatpush.msra.mxu0 %v341
    %1482 = vmatpush.msra.mxu0 %v340
    %1483 = vmatmul.f32.gmra.mxu0 %v981
    %v1484 = vpop.f32.mrf.mxu0
    %v1485 = vadd.f32 %v1465, %v1484
    %1486 = vdwg.mxu0
    %1487 = vmatpush.msra.mxu0 %v371
    %1488 = vmatpush.msra.mxu0 %v370
    %1489 = vmatpush.msra.mxu0 %v369
    %1490 = vmatpush.msra.mxu0 %v368
    %1491 = vmatpush.msra.mxu0 %v367
    %1492 = vmatpush.msra.mxu0 %v366
    %1493 = vmatpush.msra.mxu0 %v365
    %1494 = vmatpush.msra.mxu0 %v364
    %1495 = vmatpush.msra.mxu0 %v363
    %1496 = vmatpush.msra.mxu0 %v362
    %1497 = vmatpush.msra.mxu0 %v361
    %1498 = vmatpush.msra.mxu0 %v360
    %1499 = vmatpush.msra.mxu0 %v359
    %1500 = vmatpush.msra.mxu0 %v358
    %1501 = vmatpush.msra.mxu0 %v357
    %1502 = vmatpush.msra.mxu0 %v356
    %1503 = vmatmul.f32.gmra.mxu0 %v982
    %v1504 = vpop.f32.mrf.mxu0
    %v1505 = vadd.f32 %v1485, %v1504
    %1506 = vdwg.mxu0
    %1507 = vmatpush.msra.mxu0 %v387
    %1508 = vmatpush.msra.mxu0 %v386
    %1509 = vmatpush.msra.mxu0 %v385
    %1510 = vmatpush.msra.mxu0 %v384
    %1511 = vmatpush.msra.mxu0 %v383
    %1512 = vmatpush.msra.mxu0 %v382
    %1513 = vmatpush.msra.mxu0 %v381
    %1514 = vmatpush.msra.mxu0 %v380
    %1515 = vmatpush.msra.mxu0 %v379
    %1516 = vmatpush.msra.mxu0 %v378
    %1517 = vmatpush.msra.mxu0 %v377
    %1518 = vmatpush.msra.mxu0 %v376
    %1519 = vmatpush.msra.mxu0 %v375
    %1520 = vmatpush.msra.mxu0 %v374
    %1521 = vmatpush.msra.mxu0 %v373
    %1522 = vmatpush.msra.mxu0 %v372
    %1523 = vmatmul.f32.gmra.mxu0 %v983
    %v1524 = vpop.f32.mrf.mxu0
    %v1525 = vadd.f32 %v1505, %v1524
    %1526 = vdwg.mxu0
    %1527 = vmatpush.msra.mxu0 %v403
    %1528 = vmatpush.msra.mxu0 %v402
    %1529 = vmatpush.msra.mxu0 %v401
    %1530 = vmatpush.msra.mxu0 %v400
    %1531 = vmatpush.msra.mxu0 %v399
    %1532 = vmatpush.msra.mxu0 %v398
    %1533 = vmatpush.msra.mxu0 %v397
    %1534 = vmatpush.msra.mxu0 %v396
    %1535 = vmatpush.msra.mxu0 %v395
    %1536 = vmatpush.msra.mxu0 %v394
    %1537 = vmatpush.msra.mxu0 %v393
    %1538 = vmatpush.msra.mxu0 %v392
    %1539 = vmatpush.msra.mxu0 %v391
    %1540 = vmatpush.msra.mxu0 %v390
    %1541 = vmatpush.msra.mxu0 %v389
    %1542 = vmatpush.msra.mxu0 %v388
    %1543 = vmatmul.f32.gmra.mxu0 %v984
    %v1544 = vpop.f32.mrf.mxu0
    %v1545 = vadd.f32 %v1525, %v1544
    %1546 = vdwg.mxu0
    %1547 = vmatpush.msra.mxu0 %v419
    %1548 = vmatpush.msra.mxu0 %v418
    %1549 = vmatpush.msra.mxu0 %v417
    %1550 = vmatpush.msra.mxu0 %v416
    %1551 = vmatpush.msra.mxu0 %v415
    %1552 = vmatpush.msra.mxu0 %v414
    %1553 = vmatpush.msra.mxu0 %v413
    %1554 = vmatpush.msra.mxu0 %v412
    %1555 = vmatpush.msra.mxu0 %v411
    %1556 = vmatpush.msra.mxu0 %v410
    %1557 = vmatpush.msra.mxu0 %v409
    %1558 = vmatpush.msra.mxu0 %v408
    %1559 = vmatpush.msra.mxu0 %v407
    %1560 = vmatpush.msra.mxu0 %v406
    %1561 = vmatpush.msra.mxu0 %v405
    %1562 = vmatpush.msra.mxu0 %v404
    %1563 = vmatmul.f32.gmra.mxu0 %v985
    %v1564 = vpop.f32.mrf.mxu0
    %v1565 = vadd.f32 %v1545, %v1564
    %1566 = vdwg.mxu0
    %1567 = vmatpush.msra.mxu0 %v435
    %1568 = vmatpush.msra.mxu0 %v434
    %1569 = vmatpush.msra.mxu0 %v433
    %1570 = vmatpush.msra.mxu0 %v432
    %1571 = vmatpush.msra.mxu0 %v431
    %1572 = vmatpush.msra.mxu0 %v430
    %1573 = vmatpush.msra.mxu0 %v429
    %1574 = vmatpush.msra.mxu0 %v428
    %1575 = vmatpush.msra.mxu0 %v427
    %1576 = vmatpush.msra.mxu0 %v426
    %1577 = vmatpush.msra.mxu0 %v425
    %1578 = vmatpush.msra.mxu0 %v424
    %1579 = vmatpush.msra.mxu0 %v423
    %1580 = vmatpush.msra.mxu0 %v422
    %1581 = vmatpush.msra.mxu0 %v421
    %1582 = vmatpush.msra.mxu0 %v420
    %1583 = vmatmul.f32.gmra.mxu0 %v988
    %v1584 = vpop.f32.mrf.mxu0
    %v1585 = vadd.f32 %v1565, %v1584
    %1586 = vdwg.mxu0
    %1587 = vmatpush.msra.mxu0 %v451
    %1588 = vmatpush.msra.mxu0 %v450
    %1589 = vmatpush.msra.mxu0 %v449
    %1590 = vmatpush.msra.mxu0 %v448
    %1591 = vmatpush.msra.mxu0 %v447
    %1592 = vmatpush.msra.mxu0 %v446
    %1593 = vmatpush.msra.mxu0 %v445
    %1594 = vmatpush.msra.mxu0 %v444
    %1595 = vmatpush.msra.mxu0 %v443
    %1596 = vmatpush.msra.mxu0 %v442
    %1597 = vmatpush.msra.mxu0 %v441
    %1598 = vmatpush.msra.mxu0 %v440
    %1599 = vmatpush.msra.mxu0 %v439
    %1600 = vmatpush.msra.mxu0 %v438
    %1601 = vmatpush.msra.mxu0 %v437
    %1602 = vmatpush.msra.mxu0 %v436
    %1603 = vmatmul.f32.gmra.mxu0 %v989
    %v1604 = vpop.f32.mrf.mxu0
    %v1605 = vadd.f32 %v1585, %v1604
    %1606 = vdwg.mxu0
    %1607 = vmatpush.msra.mxu0 %v467
    %1608 = vmatpush.msra.mxu0 %v466
    %1609 = vmatpush.msra.mxu0 %v465
    %1610 = vmatpush.msra.mxu0 %v464
    %1611 = vmatpush.msra.mxu0 %v463
    %1612 = vmatpush.msra.mxu0 %v462
    %1613 = vmatpush.msra.mxu0 %v461
    %1614 = vmatpush.msra.mxu0 %v460
    %1615 = vmatpush.msra.mxu0 %v459
    %1616 = vmatpush.msra.mxu0 %v458
    %1617 = vmatpush.msra.mxu0 %v457
    %1618 = vmatpush.msra.mxu0 %v456
    %1619 = vmatpush.msra.mxu0 %v455
    %1620 = vmatpush.msra.mxu0 %v454
    %1621 = vmatpush.msra.mxu0 %v453
    %1622 = vmatpush.msra.mxu0 %v452
    %1623 = vmatmul.f32.gmra.mxu0 %v990
    %v1624 = vpop.f32.mrf.mxu0
    %v1625 = vadd.f32 %v1605, %v1624
    %1626 = vdwg.mxu0
    %1627 = vmatpush.msra.mxu0 %v483
    %1628 = vmatpush.msra.mxu0 %v482
    %1629 = vmatpush.msra.mxu0 %v481
    %1630 = vmatpush.msra.mxu0 %v480
    %1631 = vmatpush.msra.mxu0 %v479
    %1632 = vmatpush.msra.mxu0 %v478
    %1633 = vmatpush.msra.mxu0 %v477
    %1634 = vmatpush.msra.mxu0 %v476
    %1635 = vmatpush.msra.mxu0 %v475
    %1636 = vmatpush.msra.mxu0 %v474
    %1637 = vmatpush.msra.mxu0 %v473
    %1638 = vmatpush.msra.mxu0 %v472
    %1639 = vmatpush.msra.mxu0 %v471
    %1640 = vmatpush.msra.mxu0 %v470
    %1641 = vmatpush.msra.mxu0 %v469
    %1642 = vmatpush.msra.mxu0 %v468
    %1643 = vmatmul.f32.gmra.mxu0 %v991
    %v1644 = vpop.f32.mrf.mxu0
    %v1645 = vadd.f32 %v1625, %v1644
    %1646 = vdwg.mxu0
    %1647 = vmatpush.msra.mxu0 %v499
    %1648 = vmatpush.msra.mxu0 %v498
    %1649 = vmatpush.msra.mxu0 %v497
    %1650 = vmatpush.msra.mxu0 %v496
    %1651 = vmatpush.msra.mxu0 %v495
    %1652 = vmatpush.msra.mxu0 %v494
    %1653 = vmatpush.msra.mxu0 %v493
    %1654 = vmatpush.msra.mxu0 %v492
    %1655 = vmatpush.msra.mxu0 %v491
    %1656 = vmatpush.msra.mxu0 %v490
    %1657 = vmatpush.msra.mxu0 %v489
    %1658 = vmatpush.msra.mxu0 %v488
    %1659 = vmatpush.msra.mxu0 %v487
    %1660 = vmatpush.msra.mxu0 %v486
    %1661 = vmatpush.msra.mxu0 %v485
    %1662 = vmatpush.msra.mxu0 %v484
    %1663 = vmatmul.f32.gmra.mxu0 %v992
    %v1664 = vpop.f32.mrf.mxu0
    %v1665 = vadd.f32 %v1645, %v1664
    %1666 = vdwg.mxu0
    %1667 = vmatpush.msra.mxu0 %v515
    %1668 = vmatpush.msra.mxu0 %v514
    %1669 = vmatpush.msra.mxu0 %v513
    %1670 = vmatpush.msra.mxu0 %v512
    %1671 = vmatpush.msra.mxu0 %v511
    %1672 = vmatpush.msra.mxu0 %v510
    %1673 = vmatpush.msra.mxu0 %v509
    %1674 = vmatpush.msra.mxu0 %v508
    %1675 = vmatpush.msra.mxu0 %v507
    %1676 = vmatpush.msra.mxu0 %v506
    %1677 = vmatpush.msra.mxu0 %v505
    %1678 = vmatpush.msra.mxu0 %v504
    %1679 = vmatpush.msra.mxu0 %v503
    %1680 = vmatpush.msra.mxu0 %v502
    %1681 = vmatpush.msra.mxu0 %v501
    %1682 = vmatpush.msra.mxu0 %v500
    %1683 = vmatmul.f32.gmra.mxu0 %v993
    %v1684 = vpop.f32.mrf.mxu0
    %v1685 = vadd.f32 %v1665, %v1684
    %1686 = vdwg.mxu0
    %1687 = vmatpush.msra.mxu0 %v531
    %1688 = vmatpush.msra.mxu0 %v530
    %1689 = vmatpush.msra.mxu0 %v529
    %1690 = vmatpush.msra.mxu0 %v528
    %1691 = vmatpush.msra.mxu0 %v527
    %1692 = vmatpush.msra.mxu0 %v526
    %1693 = vmatpush.msra.mxu0 %v525
    %1694 = vmatpush.msra.mxu0 %v524
    %1695 = vmatpush.msra.mxu0 %v523
    %1696 = vmatpush.msra.mxu0 %v522
    %1697 = vmatpush.msra.mxu0 %v521
    %1698 = vmatpush.msra.mxu0 %v520
    %1699 = vmatpush.msra.mxu0 %v519
    %1700 = vmatpush.msra.mxu0 %v518
    %1701 = vmatpush.msra.mxu0 %v517
    %1702 = vmatpush.msra.mxu0 %v516
    %1703 = vmatmul.f32.gmra.mxu0 %v994
    %v1704 = vpop.f32.mrf.mxu0
    %v1705 = vadd.f32 %v1685, %v1704
    %1706 = vdwg.mxu0
    %1707 = vmatpush.msra.mxu0 %v547
    %1708 = vmatpush.msra.mxu0 %v546
    %1709 = vmatpush.msra.mxu0 %v545
    %1710 = vmatpush.msra.mxu0 %v544
    %1711 = vmatpush.msra.mxu0 %v543
    %1712 = vmatpush.msra.mxu0 %v542
    %1713 = vmatpush.msra.mxu0 %v541
    %1714 = vmatpush.msra.mxu0 %v540
    %1715 = vmatpush.msra.mxu0 %v539
    %1716 = vmatpush.msra.mxu0 %v538
    %1717 = vmatpush.msra.mxu0 %v537
    %1718 = vmatpush.msra.mxu0 %v536
    %1719 = vmatpush.msra.mxu0 %v535
    %1720 = vmatpush.msra.mxu0 %v534
    %1721 = vmatpush.msra.mxu0 %v533
    %1722 = vmatpush.msra.mxu0 %v532
    %1723 = vmatmul.f32.gmra.mxu0 %v995
    %v1724 = vpop.f32.mrf.mxu0
    %v1725 = vadd.f32 %v1705, %v1724
    %1726 = vdwg.mxu0
    %1727 = vmatpush.msra.mxu0 %v563
    %1728 = vmatpush.msra.mxu0 %v562
    %1729 = vmatpush.msra.mxu0 %v561
    %1730 = vmatpush.msra.mxu0 %v560
    %1731 = vmatpush.msra.mxu0 %v559
    %1732 = vmatpush.msra.mxu0 %v558
    %1733 = vmatpush.msra.mxu0 %v557
    %1734 = vmatpush.msra.mxu0 %v556
    %1735 = vmatpush.msra.mxu0 %v555
    %1736 = vmatpush.msra.mxu0 %v554
    %1737 = vmatpush.msra.mxu0 %v553
    %1738 = vmatpush.msra.mxu0 %v552
    %1739 = vmatpush.msra.mxu0 %v551
    %1740 = vmatpush.msra.mxu0 %v550
    %1741 = vmatpush.msra.mxu0 %v549
    %1742 = vmatpush.msra.mxu0 %v548
    %1743 = vmatmul.f32.gmra.mxu0 %v998
    %v1744 = vpop.f32.mrf.mxu0
    %v1745 = vadd.f32 %v1725, %v1744
    %1746 = vdwg.mxu0
    %1747 = vmatpush.msra.mxu0 %v579
    %1748 = vmatpush.msra.mxu0 %v578
    %1749 = vmatpush.msra.mxu0 %v577
    %1750 = vmatpush.msra.mxu0 %v576
    %1751 = vmatpush.msra.mxu0 %v575
    %1752 = vmatpush.msra.mxu0 %v574
    %1753 = vmatpush.msra.mxu0 %v573
    %1754 = vmatpush.msra.mxu0 %v572
    %1755 = vmatpush.msra.mxu0 %v571
    %1756 = vmatpush.msra.mxu0 %v570
    %1757 = vmatpush.msra.mxu0 %v569
    %1758 = vmatpush.msra.mxu0 %v568
    %1759 = vmatpush.msra.mxu0 %v567
    %1760 = vmatpush.msra.mxu0 %v566
    %1761 = vmatpush.msra.mxu0 %v565
    %1762 = vmatpush.msra.mxu0 %v564
    %1763 = vmatmul.f32.gmra.mxu0 %v999
    %v1764 = vpop.f32.mrf.mxu0
    %v1765 = vadd.f32 %v1745, %v1764
    %1766 = vdwg.mxu0
    %1767 = vmatpush.msra.mxu0 %v595
    %1768 = vmatpush.msra.mxu0 %v594
    %1769 = vmatpush.msra.mxu0 %v593
    %1770 = vmatpush.msra.mxu0 %v592
    %1771 = vmatpush.msra.mxu0 %v591
    %1772 = vmatpush.msra.mxu0 %v590
    %1773 = vmatpush.msra.mxu0 %v589
    %1774 = vmatpush.msra.mxu0 %v588
    %1775 = vmatpush.msra.mxu0 %v587
    %1776 = vmatpush.msra.mxu0 %v586
    %1777 = vmatpush.msra.mxu0 %v585
    %1778 = vmatpush.msra.mxu0 %v584
    %1779 = vmatpush.msra.mxu0 %v583
    %1780 = vmatpush.msra.mxu0 %v582
    %1781 = vmatpush.msra.mxu0 %v581
    %1782 = vmatpush.msra.mxu0 %v580
    %1783 = vmatmul.f32.gmra.mxu0 %v1000
    %v1784 = vpop.f32.mrf.mxu0
    %v1785 = vadd.f32 %v1765, %v1784
    %1786 = vdwg.mxu0
    %1787 = vmatpush.msra.mxu0 %v611
    %1788 = vmatpush.msra.mxu0 %v610
    %1789 = vmatpush.msra.mxu0 %v609
    %1790 = vmatpush.msra.mxu0 %v608
    %1791 = vmatpush.msra.mxu0 %v607
    %1792 = vmatpush.msra.mxu0 %v606
    %1793 = vmatpush.msra.mxu0 %v605
    %1794 = vmatpush.msra.mxu0 %v604
    %1795 = vmatpush.msra.mxu0 %v603
    %1796 = vmatpush.msra.mxu0 %v602
    %1797 = vmatpush.msra.mxu0 %v601
    %1798 = vmatpush.msra.mxu0 %v600
    %1799 = vmatpush.msra.mxu0 %v599
    %1800 = vmatpush.msra.mxu0 %v598
    %1801 = vmatpush.msra.mxu0 %v597
    %1802 = vmatpush.msra.mxu0 %v596
    %1803 = vmatmul.f32.gmra.mxu0 %v1001
    %v1804 = vpop.f32.mrf.mxu0
    %v1805 = vadd.f32 %v1785, %v1804
    %1806 = vdwg.mxu0
    %1807 = vmatpush.msra.mxu0 %v627
    %1808 = vmatpush.msra.mxu0 %v626
    %1809 = vmatpush.msra.mxu0 %v625
    %1810 = vmatpush.msra.mxu0 %v624
    %1811 = vmatpush.msra.mxu0 %v623
    %1812 = vmatpush.msra.mxu0 %v622
    %1813 = vmatpush.msra.mxu0 %v621
    %1814 = vmatpush.msra.mxu0 %v620
    %1815 = vmatpush.msra.mxu0 %v619
    %1816 = vmatpush.msra.mxu0 %v618
    %1817 = vmatpush.msra.mxu0 %v617
    %1818 = vmatpush.msra.mxu0 %v616
    %1819 = vmatpush.msra.mxu0 %v615
    %1820 = vmatpush.msra.mxu0 %v614
    %1821 = vmatpush.msra.mxu0 %v613
    %1822 = vmatpush.msra.mxu0 %v612
    %1823 = vmatmul.f32.gmra.mxu0 %v1002
    %v1824 = vpop.f32.mrf.mxu0
    %v1825 = vadd.f32 %v1805, %v1824
    %1826 = vdwg.mxu0
    %1827 = vmatpush.msra.mxu0 %v643
    %1828 = vmatpush.msra.mxu0 %v642
    %1829 = vmatpush.msra.mxu0 %v641
    %1830 = vmatpush.msra.mxu0 %v640
    %1831 = vmatpush.msra.mxu0 %v639
    %1832 = vmatpush.msra.mxu0 %v638
    %1833 = vmatpush.msra.mxu0 %v637
    %1834 = vmatpush.msra.mxu0 %v636
    %1835 = vmatpush.msra.mxu0 %v635
    %1836 = vmatpush.msra.mxu0 %v634
    %1837 = vmatpush.msra.mxu0 %v633
    %1838 = vmatpush.msra.mxu0 %v632
    %1839 = vmatpush.msra.mxu0 %v631
    %1840 = vmatpush.msra.mxu0 %v630
    %1841 = vmatpush.msra.mxu0 %v629
    %1842 = vmatpush.msra.mxu0 %v628
    %1843 = vmatmul.f32.gmra.mxu0 %v1003
    %v1844 = vpop.f32.mrf.mxu0
    %v1845 = vadd.f32 %v1825, %v1844
    %1846 = vdwg.mxu0
    %1847 = vmatpush.msra.mxu0 %v659
    %1848 = vmatpush.msra.mxu0 %v658
    %1849 = vmatpush.msra.mxu0 %v657
    %1850 = vmatpush.msra.mxu0 %v656
    %1851 = vmatpush.msra.mxu0 %v655
    %1852 = vmatpush.msra.mxu0 %v654
    %1853 = vmatpush.msra.mxu0 %v653
    %1854 = vmatpush.msra.mxu0 %v652
    %1855 = vmatpush.msra.mxu0 %v651
    %1856 = vmatpush.msra.mxu0 %v650
    %1857 = vmatpush.msra.mxu0 %v649
    %1858 = vmatpush.msra.mxu0 %v648
    %1859 = vmatpush.msra.mxu0 %v647
    %1860 = vmatpush.msra.mxu0 %v646
    %1861 = vmatpush.msra.mxu0 %v645
    %1862 = vmatpush.msra.mxu0 %v644
    %1863 = vmatmul.f32.gmra.mxu0 %v1004
    %v1864 = vpop.f32.mrf.mxu0
    %v1865 = vadd.f32 %v1845, %v1864
    %1866 = vdwg.mxu0
    %1867 = vmatpush.msra.mxu0 %v675
    %1868 = vmatpush.msra.mxu0 %v674
    %1869 = vmatpush.msra.mxu0 %v673
    %1870 = vmatpush.msra.mxu0 %v672
    %1871 = vmatpush.msra.mxu0 %v671
    %1872 = vmatpush.msra.mxu0 %v670
    %1873 = vmatpush.msra.mxu0 %v669
    %1874 = vmatpush.msra.mxu0 %v668
    %1875 = vmatpush.msra.mxu0 %v667
    %1876 = vmatpush.msra.mxu0 %v666
    %1877 = vmatpush.msra.mxu0 %v665
    %1878 = vmatpush.msra.mxu0 %v664
    %1879 = vmatpush.msra.mxu0 %v663
    %1880 = vmatpush.msra.mxu0 %v662
    %1881 = vmatpush.msra.mxu0 %v661
    %1882 = vmatpush.msra.mxu0 %v660
    %1883 = vmatmul.f32.gmra.mxu0 %v1005
    %v1884 = vpop.f32.mrf.mxu0
    %v1885 = vadd.f32 %v1865, %v1884
    %1886 = vdwg.mxu0
    %1887 = vmatpush.msra.mxu0 %v691
    %1888 = vmatpush.msra.mxu0 %v690
    %1889 = vmatpush.msra.mxu0 %v689
    %1890 = vmatpush.msra.mxu0 %v688
    %1891 = vmatpush.msra.mxu0 %v687
    %1892 = vmatpush.msra.mxu0 %v686
    %1893 = vmatpush.msra.mxu0 %v685
    %1894 = vmatpush.msra.mxu0 %v684
    %1895 = vmatpush.msra.mxu0 %v683
    %1896 = vmatpush.msra.mxu0 %v682
    %1897 = vmatpush.msra.mxu0 %v681
    %1898 = vmatpush.msra.mxu0 %v680
    %1899 = vmatpush.msra.mxu0 %v679
    %1900 = vmatpush.msra.mxu0 %v678
    %1901 = vmatpush.msra.mxu0 %v677
    %1902 = vmatpush.msra.mxu0 %v676
    %1903 = vmatmul.f32.gmra.mxu0 %v1008
    %v1904 = vpop.f32.mrf.mxu0
    %v1905 = vadd.f32 %v1885, %v1904
    %1906 = vdwg.mxu0
    %1907 = vmatpush.msra.mxu0 %v707
    %1908 = vmatpush.msra.mxu0 %v706
    %1909 = vmatpush.msra.mxu0 %v705
    %1910 = vmatpush.msra.mxu0 %v704
    %1911 = vmatpush.msra.mxu0 %v703
    %1912 = vmatpush.msra.mxu0 %v702
    %1913 = vmatpush.msra.mxu0 %v701
    %1914 = vmatpush.msra.mxu0 %v700
    %1915 = vmatpush.msra.mxu0 %v699
    %1916 = vmatpush.msra.mxu0 %v698
    %1917 = vmatpush.msra.mxu0 %v697
    %1918 = vmatpush.msra.mxu0 %v696
    %1919 = vmatpush.msra.mxu0 %v695
    %1920 = vmatpush.msra.mxu0 %v694
    %1921 = vmatpush.msra.mxu0 %v693
    %1922 = vmatpush.msra.mxu0 %v692
    %1923 = vmatmul.f32.gmra.mxu0 %v1009
    %v1924 = vpop.f32.mrf.mxu0
    %v1925 = vadd.f32 %v1905, %v1924
    %1926 = vdwg.mxu0
    %1927 = vmatpush.msra.mxu0 %v723
    %1928 = vmatpush.msra.mxu0 %v722
    %1929 = vmatpush.msra.mxu0 %v721
    %1930 = vmatpush.msra.mxu0 %v720
    %1931 = vmatpush.msra.mxu0 %v719
    %1932 = vmatpush.msra.mxu0 %v718
    %1933 = vmatpush.msra.mxu0 %v717
    %1934 = vmatpush.msra.mxu0 %v716
    %1935 = vmatpush.msra.mxu0 %v715
    %1936 = vmatpush.msra.mxu0 %v714
    %1937 = vmatpush.msra.mxu0 %v713
    %1938 = vmatpush.msra.mxu0 %v712
    %1939 = vmatpush.msra.mxu0 %v711
    %1940 = vmatpush.msra.mxu0 %v710
    %1941 = vmatpush.msra.mxu0 %v709
    %1942 = vmatpush.msra.mxu0 %v708
    %1943 = vmatmul.f32.gmra.mxu0 %v1010
    %v1944 = vpop.f32.mrf.mxu0
    %v1945 = vadd.f32 %v1925, %v1944
    %1946 = vdwg.mxu0
    %1947 = vmatpush.msra.mxu0 %v739
    %1948 = vmatpush.msra.mxu0 %v738
    %1949 = vmatpush.msra.mxu0 %v737
    %1950 = vmatpush.msra.mxu0 %v736
    %1951 = vmatpush.msra.mxu0 %v735
    %1952 = vmatpush.msra.mxu0 %v734
    %1953 = vmatpush.msra.mxu0 %v733
    %1954 = vmatpush.msra.mxu0 %v732
    %1955 = vmatpush.msra.mxu0 %v731
    %1956 = vmatpush.msra.mxu0 %v730
    %1957 = vmatpush.msra.mxu0 %v729
    %1958 = vmatpush.msra.mxu0 %v728
    %1959 = vmatpush.msra.mxu0 %v727
    %1960 = vmatpush.msra.mxu0 %v726
    %1961 = vmatpush.msra.mxu0 %v725
    %1962 = vmatpush.msra.mxu0 %v724
    %1963 = vmatmul.f32.gmra.mxu0 %v1011
    %v1964 = vpop.f32.mrf.mxu0
    %v1965 = vadd.f32 %v1945, %v1964
    %1966 = vdwg.mxu0
    %1967 = vmatpush.msra.mxu0 %v755
    %1968 = vmatpush.msra.mxu0 %v754
    %1969 = vmatpush.msra.mxu0 %v753
    %1970 = vmatpush.msra.mxu0 %v752
    %1971 = vmatpush.msra.mxu0 %v751
    %1972 = vmatpush.msra.mxu0 %v750
    %1973 = vmatpush.msra.mxu0 %v749
    %1974 = vmatpush.msra.mxu0 %v748
    %1975 = vmatpush.msra.mxu0 %v747
    %1976 = vmatpush.msra.mxu0 %v746
    %1977 = vmatpush.msra.mxu0 %v745
    %1978 = vmatpush.msra.mxu0 %v744
    %1979 = vmatpush.msra.mxu0 %v743
    %1980 = vmatpush.msra.mxu0 %v742
    %1981 = vmatpush.msra.mxu0 %v741
    %1982 = vmatpush.msra.mxu0 %v740
    %1983 = vmatmul.f32.gmra.mxu0 %v1012
    %v1984 = vpop.f32.mrf.mxu0
    %v1985 = vadd.f32 %v1965, %v1984
    %1986 = vdwg.mxu0
    %1987 = vmatpush.msra.mxu0 %v771
    %1988 = vmatpush.msra.mxu0 %v770
    %1989 = vmatpush.msra.mxu0 %v769
    %1990 = vmatpush.msra.mxu0 %v768
    %1991 = vmatpush.msra.mxu0 %v767
    %1992 = vmatpush.msra.mxu0 %v766
    %1993 = vmatpush.msra.mxu0 %v765
    %1994 = vmatpush.msra.mxu0 %v764
    %1995 = vmatpush.msra.mxu0 %v763
    %1996 = vmatpush.msra.mxu0 %v762
    %1997 = vmatpush.msra.mxu0 %v761
    %1998 = vmatpush.msra.mxu0 %v760
    %1999 = vmatpush.msra.mxu0 %v759
    %2000 = vmatpush.msra.mxu0 %v758
    %2001 = vmatpush.msra.mxu0 %v757
    %2002 = vmatpush.msra.mxu0 %v756
    %2003 = vmatmul.f32.gmra.mxu0 %v1013
    %v2004 = vpop.f32.mrf.mxu0
    %v2005 = vadd.f32 %v1985, %v2004
    %2006 = vdwg.mxu0
    %2007 = vmatpush.msra.mxu0 %v787
    %2008 = vmatpush.msra.mxu0 %v786
    %2009 = vmatpush.msra.mxu0 %v785
    %2010 = vmatpush.msra.mxu0 %v784
    %2011 = vmatpush.msra.mxu0 %v783
    %2012 = vmatpush.msra.mxu0 %v782
    %2013 = vmatpush.msra.mxu0 %v781
    %2014 = vmatpush.msra.mxu0 %v780
    %2015 = vmatpush.msra.mxu0 %v779
    %2016 = vmatpush.msra.mxu0 %v778
    %2017 = vmatpush.msra.mxu0 %v777
    %2018 = vmatpush.msra.mxu0 %v776
    %2019 = vmatpush.msra.mxu0 %v775
    %2020 = vmatpush.msra.mxu0 %v774
    %2021 = vmatpush.msra.mxu0 %v773
    %2022 = vmatpush.msra.mxu0 %v772
    %2023 = vmatmul.f32.gmra.mxu0 %v1014
    %v2024 = vpop.f32.mrf.mxu0
    %v2025 = vadd.f32 %v2005, %v2024
    %2026 = vdwg.mxu0
    %2027 = vmatpush.msra.mxu0 %v803
    %2028 = vmatpush.msra.mxu0 %v802
    %2029 = vmatpush.msra.mxu0 %v801
    %2030 = vmatpush.msra.mxu0 %v800
    %2031 = vmatpush.msra.mxu0 %v799
    %2032 = vmatpush.msra.mxu0 %v798
    %2033 = vmatpush.msra.mxu0 %v797
    %2034 = vmatpush.msra.mxu0 %v796
    %2035 = vmatpush.msra.mxu0 %v795
    %2036 = vmatpush.msra.mxu0 %v794
    %2037 = vmatpush.msra.mxu0 %v793
    %2038 = vmatpush.msra.mxu0 %v792
    %2039 = vmatpush.msra.mxu0 %v791
    %2040 = vmatpush.msra.mxu0 %v790
    %2041 = vmatpush.msra.mxu0 %v789
    %2042 = vmatpush.msra.mxu0 %v788
    %2043 = vmatmul.f32.gmra.mxu0 %v1015
    %v2044 = vpop.f32.mrf.mxu0
    %v2045 = vadd.f32 %v2025, %v2044
    %2046 = vdwg.mxu0
    %2047 = vmatpush.msra.mxu0 %v819
    %2048 = vmatpush.msra.mxu0 %v818
    %2049 = vmatpush.msra.mxu0 %v817
    %2050 = vmatpush.msra.mxu0 %v816
    %2051 = vmatpush.msra.mxu0 %v815
    %2052 = vmatpush.msra.mxu0 %v814
    %2053 = vmatpush.msra.mxu0 %v813
    %2054 = vmatpush.msra.mxu0 %v812
    %2055 = vmatpush.msra.mxu0 %v811
    %2056 = vmatpush.msra.mxu0 %v810
    %2057 = vmatpush.msra.mxu0 %v809
    %2058 = vmatpush.msra.mxu0 %v808
    %2059 = vmatpush.msra.mxu0 %v807
    %2060 = vmatpush.msra.mxu0 %v806
    %2061 = vmatpush.msra.mxu0 %v805
    %2062 = vmatpush.msra.mxu0 %v804
    %2063 = vmatmul.f32.gmra.mxu0 %v1018
    %v2064 = vpop.f32.mrf.mxu0
    %v2065 = vadd.f32 %v2045, %v2064
    %2066 = vdwg.mxu0
    %2067 = vmatpush.msra.mxu0 %v835
    %2068 = vmatpush.msra.mxu0 %v834
    %2069 = vmatpush.msra.mxu0 %v833
    %2070 = vmatpush.msra.mxu0 %v832
    %2071 = vmatpush.msra.mxu0 %v831
    %2072 = vmatpush.msra.mxu0 %v830
    %2073 = vmatpush.msra.mxu0 %v829
    %2074 = vmatpush.msra.mxu0 %v828
    %2075 = vmatpush.msra.mxu0 %v827
    %2076 = vmatpush.msra.mxu0 %v826
    %2077 = vmatpush.msra.mxu0 %v825
    %2078 = vmatpush.msra.mxu0 %v824
    %2079 = vmatpush.msra.mxu0 %v823
    %2080 = vmatpush.msra.mxu0 %v822
    %2081 = vmatpush.msra.mxu0 %v821
    %2082 = vmatpush.msra.mxu0 %v820
    %2083 = vmatmul.f32.gmra.mxu0 %v1019
    %v2084 = vpop.f32.mrf.mxu0
    %v2085 = vadd.f32 %v2065, %v2084
    %2086 = vdwg.mxu0
    %2087 = vmatpush.msra.mxu0 %v851
    %2088 = vmatpush.msra.mxu0 %v850
    %2089 = vmatpush.msra.mxu0 %v849
    %2090 = vmatpush.msra.mxu0 %v848
    %2091 = vmatpush.msra.mxu0 %v847
    %2092 = vmatpush.msra.mxu0 %v846
    %2093 = vmatpush.msra.mxu0 %v845
    %2094 = vmatpush.msra.mxu0 %v844
    %2095 = vmatpush.msra.mxu0 %v843
    %2096 = vmatpush.msra.mxu0 %v842
    %2097 = vmatpush.msra.mxu0 %v841
    %2098 = vmatpush.msra.mxu0 %v840
    %2099 = vmatpush.msra.mxu0 %v839
    %2100 = vmatpush.msra.mxu0 %v838
    %2101 = vmatpush.msra.mxu0 %v837
    %2102 = vmatpush.msra.mxu0 %v836
    %2103 = vmatmul.f32.gmra.mxu0 %v1020
    %v2104 = vpop.f32.mrf.mxu0
    %v2105 = vadd.f32 %v2085, %v2104
    %2106 = vdwg.mxu0
    %2107 = vmatpush.msra.mxu0 %v867
    %2108 = vmatpush.msra.mxu0 %v866
    %2109 = vmatpush.msra.mxu0 %v865
    %2110 = vmatpush.msra.mxu0 %v864
    %2111 = vmatpush.msra.mxu0 %v863
    %2112 = vmatpush.msra.mxu0 %v862
    %2113 = vmatpush.msra.mxu0 %v861
    %2114 = vmatpush.msra.mxu0 %v860
    %2115 = vmatpush.msra.mxu0 %v859
    %2116 = vmatpush.msra.mxu0 %v858
    %2117 = vmatpush.msra.mxu0 %v857
    %2118 = vmatpush.msra.mxu0 %v856
    %2119 = vmatpush.msra.mxu0 %v855
    %2120 = vmatpush.msra.mxu0 %v854
    %2121 = vmatpush.msra.mxu0 %v853
    %2122 = vmatpush.msra.mxu0 %v852
    %2123 = vmatmul.f32.gmra.mxu0 %v1021
    %v2124 = vpop.f32.mrf.mxu0
    %v2125 = vadd.f32 %v2105, %v2124
    %2126 = vdwg.mxu0
    %2127 = vmatpush.msra.mxu0 %v883
    %2128 = vmatpush.msra.mxu0 %v882
    %2129 = vmatpush.msra.mxu0 %v881
    %2130 = vmatpush.msra.mxu0 %v880
    %2131 = vmatpush.msra.mxu0 %v879
    %2132 = vmatpush.msra.mxu0 %v878
    %2133 = vmatpush.msra.mxu0 %v877
    %2134 = vmatpush.msra.mxu0 %v876
    %2135 = vmatpush.msra.mxu0 %v875
    %2136 = vmatpush.msra.mxu0 %v874
    %2137 = vmatpush.msra.mxu0 %v873
    %2138 = vmatpush.msra.mxu0 %v872
    %2139 = vmatpush.msra.mxu0 %v871
    %2140 = vmatpush.msra.mxu0 %v870
    %2141 = vmatpush.msra.mxu0 %v869
    %2142 = vmatpush.msra.mxu0 %v868
    %2143 = vmatmul.f32.gmra.mxu0 %v1022
    %v2144 = vpop.f32.mrf.mxu0
    %v2145 = vadd.f32 %v2125, %v2144
    %2146 = vdwg.mxu0
    %2147 = vmatpush.msra.mxu0 %v899
    %2148 = vmatpush.msra.mxu0 %v898
    %2149 = vmatpush.msra.mxu0 %v897
    %2150 = vmatpush.msra.mxu0 %v896
    %2151 = vmatpush.msra.mxu0 %v895
    %2152 = vmatpush.msra.mxu0 %v894
    %2153 = vmatpush.msra.mxu0 %v893
    %2154 = vmatpush.msra.mxu0 %v892
    %2155 = vmatpush.msra.mxu0 %v891
    %2156 = vmatpush.msra.mxu0 %v890
    %2157 = vmatpush.msra.mxu0 %v889
    %2158 = vmatpush.msra.mxu0 %v888
    %2159 = vmatpush.msra.mxu0 %v887
    %2160 = vmatpush.msra.mxu0 %v886
    %2161 = vmatpush.msra.mxu0 %v885
    %2162 = vmatpush.msra.mxu0 %v884
    %2163 = vmatmul.f32.gmra.mxu0 %v1023
    %v2164 = vpop.f32.mrf.mxu0
    %v2165 = vadd.f32 %v2145, %v2164
    %2166 = vdwg.mxu0
    %2167 = vmatpush.msra.mxu0 %v915
    %2168 = vmatpush.msra.mxu0 %v914
    %2169 = vmatpush.msra.mxu0 %v913
    %2170 = vmatpush.msra.mxu0 %v912
    %2171 = vmatpush.msra.mxu0 %v911
    %2172 = vmatpush.msra.mxu0 %v910
    %2173 = vmatpush.msra.mxu0 %v909
    %2174 = vmatpush.msra.mxu0 %v908
    %2175 = vmatpush.msra.mxu0 %v907
    %2176 = vmatpush.msra.mxu0 %v906
    %2177 = vmatpush.msra.mxu0 %v905
    %2178 = vmatpush.msra.mxu0 %v904
    %2179 = vmatpush.msra.mxu0 %v903
    %2180 = vmatpush.msra.mxu0 %v902
    %2181 = vmatpush.msra.mxu0 %v901
    %2182 = vmatpush.msra.mxu0 %v900
    %2183 = vmatmul.f32.gmra.mxu0 %v1024
    %v2184 = vpop.f32.mrf.mxu0
    %v2185 = vadd.f32 %v2165, %v2184
    %2186 = vdwg.mxu0
    %2187 = vmatpush.msra.mxu0 %v931
    %2188 = vmatpush.msra.mxu0 %v930
    %2189 = vmatpush.msra.mxu0 %v929
    %2190 = vmatpush.msra.mxu0 %v928
    %2191 = vmatpush.msra.mxu0 %v927
    %2192 = vmatpush.msra.mxu0 %v926
    %2193 = vmatpush.msra.mxu0 %v925
    %2194 = vmatpush.msra.mxu0 %v924
    %2195 = vmatpush.msra.mxu0 %v923
    %2196 = vmatpush.msra.mxu0 %v922
    %2197 = vmatpush.msra.mxu0 %v921
    %2198 = vmatpush.msra.mxu0 %v920
    %2199 = vmatpush.msra.mxu0 %v919
    %2200 = vmatpush.msra.mxu0 %v918
    %2201 = vmatpush.msra.mxu0 %v917
    %2202 = vmatpush.msra.mxu0 %v916
    %2203 = vmatmul.f32.gmra.mxu0 %v1025
    %v2204 = vpop.f32.mrf.mxu0
    %v2205 = vadd.f32 %v2185, %v2204
    %2206 = vdwg.mxu0
    %2207 = vmatpush.msra.mxu0 0.0
    %2208 = vmatpush.msra.mxu0 0.0
    %2209 = vmatpush.msra.mxu0 0.0
    %2210 = vmatpush.msra.mxu0 0.0
    %2211 = vmatpush.msra.mxu0 0.0
    %2212 = vmatpush.msra.mxu0 0.0
    %2213 = vmatpush.msra.mxu0 0.0
    %2214 = vmatpush.msra.mxu0 0.0
    %2215 = vmatpush.msra.mxu0 0.0
    %2216 = vmatpush.msra.mxu0 0.0
    %2217 = vmatpush.msra.mxu0 0.0
    %2218 = vmatpush.msra.mxu0 0.0
    %2219 = vmatpush.msra.mxu0 %v935
    %2220 = vmatpush.msra.mxu0 %v934
    %2221 = vmatpush.msra.mxu0 %v933
    %2222 = vmatpush.msra.mxu0 %v932
    %2223 = vmatmul.f32.gmra.mxu0 %v1085
    %v2224 = vpop.f32.mrf.mxu0
    %v2225 = vadd.f32 %v2205, %v2224
    %2226 = vdwg.mxu0
    %v2227 = vmax.f32 %v2225, 0.0
    %v2228 = vld [vmem:[%s3] sm:$0xff]
    %v2229 = vld [vmem:[%s3 + $0x8] sm:$0xff]
    %v2230 = vld [vmem:[%s3 + $0x10] sm:$0xff]
    %v2231 = vld [vmem:[%s3 + $0x18] sm:$0xff]
    %v2232 = vld [vmem:[%s3 + $0x20] sm:$0xff]
    %v2233 = vld [vmem:[%s3 + $0x28] sm:$0xff]
    %v2234 = vld [vmem:[%s3 + $0x30] sm:$0xff]
    %v2235 = vld [vmem:[%s3 + $0x38] sm:$0xff]
    %v2236 = vld [vmem:[%s3 + $0x40] sm:$0xff]
    %v2237 = vld [vmem:[%s3 + $0x48] sm:$0xff]
    %v2238 = vld [vmem:[%s3 + $0x50] sm:$0xff]
    %v2239 = vld [vmem:[%s3 + $0x58] sm:$0xff]
    %v2240 = vld [vmem:[%s3 + $0x60] sm:$0xff]
    %v2241 = vld [vmem:[%s3 + $0x68] sm:$0xff]
    %v2242 = vld [vmem:[%s3 + $0x70] sm:$0xff]
    %v2243 = vld [vmem:[%s3 + $0x78] sm:$0xff]
    %v2244 = vld [vmem:[%s4] sm:$0x1]
    %v2246 = vperm.slane %v2244, 0
    %2248 = vmatpush.msra.mxu0 %v2243
    %2249 = vmatpush.msra.mxu0 %v2242
    %2250 = vmatpush.msra.mxu0 %v2241
    %2251 = vmatpush.msra.mxu0 %v2240
    %2252 = vmatpush.msra.mxu0 %v2239
    %2253 = vmatpush.msra.mxu0 %v2238
    %2254 = vmatpush.msra.mxu0 %v2237
    %2255 = vmatpush.msra.mxu0 %v2236
    %2256 = vmatpush.msra.mxu0 %v2235
    %2257 = vmatpush.msra.mxu0 %v2234
    %2258 = vmatpush.msra.mxu0 %v2233
    %2259 = vmatpush.msra.mxu0 %v2232
    %2260 = vmatpush.msra.mxu0 %v2231
    %2261 = vmatpush.msra.mxu0 %v2230
    %2262 = vmatpush.msra.mxu0 %v2229
    %2263 = vmatpush.msra.mxu0 %v2228
    %2264 = vmatmul.f32.gmra.mxu0 %v2227
    %v2265 = vpop.f32.mrf.mxu0
    %v2266 = vadd.f32 %v2246, %v2265
    %2267 = vdwg.mxu0
    %vm2268 = vcmask 33792
    %2269 = vst.msk [vmem:[#allocation2] sm:$0x3] %vm2268, %v2266
    // Predicated region
    $region22: #{simple_cnn_forward.5} parent=1 // pred_check
      _
    $region23: #{simple_cnn_forward.5} parent=1 // pred_check_branch
      %2271 = sbr.rel (0) target = $region25
    $region24: #{simple_cnn_forward.5} parent=1 // pred_region
      %2273 = vsyncadd [#allocation3], 0
      %s2275 = sshll.u32 [#allocation2], 4
      %s2276 = int_to_ptr.vmem [resolvable:$true] %s2275
      %s2277 = sshll.u32 %s5, 4
      %s2278 = int_to_ptr.hbm [resolvable:$true] %s2277
      %2280 = dma.vmem_to_hbm [thread:$0]  %s2276, 32, %s2278, [#allocation3]
    $region25: #{simple_cnn_forward.5} parent=1 // pred_fallthru
      _
    // Predicated region
    $region26: #{simple_cnn_forward.5} parent=1 // pred_check
      _
    $region27: #{simple_cnn_forward.5} parent=1 // pred_check_branch
      %2282 = sbr.rel (0) target = $region29
    $region28: #{simple_cnn_forward.5} parent=1 // pred_region
      %2284 = dma.done [#allocation3], 32
    $region29: #{simple_cnn_forward.5} parent=1 // pred_fallthru
      _
    %2285 = vsyncpa [#allocation3], 1

</llo_original>
